<compile_context>
chip_gen: v7x
topology: tpu7x:2x2x1
jax: 0.10.0
libtpu: 0.0.40
codegen_flags: <defaults>
</compile_context>

<pallas_src>
import math

import numpy as np

import jax
import jax.numpy as jnp
from jax.experimental import pallas as pl
from jax.experimental.pallas import tpu as pltpu


def _pad128(n: int) -> int:
    return ((n + 127) // 128) * 128


# ------------------------------- fused kernel -------------------------------- #

def _make_dreamer_kernel(cfg):
    """Builds the kernel body; cfg holds static dims / offsets closed over at trace."""
    D, S = cfg["deter"], cfg["stoc"]
    boff = cfg["bias_off"]          # name -> (lane offset, width) in the bias slab
    dcol = cfg["dec_cols"]          # ((off, w) x 4) columns inside the decoder-tail slab
    packw = cfg["packw"]

    def kernel(state_ref, action_ref, eps_post_ref, eps_pred_ref,
               init_deter_ref, init_stoc_ref,
               we0, we1, we2, we3, we4,
               wp1s, wp1a, wp2,
               wgi, wgh,
               wpp, wpoe,
               wd1d, wd1s,
               dec_tail_hbm, bias_ref,
               out_ref,
               deter_c, stoc_c, dec_vmem, dec_sem):
        t = pl.program_id(0)

        # -- step-0 setup: load initial recurrent state, start decoder-tail DMA early --
        @pl.when(t == 0)
        def _init():
            deter_c[...] = init_deter_ref[...]
            stoc_c[...] = init_stoc_ref[...]
            pltpu.make_async_copy(dec_tail_hbm, dec_vmem, dec_sem).start()

        def bias(name):
            off, w = boff[name]
            return bias_ref[:, off:off + w]

        def mm(x, w):
            # bf16 x bf16 (or f32 x f32 for the tiny collapsed mats), f32 accumulate.
            return jnp.dot(x.astype(w.dtype), w, preferred_element_type=jnp.float32)

        def elu(y):
            # ELU(alpha=1); clamp before exp so no inf is ever produced on the dead path.
            return jnp.where(y > 0, y, jnp.exp(jnp.minimum(y, 0.0)) - 1.0)

        def sigmoid(y):
            return 1.0 / (1.0 + jnp.exp(-y))

        # ---------------- encoder ----------------
        x = state_ref[0]
        x = elu(mm(x, we0[...]) + bias("be0"))
        x = elu(mm(x, we1[...]) + bias("be1"))
        x = elu(mm(x, we2[...]) + bias("be2"))
        x = elu(mm(x, we3[...]) + bias("be3"))
        embedding = mm(x, we4[...]) + bias("be4")

        # -------- pre_recurrent: dual dot == Linear(cat([prev_stoc, action])) --------
        h_pre = elu(mm(stoc_c[...], wp1s[...]) + mm(action_ref[0], wp1a[...]) + bias("bp1"))
        h_pre = elu(mm(h_pre, wp2[...]) + bias("bp2"))

        # ---------------- GRU cell (nn.GRUCell semantics, gate order r|z|n) ----------
        h = deter_c[...]
        gi = mm(h_pre, wgi[...]) + bias("bgi")       # (B, 3D)
        gh = mm(h, wgh[...]) + bias("bgh")           # (B, 3D)
        s_rz = gi[:, :2 * D] + gh[:, :2 * D]         # single add over lane-aligned 2D slice
        r = sigmoid(s_rz[:, :D])
        z = sigmoid(s_rz[:, D:])
        n = jnp.tanh(gi[:, 2 * D:] + r * gh[:, 2 * D:])
        new_deter = (1.0 - z) * n + z * h
        deter_c[...] = new_deter

        # -------- prior / post dists (offline-collapsed linear chains) + rsample -----
        pp = mm(new_deter, wpp[...])                           # (B, 4S): [prior | post_deter]
        prior_out = pp[:, :2 * S] + bias("bpr")
        post_out = pp[:, 2 * S:] + mm(embedding, wpoe[...]) + bias("bpo")
        prior_mean, prior_log_std = prior_out[:, :S], prior_out[:, S:]
        post_mean, post_log_std = post_out[:, :S], post_out[:, S:]
        prior_std = jnp.exp(prior_log_std)
        post_std = jnp.exp(post_log_std)
        new_stoc = post_mean + post_std * eps_post_ref[0]      # reparameterised rsample
        stoc_c[...] = new_stoc

        # ---- decoder-tail weights: DMA issued at t==0 must have landed by here -------
        @pl.when(t == 0)
        def _wait_dec():
            pltpu.make_async_copy(dec_tail_hbm, dec_vmem, dec_sem).wait()

        # -------------- decoder: dual dot == Linear(cat([deter, stoc])) --------------
        (o2, w2), (o3, w3), (o4, w4), (o5, w5) = dcol
        y = elu(mm(new_deter, wd1d[...]) + mm(new_stoc, wd1s[...]) + bias("bd1"))
        y = elu(mm(y, dec_vmem[:, o2:o2 + w2]) + bias("bd2"))
        y = elu(mm(y, dec_vmem[:, o3:o3 + w3]) + bias("bd3"))
        y = elu(mm(y, dec_vmem[:, o4:o4 + w4]) + bias("bd4"))
        dec_out = mm(y, dec_vmem[:, o5:o5 + w5]) + bias("bd5")   # (B=2, 2*state_dim)

        # Reference quirk: decoder output tuple-unpacked along the BATCH axis.
        next_pred_mean = dec_out[0:1, :]
        next_pred_log_std = dec_out[1:2, :]
        next_pred = next_pred_mean + jnp.exp(next_pred_log_std) * eps_pred_ref[0]

        # ---------------- single lane-dense packed output slab -----------------------
        pred_rows = jnp.concatenate([next_pred, jnp.zeros_like(next_pred)], axis=0)
        packed = jnp.concatenate(
            [prior_mean, prior_std, post_mean, post_std, new_stoc, new_deter, pred_rows],
            axis=-1)
        pad = packw - packed.shape[-1]
        if pad:
            packed = jnp.concatenate(
                [packed, jnp.zeros((packed.shape[0], pad), jnp.float32)], axis=-1)
        out_ref[0] = packed

    return kernel


# --------------------------- parameter construction --------------------------- #

def _uniform(key, shape, bound):
    return jax.random.uniform(key, shape, jnp.float32, -bound, bound)


def init_linear(key, in_dim, out_dim):
    kw, kb = jax.random.split(key)
    bound = 1.0 / math.sqrt(in_dim)
    return _uniform(kw, (in_dim, out_dim), bound), _uniform(kb, (1, out_dim), bound)


def init_params(key, state_dim, embed_dim, action_dim, hidden_dim,
                deter_dim, stoc_dim, pre_sizes=(512, 512)):
    """Structured params matching the reference module layout (weights stored (in, out))."""
    keys = iter(jax.random.split(key, 64))
    p = {}
    enc_dims = [state_dim, 512, 512, 512, 512, embed_dim]
    p["encoder"] = [init_linear(next(keys), enc_dims[i], enc_dims[i + 1]) for i in range(5)]
    dims = [stoc_dim + action_dim] + list(pre_sizes)
    p["pre_recurrent"] = [init_linear(next(keys), dims[i], dims[i + 1])
                          for i in range(len(pre_sizes))]
    bound = 1.0 / math.sqrt(deter_dim)
    p["gru"] = {"w_i": _uniform(next(keys), (hidden_dim, 3 * deter_dim), bound),
                "w_h": _uniform(next(keys), (deter_dim, 3 * deter_dim), bound),
                "b_i": _uniform(next(keys), (1, 3 * deter_dim), bound),
                "b_h": _uniform(next(keys), (1, 3 * deter_dim), bound)}
    post_dims = [deter_dim + embed_dim] + list(pre_sizes[::-1]) + [2 * stoc_dim]
    prior_dims = [deter_dim] + list(pre_sizes[::-1]) + [2 * stoc_dim]
    p["post_dist_mlp"] = [init_linear(next(keys), post_dims[i], post_dims[i + 1])
                          for i in range(len(post_dims) - 1)]
    p["prior_dist_mlp"] = [init_linear(next(keys), prior_dims[i], prior_dims[i + 1])
                           for i in range(len(prior_dims) - 1)]
    dec_dims = [deter_dim + stoc_dim, 512, 512, 512, 512, 2 * state_dim]
    p["decoder"] = [init_linear(next(keys), dec_dims[i], dec_dims[i + 1]) for i in range(5)]
    return p


def _collapse_linear_chain_f64(layers):
    """Fold a chain of activation-free Linear layers into one (W, b), folded in f64."""
    w = np.asarray(layers[0][0], np.float64)
    b = np.asarray(layers[0][1], np.float64)
    for w2, b2 in layers[1:]:
        w2 = np.asarray(w2, np.float64)
        b2 = np.asarray(b2, np.float64)
        b = b @ w2 + b2
        w = w @ w2
    return w.astype(np.float32), b.astype(np.float32)


def pack_params(p, *, state_dim, embed_dim, action_dim, hidden_dim, deter_dim,
                stoc_dim, pre_sizes=(512, 512), weight_dtype=jnp.bfloat16):
    """Flatten structured params into the fused kernel's argument layout."""
    dt = weight_dtype
    S, D = stoc_dim, deter_dim

    enc_w = tuple(w.astype(dt) for w, _ in p["encoder"])

    (pw1, pb1), (pw2, pb2) = p["pre_recurrent"]
    pre_w1s, pre_w1a = pw1[:S].astype(dt), pw1[S:].astype(dt)
    pre_w2 = pw2.astype(dt)

    g = p["gru"]
    gru_wi, gru_wh = g["w_i"].astype(dt), g["w_h"].astype(dt)

    # prior/post chains collapsed offline (no activations in the reference), folded f64.
    wpr, bpr = _collapse_linear_chain_f64(p["prior_dist_mlp"])
    wpo, bpo = _collapse_linear_chain_f64(p["post_dist_mlp"])
    wpp = jnp.asarray(np.concatenate([wpr, wpo[:D]], axis=1))          # (D, 4S) f32
    wpoe = jnp.asarray(wpo[D:])                                        # (E, 2S) f32

    (dw1, db1), (dw2, db2), (dw3, db3), (dw4, db4), (dw5, db5) = p["decoder"]
    dec_w1d, dec_w1s = dw1[:D].astype(dt), dw1[D:].astype(dt)

    # decoder tail (layers 2..5) packed column-wise into one HBM slab (manual DMA target)
    dec_cols, cols, cur = [], [], 0
    for w in (dw2, dw3, dw4, dw5):
        wnp = np.asarray(w, np.float32)
        dec_cols.append((cur, wnp.shape[1]))
        cols.append(wnp)
        padded = _pad128(wnp.shape[1])
        if padded != wnp.shape[1]:
            cols.append(np.zeros((wnp.shape[0], padded - wnp.shape[1]), np.float32))
        cur += padded
    dec_tail = jnp.asarray(np.concatenate(cols, axis=1)).astype(dt)

    # all (1, N) f32 biases packed into one slab with 128-lane-aligned offsets
    bias_entries = [
        ("be0", p["encoder"][0][1]), ("be1", p["encoder"][1][1]),
        ("be2", p["encoder"][2][1]), ("be3", p["encoder"][3][1]),
        ("be4", p["encoder"][4][1]),
        ("bp1", pb1), ("bp2", pb2),
        ("bgi", g["b_i"]), ("bgh", g["b_h"]),
        ("bpr", bpr), ("bpo", bpo),
        ("bd1", db1), ("bd2", db2), ("bd3", db3), ("bd4", db4), ("bd5", db5),
    ]
    bias_off, cur = {}, 0
    for name, vec in bias_entries:
        w = int(vec.shape[-1])
        bias_off[name] = (cur, w)
        cur = _pad128(cur + w)
    slab = np.zeros((1, max(cur, 128)), np.float32)
    for name, vec in bias_entries:
        off, w = bias_off[name]
        slab[0, off:off + w] = np.asarray(vec, np.float32).reshape(-1)
    bias_slab = jnp.asarray(slab)

    packw = _pad128(5 * S + D + 2 * state_dim)

    cfg = dict(state=state_dim, embed=embed_dim, action=action_dim,
               deter=D, stoc=S, pre_sizes=tuple(pre_sizes),
               bias_off=bias_off, dec_cols=tuple(dec_cols), packw=packw)

    return dict(enc_w=enc_w, pre_w1s=pre_w1s, pre_w1a=pre_w1a, pre_w2=pre_w2,
                gru_wi=gru_wi, gru_wh=gru_wh, wpp=wpp, wpoe=wpoe,
                dec_w1d=dec_w1d, dec_w1s=dec_w1s, dec_tail=dec_tail,
                bias=bias_slab, cfg=cfg)


# ------------------------------ kernel wrappers ------------------------------- #

def mlp_dreamer_rollout(packed, states, actions, init_hidden, eps_post, eps_pred):
    """Run T forward steps inside ONE pallas_call (grid axis = time, weights resident).

    states (T,B,state_dim)  actions (T,B,action_dim)
    eps_post (T,B,stoc_dim) eps_pred (T,1,2*state_dim)
    """
    cfg = packed["cfg"]
    Sd, Ed, Ad = cfg["state"], cfg["embed"], cfg["action"]
    D, S, packw = cfg["deter"], cfg["stoc"], cfg["packw"]
    T, B = states.shape[0], states.shape[1]
    assert B == 2, "reference decoder-unpacking quirk requires batch == 2"

    kernel = _make_dreamer_kernel(cfg)

    def const_spec(arr):
        nd = arr.ndim
        return pl.BlockSpec(arr.shape, lambda t: (0,) * nd)

    def step_spec(shape):
        return pl.BlockSpec((1,) + tuple(shape[1:]),
                            lambda t: (t,) + (0,) * (len(shape) - 1))

    weight_arrays = (list(packed["enc_w"]) +
                     [packed["pre_w1s"], packed["pre_w1a"], packed["pre_w2"],
                      packed["gru_wi"], packed["gru_wh"],
                      packed["wpp"], packed["wpoe"],
                      packed["dec_w1d"], packed["dec_w1s"]])

    inputs = ([states, actions, eps_post, eps_pred,
               init_hidden["deter"], init_hidden["stoc"]]
              + weight_arrays + [packed["dec_tail"], packed["bias"]])

    in_specs = ([step_spec(states.shape), step_spec(actions.shape),
                 step_spec(eps_post.shape), step_spec(eps_pred.shape),
                 const_spec(init_hidden["deter"]), const_spec(init_hidden["stoc"])]
                + [const_spec(w) for w in weight_arrays]
                + [pl.BlockSpec(memory_space=pl.ANY), const_spec(packed["bias"])])

    out_shape = jax.ShapeDtypeStruct((T, B, packw), jnp.float32)
    out_spec = pl.BlockSpec((1, B, packw), lambda t: (t, 0, 0))

    scratch = [pltpu.VMEM((B, D), jnp.float32),                      # deter carry
               pltpu.VMEM((B, S), jnp.float32),                      # stoc carry
               pltpu.VMEM(packed["dec_tail"].shape, packed["dec_tail"].dtype),
               pltpu.SemaphoreType.DMA(())]

    # advisory cost estimate so XLA schedules surrounding ops around the custom call
    n_mac = (Sd * 512 + 3 * 512 * 512 + 512 * Ed
             + (S + Ad) * 512 + 512 * 512
             + 512 * 3 * D + D * 3 * D
             + D * 4 * S + Ed * 2 * S
             + (D + S) * 512 + 3 * 512 * 512 + 512 * 2 * Sd)
    bytes_in = int(sum(int(a.size) * a.dtype.itemsize for a in inputs))
    cost = pl.CostEstimate(flops=int(2 * B * n_mac * T),
                           transcendentals=int(6000 * B * T),
                           bytes_accessed=bytes_in + T * B * packw * 4)

    out = pl.pallas_call(
        kernel,
        out_shape=out_shape,
        grid_spec=pltpu.PrefetchScalarGridSpec(
            num_scalar_prefetch=0, grid=(T,),
            in_specs=in_specs, out_specs=out_spec, scratch_shapes=scratch),
        compiler_params=pltpu.CompilerParams(dimension_semantics=("arbitrary",)),
        cost_estimate=cost,
    )(*inputs)

    o_det, o_pred = 5 * S, 5 * S + D
    return dict(
        prior_mean=out[:, :, 0:S], prior_std=out[:, :, S:2 * S],
        post_mean=out[:, :, 2 * S:3 * S], post_std=out[:, :, 3 * S:4 * S],
        stoc=out[:, :, 4 * S:5 * S],
        deter=out[:, :, o_det:o_det + D],
        next_pred=out[:, 0, o_pred:o_pred + 2 * Sd],
    )


def mlp_dreamer_forward(packed, state, action, hidden_state, eps_post, eps_pred):
    """Single-step forward matching MLPDreamerModel.forward (the T=1 rollout instance)."""
    r = mlp_dreamer_rollout(packed, state[None], action[None], hidden_state,
                            eps_post[None], eps_pred[None])
    return (r["next_pred"][0],
            {"mean": r["prior_mean"][0], "std": r["prior_std"][0]},
            {"mean": r["post_mean"][0], "std": r["post_std"][0]},
            {"deter": r["deter"][0], "stoc": r["stoc"][0]})


# -------------------------- pure-JAX mirror (validation) ----------------------- #

def _forward_ref(packed, state, action, hidden, eps_post, eps_pred):
    cfg = packed["cfg"]
    D, S = cfg["deter"], cfg["stoc"]
    boff, dcol, bias = cfg["bias_off"], cfg["dec_cols"], packed["bias"]

    def b(name):
        off, w = boff[name]
        return bias[:, off:off + w]

    def mm(x, w):
        return jnp.dot(x.astype(w.dtype), w, preferred_element_type=jnp.float32)

    def elu(y):
        return jnp.where(y > 0, y, jnp.exp(jnp.minimum(y, 0.0)) - 1.0)

    sig = lambda y: 1.0 / (1.0 + jnp.exp(-y))

    we0, we1, we2, we3, we4 = packed["enc_w"]
    x = elu(mm(state, we0) + b("be0"))
    x = elu(mm(x, we1) + b("be1"))
    x = elu(mm(x, we2) + b("be2"))
    x = elu(mm(x, we3) + b("be3"))
    embedding = mm(x, we4) + b("be4")

    h_pre = elu(mm(hidden["stoc"], packed["pre_w1s"]) + mm(action, packed["pre_w1a"]) + b("bp1"))
    h_pre = elu(mm(h_pre, packed["pre_w2"]) + b("bp2"))

    h = hidden["deter"]
    gi = mm(h_pre, packed["gru_wi"]) + b("bgi")
    gh = mm(h, packed["gru_wh"]) + b("bgh")
    r = sig(gi[:, :D] + gh[:, :D])
    z = sig(gi[:, D:2 * D] + gh[:, D:2 * D])
    n = jnp.tanh(gi[:, 2 * D:] + r * gh[:, 2 * D:])
    new_deter = (1.0 - z) * n + z * h

    pp = mm(new_deter, packed["wpp"])
    prior_out = pp[:, :2 * S] + b("bpr")
    post_out = pp[:, 2 * S:] + mm(embedding, packed["wpoe"]) + b("bpo")
    prior_mean, prior_std = prior_out[:, :S], jnp.exp(prior_out[:, S:])
    post_mean, post_std = post_out[:, :S], jnp.exp(post_out[:, S:])
    new_stoc = post_mean + post_std * eps_post

    dt = packed["dec_tail"]
    y = elu(mm(new_deter, packed["dec_w1d"]) + mm(new_stoc, packed["dec_w1s"]) + b("bd1"))
    y = elu(mm(y, dt[:, dcol[0][0]:dcol[0][0] + dcol[0][1]]) + b("bd2"))
    y = elu(mm(y, dt[:, dcol[1][0]:dcol[1][0] + dcol[1][1]]) + b("bd3"))
    y = elu(mm(y, dt[:, dcol[2][0]:dcol[2][0] + dcol[2][1]]) + b("bd4"))
    dec_out = mm(y, dt[:, dcol[3][0]:dcol[3][0] + dcol[3][1]]) + b("bd5")
    next_pred = dec_out[0] + jnp.exp(dec_out[1]) * eps_pred[0]

    return (next_pred, {"mean": prior_mean, "std": prior_std},
            {"mean": post_mean, "std": post_std},
            {"deter": new_deter, "stoc": new_stoc})


# ------------------------------------ main ------------------------------------ #

if __name__ == "__main__":
    state_dim, embed_dim, action_dim = 16, 32, 8
    hidden_dim, deter_dim, stoc_dim = 512, 64, 32    # hidden_dim == pre_recurrent output
    batch, T = 2, 4   # batch must be 2: decoder output is batch-unpacked in the reference

    key = jax.random.PRNGKey(0)
    kp, ks, ka, kh1, kh2, ke1, ke2 = jax.random.split(key, 7)

    params = init_params(kp, state_dim, embed_dim, action_dim, hidden_dim,
                         deter_dim, stoc_dim)
    packed = pack_params(params, state_dim=state_dim, embed_dim=embed_dim,
                         action_dim=action_dim, hidden_dim=hidden_dim,
                         deter_dim=deter_dim, stoc_dim=stoc_dim)

    states = jax.random.normal(ks, (T, batch, state_dim), jnp.float32)
    actions = jax.random.normal(ka, (T, batch, action_dim), jnp.float32)
    eps_post = jax.random.normal(ke1, (T, batch, stoc_dim), jnp.float32)
    eps_pred = jax.random.normal(ke2, (T, 1, 2 * state_dim), jnp.float32)
    hidden0 = {"deter": 0.1 * jax.random.normal(kh1, (batch, deter_dim), jnp.float32),
               "stoc": 0.1 * jax.random.normal(kh2, (batch, stoc_dim), jnp.float32)}

    # ---------------- single-step forward (T=1 instance of the fused kernel) --------
    next_pred, prior_d, post_d, new_hidden = mlp_dreamer_forward(
        packed, states[0], actions[0], hidden0, eps_post[0], eps_pred[0])
    jax.block_until_ready(next_pred)

    assert next_pred.shape == (2 * state_dim,)
    assert prior_d["mean"].shape == (batch, stoc_dim) and prior_d["std"].shape == (batch, stoc_dim)
    assert post_d["mean"].shape == (batch, stoc_dim) and post_d["std"].shape == (batch, stoc_dim)
    assert new_hidden["deter"].shape == (batch, deter_dim)
    assert new_hidden["stoc"].shape == (batch, stoc_dim)

    # pure-JAX mirror check (same packed params / dtypes; tolerance covers MXU rounding)
    rp, rpd, rqd, rh = _forward_ref(packed, states[0], actions[0], hidden0,
                                    eps_post[0], eps_pred[0])
    for got, want in [(next_pred, rp), (prior_d["mean"], rpd["mean"]),
                      (prior_d["std"], rpd["std"]), (post_d["mean"], rqd["mean"]),
                      (post_d["std"], rqd["std"]), (new_hidden["deter"], rh["deter"]),
                      (new_hidden["stoc"], rh["stoc"])]:
        assert bool(jnp.allclose(got, want, rtol=2e-2, atol=2e-2)), \
            float(jnp.max(jnp.abs(got - want)))

    # --------- multi-step rollout: weights stay VMEM-resident across the time grid ---
    traj = mlp_dreamer_rollout(packed, states, actions, hidden0, eps_post, eps_pred)
    jax.block_until_ready(traj)
    assert traj["deter"].shape == (T, batch, deter_dim)
    assert traj["stoc"].shape == (T, batch, stoc_dim)
    assert traj["next_pred"].shape == (T, 2 * state_dim)
    assert all(bool(jnp.all(jnp.isfinite(v))) for v in traj.values())
    # step 0 of the rollout must reproduce the single-step forward
    assert bool(jnp.allclose(traj["deter"][0], new_hidden["deter"], rtol=1e-3, atol=1e-3))
    assert bool(jnp.allclose(traj["next_pred"][0], next_pred, rtol=1e-3, atol=1e-3))

    print("KERNEL_OK")
</pallas_src>

<mosaic_0001>
module attributes {stable_mosaic.version = 11 : i64} {
  func.func @kernel(%arg0: i32, %arg1: memref<1x2x16xf32, #tpu.memory_space<vmem>>, %arg2: memref<1x2x8xf32, #tpu.memory_space<vmem>>, %arg3: memref<1x2x32xf32, #tpu.memory_space<vmem>>, %arg4: memref<1x1x32xf32, #tpu.memory_space<vmem>>, %arg5: memref<2x64xf32, #tpu.memory_space<vmem>>, %arg6: memref<2x32xf32, #tpu.memory_space<vmem>>, %arg7: memref<16x512xbf16, #tpu.memory_space<vmem>>, %arg8: memref<512x512xbf16, #tpu.memory_space<vmem>>, %arg9: memref<512x512xbf16, #tpu.memory_space<vmem>>, %arg10: memref<512x512xbf16, #tpu.memory_space<vmem>>, %arg11: memref<512x32xbf16, #tpu.memory_space<vmem>>, %arg12: memref<32x512xbf16, #tpu.memory_space<vmem>>, %arg13: memref<8x512xbf16, #tpu.memory_space<vmem>>, %arg14: memref<512x512xbf16, #tpu.memory_space<vmem>>, %arg15: memref<512x192xbf16, #tpu.memory_space<vmem>>, %arg16: memref<64x192xbf16, #tpu.memory_space<vmem>>, %arg17: memref<64x128xf32, #tpu.memory_space<vmem>>, %arg18: memref<32x64xf32, #tpu.memory_space<vmem>>, %arg19: memref<64x512xbf16, #tpu.memory_space<vmem>>, %arg20: memref<32x512xbf16, #tpu.memory_space<vmem>>, %arg21: memref<512x1664xbf16, #tpu.memory_space<any>>, %arg22: memref<1x6144xf32, #tpu.memory_space<vmem>>, %arg23: memref<1x2x256xf32, #tpu.memory_space<vmem>>, %arg24: memref<2x64xf32, #tpu.memory_space<vmem>>, %arg25: memref<2x32xf32, #tpu.memory_space<vmem>>, %arg26: memref<512x1664xbf16, #tpu.memory_space<vmem>>, %arg27: memref<!tpu.dma_semaphore, #tpu.memory_space<semaphore_mem>>) attributes {dimension_semantics = [#tpu.dimension_semantics<arbitrary>], iteration_bounds = array<i64: 1>, scalar_prefetch = 0 : i64, scratch_operands = 4 : i64, tpu.core_type = #tpu.core_type<tc>, window_params = [{transform_indices = @transform_0, window_bounds = array<i64: 1, 2, 16>}, {transform_indices = @transform_1, window_bounds = array<i64: 1, 2, 8>}, {transform_indices = @transform_2, window_bounds = array<i64: 1, 2, 32>}, {transform_indices = @transform_3, window_bounds = array<i64: 1, 1, 32>}, {pipeline_mode = #tpu.pipeline_mode<synchronous>, transform_indices = @transform_4, window_bounds = array<i64: 2, 64>}, {pipeline_mode = #tpu.pipeline_mode<synchronous>, transform_indices = @transform_5, window_bounds = array<i64: 2, 32>}, {pipeline_mode = #tpu.pipeline_mode<synchronous>, transform_indices = @transform_6, window_bounds = array<i64: 16, 512>}, {pipeline_mode = #tpu.pipeline_mode<synchronous>, transform_indices = @transform_7, window_bounds = array<i64: 512, 512>}, {pipeline_mode = #tpu.pipeline_mode<synchronous>, transform_indices = @transform_8, window_bounds = array<i64: 512, 512>}, {pipeline_mode = #tpu.pipeline_mode<synchronous>, transform_indices = @transform_9, window_bounds = array<i64: 512, 512>}, {pipeline_mode = #tpu.pipeline_mode<synchronous>, transform_indices = @transform_10, window_bounds = array<i64: 512, 32>}, {pipeline_mode = #tpu.pipeline_mode<synchronous>, transform_indices = @transform_11, window_bounds = array<i64: 32, 512>}, {pipeline_mode = #tpu.pipeline_mode<synchronous>, transform_indices = @transform_12, window_bounds = array<i64: 8, 512>}, {pipeline_mode = #tpu.pipeline_mode<synchronous>, transform_indices = @transform_13, window_bounds = array<i64: 512, 512>}, {pipeline_mode = #tpu.pipeline_mode<synchronous>, transform_indices = @transform_14, window_bounds = array<i64: 512, 192>}, {pipeline_mode = #tpu.pipeline_mode<synchronous>, transform_indices = @transform_15, window_bounds = array<i64: 64, 192>}, {pipeline_mode = #tpu.pipeline_mode<synchronous>, transform_indices = @transform_16, window_bounds = array<i64: 64, 128>}, {pipeline_mode = #tpu.pipeline_mode<synchronous>, transform_indices = @transform_17, window_bounds = array<i64: 32, 64>}, {pipeline_mode = #tpu.pipeline_mode<synchronous>, transform_indices = @transform_18, window_bounds = array<i64: 64, 512>}, {pipeline_mode = #tpu.pipeline_mode<synchronous>, transform_indices = @transform_19, window_bounds = array<i64: 32, 512>}, {}, {pipeline_mode = #tpu.pipeline_mode<synchronous>, transform_indices = @transform_21, window_bounds = array<i64: 1, 6144>}, {transform_indices = @transform_22, window_bounds = array<i64: 1, 2, 256>}]} {
    %c0_i32 = arith.constant 0 : i32
    %0 = arith.cmpi eq, %arg0, %c0_i32 : i32
    %1 = arith.extui %0 : i1 to i32
    %c0_i32_0 = arith.constant 0 : i32
    %2 = arith.cmpi ne, %1, %c0_i32_0 : i32
    scf.if %2 {
      %c0_133 = arith.constant 0 : index
      %c0_134 = arith.constant 0 : index
      %251 = vector.load %arg5[%c0_133, %c0_134] : memref<2x64xf32, #tpu.memory_space<vmem>>, vector<2x64xf32>
      %c0_135 = arith.constant 0 : index
      %c0_136 = arith.constant 0 : index
      %252 = vector.load %arg24[%c0_135, %c0_136] : memref<2x64xf32, #tpu.memory_space<vmem>>, vector<2x64xf32>
      tpu.vector_store %arg24[%c0_135, %c0_136], %251 {strides = array<i32>} : memref<2x64xf32, #tpu.memory_space<vmem>>, vector<2x64xf32>,
      %c0_137 = arith.constant 0 : index
      %c0_138 = arith.constant 0 : index
      %253 = vector.load %arg6[%c0_137, %c0_138] : memref<2x32xf32, #tpu.memory_space<vmem>>, vector<2x32xf32>
      %c0_139 = arith.constant 0 : index
      %c0_140 = arith.constant 0 : index
      %254 = vector.load %arg25[%c0_139, %c0_140] : memref<2x32xf32, #tpu.memory_space<vmem>>, vector<2x32xf32>
      tpu.vector_store %arg25[%c0_139, %c0_140], %253 {strides = array<i32>} : memref<2x32xf32, #tpu.memory_space<vmem>>, vector<2x32xf32>,
      tpu.enqueue_dma source(%arg21 : memref<512x1664xbf16, #tpu.memory_space<any>>) target(%arg26 : memref<512x1664xbf16, #tpu.memory_space<vmem>>) target_semaphore(%arg27 : memref<!tpu.dma_semaphore, #tpu.memory_space<semaphore_mem>>)
    } else {
    }
    %c0 = arith.constant 0 : index
    %c0_1 = arith.constant 0 : index
    %c0_2 = arith.constant 0 : index
    %3 = vector.load %arg1[%c0, %c0_1, %c0_2] : memref<1x2x16xf32, #tpu.memory_space<vmem>>, vector<1x2x16xf32>
    %4 = vector.shape_cast %3 : vector<1x2x16xf32> to vector<2x16xf32>
    %c0_3 = arith.constant 0 : index
    %c0_4 = arith.constant 0 : index
    %5 = vector.load %arg7[%c0_3, %c0_4] : memref<16x512xbf16, #tpu.memory_space<vmem>>, vector<16x512xbf16>
    %6 = arith.truncf %4 : vector<2x16xf32> to vector<2x16xbf16>
    %cst = arith.constant dense<0.000000e+00> : vector<2x512xf32>
    %7 = tpu.matmul %6, %5, %cst {dimension_numbers = #tpu.dot_dimension_numbers<[1], [0], [0], [1], [0, 0, 1, 1], [], []>} : vector<2x16xbf16>, vector<16x512xbf16>, vector<2x512xf32> -> vector<2x512xf32>
    %c0_5 = arith.constant 0 : index
    %c0_6 = arith.constant 0 : index
    %8 = vector.load %arg22[%c0_5, %c0_6] : memref<1x6144xf32, #tpu.memory_space<vmem>>, vector<1x512xf32>
    %9 = vector.broadcast %8 : vector<1x512xf32> to vector<2x512xf32>
    %10 = arith.addf %7, %9 : vector<2x512xf32>
    %cst_7 = arith.constant 0.000000e+00 : f32
    %11 = vector.broadcast %cst_7 : f32 to vector<2x512xf32>
    %12 = arith.cmpf ogt, %10, %11 : vector<2x512xf32>
    %cst_8 = arith.constant 0.000000e+00 : f32
    %13 = vector.broadcast %cst_8 : f32 to vector<2x512xf32>
    %14 = arith.minimumf %10, %13 : vector<2x512xf32>
    %15 = math.exp %14 : vector<2x512xf32>
    %cst_9 = arith.constant 1.000000e+00 : f32
    %16 = vector.broadcast %cst_9 : f32 to vector<2x512xf32>
    %17 = arith.subf %15, %16 : vector<2x512xf32>
    %18 = arith.select %12, %10, %17 : vector<2x512xi1>, vector<2x512xf32>
    %c0_10 = arith.constant 0 : index
    %c0_11 = arith.constant 0 : index
    %19 = vector.load %arg8[%c0_10, %c0_11] : memref<512x512xbf16, #tpu.memory_space<vmem>>, vector<512x512xbf16>
    %20 = arith.truncf %18 : vector<2x512xf32> to vector<2x512xbf16>
    %cst_12 = arith.constant dense<0.000000e+00> : vector<2x512xf32>
    %21 = tpu.matmul %20, %19, %cst_12 {dimension_numbers = #tpu.dot_dimension_numbers<[1], [0], [0], [1], [0, 0, 1, 1], [], []>} : vector<2x512xbf16>, vector<512x512xbf16>, vector<2x512xf32> -> vector<2x512xf32>
    %c0_13 = arith.constant 0 : index
    %c512 = arith.constant 512 : index
    %22 = vector.load %arg22[%c0_13, %c512] : memref<1x6144xf32, #tpu.memory_space<vmem>>, vector<1x512xf32>
    %23 = vector.broadcast %22 : vector<1x512xf32> to vector<2x512xf32>
    %24 = arith.addf %21, %23 : vector<2x512xf32>
    %cst_14 = arith.constant 0.000000e+00 : f32
    %25 = vector.broadcast %cst_14 : f32 to vector<2x512xf32>
    %26 = arith.cmpf ogt, %24, %25 : vector<2x512xf32>
    %cst_15 = arith.constant 0.000000e+00 : f32
    %27 = vector.broadcast %cst_15 : f32 to vector<2x512xf32>
    %28 = arith.minimumf %24, %27 : vector<2x512xf32>
    %29 = math.exp %28 : vector<2x512xf32>
    %cst_16 = arith.constant 1.000000e+00 : f32
    %30 = vector.broadcast %cst_16 : f32 to vector<2x512xf32>
    %31 = arith.subf %29, %30 : vector<2x512xf32>
    %32 = arith.select %26, %24, %31 : vector<2x512xi1>, vector<2x512xf32>
    %c0_17 = arith.constant 0 : index
    %c0_18 = arith.constant 0 : index
    %33 = vector.load %arg9[%c0_17, %c0_18] : memref<512x512xbf16, #tpu.memory_space<vmem>>, vector<512x512xbf16>
    %34 = arith.truncf %32 : vector<2x512xf32> to vector<2x512xbf16>
    %cst_19 = arith.constant dense<0.000000e+00> : vector<2x512xf32>
    %35 = tpu.matmul %34, %33, %cst_19 {dimension_numbers = #tpu.dot_dimension_numbers<[1], [0], [0], [1], [0, 0, 1, 1], [], []>} : vector<2x512xbf16>, vector<512x512xbf16>, vector<2x512xf32> -> vector<2x512xf32>
    %c0_20 = arith.constant 0 : index
    %c1024 = arith.constant 1024 : index
    %36 = vector.load %arg22[%c0_20, %c1024] : memref<1x6144xf32, #tpu.memory_space<vmem>>, vector<1x512xf32>
    %37 = vector.broadcast %36 : vector<1x512xf32> to vector<2x512xf32>
    %38 = arith.addf %35, %37 : vector<2x512xf32>
    %cst_21 = arith.constant 0.000000e+00 : f32
    %39 = vector.broadcast %cst_21 : f32 to vector<2x512xf32>
    %40 = arith.cmpf ogt, %38, %39 : vector<2x512xf32>
    %cst_22 = arith.constant 0.000000e+00 : f32
    %41 = vector.broadcast %cst_22 : f32 to vector<2x512xf32>
    %42 = arith.minimumf %38, %41 : vector<2x512xf32>
    %43 = math.exp %42 : vector<2x512xf32>
    %cst_23 = arith.constant 1.000000e+00 : f32
    %44 = vector.broadcast %cst_23 : f32 to vector<2x512xf32>
    %45 = arith.subf %43, %44 : vector<2x512xf32>
    %46 = arith.select %40, %38, %45 : vector<2x512xi1>, vector<2x512xf32>
    %c0_24 = arith.constant 0 : index
    %c0_25 = arith.constant 0 : index
    %47 = vector.load %arg10[%c0_24, %c0_25] : memref<512x512xbf16, #tpu.memory_space<vmem>>, vector<512x512xbf16>
    %48 = arith.truncf %46 : vector<2x512xf32> to vector<2x512xbf16>
    %cst_26 = arith.constant dense<0.000000e+00> : vector<2x512xf32>
    %49 = tpu.matmul %48, %47, %cst_26 {dimension_numbers = #tpu.dot_dimension_numbers<[1], [0], [0], [1], [0, 0, 1, 1], [], []>} : vector<2x512xbf16>, vector<512x512xbf16>, vector<2x512xf32> -> vector<2x512xf32>
    %c0_27 = arith.constant 0 : index
    %c1536 = arith.constant 1536 : index
    %50 = vector.load %arg22[%c0_27, %c1536] : memref<1x6144xf32, #tpu.memory_space<vmem>>, vector<1x512xf32>
    %51 = vector.broadcast %50 : vector<1x512xf32> to vector<2x512xf32>
    %52 = arith.addf %49, %51 : vector<2x512xf32>
    %cst_28 = arith.constant 0.000000e+00 : f32
    %53 = vector.broadcast %cst_28 : f32 to vector<2x512xf32>
    %54 = arith.cmpf ogt, %52, %53 : vector<2x512xf32>
    %cst_29 = arith.constant 0.000000e+00 : f32
    %55 = vector.broadcast %cst_29 : f32 to vector<2x512xf32>
    %56 = arith.minimumf %52, %55 : vector<2x512xf32>
    %57 = math.exp %56 : vector<2x512xf32>
    %cst_30 = arith.constant 1.000000e+00 : f32
    %58 = vector.broadcast %cst_30 : f32 to vector<2x512xf32>
    %59 = arith.subf %57, %58 : vector<2x512xf32>
    %60 = arith.select %54, %52, %59 : vector<2x512xi1>, vector<2x512xf32>
    %c0_31 = arith.constant 0 : index
    %c0_32 = arith.constant 0 : index
    %61 = vector.load %arg11[%c0_31, %c0_32] : memref<512x32xbf16, #tpu.memory_space<vmem>>, vector<512x32xbf16>
    %62 = arith.truncf %60 : vector<2x512xf32> to vector<2x512xbf16>
    %cst_33 = arith.constant dense<0.000000e+00> : vector<2x32xf32>
    %63 = tpu.matmul %62, %61, %cst_33 {dimension_numbers = #tpu.dot_dimension_numbers<[1], [0], [0], [1], [0, 0, 1, 1], [], []>} : vector<2x512xbf16>, vector<512x32xbf16>, vector<2x32xf32> -> vector<2x32xf32>
    %c0_34 = arith.constant 0 : index
    %c2048 = arith.constant 2048 : index
    %64 = vector.load %arg22[%c0_34, %c2048] : memref<1x6144xf32, #tpu.memory_space<vmem>>, vector<1x32xf32>
    %65 = vector.broadcast %64 : vector<1x32xf32> to vector<2x32xf32>
    %66 = arith.addf %63, %65 : vector<2x32xf32>
    %c0_35 = arith.constant 0 : index
    %c0_36 = arith.constant 0 : index
    %67 = vector.load %arg25[%c0_35, %c0_36] : memref<2x32xf32, #tpu.memory_space<vmem>>, vector<2x32xf32>
    %c0_37 = arith.constant 0 : index
    %c0_38 = arith.constant 0 : index
    %68 = vector.load %arg12[%c0_37, %c0_38] : memref<32x512xbf16, #tpu.memory_space<vmem>>, vector<32x512xbf16>
    %69 = arith.truncf %67 : vector<2x32xf32> to vector<2x32xbf16>
    %cst_39 = arith.constant dense<0.000000e+00> : vector<2x512xf32>
    %70 = tpu.matmul %69, %68, %cst_39 {dimension_numbers = #tpu.dot_dimension_numbers<[1], [0], [0], [1], [0, 0, 1, 1], [], []>} : vector<2x32xbf16>, vector<32x512xbf16>, vector<2x512xf32> -> vector<2x512xf32>
    %c0_40 = arith.constant 0 : index
    %c0_41 = arith.constant 0 : index
    %c0_42 = arith.constant 0 : index
    %71 = vector.load %arg2[%c0_40, %c0_41, %c0_42] : memref<1x2x8xf32, #tpu.memory_space<vmem>>, vector<1x2x8xf32>
    %72 = vector.shape_cast %71 : vector<1x2x8xf32> to vector<2x8xf32>
    %c0_43 = arith.constant 0 : index
    %c0_44 = arith.constant 0 : index
    %73 = vector.load %arg13[%c0_43, %c0_44] : memref<8x512xbf16, #tpu.memory_space<vmem>>, vector<8x512xbf16>
    %74 = arith.truncf %72 : vector<2x8xf32> to vector<2x8xbf16>
    %cst_45 = arith.constant dense<0.000000e+00> : vector<2x512xf32>
    %75 = tpu.matmul %74, %73, %cst_45 {dimension_numbers = #tpu.dot_dimension_numbers<[1], [0], [0], [1], [0, 0, 1, 1], [], []>} : vector<2x8xbf16>, vector<8x512xbf16>, vector<2x512xf32> -> vector<2x512xf32>
    %76 = arith.addf %70, %75 : vector<2x512xf32>
    %c0_46 = arith.constant 0 : index
    %c2176 = arith.constant 2176 : index
    %77 = vector.load %arg22[%c0_46, %c2176] : memref<1x6144xf32, #tpu.memory_space<vmem>>, vector<1x512xf32>
    %78 = vector.broadcast %77 : vector<1x512xf32> to vector<2x512xf32>
    %79 = arith.addf %76, %78 : vector<2x512xf32>
    %cst_47 = arith.constant 0.000000e+00 : f32
    %80 = vector.broadcast %cst_47 : f32 to vector<2x512xf32>
    %81 = arith.cmpf ogt, %79, %80 : vector<2x512xf32>
    %cst_48 = arith.constant 0.000000e+00 : f32
    %82 = vector.broadcast %cst_48 : f32 to vector<2x512xf32>
    %83 = arith.minimumf %79, %82 : vector<2x512xf32>
    %84 = math.exp %83 : vector<2x512xf32>
    %cst_49 = arith.constant 1.000000e+00 : f32
    %85 = vector.broadcast %cst_49 : f32 to vector<2x512xf32>
    %86 = arith.subf %84, %85 : vector<2x512xf32>
    %87 = arith.select %81, %79, %86 : vector<2x512xi1>, vector<2x512xf32>
    %c0_50 = arith.constant 0 : index
    %c0_51 = arith.constant 0 : index
    %88 = vector.load %arg14[%c0_50, %c0_51] : memref<512x512xbf16, #tpu.memory_space<vmem>>, vector<512x512xbf16>
    %89 = arith.truncf %87 : vector<2x512xf32> to vector<2x512xbf16>
    %cst_52 = arith.constant dense<0.000000e+00> : vector<2x512xf32>
    %90 = tpu.matmul %89, %88, %cst_52 {dimension_numbers = #tpu.dot_dimension_numbers<[1], [0], [0], [1], [0, 0, 1, 1], [], []>} : vector<2x512xbf16>, vector<512x512xbf16>, vector<2x512xf32> -> vector<2x512xf32>
    %c0_53 = arith.constant 0 : index
    %c2688 = arith.constant 2688 : index
    %91 = vector.load %arg22[%c0_53, %c2688] : memref<1x6144xf32, #tpu.memory_space<vmem>>, vector<1x512xf32>
    %92 = vector.broadcast %91 : vector<1x512xf32> to vector<2x512xf32>
    %93 = arith.addf %90, %92 : vector<2x512xf32>
    %cst_54 = arith.constant 0.000000e+00 : f32
    %94 = vector.broadcast %cst_54 : f32 to vector<2x512xf32>
    %95 = arith.cmpf ogt, %93, %94 : vector<2x512xf32>
    %cst_55 = arith.constant 0.000000e+00 : f32
    %96 = vector.broadcast %cst_55 : f32 to vector<2x512xf32>
    %97 = arith.minimumf %93, %96 : vector<2x512xf32>
    %98 = math.exp %97 : vector<2x512xf32>
    %cst_56 = arith.constant 1.000000e+00 : f32
    %99 = vector.broadcast %cst_56 : f32 to vector<2x512xf32>
    %100 = arith.subf %98, %99 : vector<2x512xf32>
    %101 = arith.select %95, %93, %100 : vector<2x512xi1>, vector<2x512xf32>
    %c0_57 = arith.constant 0 : index
    %c0_58 = arith.constant 0 : index
    %102 = vector.load %arg24[%c0_57, %c0_58] : memref<2x64xf32, #tpu.memory_space<vmem>>, vector<2x64xf32>
    %c0_59 = arith.constant 0 : index
    %c0_60 = arith.constant 0 : index
    %103 = vector.load %arg15[%c0_59, %c0_60] : memref<512x192xbf16, #tpu.memory_space<vmem>>, vector<512x192xbf16>
    %104 = arith.truncf %101 : vector<2x512xf32> to vector<2x512xbf16>
    %cst_61 = arith.constant dense<0.000000e+00> : vector<2x192xf32>
    %105 = tpu.matmul %104, %103, %cst_61 {dimension_numbers = #tpu.dot_dimension_numbers<[1], [0], [0], [1], [0, 0, 1, 1], [], []>} : vector<2x512xbf16>, vector<512x192xbf16>, vector<2x192xf32> -> vector<2x192xf32>
    %c0_62 = arith.constant 0 : index
    %c3200 = arith.constant 3200 : index
    %106 = vector.load %arg22[%c0_62, %c3200] : memref<1x6144xf32, #tpu.memory_space<vmem>>, vector<1x192xf32>
    %107 = vector.broadcast %106 : vector<1x192xf32> to vector<2x192xf32>
    %108 = arith.addf %105, %107 : vector<2x192xf32>
    %c0_63 = arith.constant 0 : index
    %c0_64 = arith.constant 0 : index
    %109 = vector.load %arg16[%c0_63, %c0_64] : memref<64x192xbf16, #tpu.memory_space<vmem>>, vector<64x192xbf16>
    %110 = arith.truncf %102 : vector<2x64xf32> to vector<2x64xbf16>
    %cst_65 = arith.constant dense<0.000000e+00> : vector<2x192xf32>
    %111 = tpu.matmul %110, %109, %cst_65 {dimension_numbers = #tpu.dot_dimension_numbers<[1], [0], [0], [1], [0, 0, 1, 1], [], []>} : vector<2x64xbf16>, vector<64x192xbf16>, vector<2x192xf32> -> vector<2x192xf32>
    %c0_66 = arith.constant 0 : index
    %c3456 = arith.constant 3456 : index
    %112 = vector.load %arg22[%c0_66, %c3456] : memref<1x6144xf32, #tpu.memory_space<vmem>>, vector<1x192xf32>
    %113 = vector.broadcast %112 : vector<1x192xf32> to vector<2x192xf32>
    %114 = arith.addf %111, %113 : vector<2x192xf32>
    %115 = vector.extract_strided_slice %108 {offsets = [0, 0], sizes = [2, 128], strides = [1, 1]} : vector<2x192xf32> to vector<2x128xf32>
    %116 = vector.extract_strided_slice %114 {offsets = [0, 0], sizes = [2, 128], strides = [1, 1]} : vector<2x192xf32> to vector<2x128xf32>
    %117 = arith.addf %115, %116 : vector<2x128xf32>
    %118 = vector.extract_strided_slice %117 {offsets = [0, 0], sizes = [2, 64], strides = [1, 1]} : vector<2x128xf32> to vector<2x64xf32>
    %cst_67 = arith.constant 0.000000e+00 : f32
    %119 = vector.broadcast %cst_67 : f32 to vector<2x64xf32>
    %120 = arith.subf %119, %118 : vector<2x64xf32>
    %121 = math.exp %120 : vector<2x64xf32>
    %cst_68 = arith.constant 1.000000e+00 : f32
    %122 = vector.broadcast %cst_68 : f32 to vector<2x64xf32>
    %123 = arith.addf %122, %121 : vector<2x64xf32>
    %cst_69 = arith.constant 1.000000e+00 : f32
    %124 = vector.broadcast %cst_69 : f32 to vector<2x64xf32>
    %125 = arith.divf %124, %123 : vector<2x64xf32>
    %126 = vector.extract_strided_slice %117 {offsets = [0, 64], sizes = [2, 64], strides = [1, 1]} : vector<2x128xf32> to vector<2x64xf32>
    %cst_70 = arith.constant 0.000000e+00 : f32
    %127 = vector.broadcast %cst_70 : f32 to vector<2x64xf32>
    %128 = arith.subf %127, %126 : vector<2x64xf32>
    %129 = math.exp %128 : vector<2x64xf32>
    %cst_71 = arith.constant 1.000000e+00 : f32
    %130 = vector.broadcast %cst_71 : f32 to vector<2x64xf32>
    %131 = arith.addf %130, %129 : vector<2x64xf32>
    %cst_72 = arith.constant 1.000000e+00 : f32
    %132 = vector.broadcast %cst_72 : f32 to vector<2x64xf32>
    %133 = arith.divf %132, %131 : vector<2x64xf32>
    %134 = vector.extract_strided_slice %108 {offsets = [0, 128], sizes = [2, 64], strides = [1, 1]} : vector<2x192xf32> to vector<2x64xf32>
    %135 = vector.extract_strided_slice %114 {offsets = [0, 128], sizes = [2, 64], strides = [1, 1]} : vector<2x192xf32> to vector<2x64xf32>
    %136 = arith.mulf %125, %135 : vector<2x64xf32>
    %137 = arith.addf %134, %136 : vector<2x64xf32>
    %138 = math.tanh %137 : vector<2x64xf32>
    %cst_73 = arith.constant 1.000000e+00 : f32
    %139 = vector.broadcast %cst_73 : f32 to vector<2x64xf32>
    %140 = arith.subf %139, %133 : vector<2x64xf32>
    %141 = arith.mulf %140, %138 : vector<2x64xf32>
    %142 = arith.mulf %133, %102 : vector<2x64xf32>
    %143 = arith.addf %141, %142 : vector<2x64xf32>
    %c0_74 = arith.constant 0 : index
    %c0_75 = arith.constant 0 : index
    %144 = vector.load %arg24[%c0_74, %c0_75] : memref<2x64xf32, #tpu.memory_space<vmem>>, vector<2x64xf32>
    tpu.vector_store %arg24[%c0_74, %c0_75], %143 {strides = array<i32>} : memref<2x64xf32, #tpu.memory_space<vmem>>, vector<2x64xf32>,
    %c0_76 = arith.constant 0 : index
    %c0_77 = arith.constant 0 : index
    %145 = vector.load %arg17[%c0_76, %c0_77] : memref<64x128xf32, #tpu.memory_space<vmem>>, vector<64x128xf32>
    %cst_78 = arith.constant dense<0.000000e+00> : vector<2x128xf32>
    %146 = tpu.matmul %143, %145, %cst_78 {dimension_numbers = #tpu.dot_dimension_numbers<[1], [0], [0], [1], [0, 0, 1, 1], [], []>} : vector<2x64xf32>, vector<64x128xf32>, vector<2x128xf32> -> vector<2x128xf32>
    %147 = vector.extract_strided_slice %146 {offsets = [0, 0], sizes = [2, 64], strides = [1, 1]} : vector<2x128xf32> to vector<2x64xf32>
    %c0_79 = arith.constant 0 : index
    %c3712 = arith.constant 3712 : index
    %148 = vector.load %arg22[%c0_79, %c3712] : memref<1x6144xf32, #tpu.memory_space<vmem>>, vector<1x64xf32>
    %149 = vector.broadcast %148 : vector<1x64xf32> to vector<2x64xf32>
    %150 = arith.addf %147, %149 : vector<2x64xf32>
    %151 = vector.extract_strided_slice %146 {offsets = [0, 64], sizes = [2, 64], strides = [1, 1]} : vector<2x128xf32> to vector<2x64xf32>
    %c0_80 = arith.constant 0 : index
    %c0_81 = arith.constant 0 : index
    %152 = vector.load %arg18[%c0_80, %c0_81] : memref<32x64xf32, #tpu.memory_space<vmem>>, vector<32x64xf32>
    %cst_82 = arith.constant dense<0.000000e+00> : vector<2x64xf32>
    %153 = tpu.matmul %66, %152, %cst_82 {dimension_numbers = #tpu.dot_dimension_numbers<[1], [0], [0], [1], [0, 0, 1, 1], [], []>} : vector<2x32xf32>, vector<32x64xf32>, vector<2x64xf32> -> vector<2x64xf32>
    %154 = arith.addf %151, %153 : vector<2x64xf32>
    %c0_83 = arith.constant 0 : index
    %c3840 = arith.constant 3840 : index
    %155 = vector.load %arg22[%c0_83, %c3840] : memref<1x6144xf32, #tpu.memory_space<vmem>>, vector<1x64xf32>
    %156 = vector.broadcast %155 : vector<1x64xf32> to vector<2x64xf32>
    %157 = arith.addf %154, %156 : vector<2x64xf32>
    %158 = vector.extract_strided_slice %150 {offsets = [0, 0], sizes = [2, 32], strides = [1, 1]} : vector<2x64xf32> to vector<2x32xf32>
    %159 = vector.extract_strided_slice %150 {offsets = [0, 32], sizes = [2, 32], strides = [1, 1]} : vector<2x64xf32> to vector<2x32xf32>
    %160 = vector.extract_strided_slice %157 {offsets = [0, 0], sizes = [2, 32], strides = [1, 1]} : vector<2x64xf32> to vector<2x32xf32>
    %161 = vector.extract_strided_slice %157 {offsets = [0, 32], sizes = [2, 32], strides = [1, 1]} : vector<2x64xf32> to vector<2x32xf32>
    %162 = math.exp %159 : vector<2x32xf32>
    %163 = math.exp %161 : vector<2x32xf32>
    %c0_84 = arith.constant 0 : index
    %c0_85 = arith.constant 0 : index
    %c0_86 = arith.constant 0 : index
    %164 = vector.load %arg3[%c0_84, %c0_85, %c0_86] : memref<1x2x32xf32, #tpu.memory_space<vmem>>, vector<1x2x32xf32>
    %165 = vector.shape_cast %164 : vector<1x2x32xf32> to vector<2x32xf32>
    %166 = arith.mulf %163, %165 : vector<2x32xf32>
    %167 = arith.addf %160, %166 : vector<2x32xf32>
    %c0_87 = arith.constant 0 : index
    %c0_88 = arith.constant 0 : index
    %168 = vector.load %arg25[%c0_87, %c0_88] : memref<2x32xf32, #tpu.memory_space<vmem>>, vector<2x32xf32>
    tpu.vector_store %arg25[%c0_87, %c0_88], %167 {strides = array<i32>} : memref<2x32xf32, #tpu.memory_space<vmem>>, vector<2x32xf32>,
    %c0_i32_89 = arith.constant 0 : i32
    %169 = arith.cmpi eq, %arg0, %c0_i32_89 : i32
    %170 = arith.extui %169 : i1 to i32
    %c0_i32_90 = arith.constant 0 : i32
    %171 = arith.cmpi ne, %170, %c0_i32_90 : i32
    scf.if %171 {
      tpu.wait_dma2 semaphore(%arg27 : memref<!tpu.dma_semaphore, #tpu.memory_space<semaphore_mem>>) src(%arg21 : memref<512x1664xbf16, #tpu.memory_space<any>>) dst(%arg26 : memref<512x1664xbf16, #tpu.memory_space<vmem>>)
    } else {
    }
    %c0_91 = arith.constant 0 : index
    %c0_92 = arith.constant 0 : index
    %172 = vector.load %arg19[%c0_91, %c0_92] : memref<64x512xbf16, #tpu.memory_space<vmem>>, vector<64x512xbf16>
    %173 = arith.truncf %143 : vector<2x64xf32> to vector<2x64xbf16>
    %cst_93 = arith.constant dense<0.000000e+00> : vector<2x512xf32>
    %174 = tpu.matmul %173, %172, %cst_93 {dimension_numbers = #tpu.dot_dimension_numbers<[1], [0], [0], [1], [0, 0, 1, 1], [], []>} : vector<2x64xbf16>, vector<64x512xbf16>, vector<2x512xf32> -> vector<2x512xf32>
    %c0_94 = arith.constant 0 : index
    %c0_95 = arith.constant 0 : index
    %175 = vector.load %arg20[%c0_94, %c0_95] : memref<32x512xbf16, #tpu.memory_space<vmem>>, vector<32x512xbf16>
    %176 = arith.truncf %167 : vector<2x32xf32> to vector<2x32xbf16>
    %cst_96 = arith.constant dense<0.000000e+00> : vector<2x512xf32>
    %177 = tpu.matmul %176, %175, %cst_96 {dimension_numbers = #tpu.dot_dimension_numbers<[1], [0], [0], [1], [0, 0, 1, 1], [], []>} : vector<2x32xbf16>, vector<32x512xbf16>, vector<2x512xf32> -> vector<2x512xf32>
    %178 = arith.addf %174, %177 : vector<2x512xf32>
    %c0_97 = arith.constant 0 : index
    %c3968 = arith.constant 3968 : index
    %179 = vector.load %arg22[%c0_97, %c3968] : memref<1x6144xf32, #tpu.memory_space<vmem>>, vector<1x512xf32>
    %180 = vector.broadcast %179 : vector<1x512xf32> to vector<2x512xf32>
    %181 = arith.addf %178, %180 : vector<2x512xf32>
    %cst_98 = arith.constant 0.000000e+00 : f32
    %182 = vector.broadcast %cst_98 : f32 to vector<2x512xf32>
    %183 = arith.cmpf ogt, %181, %182 : vector<2x512xf32>
    %cst_99 = arith.constant 0.000000e+00 : f32
    %184 = vector.broadcast %cst_99 : f32 to vector<2x512xf32>
    %185 = arith.minimumf %181, %184 : vector<2x512xf32>
    %186 = math.exp %185 : vector<2x512xf32>
    %cst_100 = arith.constant 1.000000e+00 : f32
    %187 = vector.broadcast %cst_100 : f32 to vector<2x512xf32>
    %188 = arith.subf %186, %187 : vector<2x512xf32>
    %189 = arith.select %183, %181, %188 : vector<2x512xi1>, vector<2x512xf32>
    %c0_101 = arith.constant 0 : index
    %c0_102 = arith.constant 0 : index
    %190 = vector.load %arg26[%c0_101, %c0_102] : memref<512x1664xbf16, #tpu.memory_space<vmem>>, vector<512x512xbf16>
    %191 = arith.truncf %189 : vector<2x512xf32> to vector<2x512xbf16>
    %cst_103 = arith.constant dense<0.000000e+00> : vector<2x512xf32>
    %192 = tpu.matmul %191, %190, %cst_103 {dimension_numbers = #tpu.dot_dimension_numbers<[1], [0], [0], [1], [0, 0, 1, 1], [], []>} : vector<2x512xbf16>, vector<512x512xbf16>, vector<2x512xf32> -> vector<2x512xf32>
    %c0_104 = arith.constant 0 : index
    %c4480 = arith.constant 4480 : index
    %193 = vector.load %arg22[%c0_104, %c4480] : memref<1x6144xf32, #tpu.memory_space<vmem>>, vector<1x512xf32>
    %194 = vector.broadcast %193 : vector<1x512xf32> to vector<2x512xf32>
    %195 = arith.addf %192, %194 : vector<2x512xf32>
    %cst_105 = arith.constant 0.000000e+00 : f32
    %196 = vector.broadcast %cst_105 : f32 to vector<2x512xf32>
    %197 = arith.cmpf ogt, %195, %196 : vector<2x512xf32>
    %cst_106 = arith.constant 0.000000e+00 : f32
    %198 = vector.broadcast %cst_106 : f32 to vector<2x512xf32>
    %199 = arith.minimumf %195, %198 : vector<2x512xf32>
    %200 = math.exp %199 : vector<2x512xf32>
    %cst_107 = arith.constant 1.000000e+00 : f32
    %201 = vector.broadcast %cst_107 : f32 to vector<2x512xf32>
    %202 = arith.subf %200, %201 : vector<2x512xf32>
    %203 = arith.select %197, %195, %202 : vector<2x512xi1>, vector<2x512xf32>
    %c0_108 = arith.constant 0 : index
    %c512_109 = arith.constant 512 : index
    %204 = vector.load %arg26[%c0_108, %c512_109] : memref<512x1664xbf16, #tpu.memory_space<vmem>>, vector<512x512xbf16>
    %205 = arith.truncf %203 : vector<2x512xf32> to vector<2x512xbf16>
    %cst_110 = arith.constant dense<0.000000e+00> : vector<2x512xf32>
    %206 = tpu.matmul %205, %204, %cst_110 {dimension_numbers = #tpu.dot_dimension_numbers<[1], [0], [0], [1], [0, 0, 1, 1], [], []>} : vector<2x512xbf16>, vector<512x512xbf16>, vector<2x512xf32> -> vector<2x512xf32>
    %c0_111 = arith.constant 0 : index
    %c4992 = arith.constant 4992 : index
    %207 = vector.load %arg22[%c0_111, %c4992] : memref<1x6144xf32, #tpu.memory_space<vmem>>, vector<1x512xf32>
    %208 = vector.broadcast %207 : vector<1x512xf32> to vector<2x512xf32>
    %209 = arith.addf %206, %208 : vector<2x512xf32>
    %cst_112 = arith.constant 0.000000e+00 : f32
    %210 = vector.broadcast %cst_112 : f32 to vector<2x512xf32>
    %211 = arith.cmpf ogt, %209, %210 : vector<2x512xf32>
    %cst_113 = arith.constant 0.000000e+00 : f32
    %212 = vector.broadcast %cst_113 : f32 to vector<2x512xf32>
    %213 = arith.minimumf %209, %212 : vector<2x512xf32>
    %214 = math.exp %213 : vector<2x512xf32>
    %cst_114 = arith.constant 1.000000e+00 : f32
    %215 = vector.broadcast %cst_114 : f32 to vector<2x512xf32>
    %216 = arith.subf %214, %215 : vector<2x512xf32>
    %217 = arith.select %211, %209, %216 : vector<2x512xi1>, vector<2x512xf32>
    %c0_115 = arith.constant 0 : index
    %c1024_116 = arith.constant 1024 : index
    %218 = vector.load %arg26[%c0_115, %c1024_116] : memref<512x1664xbf16, #tpu.memory_space<vmem>>, vector<512x512xbf16>
    %219 = arith.truncf %217 : vector<2x512xf32> to vector<2x512xbf16>
    %cst_117 = arith.constant dense<0.000000e+00> : vector<2x512xf32>
    %220 = tpu.matmul %219, %218, %cst_117 {dimension_numbers = #tpu.dot_dimension_numbers<[1], [0], [0], [1], [0, 0, 1, 1], [], []>} : vector<2x512xbf16>, vector<512x512xbf16>, vector<2x512xf32> -> vector<2x512xf32>
    %c0_118 = arith.constant 0 : index
    %c5504 = arith.constant 5504 : index
    %221 = vector.load %arg22[%c0_118, %c5504] : memref<1x6144xf32, #tpu.memory_space<vmem>>, vector<1x512xf32>
    %222 = vector.broadcast %221 : vector<1x512xf32> to vector<2x512xf32>
    %223 = arith.addf %220, %222 : vector<2x512xf32>
    %cst_119 = arith.constant 0.000000e+00 : f32
    %224 = vector.broadcast %cst_119 : f32 to vector<2x512xf32>
    %225 = arith.cmpf ogt, %223, %224 : vector<2x512xf32>
    %cst_120 = arith.constant 0.000000e+00 : f32
    %226 = vector.broadcast %cst_120 : f32 to vector<2x512xf32>
    %227 = arith.minimumf %223, %226 : vector<2x512xf32>
    %228 = math.exp %227 : vector<2x512xf32>
    %cst_121 = arith.constant 1.000000e+00 : f32
    %229 = vector.broadcast %cst_121 : f32 to vector<2x512xf32>
    %230 = arith.subf %228, %229 : vector<2x512xf32>
    %231 = arith.select %225, %223, %230 : vector<2x512xi1>, vector<2x512xf32>
    %c0_122 = arith.constant 0 : index
    %c1536_123 = arith.constant 1536 : index
    %232 = vector.load %arg26[%c0_122, %c1536_123] : memref<512x1664xbf16, #tpu.memory_space<vmem>>, vector<512x32xbf16>
    %233 = arith.truncf %231 : vector<2x512xf32> to vector<2x512xbf16>
    %cst_124 = arith.constant dense<0.000000e+00> : vector<2x32xf32>
    %234 = tpu.matmul %233, %232, %cst_124 {dimension_numbers = #tpu.dot_dimension_numbers<[1], [0], [0], [1], [0, 0, 1, 1], [], []>} : vector<2x512xbf16>, vector<512x32xbf16>, vector<2x32xf32> -> vector<2x32xf32>
    %c0_125 = arith.constant 0 : index
    %c6016 = arith.constant 6016 : index
    %235 = vector.load %arg22[%c0_125, %c6016] : memref<1x6144xf32, #tpu.memory_space<vmem>>, vector<1x32xf32>
    %236 = vector.broadcast %235 : vector<1x32xf32> to vector<2x32xf32>
    %237 = arith.addf %234, %236 : vector<2x32xf32>
    %238 = vector.extract_strided_slice %237 {offsets = [0, 0], sizes = [1, 32], strides = [1, 1]} : vector<2x32xf32> to vector<1x32xf32>
    %239 = vector.extract_strided_slice %237 {offsets = [1, 0], sizes = [1, 32], strides = [1, 1]} : vector<2x32xf32> to vector<1x32xf32>
    %240 = math.exp %239 : vector<1x32xf32>
    %c0_126 = arith.constant 0 : index
    %c0_127 = arith.constant 0 : index
    %c0_128 = arith.constant 0 : index
    %241 = vector.load %arg4[%c0_126, %c0_127, %c0_128] : memref<1x1x32xf32, #tpu.memory_space<vmem>>, vector<1x1x32xf32>
    %242 = vector.shape_cast %241 : vector<1x1x32xf32> to vector<1x32xf32>
    %243 = arith.mulf %240, %242 : vector<1x32xf32>
    %244 = arith.addf %238, %243 : vector<1x32xf32>
    %cst_129 = arith.constant 0.000000e+00 : f32
    %245 = vector.broadcast %cst_129 : f32 to vector<1x32xf32>
    %246 = tpu.concatenate %244, %245 in 0 : vector<1x32xf32>, vector<1x32xf32> -> vector<2x32xf32>
    %247 = tpu.concatenate %158, %162, %160, %163, %167, %143, %246 in 1 : vector<2x32xf32>, vector<2x32xf32>, vector<2x32xf32>, vector<2x32xf32>, vector<2x32xf32>, vector<2x64xf32>, vector<2x32xf32> -> vector<2x256xf32>
    %c0_130 = arith.constant 0 : index
    %c0_131 = arith.constant 0 : index
    %c0_132 = arith.constant 0 : index
    %248 = vector.load %arg23[%c0_130, %c0_131, %c0_132] : memref<1x2x256xf32, #tpu.memory_space<vmem>>, vector<1x2x256xf32>
    %249 = vector.shape_cast %248 : vector<1x2x256xf32> to vector<2x256xf32>
    %250 = vector.shape_cast %247 : vector<2x256xf32> to vector<1x2x256xf32>
    tpu.vector_store %arg23[%c0_130, %c0_131, %c0_132], %250 {strides = array<i32>} : memref<1x2x256xf32, #tpu.memory_space<vmem>>, vector<1x2x256xf32>,
    return
  }
  func.func @transform_0(%arg0: i32) -> (i32, i32, i32) {
    %c0_i32 = arith.constant 0 : i32
    %c0_i32_0 = arith.constant 0 : i32
    %c0_i32_1 = arith.constant 0 : i32
    return %arg0, %c0_i32, %c0_i32_0 : i32, i32, i32
  }
  func.func @transform_1(%arg0: i32) -> (i32, i32, i32) {
    %c0_i32 = arith.constant 0 : i32
    %c0_i32_0 = arith.constant 0 : i32
    %c0_i32_1 = arith.constant 0 : i32
    return %arg0, %c0_i32, %c0_i32_0 : i32, i32, i32
  }
  func.func @transform_2(%arg0: i32) -> (i32, i32, i32) {
    %c0_i32 = arith.constant 0 : i32
    %c0_i32_0 = arith.constant 0 : i32
    %c0_i32_1 = arith.constant 0 : i32
    return %arg0, %c0_i32, %c0_i32_0 : i32, i32, i32
  }
  func.func @transform_3(%arg0: i32) -> (i32, i32, i32) {
    %c0_i32 = arith.constant 0 : i32
    %c0_i32_0 = arith.constant 0 : i32
    %c0_i32_1 = arith.constant 0 : i32
    return %arg0, %c0_i32, %c0_i32_0 : i32, i32, i32
  }
  func.func @transform_4(%arg0: i32) -> (i32, i32) {
    %c0_i32 = arith.constant 0 : i32
    %c0_i32_0 = arith.constant 0 : i32
    %c0_i32_1 = arith.constant 0 : i32
    return %c0_i32, %c0_i32_0 : i32, i32
  }
  func.func @transform_5(%arg0: i32) -> (i32, i32) {
    %c0_i32 = arith.constant 0 : i32
    %c0_i32_0 = arith.constant 0 : i32
    %c0_i32_1 = arith.constant 0 : i32
    return %c0_i32, %c0_i32_0 : i32, i32
  }
  func.func @transform_6(%arg0: i32) -> (i32, i32) {
    %c0_i32 = arith.constant 0 : i32
    %c0_i32_0 = arith.constant 0 : i32
    %c0_i32_1 = arith.constant 0 : i32
    return %c0_i32, %c0_i32_0 : i32, i32
  }
  func.func @transform_7(%arg0: i32) -> (i32, i32) {
    %c0_i32 = arith.constant 0 : i32
    %c0_i32_0 = arith.constant 0 : i32
    %c0_i32_1 = arith.constant 0 : i32
    return %c0_i32, %c0_i32_0 : i32, i32
  }
  func.func @transform_8(%arg0: i32) -> (i32, i32) {
    %c0_i32 = arith.constant 0 : i32
    %c0_i32_0 = arith.constant 0 : i32
    %c0_i32_1 = arith.constant 0 : i32
    return %c0_i32, %c0_i32_0 : i32, i32
  }
  func.func @transform_9(%arg0: i32) -> (i32, i32) {
    %c0_i32 = arith.constant 0 : i32
    %c0_i32_0 = arith.constant 0 : i32
    %c0_i32_1 = arith.constant 0 : i32
    return %c0_i32, %c0_i32_0 : i32, i32
  }
  func.func @transform_10(%arg0: i32) -> (i32, i32) {
    %c0_i32 = arith.constant 0 : i32
    %c0_i32_0 = arith.constant 0 : i32
    %c0_i32_1 = arith.constant 0 : i32
    return %c0_i32, %c0_i32_0 : i32, i32
  }
  func.func @transform_11(%arg0: i32) -> (i32, i32) {
    %c0_i32 = arith.constant 0 : i32
    %c0_i32_0 = arith.constant 0 : i32
    %c0_i32_1 = arith.constant 0 : i32
    return %c0_i32, %c0_i32_0 : i32, i32
  }
  func.func @transform_12(%arg0: i32) -> (i32, i32) {
    %c0_i32 = arith.constant 0 : i32
    %c0_i32_0 = arith.constant 0 : i32
    %c0_i32_1 = arith.constant 0 : i32
    return %c0_i32, %c0_i32_0 : i32, i32
  }
  func.func @transform_13(%arg0: i32) -> (i32, i32) {
    %c0_i32 = arith.constant 0 : i32
    %c0_i32_0 = arith.constant 0 : i32
    %c0_i32_1 = arith.constant 0 : i32
    return %c0_i32, %c0_i32_0 : i32, i32
  }
  func.func @transform_14(%arg0: i32) -> (i32, i32) {
    %c0_i32 = arith.constant 0 : i32
    %c0_i32_0 = arith.constant 0 : i32
    %c0_i32_1 = arith.constant 0 : i32
    return %c0_i32, %c0_i32_0 : i32, i32
  }
  func.func @transform_15(%arg0: i32) -> (i32, i32) {
    %c0_i32 = arith.constant 0 : i32
    %c0_i32_0 = arith.constant 0 : i32
    %c0_i32_1 = arith.constant 0 : i32
    return %c0_i32, %c0_i32_0 : i32, i32
  }
  func.func @transform_16(%arg0: i32) -> (i32, i32) {
    %c0_i32 = arith.constant 0 : i32
    %c0_i32_0 = arith.constant 0 : i32
    %c0_i32_1 = arith.constant 0 : i32
    return %c0_i32, %c0_i32_0 : i32, i32
  }
  func.func @transform_17(%arg0: i32) -> (i32, i32) {
    %c0_i32 = arith.constant 0 : i32
    %c0_i32_0 = arith.constant 0 : i32
    %c0_i32_1 = arith.constant 0 : i32
    return %c0_i32, %c0_i32_0 : i32, i32
  }
  func.func @transform_18(%arg0: i32) -> (i32, i32) {
    %c0_i32 = arith.constant 0 : i32
    %c0_i32_0 = arith.constant 0 : i32
    %c0_i32_1 = arith.constant 0 : i32
    return %c0_i32, %c0_i32_0 : i32, i32
  }
  func.func @transform_19(%arg0: i32) -> (i32, i32) {
    %c0_i32 = arith.constant 0 : i32
    %c0_i32_0 = arith.constant 0 : i32
    %c0_i32_1 = arith.constant 0 : i32
    return %c0_i32, %c0_i32_0 : i32, i32
  }
  func.func @transform_21(%arg0: i32) -> (i32, i32) {
    %c0_i32 = arith.constant 0 : i32
    %c0_i32_0 = arith.constant 0 : i32
    %c0_i32_1 = arith.constant 0 : i32
    return %c0_i32, %c0_i32_0 : i32, i32
  }
  func.func @transform_22(%arg0: i32) -> (i32, i32, i32) {
    %c0_i32 = arith.constant 0 : i32
    %c0_i32_0 = arith.constant 0 : i32
    %c0_i32_1 = arith.constant 0 : i32
    return %arg0, %c0_i32, %c0_i32_0 : i32, i32, i32
  }
}

</mosaic_0001>

<llo_original>
// kernel: tpu_custom_call.1
$region0: #{tpu_custom_call.1}
  #allocation0 [shape = 'u32[]', space=smem, size = 0x4, offset = 0x4, fixed_abs, tag = 'smem constant byte address 0x4 - core index']
  #allocation1 [shape = 'u32[144,128]{1,0:T(1,128)}', space=vmem, size = 0x12000, scoped, tag = 'internal scratch']
  #allocation2 [shape = 'f32[2,64]{1,0:T(2,128)}', space=vmem, size = 0x400, scoped, tag = 'scratch operand']
  #allocation3 [shape = 'f32[2,32]{1,0:T(2,128)}', space=vmem, size = 0x400, scoped, tag = 'scratch operand']
  #allocation4 [shape = 'bf16[512,1664]{1,0:T(16,128)(2,1)}', space=vmem, size = 0x1a0000, scoped, tag = 'scratch operand']
  #allocation5 [shape = 's32[1]{0}', space=sflag, size = 0x4, scoped, tag = 'scratch operand']
  #allocation37 [shape = 's32[]', space=sflag, size = 0x4, offset = 0, fixed_abs, tag = 'sflag constant byte address 0x0 - dummy sync flag']
  %s0 = inlined_call_operand.hbm [shape: f32[1,2,16], index: 0, kind: input, shape index: {}]
  %s1 = inlined_call_operand.hbm [shape: f32[1,2,8], index: 1, kind: input, shape index: {}]
  %s2 = inlined_call_operand.hbm [shape: f32[1,2,32], index: 2, kind: input, shape index: {}]
  %s3 = inlined_call_operand.hbm [shape: f32[1,1,32], index: 3, kind: input, shape index: {}]
  %s4 = inlined_call_operand.hbm [shape: f32[2,64], index: 4, kind: input, shape index: {}]
  %s5 = inlined_call_operand.hbm [shape: f32[2,32], index: 5, kind: input, shape index: {}]
  %s6 = inlined_call_operand.hbm [shape: bf16[16,512], index: 6, kind: input, shape index: {}]
  %s7 = inlined_call_operand.hbm [shape: bf16[512,512], index: 7, kind: input, shape index: {}]
  %s8 = inlined_call_operand.hbm [shape: bf16[512,512], index: 8, kind: input, shape index: {}]
  %s9 = inlined_call_operand.hbm [shape: bf16[512,512], index: 9, kind: input, shape index: {}]
  %s10 = inlined_call_operand.vmem [shape: bf16[512,32], index: 10, kind: input, shape index: {}]
  %s11 = inlined_call_operand.hbm [shape: bf16[32,512], index: 11, kind: input, shape index: {}]
  %s12 = inlined_call_operand.hbm [shape: bf16[8,512], index: 12, kind: input, shape index: {}]
  %s13 = inlined_call_operand.hbm [shape: bf16[512,512], index: 13, kind: input, shape index: {}]
  %s14 = inlined_call_operand.vmem [shape: bf16[512,192], index: 14, kind: input, shape index: {}]
  %s15 = inlined_call_operand.hbm [shape: bf16[64,192], index: 15, kind: input, shape index: {}]
  %s16 = inlined_call_operand.hbm [shape: f32[64,128], index: 16, kind: input, shape index: {}]
  %s17 = inlined_call_operand.hbm [shape: f32[32,64], index: 17, kind: input, shape index: {}]
  %s18 = inlined_call_operand.hbm [shape: bf16[64,512], index: 18, kind: input, shape index: {}]
  %s19 = inlined_call_operand.hbm [shape: bf16[32,512], index: 19, kind: input, shape index: {}]
  %s20 = inlined_call_operand.hbm [shape: bf16[512,1664], index: 20, kind: input, shape index: {}]
  %s21 = inlined_call_operand.hbm [shape: f32[1,6144], index: 21, kind: input, shape index: {}]
  %s22 = inlined_call_operand.hbm [shape: f32[1,2,256], index: 22, kind: output, shape index: {}]
  %s23 = sld [smem:[#allocation0]]
  $region178: #{tpu_custom_call.1} parent=0
    _
  %s25 = ssub.s32 1, %s23
  %s26 = scalar_select 0, %s25, %s23
  $region1: #{tpu_custom_call.1} parent=0
    #allocation6 [shape = 'u8[1024]{0}', space=vmem, size = 0x400, scoped, tag = 'input window, operand 0, single buffered']
    #allocation7 [shape = 's32[1]{0}', space=sflag, size = 0x4, scoped, tag = 'scoped memory for tpu_custom_call.1']
    #allocation8 [shape = 's32[1]{0}', space=sflag, size = 0x4, scoped, tag = 'scoped memory for tpu_custom_call.1']
    #allocation9 [shape = 'u8[1024]{0}', space=vmem, size = 0x400, scoped, tag = 'input window, operand 1, single buffered']
    #allocation10 [shape = 's32[1]{0}', space=sflag, size = 0x4, scoped, tag = 'scoped memory for tpu_custom_call.1']
    #allocation11 [shape = 'u8[1024]{0}', space=vmem, size = 0x400, scoped, tag = 'input window, operand 2, single buffered']
    #allocation12 [shape = 'u8[512]{0}', space=vmem, size = 0x400, scoped, tag = 'input window, operand 3, single buffered']
    #allocation13 [shape = 's32[1]{0}', space=sflag, size = 0x4, scoped, tag = 'scoped memory for tpu_custom_call.1']
    #allocation14 [shape = 'u8[1024]{0}', space=vmem, size = 0x400, scoped, tag = 'input window, operand 4, single buffered']
    #allocation15 [shape = 'u8[1024]{0}', space=vmem, size = 0x400, scoped, tag = 'input window, operand 5, single buffered']
    #allocation16 [shape = 's32[1]{0}', space=sflag, size = 0x4, scoped, tag = 'scoped memory for tpu_custom_call.1']
    #allocation17 [shape = 'u8[16384]{0}', space=vmem, size = 0x4000, scoped, tag = 'input window, operand 6, single buffered']
    #allocation18 [shape = 'u8[524288]{0}', space=vmem, size = 0x80000, scoped, tag = 'input window, operand 7, single buffered']
    #allocation19 [shape = 's32[1]{0}', space=sflag, size = 0x4, scoped, tag = 'scoped memory for tpu_custom_call.1']
    #allocation20 [shape = 'u8[524288]{0}', space=vmem, size = 0x80000, scoped, tag = 'input window, operand 8, single buffered']
    #allocation21 [shape = 'u8[524288]{0}', space=vmem, size = 0x80000, scoped, tag = 'input window, operand 9, single buffered']
    #allocation22 [shape = 's32[1]{0}', space=sflag, size = 0x4, scoped, tag = 'scoped memory for tpu_custom_call.1']
    #allocation23 [shape = 'u8[32768]{0}', space=vmem, size = 0x8000, scoped, tag = 'input window, operand 11, single buffered']
    #allocation24 [shape = 'u8[8192]{0}', space=vmem, size = 0x2000, scoped, tag = 'input window, operand 12, single buffered']
    #allocation25 [shape = 's32[1]{0}', space=sflag, size = 0x4, scoped, tag = 'scoped memory for tpu_custom_call.1']
    #allocation26 [shape = 'u8[524288]{0}', space=vmem, size = 0x80000, scoped, tag = 'input window, operand 13, single buffered']
    #allocation27 [shape = 'u8[32768]{0}', space=vmem, size = 0x8000, scoped, tag = 'input window, operand 15, single buffered']
    #allocation28 [shape = 's32[1]{0}', space=sflag, size = 0x4, scoped, tag = 'scoped memory for tpu_custom_call.1']
    #allocation29 [shape = 'u8[32768]{0}', space=vmem, size = 0x8000, scoped, tag = 'input window, operand 16, single buffered']
    #allocation30 [shape = 'u8[16384]{0}', space=vmem, size = 0x4000, scoped, tag = 'input window, operand 17, single buffered']
    #allocation31 [shape = 's32[1]{0}', space=sflag, size = 0x4, scoped, tag = 'scoped memory for tpu_custom_call.1']
    #allocation32 [shape = 'u8[65536]{0}', space=vmem, size = 0x10000, scoped, tag = 'input window, operand 18, single buffered']
    #allocation33 [shape = 'u8[32768]{0}', space=vmem, size = 0x8000, scoped, tag = 'input window, operand 19, single buffered']
    #allocation34 [shape = 's32[1]{0}', space=sflag, size = 0x4, scoped, tag = 'scoped memory for tpu_custom_call.1']
    #allocation35 [shape = 'u8[24576]{0}', space=vmem, size = 0x6000, scoped, tag = 'input window, operand 21, single buffered']
    #allocation36 [shape = 'u8[2048]{0}', space=vmem, size = 0x800, scoped, tag = 'output window, operand 0, single buffered']
    %27 = vsyncpa [#allocation7], 0
    %28 = vsyncpa [#allocation10], 0
    %29 = vsyncpa [#allocation13], 0
    %30 = vsyncpa [#allocation16], 0
    %31 = vsyncpa [#allocation19], 0
    %32 = vsyncpa [#allocation22], 0
    %33 = vsyncpa [#allocation25], 0
    %34 = vsyncpa [#allocation28], 0
    %35 = vsyncpa [#allocation31], 0
    %36 = vsyncpa [#allocation34], 0
    %37 = vsyncpa [#allocation8], 0
    // Predicated region
    $region2: #{tpu_custom_call.1} parent=1 // pred_check
      _
    $region3: #{tpu_custom_call.1} parent=1 // pred_check_branch
      %39 = sbr.rel (0) target = $region5
    $region4: #{tpu_custom_call.1} parent=1 // pred_region
      %s41 = ssub.s32 32, 32
      %42 = vsyncadd [#allocation7], %s41
      %s44 = sshll.u32 [#allocation6], 4
      %s45 = int_to_ptr.vmem [resolvable:$true] %s44
      %47 = dma.hbm_to_vmem [thread:$0]  %s0, 32, %s45, [#allocation7]
    $region5: #{tpu_custom_call.1} parent=1 // pred_fallthru
      _
    // Predicated region
    $region6: #{tpu_custom_call.1} parent=1 // pred_check
      _
    $region7: #{tpu_custom_call.1} parent=1 // pred_check_branch
      %49 = sbr.rel (0) target = $region9
    $region8: #{tpu_custom_call.1} parent=1 // pred_region
      %s51 = ssub.s32 32, 32
      %52 = vsyncadd [#allocation10], %s51
      %s54 = sshll.u32 [#allocation9], 4
      %s55 = int_to_ptr.vmem [resolvable:$true] %s54
      %57 = dma.hbm_to_vmem [thread:$0]  %s1, 32, %s55, [#allocation10]
    $region9: #{tpu_custom_call.1} parent=1 // pred_fallthru
      _
    // Predicated region
    $region10: #{tpu_custom_call.1} parent=1 // pred_check
      _
    $region11: #{tpu_custom_call.1} parent=1 // pred_check_branch
      %59 = sbr.rel (0) target = $region13
    $region12: #{tpu_custom_call.1} parent=1 // pred_region
      %s61 = ssub.s32 32, 32
      %62 = vsyncadd [#allocation10], %s61
      %s64 = sshll.u32 [#allocation11], 4
      %s65 = int_to_ptr.vmem [resolvable:$true] %s64
      %67 = dma.hbm_to_vmem [thread:$0]  %s2, 32, %s65, [#allocation10]
    $region13: #{tpu_custom_call.1} parent=1 // pred_fallthru
      _
    // Predicated region
    $region14: #{tpu_custom_call.1} parent=1 // pred_check
      _
    $region15: #{tpu_custom_call.1} parent=1 // pred_check_branch
      %69 = sbr.rel (0) target = $region17
    $region16: #{tpu_custom_call.1} parent=1 // pred_region
      %s71 = ssub.s32 16, 16
      %72 = vsyncadd [#allocation13], %s71
      %s74 = sshll.u32 [#allocation12], 4
      %s75 = int_to_ptr.vmem [resolvable:$true] %s74
      %77 = dma.hbm_to_vmem [thread:$0]  %s3, 16, %s75, [#allocation13]
    $region17: #{tpu_custom_call.1} parent=1 // pred_fallthru
      _
    // Predicated region
    $region18: #{tpu_custom_call.1} parent=1 // pred_check
      _
    $region19: #{tpu_custom_call.1} parent=1 // pred_check_branch
      %79 = sbr.rel (0) target = $region21
    $region20: #{tpu_custom_call.1} parent=1 // pred_region
      %s81 = ssub.s32 32, 32
      %82 = vsyncadd [#allocation13], %s81
      %s84 = sshll.u32 [#allocation14], 4
      %s85 = int_to_ptr.vmem [resolvable:$true] %s84
      %87 = dma.hbm_to_vmem [thread:$0]  %s4, 32, %s85, [#allocation13]
    $region21: #{tpu_custom_call.1} parent=1 // pred_fallthru
      _
    // Predicated region
    $region22: #{tpu_custom_call.1} parent=1 // pred_check
      _
    $region23: #{tpu_custom_call.1} parent=1 // pred_check_branch
      %89 = sbr.rel (0) target = $region25
    $region24: #{tpu_custom_call.1} parent=1 // pred_region
      %s91 = ssub.s32 32, 32
      %92 = vsyncadd [#allocation16], %s91
      %s94 = sshll.u32 [#allocation15], 4
      %s95 = int_to_ptr.vmem [resolvable:$true] %s94
      %97 = dma.hbm_to_vmem [thread:$0]  %s5, 32, %s95, [#allocation16]
    $region25: #{tpu_custom_call.1} parent=1 // pred_fallthru
      _
    // Predicated region
    $region26: #{tpu_custom_call.1} parent=1 // pred_check
      _
    $region27: #{tpu_custom_call.1} parent=1 // pred_check_branch
      %99 = sbr.rel (0) target = $region29
    $region28: #{tpu_custom_call.1} parent=1 // pred_region
      %s101 = ssub.s32 512, 512
      %102 = vsyncadd [#allocation16], %s101
      %s103 = sshll.u32 [#allocation17], 4
      %s104 = int_to_ptr.vmem [resolvable:$true] %s103
      %109 = dma.hbm_to_vmem [thread:$0]  %s6, 512, %s104, [#allocation16], 256, 256, 16
    $region29: #{tpu_custom_call.1} parent=1 // pred_fallthru
      _
    // Predicated region
    $region30: #{tpu_custom_call.1} parent=1 // pred_check
      _
    $region31: #{tpu_custom_call.1} parent=1 // pred_check_branch
      %111 = sbr.rel (0) target = $region33
    $region32: #{tpu_custom_call.1} parent=1 // pred_region
      %s113 = ssub.s32 16384, 16384
      %114 = vsyncadd [#allocation19], %s113
      %s115 = sshll.u32 [#allocation18], 4
      %s116 = int_to_ptr.vmem [resolvable:$true] %s115
      %121 = dma.hbm_to_vmem [thread:$0]  %s7, 16384, %s116, [#allocation19], 256, 256, 16
    $region33: #{tpu_custom_call.1} parent=1 // pred_fallthru
      _
    // Predicated region
    $region34: #{tpu_custom_call.1} parent=1 // pred_check
      _
    $region35: #{tpu_custom_call.1} parent=1 // pred_check_branch
      %123 = sbr.rel (0) target = $region37
    $region36: #{tpu_custom_call.1} parent=1 // pred_region
      %s125 = ssub.s32 16384, 16384
      %126 = vsyncadd [#allocation19], %s125
      %s127 = sshll.u32 [#allocation20], 4
      %s128 = int_to_ptr.vmem [resolvable:$true] %s127
      %133 = dma.hbm_to_vmem [thread:$0]  %s8, 16384, %s128, [#allocation19], 256, 256, 16
    $region37: #{tpu_custom_call.1} parent=1 // pred_fallthru
      _
    // Predicated region
    $region38: #{tpu_custom_call.1} parent=1 // pred_check
      _
    $region39: #{tpu_custom_call.1} parent=1 // pred_check_branch
      %135 = sbr.rel (0) target = $region41
    $region40: #{tpu_custom_call.1} parent=1 // pred_region
      %s137 = ssub.s32 16384, 16384
      %138 = vsyncadd [#allocation22], %s137
      %s139 = sshll.u32 [#allocation21], 4
      %s140 = int_to_ptr.vmem [resolvable:$true] %s139
      %145 = dma.hbm_to_vmem [thread:$0]  %s9, 16384, %s140, [#allocation22], 256, 256, 16
    $region41: #{tpu_custom_call.1} parent=1 // pred_fallthru
      _
    // Predicated region
    $region42: #{tpu_custom_call.1} parent=1 // pred_check
      _
    $region43: #{tpu_custom_call.1} parent=1 // pred_check_branch
      %147 = sbr.rel (0) target = $region45
    $region44: #{tpu_custom_call.1} parent=1 // pred_region
      _
    $region45: #{tpu_custom_call.1} parent=1 // pred_fallthru
      _
    // Predicated region
    $region46: #{tpu_custom_call.1} parent=1 // pred_check
      _
    $region47: #{tpu_custom_call.1} parent=1 // pred_check_branch
      %149 = sbr.rel (0) target = $region49
    $region48: #{tpu_custom_call.1} parent=1 // pred_region
      %s151 = ssub.s32 1024, 1024
      %152 = vsyncadd [#allocation22], %s151
      %s153 = sshll.u32 [#allocation23], 4
      %s154 = int_to_ptr.vmem [resolvable:$true] %s153
      %159 = dma.hbm_to_vmem [thread:$0]  %s11, 1024, %s154, [#allocation22], 256, 256, 16
    $region49: #{tpu_custom_call.1} parent=1 // pred_fallthru
      _
    // Predicated region
    $region50: #{tpu_custom_call.1} parent=1 // pred_check
      _
    $region51: #{tpu_custom_call.1} parent=1 // pred_check_branch
      %161 = sbr.rel (0) target = $region53
    $region52: #{tpu_custom_call.1} parent=1 // pred_region
      %s163 = ssub.s32 256, 256
      %164 = vsyncadd [#allocation25], %s163
      %s166 = sshll.u32 [#allocation24], 4
      %s167 = int_to_ptr.vmem [resolvable:$true] %s166
      %169 = dma.hbm_to_vmem [thread:$0]  %s12, 256, %s167, [#allocation25]
    $region53: #{tpu_custom_call.1} parent=1 // pred_fallthru
      _
    // Predicated region
    $region54: #{tpu_custom_call.1} parent=1 // pred_check
      _
    $region55: #{tpu_custom_call.1} parent=1 // pred_check_branch
      %171 = sbr.rel (0) target = $region57
    $region56: #{tpu_custom_call.1} parent=1 // pred_region
      %s173 = ssub.s32 16384, 16384
      %174 = vsyncadd [#allocation25], %s173
      %s175 = sshll.u32 [#allocation26], 4
      %s176 = int_to_ptr.vmem [resolvable:$true] %s175
      %181 = dma.hbm_to_vmem [thread:$0]  %s13, 16384, %s176, [#allocation25], 256, 256, 16
    $region57: #{tpu_custom_call.1} parent=1 // pred_fallthru
      _
    // Predicated region
    $region58: #{tpu_custom_call.1} parent=1 // pred_check
      _
    $region59: #{tpu_custom_call.1} parent=1 // pred_check_branch
      %183 = sbr.rel (0) target = $region61
    $region60: #{tpu_custom_call.1} parent=1 // pred_region
      _
    $region61: #{tpu_custom_call.1} parent=1 // pred_fallthru
      _
    // Predicated region
    $region62: #{tpu_custom_call.1} parent=1 // pred_check
      _
    $region63: #{tpu_custom_call.1} parent=1 // pred_check_branch
      %185 = sbr.rel (0) target = $region65
    $region64: #{tpu_custom_call.1} parent=1 // pred_region
      %s187 = ssub.s32 1024, 1024
      %188 = vsyncadd [#allocation28], %s187
      %s189 = sshll.u32 [#allocation27], 4
      %s190 = int_to_ptr.vmem [resolvable:$true] %s189
      %195 = dma.hbm_to_vmem [thread:$0]  %s15, 1024, %s190, [#allocation28], 128, 128, 8
    $region65: #{tpu_custom_call.1} parent=1 // pred_fallthru
      _
    // Predicated region
    $region66: #{tpu_custom_call.1} parent=1 // pred_check
      _
    $region67: #{tpu_custom_call.1} parent=1 // pred_check_branch
      %197 = sbr.rel (0) target = $region69
    $region68: #{tpu_custom_call.1} parent=1 // pred_region
      %s199 = ssub.s32 1024, 1024
      %200 = vsyncadd [#allocation28], %s199
      %s201 = sshll.u32 [#allocation29], 4
      %s202 = int_to_ptr.vmem [resolvable:$true] %s201
      %207 = dma.hbm_to_vmem [thread:$0]  %s16, 1024, %s202, [#allocation28], 128, 128, 8
    $region69: #{tpu_custom_call.1} parent=1 // pred_fallthru
      _
    // Predicated region
    $region70: #{tpu_custom_call.1} parent=1 // pred_check
      _
    $region71: #{tpu_custom_call.1} parent=1 // pred_check_branch
      %209 = sbr.rel (0) target = $region73
    $region72: #{tpu_custom_call.1} parent=1 // pred_region
      %s211 = ssub.s32 512, 512
      %212 = vsyncadd [#allocation31], %s211
      %s213 = sshll.u32 [#allocation30], 4
      %s214 = int_to_ptr.vmem [resolvable:$true] %s213
      %219 = dma.hbm_to_vmem [thread:$0]  %s17, 512, %s214, [#allocation31], 128, 128, 8
    $region73: #{tpu_custom_call.1} parent=1 // pred_fallthru
      _
    // Predicated region
    $region74: #{tpu_custom_call.1} parent=1 // pred_check
      _
    $region75: #{tpu_custom_call.1} parent=1 // pred_check_branch
      %221 = sbr.rel (0) target = $region77
    $region76: #{tpu_custom_call.1} parent=1 // pred_region
      %s223 = ssub.s32 2048, 2048
      %224 = vsyncadd [#allocation31], %s223
      %s225 = sshll.u32 [#allocation32], 4
      %s226 = int_to_ptr.vmem [resolvable:$true] %s225
      %231 = dma.hbm_to_vmem [thread:$0]  %s18, 2048, %s226, [#allocation31], 256, 256, 16
    $region77: #{tpu_custom_call.1} parent=1 // pred_fallthru
      _
    // Predicated region
    $region78: #{tpu_custom_call.1} parent=1 // pred_check
      _
    $region79: #{tpu_custom_call.1} parent=1 // pred_check_branch
      %233 = sbr.rel (0) target = $region81
    $region80: #{tpu_custom_call.1} parent=1 // pred_region
      %s235 = ssub.s32 1024, 1024
      %236 = vsyncadd [#allocation34], %s235
      %s237 = sshll.u32 [#allocation33], 4
      %s238 = int_to_ptr.vmem [resolvable:$true] %s237
      %243 = dma.hbm_to_vmem [thread:$0]  %s19, 1024, %s238, [#allocation34], 256, 256, 16
    $region81: #{tpu_custom_call.1} parent=1 // pred_fallthru
      _
    // Predicated region
    $region82: #{tpu_custom_call.1} parent=1 // pred_check
      _
    $region83: #{tpu_custom_call.1} parent=1 // pred_check_branch
      %245 = sbr.rel (0) target = $region85
    $region84: #{tpu_custom_call.1} parent=1 // pred_region
      %s247 = ssub.s32 768, 768
      %248 = vsyncadd [#allocation34], %s247
      %s250 = sshll.u32 [#allocation35], 4
      %s251 = int_to_ptr.vmem [resolvable:$true] %s250
      %253 = dma.hbm_to_vmem [thread:$0]  %s21, 768, %s251, [#allocation34]
    $region85: #{tpu_custom_call.1} parent=1 // pred_fallthru
      _
    // Predicated region
    $region86: #{tpu_custom_call.1} parent=1 // pred_check
      _
    $region87: #{tpu_custom_call.1} parent=1 // pred_check_branch
      %255 = sbr.rel (0) target = $region89
    $region88: #{tpu_custom_call.1} parent=1 // pred_region
      %256 = dma.done [#allocation7], 32
    $region89: #{tpu_custom_call.1} parent=1 // pred_fallthru
      _
    // Predicated region
    $region90: #{tpu_custom_call.1} parent=1 // pred_check
      _
    $region91: #{tpu_custom_call.1} parent=1 // pred_check_branch
      %258 = sbr.rel (0) target = $region93
    $region92: #{tpu_custom_call.1} parent=1 // pred_region
      %259 = dma.done [#allocation10], 32
    $region93: #{tpu_custom_call.1} parent=1 // pred_fallthru
      _
    // Predicated region
    $region94: #{tpu_custom_call.1} parent=1 // pred_check
      _
    $region95: #{tpu_custom_call.1} parent=1 // pred_check_branch
      %261 = sbr.rel (0) target = $region97
    $region96: #{tpu_custom_call.1} parent=1 // pred_region
      %262 = dma.done [#allocation10], 32
    $region97: #{tpu_custom_call.1} parent=1 // pred_fallthru
      _
    // Predicated region
    $region98: #{tpu_custom_call.1} parent=1 // pred_check
      _
    $region99: #{tpu_custom_call.1} parent=1 // pred_check_branch
      %264 = sbr.rel (0) target = $region101
    $region100: #{tpu_custom_call.1} parent=1 // pred_region
      %265 = dma.done [#allocation13], 16
    $region101: #{tpu_custom_call.1} parent=1 // pred_fallthru
      _
    // Predicated region
    $region102: #{tpu_custom_call.1} parent=1 // pred_check
      _
    $region103: #{tpu_custom_call.1} parent=1 // pred_check_branch
      %267 = sbr.rel (0) target = $region105
    $region104: #{tpu_custom_call.1} parent=1 // pred_region
      %268 = dma.done [#allocation13], 32
    $region105: #{tpu_custom_call.1} parent=1 // pred_fallthru
      _
    // Predicated region
    $region106: #{tpu_custom_call.1} parent=1 // pred_check
      _
    $region107: #{tpu_custom_call.1} parent=1 // pred_check_branch
      %270 = sbr.rel (0) target = $region109
    $region108: #{tpu_custom_call.1} parent=1 // pred_region
      %271 = dma.done [#allocation16], 32
    $region109: #{tpu_custom_call.1} parent=1 // pred_fallthru
      _
    // Predicated region
    $region110: #{tpu_custom_call.1} parent=1 // pred_check
      _
    $region111: #{tpu_custom_call.1} parent=1 // pred_check_branch
      %273 = sbr.rel (0) target = $region113
    $region112: #{tpu_custom_call.1} parent=1 // pred_region
      %274 = dma.done [#allocation16], 512
    $region113: #{tpu_custom_call.1} parent=1 // pred_fallthru
      _
    // Predicated region
    $region114: #{tpu_custom_call.1} parent=1 // pred_check
      _
    $region115: #{tpu_custom_call.1} parent=1 // pred_check_branch
      %276 = sbr.rel (0) target = $region117
    $region116: #{tpu_custom_call.1} parent=1 // pred_region
      %277 = dma.done [#allocation19], 16384
    $region117: #{tpu_custom_call.1} parent=1 // pred_fallthru
      _
    // Predicated region
    $region118: #{tpu_custom_call.1} parent=1 // pred_check
      _
    $region119: #{tpu_custom_call.1} parent=1 // pred_check_branch
      %279 = sbr.rel (0) target = $region121
    $region120: #{tpu_custom_call.1} parent=1 // pred_region
      %280 = dma.done [#allocation19], 16384
    $region121: #{tpu_custom_call.1} parent=1 // pred_fallthru
      _
    // Predicated region
    $region122: #{tpu_custom_call.1} parent=1 // pred_check
      _
    $region123: #{tpu_custom_call.1} parent=1 // pred_check_branch
      %282 = sbr.rel (0) target = $region125
    $region124: #{tpu_custom_call.1} parent=1 // pred_region
      %283 = dma.done [#allocation22], 16384
    $region125: #{tpu_custom_call.1} parent=1 // pred_fallthru
      _
    // Predicated region
    $region126: #{tpu_custom_call.1} parent=1 // pred_check
      _
    $region127: #{tpu_custom_call.1} parent=1 // pred_check_branch
      %285 = sbr.rel (0) target = $region129
    $region128: #{tpu_custom_call.1} parent=1 // pred_region
      %286 = dma.done [#allocation22], 1024
    $region129: #{tpu_custom_call.1} parent=1 // pred_fallthru
      _
    // Predicated region
    $region130: #{tpu_custom_call.1} parent=1 // pred_check
      _
    $region131: #{tpu_custom_call.1} parent=1 // pred_check_branch
      %288 = sbr.rel (0) target = $region133
    $region132: #{tpu_custom_call.1} parent=1 // pred_region
      %289 = dma.done [#allocation25], 256
    $region133: #{tpu_custom_call.1} parent=1 // pred_fallthru
      _
    // Predicated region
    $region134: #{tpu_custom_call.1} parent=1 // pred_check
      _
    $region135: #{tpu_custom_call.1} parent=1 // pred_check_branch
      %291 = sbr.rel (0) target = $region137
    $region136: #{tpu_custom_call.1} parent=1 // pred_region
      %292 = dma.done [#allocation25], 16384
    $region137: #{tpu_custom_call.1} parent=1 // pred_fallthru
      _
    // Predicated region
    $region138: #{tpu_custom_call.1} parent=1 // pred_check
      _
    $region139: #{tpu_custom_call.1} parent=1 // pred_check_branch
      %294 = sbr.rel (0) target = $region141
    $region140: #{tpu_custom_call.1} parent=1 // pred_region
      %295 = dma.done [#allocation28], 1024
    $region141: #{tpu_custom_call.1} parent=1 // pred_fallthru
      _
    // Predicated region
    $region142: #{tpu_custom_call.1} parent=1 // pred_check
      _
    $region143: #{tpu_custom_call.1} parent=1 // pred_check_branch
      %297 = sbr.rel (0) target = $region145
    $region144: #{tpu_custom_call.1} parent=1 // pred_region
      %298 = dma.done [#allocation28], 1024
    $region145: #{tpu_custom_call.1} parent=1 // pred_fallthru
      _
    // Predicated region
    $region146: #{tpu_custom_call.1} parent=1 // pred_check
      _
    $region147: #{tpu_custom_call.1} parent=1 // pred_check_branch
      %300 = sbr.rel (0) target = $region149
    $region148: #{tpu_custom_call.1} parent=1 // pred_region
      %301 = dma.done [#allocation31], 512
    $region149: #{tpu_custom_call.1} parent=1 // pred_fallthru
      _
    // Predicated region
    $region150: #{tpu_custom_call.1} parent=1 // pred_check
      _
    $region151: #{tpu_custom_call.1} parent=1 // pred_check_branch
      %303 = sbr.rel (0) target = $region153
    $region152: #{tpu_custom_call.1} parent=1 // pred_region
      %304 = dma.done [#allocation31], 2048
    $region153: #{tpu_custom_call.1} parent=1 // pred_fallthru
      _
    // Predicated region
    $region154: #{tpu_custom_call.1} parent=1 // pred_check
      _
    $region155: #{tpu_custom_call.1} parent=1 // pred_check_branch
      %306 = sbr.rel (0) target = $region157
    $region156: #{tpu_custom_call.1} parent=1 // pred_region
      %307 = dma.done [#allocation34], 1024
    $region157: #{tpu_custom_call.1} parent=1 // pred_fallthru
      _
    // Predicated region
    $region158: #{tpu_custom_call.1} parent=1 // pred_check
      _
    $region159: #{tpu_custom_call.1} parent=1 // pred_check_branch
      %309 = sbr.rel (0) target = $region161
    $region160: #{tpu_custom_call.1} parent=1 // pred_region
      %310 = dma.done [#allocation34], 768
    $region161: #{tpu_custom_call.1} parent=1 // pred_fallthru
      _
    %p312 = scmp.eq.s32.totalorder 0, 0
    // Predicated region
    $region162: #{tpu_custom_call.1} parent=1 // pred_check
      %p313 = pneg %p312
    $region163: #{tpu_custom_call.1} parent=1 // pred_check_branch
      %315 = sbr.rel (%p313) target = $region165
    $region164: #{tpu_custom_call.1} parent=1 // pred_region
      #allocation38 [shape = 'u32[9]{0}', space=smem, size = 0x24, scoped, tag = 'DMA stride descriptor']
      %v316 = vld [vmem:[#allocation14] sm:$0x3]
      %vm317 = vcmask 517120
      %318 = vst.msk [vmem:[#allocation2] sm:$0x3] %vm317, %v316
      %v319 = vld [vmem:[#allocation15] sm:$0x3]
      %vm320 = vcmask 254976
      %321 = vst.msk [vmem:[#allocation3] sm:$0x3] %vm320, %v319
      %s323 = sshll.u32 1, 14
      %s324 = sxor.u32 4294967295, %s323
      %s326 = sld [smem:[#allocation0]]
      %s327 = sadd.s32 2, %s326
      %s329 = sshll.u32 7, 26
      %s330 = sxor.u32 4294967295, %s329
      %s331 = sand.u32 0, %s330
      %s332 = sshll.u32 %s327, 26
      %s333 = sor.u32 %s331, %s332
      %s334 = sshll.u32 [#allocation4], 4
      %s335 = int_to_ptr.vmem [resolvable:$true] %s334
      %338 = sst [smem:[#allocation38]] 1664
      %s339 = scalar_lea.smem [#allocation38], 1
      %340 = sst [smem:[%s339]] 1664
      %s341 = scalar_lea.smem [#allocation38], 2
      %342 = sst [smem:[%s341]] 13
      %s343 = scalar_lea.smem [#allocation38], 3
      %344 = sst [smem:[%s343]] 64
      %s345 = scalar_lea.smem [#allocation38], 4
      %346 = sst [smem:[%s345]] 128
      %s347 = scalar_lea.smem [#allocation38], 5
      %348 = sst [smem:[%s347]] 2
      %s349 = scalar_lea.smem [#allocation38], 6
      %350 = sst [smem:[%s349]] 832
      %s351 = scalar_lea.smem [#allocation38], 7
      %352 = sst [smem:[%s351]] 64
      %s353 = scalar_lea.smem [#allocation38], 8
      %354 = sst [smem:[%s353]] 4
      %356 = dma.general %s20, 53248, %s335, [#allocation5], [#allocation37], [#allocation38], %s333, 0
    $region165: #{tpu_custom_call.1} parent=1 // pred_fallthru
      _
    %v357 = vld [vmem:[#allocation6] sm:$0x3]
    %v358 = vld [vmem:[#allocation17] sm:$0xff]
    %v359 = vld [vmem:[#allocation17 + $0x8] sm:$0xff]
    %v360 = vld [vmem:[#allocation17 + $0x10] sm:$0xff]
    %v361 = vld [vmem:[#allocation17 + $0x18] sm:$0xff]
    %v362 = vpack.c.bf16 %v357, %v357
    %v363 = vld [vmem:[#allocation35] sm:$0xf]
    %v365 = vlaneseq
    %v366 = vshrl.u32 %v365, 7
    %v367 = vsub.s32 0, %v366
    %v368 = vrot.slane %v363, %v367
    %v369 = vlaneseq
    %v370 = vshrl.u32 %v369, 7
    %v371 = vsub.s32 1, %v370
    %v372 = vrot.slane %v363, %v371
    %v373 = vlaneseq
    %v374 = vshrl.u32 %v373, 7
    %v375 = vsub.s32 2, %v374
    %v376 = vrot.slane %v363, %v375
    %v377 = vlaneseq
    %v378 = vshrl.u32 %v377, 7
    %v379 = vsub.s32 3, %v378
    %v380 = vrot.slane %v363, %v379
    %v389 = vunpack.c.l.b16 %v358
    %v390 = vunpack.c.h.b16 %v358
    %v391 = vunpack.c.l.b16 %v359
    %v392 = vunpack.c.h.b16 %v359
    %v393 = vunpack.c.l.b16 %v360
    %v394 = vunpack.c.h.b16 %v360
    %v395 = vunpack.c.l.b16 %v361
    %v396 = vunpack.c.h.b16 %v361
    %v397 = vpack.c.b16 %v393, %v389
    %v398 = vpack.c.b16 %v394, %v390
    %v399 = vpack.c.b16 %v395, %v391
    %v400 = vpack.c.b16 %v396, %v392
    %vm405 = vcmask 130048
    %v407 = vsel %vm405, %v362, 0
    %409 = vmatprep.subr.bf16.mxu0 %v398
    %410 = vmatpush1.bf16.msra.mxu0 %v397
    %411 = vmatprep.subr.bf16.mxu0 0
    %412 = vmatpush1.bf16.msra.mxu0 0
    %413 = vmatprep.subr.bf16.mxu0 0
    %414 = vmatpush1.bf16.msra.mxu0 0
    %415 = vmatprep.subr.bf16.mxu0 0
    %416 = vmatpush1.bf16.msra.mxu0 0
    %417 = vmatprep.subr.bf16.mxu0 0
    %418 = vmatpush1.bf16.msra.mxu0 0
    %419 = vmatprep.subr.bf16.mxu0 0
    %420 = vmatpush1.bf16.msra.mxu0 0
    %421 = vmatprep.subr.bf16.mxu0 0
    %422 = vmatpush1.bf16.msra.mxu0 0
    %423 = vmatprep.subr.bf16.mxu0 0
    %424 = vmatpush1.bf16.msra.mxu0 0
    %425 = vmatprep.subr.bf16.mxu0 0
    %426 = vmatpush1.bf16.msra.mxu0 0
    %427 = vmatprep.subr.bf16.mxu0 0
    %428 = vmatpush1.bf16.msra.mxu0 0
    %429 = vmatprep.subr.bf16.mxu0 0
    %430 = vmatpush1.bf16.msra.mxu0 0
    %431 = vmatprep.subr.bf16.mxu0 0
    %432 = vmatpush1.bf16.msra.mxu0 0
    %433 = vmatprep.subr.bf16.mxu0 0
    %434 = vmatpush1.bf16.msra.mxu0 0
    %435 = vmatprep.subr.bf16.mxu0 0
    %436 = vmatpush1.bf16.msra.mxu0 0
    %437 = vmatprep.subr.bf16.mxu0 0
    %438 = vmatpush1.bf16.msra.mxu0 0
    %439 = vmatprep.subr.bf16.mxu0 0
    %440 = vmatpush1.bf16.msra.mxu0 0
    %441 = vmatprep.mubr.bf16.mxu0 0
    %442 = vmatmul.mubr.bf16.gmra.mrb[0].mxu0 %v407
    %v443 = vpop.f32.mrb[0].mxu0
    %v444 = vadd.f32 %v368, %v443
    %v445 = vpop.f32.mrb[0].mxu0
    %v446 = vadd.f32 %v372, %v445
    %v447 = vpop.f32.mrb[0].mxu0
    %v448 = vpop.f32.mrb[0].mxu0
    %449 = vdwg.mxu0
    %450 = vmatprep.subr.bf16.mxu0 %v400
    %451 = vmatpush1.bf16.msra.mxu0 %v399
    %452 = vmatprep.subr.bf16.mxu0 0
    %453 = vmatpush1.bf16.msra.mxu0 0
    %454 = vmatprep.subr.bf16.mxu0 0
    %455 = vmatpush1.bf16.msra.mxu0 0
    %456 = vmatprep.subr.bf16.mxu0 0
    %457 = vmatpush1.bf16.msra.mxu0 0
    %458 = vmatprep.subr.bf16.mxu0 0
    %459 = vmatpush1.bf16.msra.mxu0 0
    %460 = vmatprep.subr.bf16.mxu0 0
    %461 = vmatpush1.bf16.msra.mxu0 0
    %462 = vmatprep.subr.bf16.mxu0 0
    %463 = vmatpush1.bf16.msra.mxu0 0
    %464 = vmatprep.subr.bf16.mxu0 0
    %465 = vmatpush1.bf16.msra.mxu0 0
    %466 = vmatprep.subr.bf16.mxu0 0
    %467 = vmatpush1.bf16.msra.mxu0 0
    %468 = vmatprep.subr.bf16.mxu0 0
    %469 = vmatpush1.bf16.msra.mxu0 0
    %470 = vmatprep.subr.bf16.mxu0 0
    %471 = vmatpush1.bf16.msra.mxu0 0
    %472 = vmatprep.subr.bf16.mxu0 0
    %473 = vmatpush1.bf16.msra.mxu0 0
    %474 = vmatprep.subr.bf16.mxu0 0
    %475 = vmatpush1.bf16.msra.mxu0 0
    %476 = vmatprep.subr.bf16.mxu0 0
    %477 = vmatpush1.bf16.msra.mxu0 0
    %478 = vmatprep.subr.bf16.mxu0 0
    %479 = vmatpush1.bf16.msra.mxu0 0
    %480 = vmatprep.subr.bf16.mxu0 0
    %481 = vmatpush1.bf16.msra.mxu0 0
    %482 = vmatprep.mubr.bf16.mxu0 0
    %483 = vmatmul.mubr.bf16.gmra.mrb[0].mxu0 %v407
    %v484 = vpop.f32.mrb[0].mxu0
    %v485 = vadd.f32 %v376, %v484
    %v486 = vpop.f32.mrb[0].mxu0
    %v487 = vadd.f32 %v380, %v486
    %v488 = vpop.f32.mrb[0].mxu0
    %v489 = vpop.f32.mrb[0].mxu0
    %490 = vdwg.mxu0
    %vm491 = vcmp.gt.f32.partialorder %v444, 0.0
    %vm492 = vcmp.gt.f32.partialorder %v446, 0.0
    %vm493 = vcmp.gt.f32.partialorder %v485, 0.0
    %vm494 = vcmp.gt.f32.partialorder %v487, 0.0
    %v495 = vmin.f32 %v444, 0.0
    %v496 = vmin.f32 %v446, 0.0
    %v497 = vmin.f32 %v485, 0.0
    %v498 = vmin.f32 %v487, 0.0
    %v499 = vmul.f32 %v495, 1.442695
    %v500 = vpow.pop %v499
    %v501 = vmul.f32 %v496, 1.442695
    %v502 = vpow.pop %v501
    %v503 = vmul.f32 %v497, 1.442695
    %v504 = vpow.pop %v503
    %v505 = vmul.f32 %v498, 1.442695
    %v506 = vpow.pop %v505
    %v507 = vsub.f32 %v500, 1.0
    %v508 = vsub.f32 %v502, 1.0
    %v509 = vsub.f32 %v504, 1.0
    %v510 = vsub.f32 %v506, 1.0
    %v511 = vsel %vm491, %v444, %v507
    %v512 = vsel %vm492, %v446, %v508
    %v513 = vsel %vm493, %v485, %v509
    %v514 = vsel %vm494, %v487, %v510
    %v515 = vld [vmem:[#allocation18] sm:$0xff]
    %v516 = vld [vmem:[#allocation18 + $0x8] sm:$0xff]
    %v517 = vld [vmem:[#allocation18 + $0x10] sm:$0xff]
    %v518 = vld [vmem:[#allocation18 + $0x18] sm:$0xff]
    %v519 = vld [vmem:[#allocation18 + $0x20] sm:$0xff]
    %v520 = vld [vmem:[#allocation18 + $0x28] sm:$0xff]
    %v521 = vld [vmem:[#allocation18 + $0x30] sm:$0xff]
    %v522 = vld [vmem:[#allocation18 + $0x38] sm:$0xff]
    %v523 = vld [vmem:[#allocation18 + $0x40] sm:$0xff]
    %v524 = vld [vmem:[#allocation18 + $0x48] sm:$0xff]
    %v525 = vld [vmem:[#allocation18 + $0x50] sm:$0xff]
    %v526 = vld [vmem:[#allocation18 + $0x58] sm:$0xff]
    %v527 = vld [vmem:[#allocation18 + $0x60] sm:$0xff]
    %v528 = vld [vmem:[#allocation18 + $0x68] sm:$0xff]
    %v529 = vld [vmem:[#allocation18 + $0x70] sm:$0xff]
    %v530 = vld [vmem:[#allocation18 + $0x78] sm:$0xff]
    %v531 = vld [vmem:[#allocation18 + $0x80] sm:$0xff]
    %v532 = vld [vmem:[#allocation18 + $0x88] sm:$0xff]
    %v533 = vld [vmem:[#allocation18 + $0x90] sm:$0xff]
    %v534 = vld [vmem:[#allocation18 + $0x98] sm:$0xff]
    %v535 = vld [vmem:[#allocation18 + $0xa0] sm:$0xff]
    %v536 = vld [vmem:[#allocation18 + $0xa8] sm:$0xff]
    %v537 = vld [vmem:[#allocation18 + $0xb0] sm:$0xff]
    %v538 = vld [vmem:[#allocation18 + $0xb8] sm:$0xff]
    %v539 = vld [vmem:[#allocation18 + $0xc0] sm:$0xff]
    %v540 = vld [vmem:[#allocation18 + $0xc8] sm:$0xff]
    %v541 = vld [vmem:[#allocation18 + $0xd0] sm:$0xff]
    %v542 = vld [vmem:[#allocation18 + $0xd8] sm:$0xff]
    %v543 = vld [vmem:[#allocation18 + $0xe0] sm:$0xff]
    %v544 = vld [vmem:[#allocation18 + $0xe8] sm:$0xff]
    %v545 = vld [vmem:[#allocation18 + $0xf0] sm:$0xff]
    %v546 = vld [vmem:[#allocation18 + $0xf8] sm:$0xff]
    %v547 = vld [vmem:[#allocation18 + $0x100] sm:$0xff]
    %v548 = vld [vmem:[#allocation18 + $0x108] sm:$0xff]
    %v549 = vld [vmem:[#allocation18 + $0x110] sm:$0xff]
    %v550 = vld [vmem:[#allocation18 + $0x118] sm:$0xff]
    %v551 = vld [vmem:[#allocation18 + $0x120] sm:$0xff]
    %v552 = vld [vmem:[#allocation18 + $0x128] sm:$0xff]
    %v553 = vld [vmem:[#allocation18 + $0x130] sm:$0xff]
    %v554 = vld [vmem:[#allocation18 + $0x138] sm:$0xff]
    %v555 = vld [vmem:[#allocation18 + $0x140] sm:$0xff]
    %v556 = vld [vmem:[#allocation18 + $0x148] sm:$0xff]
    %v557 = vld [vmem:[#allocation18 + $0x150] sm:$0xff]
    %v558 = vld [vmem:[#allocation18 + $0x158] sm:$0xff]
    %v559 = vld [vmem:[#allocation18 + $0x160] sm:$0xff]
    %v560 = vld [vmem:[#allocation18 + $0x168] sm:$0xff]
    %v561 = vld [vmem:[#allocation18 + $0x170] sm:$0xff]
    %v562 = vld [vmem:[#allocation18 + $0x178] sm:$0xff]
    %v563 = vld [vmem:[#allocation18 + $0x180] sm:$0xff]
    %v564 = vld [vmem:[#allocation18 + $0x188] sm:$0xff]
    %v565 = vld [vmem:[#allocation18 + $0x190] sm:$0xff]
    %v566 = vld [vmem:[#allocation18 + $0x198] sm:$0xff]
    %v567 = vld [vmem:[#allocation18 + $0x1a0] sm:$0xff]
    %v568 = vld [vmem:[#allocation18 + $0x1a8] sm:$0xff]
    %v569 = vld [vmem:[#allocation18 + $0x1b0] sm:$0xff]
    %v570 = vld [vmem:[#allocation18 + $0x1b8] sm:$0xff]
    %v571 = vld [vmem:[#allocation18 + $0x1c0] sm:$0xff]
    %v572 = vld [vmem:[#allocation18 + $0x1c8] sm:$0xff]
    %v573 = vld [vmem:[#allocation18 + $0x1d0] sm:$0xff]
    %v574 = vld [vmem:[#allocation18 + $0x1d8] sm:$0xff]
    %v575 = vld [vmem:[#allocation18 + $0x1e0] sm:$0xff]
    %v576 = vld [vmem:[#allocation18 + $0x1e8] sm:$0xff]
    %v577 = vld [vmem:[#allocation18 + $0x1f0] sm:$0xff]
    %v578 = vld [vmem:[#allocation18 + $0x1f8] sm:$0xff]
    %v579 = vld [vmem:[#allocation18 + $0x200] sm:$0xff]
    %v580 = vld [vmem:[#allocation18 + $0x208] sm:$0xff]
    %v581 = vld [vmem:[#allocation18 + $0x210] sm:$0xff]
    %v582 = vld [vmem:[#allocation18 + $0x218] sm:$0xff]
    %v583 = vld [vmem:[#allocation18 + $0x220] sm:$0xff]
    %v584 = vld [vmem:[#allocation18 + $0x228] sm:$0xff]
    %v585 = vld [vmem:[#allocation18 + $0x230] sm:$0xff]
    %v586 = vld [vmem:[#allocation18 + $0x238] sm:$0xff]
    %v587 = vld [vmem:[#allocation18 + $0x240] sm:$0xff]
    %v588 = vld [vmem:[#allocation18 + $0x248] sm:$0xff]
    %v589 = vld [vmem:[#allocation18 + $0x250] sm:$0xff]
    %v590 = vld [vmem:[#allocation18 + $0x258] sm:$0xff]
    %v591 = vld [vmem:[#allocation18 + $0x260] sm:$0xff]
    %v592 = vld [vmem:[#allocation18 + $0x268] sm:$0xff]
    %v593 = vld [vmem:[#allocation18 + $0x270] sm:$0xff]
    %v594 = vld [vmem:[#allocation18 + $0x278] sm:$0xff]
    %v595 = vld [vmem:[#allocation18 + $0x280] sm:$0xff]
    %v596 = vld [vmem:[#allocation18 + $0x288] sm:$0xff]
    %v597 = vld [vmem:[#allocation18 + $0x290] sm:$0xff]
    %v598 = vld [vmem:[#allocation18 + $0x298] sm:$0xff]
    %v599 = vld [vmem:[#allocation18 + $0x2a0] sm:$0xff]
    %v600 = vld [vmem:[#allocation18 + $0x2a8] sm:$0xff]
    %v601 = vld [vmem:[#allocation18 + $0x2b0] sm:$0xff]
    %v602 = vld [vmem:[#allocation18 + $0x2b8] sm:$0xff]
    %v603 = vld [vmem:[#allocation18 + $0x2c0] sm:$0xff]
    %v604 = vld [vmem:[#allocation18 + $0x2c8] sm:$0xff]
    %v605 = vld [vmem:[#allocation18 + $0x2d0] sm:$0xff]
    %v606 = vld [vmem:[#allocation18 + $0x2d8] sm:$0xff]
    %v607 = vld [vmem:[#allocation18 + $0x2e0] sm:$0xff]
    %v608 = vld [vmem:[#allocation18 + $0x2e8] sm:$0xff]
    %v609 = vld [vmem:[#allocation18 + $0x2f0] sm:$0xff]
    %v610 = vld [vmem:[#allocation18 + $0x2f8] sm:$0xff]
    %v611 = vld [vmem:[#allocation18 + $0x300] sm:$0xff]
    %v612 = vld [vmem:[#allocation18 + $0x308] sm:$0xff]
    %v613 = vld [vmem:[#allocation18 + $0x310] sm:$0xff]
    %v614 = vld [vmem:[#allocation18 + $0x318] sm:$0xff]
    %v615 = vld [vmem:[#allocation18 + $0x320] sm:$0xff]
    %v616 = vld [vmem:[#allocation18 + $0x328] sm:$0xff]
    %v617 = vld [vmem:[#allocation18 + $0x330] sm:$0xff]
    %v618 = vld [vmem:[#allocation18 + $0x338] sm:$0xff]
    %v619 = vld [vmem:[#allocation18 + $0x340] sm:$0xff]
    %v620 = vld [vmem:[#allocation18 + $0x348] sm:$0xff]
    %v621 = vld [vmem:[#allocation18 + $0x350] sm:$0xff]
    %v622 = vld [vmem:[#allocation18 + $0x358] sm:$0xff]
    %v623 = vld [vmem:[#allocation18 + $0x360] sm:$0xff]
    %v624 = vld [vmem:[#allocation18 + $0x368] sm:$0xff]
    %v625 = vld [vmem:[#allocation18 + $0x370] sm:$0xff]
    %v626 = vld [vmem:[#allocation18 + $0x378] sm:$0xff]
    %v627 = vld [vmem:[#allocation18 + $0x380] sm:$0xff]
    %v628 = vld [vmem:[#allocation18 + $0x388] sm:$0xff]
    %v629 = vld [vmem:[#allocation18 + $0x390] sm:$0xff]
    %v630 = vld [vmem:[#allocation18 + $0x398] sm:$0xff]
    %v631 = vld [vmem:[#allocation18 + $0x3a0] sm:$0xff]
    %v632 = vld [vmem:[#allocation18 + $0x3a8] sm:$0xff]
    %v633 = vld [vmem:[#allocation18 + $0x3b0] sm:$0xff]
    %v634 = vld [vmem:[#allocation18 + $0x3b8] sm:$0xff]
    %v635 = vld [vmem:[#allocation18 + $0x3c0] sm:$0xff]
    %v636 = vld [vmem:[#allocation18 + $0x3c8] sm:$0xff]
    %v637 = vld [vmem:[#allocation18 + $0x3d0] sm:$0xff]
    %v638 = vld [vmem:[#allocation18 + $0x3d8] sm:$0xff]
    %v639 = vld [vmem:[#allocation18 + $0x3e0] sm:$0xff]
    %v640 = vld [vmem:[#allocation18 + $0x3e8] sm:$0xff]
    %v641 = vld [vmem:[#allocation18 + $0x3f0] sm:$0xff]
    %v642 = vld [vmem:[#allocation18 + $0x3f8] sm:$0xff]
    %v643 = vpack.c.bf16 %v511, %v511
    %v644 = vpack.c.bf16 %v512, %v512
    %v645 = vpack.c.bf16 %v513, %v513
    %v646 = vpack.c.bf16 %v514, %v514
    %v647 = vld [vmem:[#allocation35 + $0x4] sm:$0xf]
    %v649 = vlaneseq
    %v650 = vshrl.u32 %v649, 7
    %v651 = vsub.s32 0, %v650
    %v652 = vrot.slane %v647, %v651
    %v653 = vlaneseq
    %v654 = vshrl.u32 %v653, 7
    %v655 = vsub.s32 1, %v654
    %v656 = vrot.slane %v647, %v655
    %v657 = vlaneseq
    %v658 = vshrl.u32 %v657, 7
    %v659 = vsub.s32 2, %v658
    %v660 = vrot.slane %v647, %v659
    %v661 = vlaneseq
    %v662 = vshrl.u32 %v661, 7
    %v663 = vsub.s32 3, %v662
    %v664 = vrot.slane %v647, %v663
    %v797 = vunpack.c.l.b16 %v515
    %v798 = vunpack.c.h.b16 %v515
    %v799 = vunpack.c.l.b16 %v516
    %v800 = vunpack.c.h.b16 %v516
    %v801 = vunpack.c.l.b16 %v517
    %v802 = vunpack.c.h.b16 %v517
    %v803 = vunpack.c.l.b16 %v518
    %v804 = vunpack.c.h.b16 %v518
    %v805 = vunpack.c.l.b16 %v519
    %v806 = vunpack.c.h.b16 %v519
    %v807 = vunpack.c.l.b16 %v520
    %v808 = vunpack.c.h.b16 %v520
    %v809 = vunpack.c.l.b16 %v521
    %v810 = vunpack.c.h.b16 %v521
    %v811 = vunpack.c.l.b16 %v522
    %v812 = vunpack.c.h.b16 %v522
    %v813 = vunpack.c.l.b16 %v523
    %v814 = vunpack.c.h.b16 %v523
    %v815 = vunpack.c.l.b16 %v524
    %v816 = vunpack.c.h.b16 %v524
    %v817 = vunpack.c.l.b16 %v525
    %v818 = vunpack.c.h.b16 %v525
    %v819 = vunpack.c.l.b16 %v526
    %v820 = vunpack.c.h.b16 %v526
    %v821 = vunpack.c.l.b16 %v527
    %v822 = vunpack.c.h.b16 %v527
    %v823 = vunpack.c.l.b16 %v528
    %v824 = vunpack.c.h.b16 %v528
    %v825 = vunpack.c.l.b16 %v529
    %v826 = vunpack.c.h.b16 %v529
    %v827 = vunpack.c.l.b16 %v530
    %v828 = vunpack.c.h.b16 %v530
    %v829 = vunpack.c.l.b16 %v531
    %v830 = vunpack.c.h.b16 %v531
    %v831 = vunpack.c.l.b16 %v532
    %v832 = vunpack.c.h.b16 %v532
    %v833 = vunpack.c.l.b16 %v533
    %v834 = vunpack.c.h.b16 %v533
    %v835 = vunpack.c.l.b16 %v534
    %v836 = vunpack.c.h.b16 %v534
    %v837 = vunpack.c.l.b16 %v535
    %v838 = vunpack.c.h.b16 %v535
    %v839 = vunpack.c.l.b16 %v536
    %v840 = vunpack.c.h.b16 %v536
    %v841 = vunpack.c.l.b16 %v537
    %v842 = vunpack.c.h.b16 %v537
    %v843 = vunpack.c.l.b16 %v538
    %v844 = vunpack.c.h.b16 %v538
    %v845 = vunpack.c.l.b16 %v539
    %v846 = vunpack.c.h.b16 %v539
    %v847 = vunpack.c.l.b16 %v540
    %v848 = vunpack.c.h.b16 %v540
    %v849 = vunpack.c.l.b16 %v541
    %v850 = vunpack.c.h.b16 %v541
    %v851 = vunpack.c.l.b16 %v542
    %v852 = vunpack.c.h.b16 %v542
    %v853 = vunpack.c.l.b16 %v543
    %v854 = vunpack.c.h.b16 %v543
    %v855 = vunpack.c.l.b16 %v544
    %v856 = vunpack.c.h.b16 %v544
    %v857 = vunpack.c.l.b16 %v545
    %v858 = vunpack.c.h.b16 %v545
    %v859 = vunpack.c.l.b16 %v546
    %v860 = vunpack.c.h.b16 %v546
    %v861 = vunpack.c.l.b16 %v547
    %v862 = vunpack.c.h.b16 %v547
    %v863 = vunpack.c.l.b16 %v548
    %v864 = vunpack.c.h.b16 %v548
    %v865 = vunpack.c.l.b16 %v549
    %v866 = vunpack.c.h.b16 %v549
    %v867 = vunpack.c.l.b16 %v550
    %v868 = vunpack.c.h.b16 %v550
    %v869 = vunpack.c.l.b16 %v551
    %v870 = vunpack.c.h.b16 %v551
    %v871 = vunpack.c.l.b16 %v552
    %v872 = vunpack.c.h.b16 %v552
    %v873 = vunpack.c.l.b16 %v553
    %v874 = vunpack.c.h.b16 %v553
    %v875 = vunpack.c.l.b16 %v554
    %v876 = vunpack.c.h.b16 %v554
    %v877 = vunpack.c.l.b16 %v555
    %v878 = vunpack.c.h.b16 %v555
    %v879 = vunpack.c.l.b16 %v556
    %v880 = vunpack.c.h.b16 %v556
    %v881 = vunpack.c.l.b16 %v557
    %v882 = vunpack.c.h.b16 %v557
    %v883 = vunpack.c.l.b16 %v558
    %v884 = vunpack.c.h.b16 %v558
    %v885 = vunpack.c.l.b16 %v559
    %v886 = vunpack.c.h.b16 %v559
    %v887 = vunpack.c.l.b16 %v560
    %v888 = vunpack.c.h.b16 %v560
    %v889 = vunpack.c.l.b16 %v561
    %v890 = vunpack.c.h.b16 %v561
    %v891 = vunpack.c.l.b16 %v562
    %v892 = vunpack.c.h.b16 %v562
    %v893 = vunpack.c.l.b16 %v563
    %v894 = vunpack.c.h.b16 %v563
    %v895 = vunpack.c.l.b16 %v564
    %v896 = vunpack.c.h.b16 %v564
    %v897 = vunpack.c.l.b16 %v565
    %v898 = vunpack.c.h.b16 %v565
    %v899 = vunpack.c.l.b16 %v566
    %v900 = vunpack.c.h.b16 %v566
    %v901 = vunpack.c.l.b16 %v567
    %v902 = vunpack.c.h.b16 %v567
    %v903 = vunpack.c.l.b16 %v568
    %v904 = vunpack.c.h.b16 %v568
    %v905 = vunpack.c.l.b16 %v569
    %v906 = vunpack.c.h.b16 %v569
    %v907 = vunpack.c.l.b16 %v570
    %v908 = vunpack.c.h.b16 %v570
    %v909 = vunpack.c.l.b16 %v571
    %v910 = vunpack.c.h.b16 %v571
    %v911 = vunpack.c.l.b16 %v572
    %v912 = vunpack.c.h.b16 %v572
    %v913 = vunpack.c.l.b16 %v573
    %v914 = vunpack.c.h.b16 %v573
    %v915 = vunpack.c.l.b16 %v574
    %v916 = vunpack.c.h.b16 %v574
    %v917 = vunpack.c.l.b16 %v575
    %v918 = vunpack.c.h.b16 %v575
    %v919 = vunpack.c.l.b16 %v576
    %v920 = vunpack.c.h.b16 %v576
    %v921 = vunpack.c.l.b16 %v577
    %v922 = vunpack.c.h.b16 %v577
    %v923 = vunpack.c.l.b16 %v578
    %v924 = vunpack.c.h.b16 %v578
    %v925 = vunpack.c.l.b16 %v579
    %v926 = vunpack.c.h.b16 %v579
    %v927 = vunpack.c.l.b16 %v580
    %v928 = vunpack.c.h.b16 %v580
    %v929 = vunpack.c.l.b16 %v581
    %v930 = vunpack.c.h.b16 %v581
    %v931 = vunpack.c.l.b16 %v582
    %v932 = vunpack.c.h.b16 %v582
    %v933 = vunpack.c.l.b16 %v583
    %v934 = vunpack.c.h.b16 %v583
    %v935 = vunpack.c.l.b16 %v584
    %v936 = vunpack.c.h.b16 %v584
    %v937 = vunpack.c.l.b16 %v585
    %v938 = vunpack.c.h.b16 %v585
    %v939 = vunpack.c.l.b16 %v586
    %v940 = vunpack.c.h.b16 %v586
    %v941 = vunpack.c.l.b16 %v587
    %v942 = vunpack.c.h.b16 %v587
    %v943 = vunpack.c.l.b16 %v588
    %v944 = vunpack.c.h.b16 %v588
    %v945 = vunpack.c.l.b16 %v589
    %v946 = vunpack.c.h.b16 %v589
    %v947 = vunpack.c.l.b16 %v590
    %v948 = vunpack.c.h.b16 %v590
    %v949 = vunpack.c.l.b16 %v591
    %v950 = vunpack.c.h.b16 %v591
    %v951 = vunpack.c.l.b16 %v592
    %v952 = vunpack.c.h.b16 %v592
    %v953 = vunpack.c.l.b16 %v593
    %v954 = vunpack.c.h.b16 %v593
    %v955 = vunpack.c.l.b16 %v594
    %v956 = vunpack.c.h.b16 %v594
    %v957 = vunpack.c.l.b16 %v595
    %v958 = vunpack.c.h.b16 %v595
    %v959 = vunpack.c.l.b16 %v596
    %v960 = vunpack.c.h.b16 %v596
    %v961 = vunpack.c.l.b16 %v597
    %v962 = vunpack.c.h.b16 %v597
    %v963 = vunpack.c.l.b16 %v598
    %v964 = vunpack.c.h.b16 %v598
    %v965 = vunpack.c.l.b16 %v599
    %v966 = vunpack.c.h.b16 %v599
    %v967 = vunpack.c.l.b16 %v600
    %v968 = vunpack.c.h.b16 %v600
    %v969 = vunpack.c.l.b16 %v601
    %v970 = vunpack.c.h.b16 %v601
    %v971 = vunpack.c.l.b16 %v602
    %v972 = vunpack.c.h.b16 %v602
    %v973 = vunpack.c.l.b16 %v603
    %v974 = vunpack.c.h.b16 %v603
    %v975 = vunpack.c.l.b16 %v604
    %v976 = vunpack.c.h.b16 %v604
    %v977 = vunpack.c.l.b16 %v605
    %v978 = vunpack.c.h.b16 %v605
    %v979 = vunpack.c.l.b16 %v606
    %v980 = vunpack.c.h.b16 %v606
    %v981 = vunpack.c.l.b16 %v607
    %v982 = vunpack.c.h.b16 %v607
    %v983 = vunpack.c.l.b16 %v608
    %v984 = vunpack.c.h.b16 %v608
    %v985 = vunpack.c.l.b16 %v609
    %v986 = vunpack.c.h.b16 %v609
    %v987 = vunpack.c.l.b16 %v610
    %v988 = vunpack.c.h.b16 %v610
    %v989 = vunpack.c.l.b16 %v611
    %v990 = vunpack.c.h.b16 %v611
    %v991 = vunpack.c.l.b16 %v612
    %v992 = vunpack.c.h.b16 %v612
    %v993 = vunpack.c.l.b16 %v613
    %v994 = vunpack.c.h.b16 %v613
    %v995 = vunpack.c.l.b16 %v614
    %v996 = vunpack.c.h.b16 %v614
    %v997 = vunpack.c.l.b16 %v615
    %v998 = vunpack.c.h.b16 %v615
    %v999 = vunpack.c.l.b16 %v616
    %v1000 = vunpack.c.h.b16 %v616
    %v1001 = vunpack.c.l.b16 %v617
    %v1002 = vunpack.c.h.b16 %v617
    %v1003 = vunpack.c.l.b16 %v618
    %v1004 = vunpack.c.h.b16 %v618
    %v1005 = vunpack.c.l.b16 %v619
    %v1006 = vunpack.c.h.b16 %v619
    %v1007 = vunpack.c.l.b16 %v620
    %v1008 = vunpack.c.h.b16 %v620
    %v1009 = vunpack.c.l.b16 %v621
    %v1010 = vunpack.c.h.b16 %v621
    %v1011 = vunpack.c.l.b16 %v622
    %v1012 = vunpack.c.h.b16 %v622
    %v1013 = vunpack.c.l.b16 %v623
    %v1014 = vunpack.c.h.b16 %v623
    %v1015 = vunpack.c.l.b16 %v624
    %v1016 = vunpack.c.h.b16 %v624
    %v1017 = vunpack.c.l.b16 %v625
    %v1018 = vunpack.c.h.b16 %v625
    %v1019 = vunpack.c.l.b16 %v626
    %v1020 = vunpack.c.h.b16 %v626
    %v1021 = vunpack.c.l.b16 %v627
    %v1022 = vunpack.c.h.b16 %v627
    %v1023 = vunpack.c.l.b16 %v628
    %v1024 = vunpack.c.h.b16 %v628
    %v1025 = vunpack.c.l.b16 %v629
    %v1026 = vunpack.c.h.b16 %v629
    %v1027 = vunpack.c.l.b16 %v630
    %v1028 = vunpack.c.h.b16 %v630
    %v1029 = vunpack.c.l.b16 %v631
    %v1030 = vunpack.c.h.b16 %v631
    %v1031 = vunpack.c.l.b16 %v632
    %v1032 = vunpack.c.h.b16 %v632
    %v1033 = vunpack.c.l.b16 %v633
    %v1034 = vunpack.c.h.b16 %v633
    %v1035 = vunpack.c.l.b16 %v634
    %v1036 = vunpack.c.h.b16 %v634
    %v1037 = vunpack.c.l.b16 %v635
    %v1038 = vunpack.c.h.b16 %v635
    %v1039 = vunpack.c.l.b16 %v636
    %v1040 = vunpack.c.h.b16 %v636
    %v1041 = vunpack.c.l.b16 %v637
    %v1042 = vunpack.c.h.b16 %v637
    %v1043 = vunpack.c.l.b16 %v638
    %v1044 = vunpack.c.h.b16 %v638
    %v1045 = vunpack.c.l.b16 %v639
    %v1046 = vunpack.c.h.b16 %v639
    %v1047 = vunpack.c.l.b16 %v640
    %v1048 = vunpack.c.h.b16 %v640
    %v1049 = vunpack.c.l.b16 %v641
    %v1050 = vunpack.c.h.b16 %v641
    %v1051 = vunpack.c.l.b16 %v642
    %v1052 = vunpack.c.h.b16 %v642
    %v1053 = vpack.c.b16 %v801, %v797
    %v1054 = vpack.c.b16 %v802, %v798
    %v1055 = vpack.c.b16 %v803, %v799
    %v1056 = vpack.c.b16 %v804, %v800
    %v1057 = vpack.c.b16 %v809, %v805
    %v1058 = vpack.c.b16 %v810, %v806
    %v1059 = vpack.c.b16 %v811, %v807
    %v1060 = vpack.c.b16 %v812, %v808
    %v1061 = vpack.c.b16 %v817, %v813
    %v1062 = vpack.c.b16 %v818, %v814
    %v1063 = vpack.c.b16 %v819, %v815
    %v1064 = vpack.c.b16 %v820, %v816
    %v1065 = vpack.c.b16 %v825, %v821
    %v1066 = vpack.c.b16 %v826, %v822
    %v1067 = vpack.c.b16 %v827, %v823
    %v1068 = vpack.c.b16 %v828, %v824
    %v1069 = vpack.c.b16 %v833, %v829
    %v1070 = vpack.c.b16 %v834, %v830
    %v1071 = vpack.c.b16 %v835, %v831
    %v1072 = vpack.c.b16 %v836, %v832
    %v1073 = vpack.c.b16 %v841, %v837
    %v1074 = vpack.c.b16 %v842, %v838
    %v1075 = vpack.c.b16 %v843, %v839
    %v1076 = vpack.c.b16 %v844, %v840
    %v1077 = vpack.c.b16 %v849, %v845
    %v1078 = vpack.c.b16 %v850, %v846
    %v1079 = vpack.c.b16 %v851, %v847
    %v1080 = vpack.c.b16 %v852, %v848
    %v1081 = vpack.c.b16 %v857, %v853
    %v1082 = vpack.c.b16 %v858, %v854
    %v1083 = vpack.c.b16 %v859, %v855
    %v1084 = vpack.c.b16 %v860, %v856
    %v1085 = vpack.c.b16 %v865, %v861
    %v1086 = vpack.c.b16 %v866, %v862
    %v1087 = vpack.c.b16 %v867, %v863
    %v1088 = vpack.c.b16 %v868, %v864
    %v1089 = vpack.c.b16 %v873, %v869
    %v1090 = vpack.c.b16 %v874, %v870
    %v1091 = vpack.c.b16 %v875, %v871
    %v1092 = vpack.c.b16 %v876, %v872
    %v1093 = vpack.c.b16 %v881, %v877
    %v1094 = vpack.c.b16 %v882, %v878
    %v1095 = vpack.c.b16 %v883, %v879
    %v1096 = vpack.c.b16 %v884, %v880
    %v1097 = vpack.c.b16 %v889, %v885
    %v1098 = vpack.c.b16 %v890, %v886
    %v1099 = vpack.c.b16 %v891, %v887
    %v1100 = vpack.c.b16 %v892, %v888
    %v1101 = vpack.c.b16 %v897, %v893
    %v1102 = vpack.c.b16 %v898, %v894
    %v1103 = vpack.c.b16 %v899, %v895
    %v1104 = vpack.c.b16 %v900, %v896
    %v1105 = vpack.c.b16 %v905, %v901
    %v1106 = vpack.c.b16 %v906, %v902
    %v1107 = vpack.c.b16 %v907, %v903
    %v1108 = vpack.c.b16 %v908, %v904
    %v1109 = vpack.c.b16 %v913, %v909
    %v1110 = vpack.c.b16 %v914, %v910
    %v1111 = vpack.c.b16 %v915, %v911
    %v1112 = vpack.c.b16 %v916, %v912
    %v1113 = vpack.c.b16 %v921, %v917
    %v1114 = vpack.c.b16 %v922, %v918
    %v1115 = vpack.c.b16 %v923, %v919
    %v1116 = vpack.c.b16 %v924, %v920
    %v1117 = vpack.c.b16 %v929, %v925
    %v1118 = vpack.c.b16 %v930, %v926
    %v1119 = vpack.c.b16 %v931, %v927
    %v1120 = vpack.c.b16 %v932, %v928
    %v1121 = vpack.c.b16 %v937, %v933
    %v1122 = vpack.c.b16 %v938, %v934
    %v1123 = vpack.c.b16 %v939, %v935
    %v1124 = vpack.c.b16 %v940, %v936
    %v1125 = vpack.c.b16 %v945, %v941
    %v1126 = vpack.c.b16 %v946, %v942
    %v1127 = vpack.c.b16 %v947, %v943
    %v1128 = vpack.c.b16 %v948, %v944
    %v1129 = vpack.c.b16 %v953, %v949
    %v1130 = vpack.c.b16 %v954, %v950
    %v1131 = vpack.c.b16 %v955, %v951
    %v1132 = vpack.c.b16 %v956, %v952
    %v1133 = vpack.c.b16 %v961, %v957
    %v1134 = vpack.c.b16 %v962, %v958
    %v1135 = vpack.c.b16 %v963, %v959
    %v1136 = vpack.c.b16 %v964, %v960
    %v1137 = vpack.c.b16 %v969, %v965
    %v1138 = vpack.c.b16 %v970, %v966
    %v1139 = vpack.c.b16 %v971, %v967
    %v1140 = vpack.c.b16 %v972, %v968
    %v1141 = vpack.c.b16 %v977, %v973
    %v1142 = vpack.c.b16 %v978, %v974
    %v1143 = vpack.c.b16 %v979, %v975
    %v1144 = vpack.c.b16 %v980, %v976
    %v1145 = vpack.c.b16 %v985, %v981
    %v1146 = vpack.c.b16 %v986, %v982
    %v1147 = vpack.c.b16 %v987, %v983
    %v1148 = vpack.c.b16 %v988, %v984
    %v1149 = vpack.c.b16 %v993, %v989
    %v1150 = vpack.c.b16 %v994, %v990
    %v1151 = vpack.c.b16 %v995, %v991
    %v1152 = vpack.c.b16 %v996, %v992
    %v1153 = vpack.c.b16 %v1001, %v997
    %v1154 = vpack.c.b16 %v1002, %v998
    %v1155 = vpack.c.b16 %v1003, %v999
    %v1156 = vpack.c.b16 %v1004, %v1000
    %v1157 = vpack.c.b16 %v1009, %v1005
    %v1158 = vpack.c.b16 %v1010, %v1006
    %v1159 = vpack.c.b16 %v1011, %v1007
    %v1160 = vpack.c.b16 %v1012, %v1008
    %v1161 = vpack.c.b16 %v1017, %v1013
    %v1162 = vpack.c.b16 %v1018, %v1014
    %v1163 = vpack.c.b16 %v1019, %v1015
    %v1164 = vpack.c.b16 %v1020, %v1016
    %v1165 = vpack.c.b16 %v1025, %v1021
    %v1166 = vpack.c.b16 %v1026, %v1022
    %v1167 = vpack.c.b16 %v1027, %v1023
    %v1168 = vpack.c.b16 %v1028, %v1024
    %v1169 = vpack.c.b16 %v1033, %v1029
    %v1170 = vpack.c.b16 %v1034, %v1030
    %v1171 = vpack.c.b16 %v1035, %v1031
    %v1172 = vpack.c.b16 %v1036, %v1032
    %v1173 = vpack.c.b16 %v1041, %v1037
    %v1174 = vpack.c.b16 %v1042, %v1038
    %v1175 = vpack.c.b16 %v1043, %v1039
    %v1176 = vpack.c.b16 %v1044, %v1040
    %v1177 = vpack.c.b16 %v1049, %v1045
    %v1178 = vpack.c.b16 %v1050, %v1046
    %v1179 = vpack.c.b16 %v1051, %v1047
    %v1180 = vpack.c.b16 %v1052, %v1048
    %1309 = vmatprep.subr.bf16.mxu0 %v1054
    %1310 = vmatpush1.bf16.msra.mxu0 %v1053
    %1311 = vmatprep.subr.bf16.mxu0 %v1058
    %1312 = vmatpush1.bf16.msra.mxu0 %v1057
    %1313 = vmatprep.subr.bf16.mxu0 %v1062
    %1314 = vmatpush1.bf16.msra.mxu0 %v1061
    %1315 = vmatprep.subr.bf16.mxu0 %v1066
    %1316 = vmatpush1.bf16.msra.mxu0 %v1065
    %1317 = vmatprep.subr.bf16.mxu0 %v1070
    %1318 = vmatpush1.bf16.msra.mxu0 %v1069
    %1319 = vmatprep.subr.bf16.mxu0 %v1074
    %1320 = vmatpush1.bf16.msra.mxu0 %v1073
    %1321 = vmatprep.subr.bf16.mxu0 %v1078
    %1322 = vmatpush1.bf16.msra.mxu0 %v1077
    %1323 = vmatprep.subr.bf16.mxu0 %v1082
    %1324 = vmatpush1.bf16.msra.mxu0 %v1081
    %1325 = vmatprep.subr.bf16.mxu0 %v1086
    %1326 = vmatpush1.bf16.msra.mxu0 %v1085
    %1327 = vmatprep.subr.bf16.mxu0 %v1090
    %1328 = vmatpush1.bf16.msra.mxu0 %v1089
    %1329 = vmatprep.subr.bf16.mxu0 %v1094
    %1330 = vmatpush1.bf16.msra.mxu0 %v1093
    %1331 = vmatprep.subr.bf16.mxu0 %v1098
    %1332 = vmatpush1.bf16.msra.mxu0 %v1097
    %1333 = vmatprep.subr.bf16.mxu0 %v1102
    %1334 = vmatpush1.bf16.msra.mxu0 %v1101
    %1335 = vmatprep.subr.bf16.mxu0 %v1106
    %1336 = vmatpush1.bf16.msra.mxu0 %v1105
    %1337 = vmatprep.subr.bf16.mxu0 %v1110
    %1338 = vmatpush1.bf16.msra.mxu0 %v1109
    %1339 = vmatprep.subr.bf16.mxu0 %v1114
    %1340 = vmatpush1.bf16.msra.mxu0 %v1113
    %1341 = vmatprep.mubr.bf16.mxu0 %v644
    %1342 = vmatmul.mubr.bf16.gmra.mrb[0].mxu0 %v643
    %v1343 = vpop.f32.mrb[0].mxu0
    %v1344 = vadd.f32 %v652, %v1343
    %v1345 = vpop.f32.mrb[0].mxu0
    %v1346 = vadd.f32 %v656, %v1345
    %v1347 = vpop.f32.mrb[0].mxu0
    %v1348 = vpop.f32.mrb[0].mxu0
    %1349 = vdwg.mxu0
    %1350 = vmatprep.subr.bf16.mxu0 %v1118
    %1351 = vmatpush1.bf16.msra.mxu0 %v1117
    %1352 = vmatprep.subr.bf16.mxu0 %v1122
    %1353 = vmatpush1.bf16.msra.mxu0 %v1121
    %1354 = vmatprep.subr.bf16.mxu0 %v1126
    %1355 = vmatpush1.bf16.msra.mxu0 %v1125
    %1356 = vmatprep.subr.bf16.mxu0 %v1130
    %1357 = vmatpush1.bf16.msra.mxu0 %v1129
    %1358 = vmatprep.subr.bf16.mxu0 %v1134
    %1359 = vmatpush1.bf16.msra.mxu0 %v1133
    %1360 = vmatprep.subr.bf16.mxu0 %v1138
    %1361 = vmatpush1.bf16.msra.mxu0 %v1137
    %1362 = vmatprep.subr.bf16.mxu0 %v1142
    %1363 = vmatpush1.bf16.msra.mxu0 %v1141
    %1364 = vmatprep.subr.bf16.mxu0 %v1146
    %1365 = vmatpush1.bf16.msra.mxu0 %v1145
    %1366 = vmatprep.subr.bf16.mxu0 %v1150
    %1367 = vmatpush1.bf16.msra.mxu0 %v1149
    %1368 = vmatprep.subr.bf16.mxu0 %v1154
    %1369 = vmatpush1.bf16.msra.mxu0 %v1153
    %1370 = vmatprep.subr.bf16.mxu0 %v1158
    %1371 = vmatpush1.bf16.msra.mxu0 %v1157
    %1372 = vmatprep.subr.bf16.mxu0 %v1162
    %1373 = vmatpush1.bf16.msra.mxu0 %v1161
    %1374 = vmatprep.subr.bf16.mxu0 %v1166
    %1375 = vmatpush1.bf16.msra.mxu0 %v1165
    %1376 = vmatprep.subr.bf16.mxu0 %v1170
    %1377 = vmatpush1.bf16.msra.mxu0 %v1169
    %1378 = vmatprep.subr.bf16.mxu0 %v1174
    %1379 = vmatpush1.bf16.msra.mxu0 %v1173
    %1380 = vmatprep.subr.bf16.mxu0 %v1178
    %1381 = vmatpush1.bf16.msra.mxu0 %v1177
    %1382 = vmatprep.mubr.bf16.mxu0 %v646
    %1383 = vmatmul.mubr.bf16.gmra.mrb[0].mxu0 %v645
    %v1384 = vpop.f32.mrb[0].mxu0
    %v1385 = vadd.f32 %v1344, %v1384
    %v1386 = vpop.f32.mrb[0].mxu0
    %v1387 = vadd.f32 %v1346, %v1386
    %v1388 = vpop.f32.mrb[0].mxu0
    %v1389 = vpop.f32.mrb[0].mxu0
    %1390 = vdwg.mxu0
    %1391 = vmatprep.subr.bf16.mxu0 %v1056
    %1392 = vmatpush1.bf16.msra.mxu0 %v1055
    %1393 = vmatprep.subr.bf16.mxu0 %v1060
    %1394 = vmatpush1.bf16.msra.mxu0 %v1059
    %1395 = vmatprep.subr.bf16.mxu0 %v1064
    %1396 = vmatpush1.bf16.msra.mxu0 %v1063
    %1397 = vmatprep.subr.bf16.mxu0 %v1068
    %1398 = vmatpush1.bf16.msra.mxu0 %v1067
    %1399 = vmatprep.subr.bf16.mxu0 %v1072
    %1400 = vmatpush1.bf16.msra.mxu0 %v1071
    %1401 = vmatprep.subr.bf16.mxu0 %v1076
    %1402 = vmatpush1.bf16.msra.mxu0 %v1075
    %1403 = vmatprep.subr.bf16.mxu0 %v1080
    %1404 = vmatpush1.bf16.msra.mxu0 %v1079
    %1405 = vmatprep.subr.bf16.mxu0 %v1084
    %1406 = vmatpush1.bf16.msra.mxu0 %v1083
    %1407 = vmatprep.subr.bf16.mxu0 %v1088
    %1408 = vmatpush1.bf16.msra.mxu0 %v1087
    %1409 = vmatprep.subr.bf16.mxu0 %v1092
    %1410 = vmatpush1.bf16.msra.mxu0 %v1091
    %1411 = vmatprep.subr.bf16.mxu0 %v1096
    %1412 = vmatpush1.bf16.msra.mxu0 %v1095
    %1413 = vmatprep.subr.bf16.mxu0 %v1100
    %1414 = vmatpush1.bf16.msra.mxu0 %v1099
    %1415 = vmatprep.subr.bf16.mxu0 %v1104
    %1416 = vmatpush1.bf16.msra.mxu0 %v1103
    %1417 = vmatprep.subr.bf16.mxu0 %v1108
    %1418 = vmatpush1.bf16.msra.mxu0 %v1107
    %1419 = vmatprep.subr.bf16.mxu0 %v1112
    %1420 = vmatpush1.bf16.msra.mxu0 %v1111
    %1421 = vmatprep.subr.bf16.mxu0 %v1116
    %1422 = vmatpush1.bf16.msra.mxu0 %v1115
    %1423 = vmatprep.mubr.bf16.mxu0 %v644
    %1424 = vmatmul.mubr.bf16.gmra.mrb[0].mxu0 %v643
    %v1425 = vpop.f32.mrb[0].mxu0
    %v1426 = vadd.f32 %v660, %v1425
    %v1427 = vpop.f32.mrb[0].mxu0
    %v1428 = vadd.f32 %v664, %v1427
    %v1429 = vpop.f32.mrb[0].mxu0
    %v1430 = vpop.f32.mrb[0].mxu0
    %1431 = vdwg.mxu0
    %1432 = vmatprep.subr.bf16.mxu0 %v1120
    %1433 = vmatpush1.bf16.msra.mxu0 %v1119
    %1434 = vmatprep.subr.bf16.mxu0 %v1124
    %1435 = vmatpush1.bf16.msra.mxu0 %v1123
    %1436 = vmatprep.subr.bf16.mxu0 %v1128
    %1437 = vmatpush1.bf16.msra.mxu0 %v1127
    %1438 = vmatprep.subr.bf16.mxu0 %v1132
    %1439 = vmatpush1.bf16.msra.mxu0 %v1131
    %1440 = vmatprep.subr.bf16.mxu0 %v1136
    %1441 = vmatpush1.bf16.msra.mxu0 %v1135
    %1442 = vmatprep.subr.bf16.mxu0 %v1140
    %1443 = vmatpush1.bf16.msra.mxu0 %v1139
    %1444 = vmatprep.subr.bf16.mxu0 %v1144
    %1445 = vmatpush1.bf16.msra.mxu0 %v1143
    %1446 = vmatprep.subr.bf16.mxu0 %v1148
    %1447 = vmatpush1.bf16.msra.mxu0 %v1147
    %1448 = vmatprep.subr.bf16.mxu0 %v1152
    %1449 = vmatpush1.bf16.msra.mxu0 %v1151
    %1450 = vmatprep.subr.bf16.mxu0 %v1156
    %1451 = vmatpush1.bf16.msra.mxu0 %v1155
    %1452 = vmatprep.subr.bf16.mxu0 %v1160
    %1453 = vmatpush1.bf16.msra.mxu0 %v1159
    %1454 = vmatprep.subr.bf16.mxu0 %v1164
    %1455 = vmatpush1.bf16.msra.mxu0 %v1163
    %1456 = vmatprep.subr.bf16.mxu0 %v1168
    %1457 = vmatpush1.bf16.msra.mxu0 %v1167
    %1458 = vmatprep.subr.bf16.mxu0 %v1172
    %1459 = vmatpush1.bf16.msra.mxu0 %v1171
    %1460 = vmatprep.subr.bf16.mxu0 %v1176
    %1461 = vmatpush1.bf16.msra.mxu0 %v1175
    %1462 = vmatprep.subr.bf16.mxu0 %v1180
    %1463 = vmatpush1.bf16.msra.mxu0 %v1179
    %1464 = vmatprep.mubr.bf16.mxu0 %v646
    %1465 = vmatmul.mubr.bf16.gmra.mrb[0].mxu0 %v645
    %v1466 = vpop.f32.mrb[0].mxu0
    %v1467 = vadd.f32 %v1426, %v1466
    %v1468 = vpop.f32.mrb[0].mxu0
    %v1469 = vadd.f32 %v1428, %v1468
    %v1470 = vpop.f32.mrb[0].mxu0
    %v1471 = vpop.f32.mrb[0].mxu0
    %1472 = vdwg.mxu0
    %vm1473 = vcmp.gt.f32.partialorder %v1385, 0.0
    %vm1474 = vcmp.gt.f32.partialorder %v1387, 0.0
    %vm1475 = vcmp.gt.f32.partialorder %v1467, 0.0
    %vm1476 = vcmp.gt.f32.partialorder %v1469, 0.0
    %v1477 = vmin.f32 %v1385, 0.0
    %v1478 = vmin.f32 %v1387, 0.0
    %v1479 = vmin.f32 %v1467, 0.0
    %v1480 = vmin.f32 %v1469, 0.0
    %v1481 = vmul.f32 %v1477, 1.442695
    %v1482 = vpow.pop %v1481
    %v1483 = vmul.f32 %v1478, 1.442695
    %v1484 = vpow.pop %v1483
    %v1485 = vmul.f32 %v1479, 1.442695
    %v1486 = vpow.pop %v1485
    %v1487 = vmul.f32 %v1480, 1.442695
    %v1488 = vpow.pop %v1487
    %v1489 = vsub.f32 %v1482, 1.0
    %v1490 = vsub.f32 %v1484, 1.0
    %v1491 = vsub.f32 %v1486, 1.0
    %v1492 = vsub.f32 %v1488, 1.0
    %v1493 = vsel %vm1473, %v1385, %v1489
    %v1494 = vsel %vm1474, %v1387, %v1490
    %v1495 = vsel %vm1475, %v1467, %v1491
    %v1496 = vsel %vm1476, %v1469, %v1492
    %v1497 = vld [vmem:[#allocation20] sm:$0xff]
    %v1498 = vld [vmem:[#allocation20 + $0x8] sm:$0xff]
    %v1499 = vld [vmem:[#allocation20 + $0x10] sm:$0xff]
    %v1500 = vld [vmem:[#allocation20 + $0x18] sm:$0xff]
    %v1501 = vld [vmem:[#allocation20 + $0x20] sm:$0xff]
    %v1502 = vld [vmem:[#allocation20 + $0x28] sm:$0xff]
    %v1503 = vld [vmem:[#allocation20 + $0x30] sm:$0xff]
    %v1504 = vld [vmem:[#allocation20 + $0x38] sm:$0xff]
    %v1505 = vld [vmem:[#allocation20 + $0x40] sm:$0xff]
    %v1506 = vld [vmem:[#allocation20 + $0x48] sm:$0xff]
    %v1507 = vld [vmem:[#allocation20 + $0x50] sm:$0xff]
    %v1508 = vld [vmem:[#allocation20 + $0x58] sm:$0xff]
    %v1509 = vld [vmem:[#allocation20 + $0x60] sm:$0xff]
    %v1510 = vld [vmem:[#allocation20 + $0x68] sm:$0xff]
    %v1511 = vld [vmem:[#allocation20 + $0x70] sm:$0xff]
    %v1512 = vld [vmem:[#allocation20 + $0x78] sm:$0xff]
    %v1513 = vld [vmem:[#allocation20 + $0x80] sm:$0xff]
    %v1514 = vld [vmem:[#allocation20 + $0x88] sm:$0xff]
    %v1515 = vld [vmem:[#allocation20 + $0x90] sm:$0xff]
    %v1516 = vld [vmem:[#allocation20 + $0x98] sm:$0xff]
    %v1517 = vld [vmem:[#allocation20 + $0xa0] sm:$0xff]
    %v1518 = vld [vmem:[#allocation20 + $0xa8] sm:$0xff]
    %v1519 = vld [vmem:[#allocation20 + $0xb0] sm:$0xff]
    %v1520 = vld [vmem:[#allocation20 + $0xb8] sm:$0xff]
    %v1521 = vld [vmem:[#allocation20 + $0xc0] sm:$0xff]
    %v1522 = vld [vmem:[#allocation20 + $0xc8] sm:$0xff]
    %v1523 = vld [vmem:[#allocation20 + $0xd0] sm:$0xff]
    %v1524 = vld [vmem:[#allocation20 + $0xd8] sm:$0xff]
    %v1525 = vld [vmem:[#allocation20 + $0xe0] sm:$0xff]
    %v1526 = vld [vmem:[#allocation20 + $0xe8] sm:$0xff]
    %v1527 = vld [vmem:[#allocation20 + $0xf0] sm:$0xff]
    %v1528 = vld [vmem:[#allocation20 + $0xf8] sm:$0xff]
    %v1529 = vld [vmem:[#allocation20 + $0x100] sm:$0xff]
    %v1530 = vld [vmem:[#allocation20 + $0x108] sm:$0xff]
    %v1531 = vld [vmem:[#allocation20 + $0x110] sm:$0xff]
    %v1532 = vld [vmem:[#allocation20 + $0x118] sm:$0xff]
    %v1533 = vld [vmem:[#allocation20 + $0x120] sm:$0xff]
    %v1534 = vld [vmem:[#allocation20 + $0x128] sm:$0xff]
    %v1535 = vld [vmem:[#allocation20 + $0x130] sm:$0xff]
    %v1536 = vld [vmem:[#allocation20 + $0x138] sm:$0xff]
    %v1537 = vld [vmem:[#allocation20 + $0x140] sm:$0xff]
    %v1538 = vld [vmem:[#allocation20 + $0x148] sm:$0xff]
    %v1539 = vld [vmem:[#allocation20 + $0x150] sm:$0xff]
    %v1540 = vld [vmem:[#allocation20 + $0x158] sm:$0xff]
    %v1541 = vld [vmem:[#allocation20 + $0x160] sm:$0xff]
    %v1542 = vld [vmem:[#allocation20 + $0x168] sm:$0xff]
    %v1543 = vld [vmem:[#allocation20 + $0x170] sm:$0xff]
    %v1544 = vld [vmem:[#allocation20 + $0x178] sm:$0xff]
    %v1545 = vld [vmem:[#allocation20 + $0x180] sm:$0xff]
    %v1546 = vld [vmem:[#allocation20 + $0x188] sm:$0xff]
    %v1547 = vld [vmem:[#allocation20 + $0x190] sm:$0xff]
    %v1548 = vld [vmem:[#allocation20 + $0x198] sm:$0xff]
    %v1549 = vld [vmem:[#allocation20 + $0x1a0] sm:$0xff]
    %v1550 = vld [vmem:[#allocation20 + $0x1a8] sm:$0xff]
    %v1551 = vld [vmem:[#allocation20 + $0x1b0] sm:$0xff]
    %v1552 = vld [vmem:[#allocation20 + $0x1b8] sm:$0xff]
    %v1553 = vld [vmem:[#allocation20 + $0x1c0] sm:$0xff]
    %v1554 = vld [vmem:[#allocation20 + $0x1c8] sm:$0xff]
    %v1555 = vld [vmem:[#allocation20 + $0x1d0] sm:$0xff]
    %v1556 = vld [vmem:[#allocation20 + $0x1d8] sm:$0xff]
    %v1557 = vld [vmem:[#allocation20 + $0x1e0] sm:$0xff]
    %v1558 = vld [vmem:[#allocation20 + $0x1e8] sm:$0xff]
    %v1559 = vld [vmem:[#allocation20 + $0x1f0] sm:$0xff]
    %v1560 = vld [vmem:[#allocation20 + $0x1f8] sm:$0xff]
    %v1561 = vld [vmem:[#allocation20 + $0x200] sm:$0xff]
    %v1562 = vld [vmem:[#allocation20 + $0x208] sm:$0xff]
    %v1563 = vld [vmem:[#allocation20 + $0x210] sm:$0xff]
    %v1564 = vld [vmem:[#allocation20 + $0x218] sm:$0xff]
    %v1565 = vld [vmem:[#allocation20 + $0x220] sm:$0xff]
    %v1566 = vld [vmem:[#allocation20 + $0x228] sm:$0xff]
    %v1567 = vld [vmem:[#allocation20 + $0x230] sm:$0xff]
    %v1568 = vld [vmem:[#allocation20 + $0x238] sm:$0xff]
    %v1569 = vld [vmem:[#allocation20 + $0x240] sm:$0xff]
    %v1570 = vld [vmem:[#allocation20 + $0x248] sm:$0xff]
    %v1571 = vld [vmem:[#allocation20 + $0x250] sm:$0xff]
    %v1572 = vld [vmem:[#allocation20 + $0x258] sm:$0xff]
    %v1573 = vld [vmem:[#allocation20 + $0x260] sm:$0xff]
    %v1574 = vld [vmem:[#allocation20 + $0x268] sm:$0xff]
    %v1575 = vld [vmem:[#allocation20 + $0x270] sm:$0xff]
    %v1576 = vld [vmem:[#allocation20 + $0x278] sm:$0xff]
    %v1577 = vld [vmem:[#allocation20 + $0x280] sm:$0xff]
    %v1578 = vld [vmem:[#allocation20 + $0x288] sm:$0xff]
    %v1579 = vld [vmem:[#allocation20 + $0x290] sm:$0xff]
    %v1580 = vld [vmem:[#allocation20 + $0x298] sm:$0xff]
    %v1581 = vld [vmem:[#allocation20 + $0x2a0] sm:$0xff]
    %v1582 = vld [vmem:[#allocation20 + $0x2a8] sm:$0xff]
    %v1583 = vld [vmem:[#allocation20 + $0x2b0] sm:$0xff]
    %v1584 = vld [vmem:[#allocation20 + $0x2b8] sm:$0xff]
    %v1585 = vld [vmem:[#allocation20 + $0x2c0] sm:$0xff]
    %v1586 = vld [vmem:[#allocation20 + $0x2c8] sm:$0xff]
    %v1587 = vld [vmem:[#allocation20 + $0x2d0] sm:$0xff]
    %v1588 = vld [vmem:[#allocation20 + $0x2d8] sm:$0xff]
    %v1589 = vld [vmem:[#allocation20 + $0x2e0] sm:$0xff]
    %v1590 = vld [vmem:[#allocation20 + $0x2e8] sm:$0xff]
    %v1591 = vld [vmem:[#allocation20 + $0x2f0] sm:$0xff]
    %v1592 = vld [vmem:[#allocation20 + $0x2f8] sm:$0xff]
    %v1593 = vld [vmem:[#allocation20 + $0x300] sm:$0xff]
    %v1594 = vld [vmem:[#allocation20 + $0x308] sm:$0xff]
    %v1595 = vld [vmem:[#allocation20 + $0x310] sm:$0xff]
    %v1596 = vld [vmem:[#allocation20 + $0x318] sm:$0xff]
    %v1597 = vld [vmem:[#allocation20 + $0x320] sm:$0xff]
    %v1598 = vld [vmem:[#allocation20 + $0x328] sm:$0xff]
    %v1599 = vld [vmem:[#allocation20 + $0x330] sm:$0xff]
    %v1600 = vld [vmem:[#allocation20 + $0x338] sm:$0xff]
    %v1601 = vld [vmem:[#allocation20 + $0x340] sm:$0xff]
    %v1602 = vld [vmem:[#allocation20 + $0x348] sm:$0xff]
    %v1603 = vld [vmem:[#allocation20 + $0x350] sm:$0xff]
    %v1604 = vld [vmem:[#allocation20 + $0x358] sm:$0xff]
    %v1605 = vld [vmem:[#allocation20 + $0x360] sm:$0xff]
    %v1606 = vld [vmem:[#allocation20 + $0x368] sm:$0xff]
    %v1607 = vld [vmem:[#allocation20 + $0x370] sm:$0xff]
    %v1608 = vld [vmem:[#allocation20 + $0x378] sm:$0xff]
    %v1609 = vld [vmem:[#allocation20 + $0x380] sm:$0xff]
    %v1610 = vld [vmem:[#allocation20 + $0x388] sm:$0xff]
    %v1611 = vld [vmem:[#allocation20 + $0x390] sm:$0xff]
    %v1612 = vld [vmem:[#allocation20 + $0x398] sm:$0xff]
    %v1613 = vld [vmem:[#allocation20 + $0x3a0] sm:$0xff]
    %v1614 = vld [vmem:[#allocation20 + $0x3a8] sm:$0xff]
    %v1615 = vld [vmem:[#allocation20 + $0x3b0] sm:$0xff]
    %v1616 = vld [vmem:[#allocation20 + $0x3b8] sm:$0xff]
    %v1617 = vld [vmem:[#allocation20 + $0x3c0] sm:$0xff]
    %v1618 = vld [vmem:[#allocation20 + $0x3c8] sm:$0xff]
    %v1619 = vld [vmem:[#allocation20 + $0x3d0] sm:$0xff]
    %v1620 = vld [vmem:[#allocation20 + $0x3d8] sm:$0xff]
    %v1621 = vld [vmem:[#allocation20 + $0x3e0] sm:$0xff]
    %v1622 = vld [vmem:[#allocation20 + $0x3e8] sm:$0xff]
    %v1623 = vld [vmem:[#allocation20 + $0x3f0] sm:$0xff]
    %v1624 = vld [vmem:[#allocation20 + $0x3f8] sm:$0xff]
    %v1625 = vpack.c.bf16 %v1493, %v1493
    %v1626 = vpack.c.bf16 %v1494, %v1494
    %v1627 = vpack.c.bf16 %v1495, %v1495
    %v1628 = vpack.c.bf16 %v1496, %v1496
    %v1629 = vld [vmem:[#allocation35 + $0x8] sm:$0xf]
    %v1631 = vlaneseq
    %v1632 = vshrl.u32 %v1631, 7
    %v1633 = vsub.s32 0, %v1632
    %v1634 = vrot.slane %v1629, %v1633
    %v1635 = vlaneseq
    %v1636 = vshrl.u32 %v1635, 7
    %v1637 = vsub.s32 1, %v1636
    %v1638 = vrot.slane %v1629, %v1637
    %v1639 = vlaneseq
    %v1640 = vshrl.u32 %v1639, 7
    %v1641 = vsub.s32 2, %v1640
    %v1642 = vrot.slane %v1629, %v1641
    %v1643 = vlaneseq
    %v1644 = vshrl.u32 %v1643, 7
    %v1645 = vsub.s32 3, %v1644
    %v1646 = vrot.slane %v1629, %v1645
    %v1779 = vunpack.c.l.b16 %v1497
    %v1780 = vunpack.c.h.b16 %v1497
    %v1781 = vunpack.c.l.b16 %v1498
    %v1782 = vunpack.c.h.b16 %v1498
    %v1783 = vunpack.c.l.b16 %v1499
    %v1784 = vunpack.c.h.b16 %v1499
    %v1785 = vunpack.c.l.b16 %v1500
    %v1786 = vunpack.c.h.b16 %v1500
    %v1787 = vunpack.c.l.b16 %v1501
    %v1788 = vunpack.c.h.b16 %v1501
    %v1789 = vunpack.c.l.b16 %v1502
    %v1790 = vunpack.c.h.b16 %v1502
    %v1791 = vunpack.c.l.b16 %v1503
    %v1792 = vunpack.c.h.b16 %v1503
    %v1793 = vunpack.c.l.b16 %v1504
    %v1794 = vunpack.c.h.b16 %v1504
    %v1795 = vunpack.c.l.b16 %v1505
    %v1796 = vunpack.c.h.b16 %v1505
    %v1797 = vunpack.c.l.b16 %v1506
    %v1798 = vunpack.c.h.b16 %v1506
    %v1799 = vunpack.c.l.b16 %v1507
    %v1800 = vunpack.c.h.b16 %v1507
    %v1801 = vunpack.c.l.b16 %v1508
    %v1802 = vunpack.c.h.b16 %v1508
    %v1803 = vunpack.c.l.b16 %v1509
    %v1804 = vunpack.c.h.b16 %v1509
    %v1805 = vunpack.c.l.b16 %v1510
    %v1806 = vunpack.c.h.b16 %v1510
    %v1807 = vunpack.c.l.b16 %v1511
    %v1808 = vunpack.c.h.b16 %v1511
    %v1809 = vunpack.c.l.b16 %v1512
    %v1810 = vunpack.c.h.b16 %v1512
    %v1811 = vunpack.c.l.b16 %v1513
    %v1812 = vunpack.c.h.b16 %v1513
    %v1813 = vunpack.c.l.b16 %v1514
    %v1814 = vunpack.c.h.b16 %v1514
    %v1815 = vunpack.c.l.b16 %v1515
    %v1816 = vunpack.c.h.b16 %v1515
    %v1817 = vunpack.c.l.b16 %v1516
    %v1818 = vunpack.c.h.b16 %v1516
    %v1819 = vunpack.c.l.b16 %v1517
    %v1820 = vunpack.c.h.b16 %v1517
    %v1821 = vunpack.c.l.b16 %v1518
    %v1822 = vunpack.c.h.b16 %v1518
    %v1823 = vunpack.c.l.b16 %v1519
    %v1824 = vunpack.c.h.b16 %v1519
    %v1825 = vunpack.c.l.b16 %v1520
    %v1826 = vunpack.c.h.b16 %v1520
    %v1827 = vunpack.c.l.b16 %v1521
    %v1828 = vunpack.c.h.b16 %v1521
    %v1829 = vunpack.c.l.b16 %v1522
    %v1830 = vunpack.c.h.b16 %v1522
    %v1831 = vunpack.c.l.b16 %v1523
    %v1832 = vunpack.c.h.b16 %v1523
    %v1833 = vunpack.c.l.b16 %v1524
    %v1834 = vunpack.c.h.b16 %v1524
    %v1835 = vunpack.c.l.b16 %v1525
    %v1836 = vunpack.c.h.b16 %v1525
    %v1837 = vunpack.c.l.b16 %v1526
    %v1838 = vunpack.c.h.b16 %v1526
    %v1839 = vunpack.c.l.b16 %v1527
    %v1840 = vunpack.c.h.b16 %v1527
    %v1841 = vunpack.c.l.b16 %v1528
    %v1842 = vunpack.c.h.b16 %v1528
    %v1843 = vunpack.c.l.b16 %v1529
    %v1844 = vunpack.c.h.b16 %v1529
    %v1845 = vunpack.c.l.b16 %v1530
    %v1846 = vunpack.c.h.b16 %v1530
    %v1847 = vunpack.c.l.b16 %v1531
    %v1848 = vunpack.c.h.b16 %v1531
    %v1849 = vunpack.c.l.b16 %v1532
    %v1850 = vunpack.c.h.b16 %v1532
    %v1851 = vunpack.c.l.b16 %v1533
    %v1852 = vunpack.c.h.b16 %v1533
    %v1853 = vunpack.c.l.b16 %v1534
    %v1854 = vunpack.c.h.b16 %v1534
    %v1855 = vunpack.c.l.b16 %v1535
    %v1856 = vunpack.c.h.b16 %v1535
    %v1857 = vunpack.c.l.b16 %v1536
    %v1858 = vunpack.c.h.b16 %v1536
    %v1859 = vunpack.c.l.b16 %v1537
    %v1860 = vunpack.c.h.b16 %v1537
    %v1861 = vunpack.c.l.b16 %v1538
    %v1862 = vunpack.c.h.b16 %v1538
    %v1863 = vunpack.c.l.b16 %v1539
    %v1864 = vunpack.c.h.b16 %v1539
    %v1865 = vunpack.c.l.b16 %v1540
    %v1866 = vunpack.c.h.b16 %v1540
    %v1867 = vunpack.c.l.b16 %v1541
    %v1868 = vunpack.c.h.b16 %v1541
    %v1869 = vunpack.c.l.b16 %v1542
    %v1870 = vunpack.c.h.b16 %v1542
    %v1871 = vunpack.c.l.b16 %v1543
    %v1872 = vunpack.c.h.b16 %v1543
    %v1873 = vunpack.c.l.b16 %v1544
    %v1874 = vunpack.c.h.b16 %v1544
    %v1875 = vunpack.c.l.b16 %v1545
    %v1876 = vunpack.c.h.b16 %v1545
    %v1877 = vunpack.c.l.b16 %v1546
    %v1878 = vunpack.c.h.b16 %v1546
    %v1879 = vunpack.c.l.b16 %v1547
    %v1880 = vunpack.c.h.b16 %v1547
    %v1881 = vunpack.c.l.b16 %v1548
    %v1882 = vunpack.c.h.b16 %v1548
    %v1883 = vunpack.c.l.b16 %v1549
    %v1884 = vunpack.c.h.b16 %v1549
    %v1885 = vunpack.c.l.b16 %v1550
    %v1886 = vunpack.c.h.b16 %v1550
    %v1887 = vunpack.c.l.b16 %v1551
    %v1888 = vunpack.c.h.b16 %v1551
    %v1889 = vunpack.c.l.b16 %v1552
    %v1890 = vunpack.c.h.b16 %v1552
    %v1891 = vunpack.c.l.b16 %v1553
    %v1892 = vunpack.c.h.b16 %v1553
    %v1893 = vunpack.c.l.b16 %v1554
    %v1894 = vunpack.c.h.b16 %v1554
    %v1895 = vunpack.c.l.b16 %v1555
    %v1896 = vunpack.c.h.b16 %v1555
    %v1897 = vunpack.c.l.b16 %v1556
    %v1898 = vunpack.c.h.b16 %v1556
    %v1899 = vunpack.c.l.b16 %v1557
    %v1900 = vunpack.c.h.b16 %v1557
    %v1901 = vunpack.c.l.b16 %v1558
    %v1902 = vunpack.c.h.b16 %v1558
    %v1903 = vunpack.c.l.b16 %v1559
    %v1904 = vunpack.c.h.b16 %v1559
    %v1905 = vunpack.c.l.b16 %v1560
    %v1906 = vunpack.c.h.b16 %v1560
    %v1907 = vunpack.c.l.b16 %v1561
    %v1908 = vunpack.c.h.b16 %v1561
    %v1909 = vunpack.c.l.b16 %v1562
    %v1910 = vunpack.c.h.b16 %v1562
    %v1911 = vunpack.c.l.b16 %v1563
    %v1912 = vunpack.c.h.b16 %v1563
    %v1913 = vunpack.c.l.b16 %v1564
    %v1914 = vunpack.c.h.b16 %v1564
    %v1915 = vunpack.c.l.b16 %v1565
    %v1916 = vunpack.c.h.b16 %v1565
    %v1917 = vunpack.c.l.b16 %v1566
    %v1918 = vunpack.c.h.b16 %v1566
    %v1919 = vunpack.c.l.b16 %v1567
    %v1920 = vunpack.c.h.b16 %v1567
    %v1921 = vunpack.c.l.b16 %v1568
    %v1922 = vunpack.c.h.b16 %v1568
    %v1923 = vunpack.c.l.b16 %v1569
    %v1924 = vunpack.c.h.b16 %v1569
    %v1925 = vunpack.c.l.b16 %v1570
    %v1926 = vunpack.c.h.b16 %v1570
    %v1927 = vunpack.c.l.b16 %v1571
    %v1928 = vunpack.c.h.b16 %v1571
    %v1929 = vunpack.c.l.b16 %v1572
    %v1930 = vunpack.c.h.b16 %v1572
    %v1931 = vunpack.c.l.b16 %v1573
    %v1932 = vunpack.c.h.b16 %v1573
    %v1933 = vunpack.c.l.b16 %v1574
    %v1934 = vunpack.c.h.b16 %v1574
    %v1935 = vunpack.c.l.b16 %v1575
    %v1936 = vunpack.c.h.b16 %v1575
    %v1937 = vunpack.c.l.b16 %v1576
    %v1938 = vunpack.c.h.b16 %v1576
    %v1939 = vunpack.c.l.b16 %v1577
    %v1940 = vunpack.c.h.b16 %v1577
    %v1941 = vunpack.c.l.b16 %v1578
    %v1942 = vunpack.c.h.b16 %v1578
    %v1943 = vunpack.c.l.b16 %v1579
    %v1944 = vunpack.c.h.b16 %v1579
    %v1945 = vunpack.c.l.b16 %v1580
    %v1946 = vunpack.c.h.b16 %v1580
    %v1947 = vunpack.c.l.b16 %v1581
    %v1948 = vunpack.c.h.b16 %v1581
    %v1949 = vunpack.c.l.b16 %v1582
    %v1950 = vunpack.c.h.b16 %v1582
    %v1951 = vunpack.c.l.b16 %v1583
    %v1952 = vunpack.c.h.b16 %v1583
    %v1953 = vunpack.c.l.b16 %v1584
    %v1954 = vunpack.c.h.b16 %v1584
    %v1955 = vunpack.c.l.b16 %v1585
    %v1956 = vunpack.c.h.b16 %v1585
    %v1957 = vunpack.c.l.b16 %v1586
    %v1958 = vunpack.c.h.b16 %v1586
    %v1959 = vunpack.c.l.b16 %v1587
    %v1960 = vunpack.c.h.b16 %v1587
    %v1961 = vunpack.c.l.b16 %v1588
    %v1962 = vunpack.c.h.b16 %v1588
    %v1963 = vunpack.c.l.b16 %v1589
    %v1964 = vunpack.c.h.b16 %v1589
    %v1965 = vunpack.c.l.b16 %v1590
    %v1966 = vunpack.c.h.b16 %v1590
    %v1967 = vunpack.c.l.b16 %v1591
    %v1968 = vunpack.c.h.b16 %v1591
    %v1969 = vunpack.c.l.b16 %v1592
    %v1970 = vunpack.c.h.b16 %v1592
    %v1971 = vunpack.c.l.b16 %v1593
    %v1972 = vunpack.c.h.b16 %v1593
    %v1973 = vunpack.c.l.b16 %v1594
    %v1974 = vunpack.c.h.b16 %v1594
    %v1975 = vunpack.c.l.b16 %v1595
    %v1976 = vunpack.c.h.b16 %v1595
    %v1977 = vunpack.c.l.b16 %v1596
    %v1978 = vunpack.c.h.b16 %v1596
    %v1979 = vunpack.c.l.b16 %v1597
    %v1980 = vunpack.c.h.b16 %v1597
    %v1981 = vunpack.c.l.b16 %v1598
    %v1982 = vunpack.c.h.b16 %v1598
    %v1983 = vunpack.c.l.b16 %v1599
    %v1984 = vunpack.c.h.b16 %v1599
    %v1985 = vunpack.c.l.b16 %v1600
    %v1986 = vunpack.c.h.b16 %v1600
    %v1987 = vunpack.c.l.b16 %v1601
    %v1988 = vunpack.c.h.b16 %v1601
    %v1989 = vunpack.c.l.b16 %v1602
    %v1990 = vunpack.c.h.b16 %v1602
    %v1991 = vunpack.c.l.b16 %v1603
    %v1992 = vunpack.c.h.b16 %v1603
    %v1993 = vunpack.c.l.b16 %v1604
    %v1994 = vunpack.c.h.b16 %v1604
    %v1995 = vunpack.c.l.b16 %v1605
    %v1996 = vunpack.c.h.b16 %v1605
    %v1997 = vunpack.c.l.b16 %v1606
    %v1998 = vunpack.c.h.b16 %v1606
    %v1999 = vunpack.c.l.b16 %v1607
    %v2000 = vunpack.c.h.b16 %v1607
    %v2001 = vunpack.c.l.b16 %v1608
    %v2002 = vunpack.c.h.b16 %v1608
    %v2003 = vunpack.c.l.b16 %v1609
    %v2004 = vunpack.c.h.b16 %v1609
    %v2005 = vunpack.c.l.b16 %v1610
    %v2006 = vunpack.c.h.b16 %v1610
    %v2007 = vunpack.c.l.b16 %v1611
    %v2008 = vunpack.c.h.b16 %v1611
    %v2009 = vunpack.c.l.b16 %v1612
    %v2010 = vunpack.c.h.b16 %v1612
    %v2011 = vunpack.c.l.b16 %v1613
    %v2012 = vunpack.c.h.b16 %v1613
    %v2013 = vunpack.c.l.b16 %v1614
    %v2014 = vunpack.c.h.b16 %v1614
    %v2015 = vunpack.c.l.b16 %v1615
    %v2016 = vunpack.c.h.b16 %v1615
    %v2017 = vunpack.c.l.b16 %v1616
    %v2018 = vunpack.c.h.b16 %v1616
    %v2019 = vunpack.c.l.b16 %v1617
    %v2020 = vunpack.c.h.b16 %v1617
    %v2021 = vunpack.c.l.b16 %v1618
    %v2022 = vunpack.c.h.b16 %v1618
    %v2023 = vunpack.c.l.b16 %v1619
    %v2024 = vunpack.c.h.b16 %v1619
    %v2025 = vunpack.c.l.b16 %v1620
    %v2026 = vunpack.c.h.b16 %v1620
    %v2027 = vunpack.c.l.b16 %v1621
    %v2028 = vunpack.c.h.b16 %v1621
    %v2029 = vunpack.c.l.b16 %v1622
    %v2030 = vunpack.c.h.b16 %v1622
    %v2031 = vunpack.c.l.b16 %v1623
    %v2032 = vunpack.c.h.b16 %v1623
    %v2033 = vunpack.c.l.b16 %v1624
    %v2034 = vunpack.c.h.b16 %v1624
    %v2035 = vpack.c.b16 %v1783, %v1779
    %v2036 = vpack.c.b16 %v1784, %v1780
    %v2037 = vpack.c.b16 %v1785, %v1781
    %v2038 = vpack.c.b16 %v1786, %v1782
    %v2039 = vpack.c.b16 %v1791, %v1787
    %v2040 = vpack.c.b16 %v1792, %v1788
    %v2041 = vpack.c.b16 %v1793, %v1789
    %v2042 = vpack.c.b16 %v1794, %v1790
    %v2043 = vpack.c.b16 %v1799, %v1795
    %v2044 = vpack.c.b16 %v1800, %v1796
    %v2045 = vpack.c.b16 %v1801, %v1797
    %v2046 = vpack.c.b16 %v1802, %v1798
    %v2047 = vpack.c.b16 %v1807, %v1803
    %v2048 = vpack.c.b16 %v1808, %v1804
    %v2049 = vpack.c.b16 %v1809, %v1805
    %v2050 = vpack.c.b16 %v1810, %v1806
    %v2051 = vpack.c.b16 %v1815, %v1811
    %v2052 = vpack.c.b16 %v1816, %v1812
    %v2053 = vpack.c.b16 %v1817, %v1813
    %v2054 = vpack.c.b16 %v1818, %v1814
    %v2055 = vpack.c.b16 %v1823, %v1819
    %v2056 = vpack.c.b16 %v1824, %v1820
    %v2057 = vpack.c.b16 %v1825, %v1821
    %v2058 = vpack.c.b16 %v1826, %v1822
    %v2059 = vpack.c.b16 %v1831, %v1827
    %v2060 = vpack.c.b16 %v1832, %v1828
    %v2061 = vpack.c.b16 %v1833, %v1829
    %v2062 = vpack.c.b16 %v1834, %v1830
    %v2063 = vpack.c.b16 %v1839, %v1835
    %v2064 = vpack.c.b16 %v1840, %v1836
    %v2065 = vpack.c.b16 %v1841, %v1837
    %v2066 = vpack.c.b16 %v1842, %v1838
    %v2067 = vpack.c.b16 %v1847, %v1843
    %v2068 = vpack.c.b16 %v1848, %v1844
    %v2069 = vpack.c.b16 %v1849, %v1845
    %v2070 = vpack.c.b16 %v1850, %v1846
    %v2071 = vpack.c.b16 %v1855, %v1851
    %v2072 = vpack.c.b16 %v1856, %v1852
    %v2073 = vpack.c.b16 %v1857, %v1853
    %v2074 = vpack.c.b16 %v1858, %v1854
    %v2075 = vpack.c.b16 %v1863, %v1859
    %v2076 = vpack.c.b16 %v1864, %v1860
    %v2077 = vpack.c.b16 %v1865, %v1861
    %v2078 = vpack.c.b16 %v1866, %v1862
    %v2079 = vpack.c.b16 %v1871, %v1867
    %v2080 = vpack.c.b16 %v1872, %v1868
    %v2081 = vpack.c.b16 %v1873, %v1869
    %v2082 = vpack.c.b16 %v1874, %v1870
    %v2083 = vpack.c.b16 %v1879, %v1875
    %v2084 = vpack.c.b16 %v1880, %v1876
    %v2085 = vpack.c.b16 %v1881, %v1877
    %v2086 = vpack.c.b16 %v1882, %v1878
    %v2087 = vpack.c.b16 %v1887, %v1883
    %v2088 = vpack.c.b16 %v1888, %v1884
    %v2089 = vpack.c.b16 %v1889, %v1885
    %v2090 = vpack.c.b16 %v1890, %v1886
    %v2091 = vpack.c.b16 %v1895, %v1891
    %v2092 = vpack.c.b16 %v1896, %v1892
    %v2093 = vpack.c.b16 %v1897, %v1893
    %v2094 = vpack.c.b16 %v1898, %v1894
    %v2095 = vpack.c.b16 %v1903, %v1899
    %v2096 = vpack.c.b16 %v1904, %v1900
    %v2097 = vpack.c.b16 %v1905, %v1901
    %v2098 = vpack.c.b16 %v1906, %v1902
    %v2099 = vpack.c.b16 %v1911, %v1907
    %v2100 = vpack.c.b16 %v1912, %v1908
    %v2101 = vpack.c.b16 %v1913, %v1909
    %v2102 = vpack.c.b16 %v1914, %v1910
    %v2103 = vpack.c.b16 %v1919, %v1915
    %v2104 = vpack.c.b16 %v1920, %v1916
    %v2105 = vpack.c.b16 %v1921, %v1917
    %v2106 = vpack.c.b16 %v1922, %v1918
    %v2107 = vpack.c.b16 %v1927, %v1923
    %v2108 = vpack.c.b16 %v1928, %v1924
    %v2109 = vpack.c.b16 %v1929, %v1925
    %v2110 = vpack.c.b16 %v1930, %v1926
    %v2111 = vpack.c.b16 %v1935, %v1931
    %v2112 = vpack.c.b16 %v1936, %v1932
    %v2113 = vpack.c.b16 %v1937, %v1933
    %v2114 = vpack.c.b16 %v1938, %v1934
    %v2115 = vpack.c.b16 %v1943, %v1939
    %v2116 = vpack.c.b16 %v1944, %v1940
    %v2117 = vpack.c.b16 %v1945, %v1941
    %v2118 = vpack.c.b16 %v1946, %v1942
    %v2119 = vpack.c.b16 %v1951, %v1947
    %v2120 = vpack.c.b16 %v1952, %v1948
    %v2121 = vpack.c.b16 %v1953, %v1949
    %v2122 = vpack.c.b16 %v1954, %v1950
    %v2123 = vpack.c.b16 %v1959, %v1955
    %v2124 = vpack.c.b16 %v1960, %v1956
    %v2125 = vpack.c.b16 %v1961, %v1957
    %v2126 = vpack.c.b16 %v1962, %v1958
    %v2127 = vpack.c.b16 %v1967, %v1963
    %v2128 = vpack.c.b16 %v1968, %v1964
    %v2129 = vpack.c.b16 %v1969, %v1965
    %v2130 = vpack.c.b16 %v1970, %v1966
    %v2131 = vpack.c.b16 %v1975, %v1971
    %v2132 = vpack.c.b16 %v1976, %v1972
    %v2133 = vpack.c.b16 %v1977, %v1973
    %v2134 = vpack.c.b16 %v1978, %v1974
    %v2135 = vpack.c.b16 %v1983, %v1979
    %v2136 = vpack.c.b16 %v1984, %v1980
    %v2137 = vpack.c.b16 %v1985, %v1981
    %v2138 = vpack.c.b16 %v1986, %v1982
    %v2139 = vpack.c.b16 %v1991, %v1987
    %v2140 = vpack.c.b16 %v1992, %v1988
    %v2141 = vpack.c.b16 %v1993, %v1989
    %v2142 = vpack.c.b16 %v1994, %v1990
    %v2143 = vpack.c.b16 %v1999, %v1995
    %v2144 = vpack.c.b16 %v2000, %v1996
    %v2145 = vpack.c.b16 %v2001, %v1997
    %v2146 = vpack.c.b16 %v2002, %v1998
    %v2147 = vpack.c.b16 %v2007, %v2003
    %v2148 = vpack.c.b16 %v2008, %v2004
    %v2149 = vpack.c.b16 %v2009, %v2005
    %v2150 = vpack.c.b16 %v2010, %v2006
    %v2151 = vpack.c.b16 %v2015, %v2011
    %v2152 = vpack.c.b16 %v2016, %v2012
    %v2153 = vpack.c.b16 %v2017, %v2013
    %v2154 = vpack.c.b16 %v2018, %v2014
    %v2155 = vpack.c.b16 %v2023, %v2019
    %v2156 = vpack.c.b16 %v2024, %v2020
    %v2157 = vpack.c.b16 %v2025, %v2021
    %v2158 = vpack.c.b16 %v2026, %v2022
    %v2159 = vpack.c.b16 %v2031, %v2027
    %v2160 = vpack.c.b16 %v2032, %v2028
    %v2161 = vpack.c.b16 %v2033, %v2029
    %v2162 = vpack.c.b16 %v2034, %v2030
    %2291 = vmatprep.subr.bf16.mxu0 %v2036
    %2292 = vmatpush1.bf16.msra.mxu0 %v2035
    %2293 = vmatprep.subr.bf16.mxu0 %v2040
    %2294 = vmatpush1.bf16.msra.mxu0 %v2039
    %2295 = vmatprep.subr.bf16.mxu0 %v2044
    %2296 = vmatpush1.bf16.msra.mxu0 %v2043
    %2297 = vmatprep.subr.bf16.mxu0 %v2048
    %2298 = vmatpush1.bf16.msra.mxu0 %v2047
    %2299 = vmatprep.subr.bf16.mxu0 %v2052
    %2300 = vmatpush1.bf16.msra.mxu0 %v2051
    %2301 = vmatprep.subr.bf16.mxu0 %v2056
    %2302 = vmatpush1.bf16.msra.mxu0 %v2055
    %2303 = vmatprep.subr.bf16.mxu0 %v2060
    %2304 = vmatpush1.bf16.msra.mxu0 %v2059
    %2305 = vmatprep.subr.bf16.mxu0 %v2064
    %2306 = vmatpush1.bf16.msra.mxu0 %v2063
    %2307 = vmatprep.subr.bf16.mxu0 %v2068
    %2308 = vmatpush1.bf16.msra.mxu0 %v2067
    %2309 = vmatprep.subr.bf16.mxu0 %v2072
    %2310 = vmatpush1.bf16.msra.mxu0 %v2071
    %2311 = vmatprep.subr.bf16.mxu0 %v2076
    %2312 = vmatpush1.bf16.msra.mxu0 %v2075
    %2313 = vmatprep.subr.bf16.mxu0 %v2080
    %2314 = vmatpush1.bf16.msra.mxu0 %v2079
    %2315 = vmatprep.subr.bf16.mxu0 %v2084
    %2316 = vmatpush1.bf16.msra.mxu0 %v2083
    %2317 = vmatprep.subr.bf16.mxu0 %v2088
    %2318 = vmatpush1.bf16.msra.mxu0 %v2087
    %2319 = vmatprep.subr.bf16.mxu0 %v2092
    %2320 = vmatpush1.bf16.msra.mxu0 %v2091
    %2321 = vmatprep.subr.bf16.mxu0 %v2096
    %2322 = vmatpush1.bf16.msra.mxu0 %v2095
    %2323 = vmatprep.mubr.bf16.mxu0 %v1626
    %2324 = vmatmul.mubr.bf16.gmra.mrb[0].mxu0 %v1625
    %v2325 = vpop.f32.mrb[0].mxu0
    %v2326 = vadd.f32 %v1634, %v2325
    %v2327 = vpop.f32.mrb[0].mxu0
    %v2328 = vadd.f32 %v1638, %v2327
    %v2329 = vpop.f32.mrb[0].mxu0
    %v2330 = vpop.f32.mrb[0].mxu0
    %2331 = vdwg.mxu0
    %2332 = vmatprep.subr.bf16.mxu0 %v2100
    %2333 = vmatpush1.bf16.msra.mxu0 %v2099
    %2334 = vmatprep.subr.bf16.mxu0 %v2104
    %2335 = vmatpush1.bf16.msra.mxu0 %v2103
    %2336 = vmatprep.subr.bf16.mxu0 %v2108
    %2337 = vmatpush1.bf16.msra.mxu0 %v2107
    %2338 = vmatprep.subr.bf16.mxu0 %v2112
    %2339 = vmatpush1.bf16.msra.mxu0 %v2111
    %2340 = vmatprep.subr.bf16.mxu0 %v2116
    %2341 = vmatpush1.bf16.msra.mxu0 %v2115
    %2342 = vmatprep.subr.bf16.mxu0 %v2120
    %2343 = vmatpush1.bf16.msra.mxu0 %v2119
    %2344 = vmatprep.subr.bf16.mxu0 %v2124
    %2345 = vmatpush1.bf16.msra.mxu0 %v2123
    %2346 = vmatprep.subr.bf16.mxu0 %v2128
    %2347 = vmatpush1.bf16.msra.mxu0 %v2127
    %2348 = vmatprep.subr.bf16.mxu0 %v2132
    %2349 = vmatpush1.bf16.msra.mxu0 %v2131
    %2350 = vmatprep.subr.bf16.mxu0 %v2136
    %2351 = vmatpush1.bf16.msra.mxu0 %v2135
    %2352 = vmatprep.subr.bf16.mxu0 %v2140
    %2353 = vmatpush1.bf16.msra.mxu0 %v2139
    %2354 = vmatprep.subr.bf16.mxu0 %v2144
    %2355 = vmatpush1.bf16.msra.mxu0 %v2143
    %2356 = vmatprep.subr.bf16.mxu0 %v2148
    %2357 = vmatpush1.bf16.msra.mxu0 %v2147
    %2358 = vmatprep.subr.bf16.mxu0 %v2152
    %2359 = vmatpush1.bf16.msra.mxu0 %v2151
    %2360 = vmatprep.subr.bf16.mxu0 %v2156
    %2361 = vmatpush1.bf16.msra.mxu0 %v2155
    %2362 = vmatprep.subr.bf16.mxu0 %v2160
    %2363 = vmatpush1.bf16.msra.mxu0 %v2159
    %2364 = vmatprep.mubr.bf16.mxu0 %v1628
    %2365 = vmatmul.mubr.bf16.gmra.mrb[0].mxu0 %v1627
    %v2366 = vpop.f32.mrb[0].mxu0
    %v2367 = vadd.f32 %v2326, %v2366
    %v2368 = vpop.f32.mrb[0].mxu0
    %v2369 = vadd.f32 %v2328, %v2368
    %v2370 = vpop.f32.mrb[0].mxu0
    %v2371 = vpop.f32.mrb[0].mxu0
    %2372 = vdwg.mxu0
    %2373 = vmatprep.subr.bf16.mxu0 %v2038
    %2374 = vmatpush1.bf16.msra.mxu0 %v2037
    %2375 = vmatprep.subr.bf16.mxu0 %v2042
    %2376 = vmatpush1.bf16.msra.mxu0 %v2041
    %2377 = vmatprep.subr.bf16.mxu0 %v2046
    %2378 = vmatpush1.bf16.msra.mxu0 %v2045
    %2379 = vmatprep.subr.bf16.mxu0 %v2050
    %2380 = vmatpush1.bf16.msra.mxu0 %v2049
    %2381 = vmatprep.subr.bf16.mxu0 %v2054
    %2382 = vmatpush1.bf16.msra.mxu0 %v2053
    %2383 = vmatprep.subr.bf16.mxu0 %v2058
    %2384 = vmatpush1.bf16.msra.mxu0 %v2057
    %2385 = vmatprep.subr.bf16.mxu0 %v2062
    %2386 = vmatpush1.bf16.msra.mxu0 %v2061
    %2387 = vmatprep.subr.bf16.mxu0 %v2066
    %2388 = vmatpush1.bf16.msra.mxu0 %v2065
    %2389 = vmatprep.subr.bf16.mxu0 %v2070
    %2390 = vmatpush1.bf16.msra.mxu0 %v2069
    %2391 = vmatprep.subr.bf16.mxu0 %v2074
    %2392 = vmatpush1.bf16.msra.mxu0 %v2073
    %2393 = vmatprep.subr.bf16.mxu0 %v2078
    %2394 = vmatpush1.bf16.msra.mxu0 %v2077
    %2395 = vmatprep.subr.bf16.mxu0 %v2082
    %2396 = vmatpush1.bf16.msra.mxu0 %v2081
    %2397 = vmatprep.subr.bf16.mxu0 %v2086
    %2398 = vmatpush1.bf16.msra.mxu0 %v2085
    %2399 = vmatprep.subr.bf16.mxu0 %v2090
    %2400 = vmatpush1.bf16.msra.mxu0 %v2089
    %2401 = vmatprep.subr.bf16.mxu0 %v2094
    %2402 = vmatpush1.bf16.msra.mxu0 %v2093
    %2403 = vmatprep.subr.bf16.mxu0 %v2098
    %2404 = vmatpush1.bf16.msra.mxu0 %v2097
    %2405 = vmatprep.mubr.bf16.mxu0 %v1626
    %2406 = vmatmul.mubr.bf16.gmra.mrb[0].mxu0 %v1625
    %v2407 = vpop.f32.mrb[0].mxu0
    %v2408 = vadd.f32 %v1642, %v2407
    %v2409 = vpop.f32.mrb[0].mxu0
    %v2410 = vadd.f32 %v1646, %v2409
    %v2411 = vpop.f32.mrb[0].mxu0
    %v2412 = vpop.f32.mrb[0].mxu0
    %2413 = vdwg.mxu0
    %2414 = vmatprep.subr.bf16.mxu0 %v2102
    %2415 = vmatpush1.bf16.msra.mxu0 %v2101
    %2416 = vmatprep.subr.bf16.mxu0 %v2106
    %2417 = vmatpush1.bf16.msra.mxu0 %v2105
    %2418 = vmatprep.subr.bf16.mxu0 %v2110
    %2419 = vmatpush1.bf16.msra.mxu0 %v2109
    %2420 = vmatprep.subr.bf16.mxu0 %v2114
    %2421 = vmatpush1.bf16.msra.mxu0 %v2113
    %2422 = vmatprep.subr.bf16.mxu0 %v2118
    %2423 = vmatpush1.bf16.msra.mxu0 %v2117
    %2424 = vmatprep.subr.bf16.mxu0 %v2122
    %2425 = vmatpush1.bf16.msra.mxu0 %v2121
    %2426 = vmatprep.subr.bf16.mxu0 %v2126
    %2427 = vmatpush1.bf16.msra.mxu0 %v2125
    %2428 = vmatprep.subr.bf16.mxu0 %v2130
    %2429 = vmatpush1.bf16.msra.mxu0 %v2129
    %2430 = vmatprep.subr.bf16.mxu0 %v2134
    %2431 = vmatpush1.bf16.msra.mxu0 %v2133
    %2432 = vmatprep.subr.bf16.mxu0 %v2138
    %2433 = vmatpush1.bf16.msra.mxu0 %v2137
    %2434 = vmatprep.subr.bf16.mxu0 %v2142
    %2435 = vmatpush1.bf16.msra.mxu0 %v2141
    %2436 = vmatprep.subr.bf16.mxu0 %v2146
    %2437 = vmatpush1.bf16.msra.mxu0 %v2145
    %2438 = vmatprep.subr.bf16.mxu0 %v2150
    %2439 = vmatpush1.bf16.msra.mxu0 %v2149
    %2440 = vmatprep.subr.bf16.mxu0 %v2154
    %2441 = vmatpush1.bf16.msra.mxu0 %v2153
    %2442 = vmatprep.subr.bf16.mxu0 %v2158
    %2443 = vmatpush1.bf16.msra.mxu0 %v2157
    %2444 = vmatprep.subr.bf16.mxu0 %v2162
    %2445 = vmatpush1.bf16.msra.mxu0 %v2161
    %2446 = vmatprep.mubr.bf16.mxu0 %v1628
    %2447 = vmatmul.mubr.bf16.gmra.mrb[0].mxu0 %v1627
    %v2448 = vpop.f32.mrb[0].mxu0
    %v2449 = vadd.f32 %v2408, %v2448
    %v2450 = vpop.f32.mrb[0].mxu0
    %v2451 = vadd.f32 %v2410, %v2450
    %v2452 = vpop.f32.mrb[0].mxu0
    %v2453 = vpop.f32.mrb[0].mxu0
    %2454 = vdwg.mxu0
    %vm2455 = vcmp.gt.f32.partialorder %v2367, 0.0
    %vm2456 = vcmp.gt.f32.partialorder %v2369, 0.0
    %vm2457 = vcmp.gt.f32.partialorder %v2449, 0.0
    %vm2458 = vcmp.gt.f32.partialorder %v2451, 0.0
    %v2459 = vmin.f32 %v2367, 0.0
    %v2460 = vmin.f32 %v2369, 0.0
    %v2461 = vmin.f32 %v2449, 0.0
    %v2462 = vmin.f32 %v2451, 0.0
    %v2463 = vmul.f32 %v2459, 1.442695
    %v2464 = vpow.pop %v2463
    %v2465 = vmul.f32 %v2460, 1.442695
    %v2466 = vpow.pop %v2465
    %v2467 = vmul.f32 %v2461, 1.442695
    %v2468 = vpow.pop %v2467
    %v2469 = vmul.f32 %v2462, 1.442695
    %v2470 = vpow.pop %v2469
    %v2471 = vsub.f32 %v2464, 1.0
    %v2472 = vsub.f32 %v2466, 1.0
    %v2473 = vsub.f32 %v2468, 1.0
    %v2474 = vsub.f32 %v2470, 1.0
    %v2475 = vsel %vm2455, %v2367, %v2471
    %v2476 = vsel %vm2456, %v2369, %v2472
    %v2477 = vsel %vm2457, %v2449, %v2473
    %v2478 = vsel %vm2458, %v2451, %v2474
    %v2479 = vld [vmem:[#allocation21] sm:$0xff]
    %v2480 = vld [vmem:[#allocation21 + $0x8] sm:$0xff]
    %v2481 = vld [vmem:[#allocation21 + $0x10] sm:$0xff]
    %v2482 = vld [vmem:[#allocation21 + $0x18] sm:$0xff]
    %v2483 = vld [vmem:[#allocation21 + $0x20] sm:$0xff]
    %v2484 = vld [vmem:[#allocation21 + $0x28] sm:$0xff]
    %v2485 = vld [vmem:[#allocation21 + $0x30] sm:$0xff]
    %v2486 = vld [vmem:[#allocation21 + $0x38] sm:$0xff]
    %v2487 = vld [vmem:[#allocation21 + $0x40] sm:$0xff]
    %v2488 = vld [vmem:[#allocation21 + $0x48] sm:$0xff]
    %v2489 = vld [vmem:[#allocation21 + $0x50] sm:$0xff]
    %v2490 = vld [vmem:[#allocation21 + $0x58] sm:$0xff]
    %v2491 = vld [vmem:[#allocation21 + $0x60] sm:$0xff]
    %v2492 = vld [vmem:[#allocation21 + $0x68] sm:$0xff]
    %v2493 = vld [vmem:[#allocation21 + $0x70] sm:$0xff]
    %v2494 = vld [vmem:[#allocation21 + $0x78] sm:$0xff]
    %v2495 = vld [vmem:[#allocation21 + $0x80] sm:$0xff]
    %v2496 = vld [vmem:[#allocation21 + $0x88] sm:$0xff]
    %v2497 = vld [vmem:[#allocation21 + $0x90] sm:$0xff]
    %v2498 = vld [vmem:[#allocation21 + $0x98] sm:$0xff]
    %v2499 = vld [vmem:[#allocation21 + $0xa0] sm:$0xff]
    %v2500 = vld [vmem:[#allocation21 + $0xa8] sm:$0xff]
    %v2501 = vld [vmem:[#allocation21 + $0xb0] sm:$0xff]
    %v2502 = vld [vmem:[#allocation21 + $0xb8] sm:$0xff]
    %v2503 = vld [vmem:[#allocation21 + $0xc0] sm:$0xff]
    %v2504 = vld [vmem:[#allocation21 + $0xc8] sm:$0xff]
    %v2505 = vld [vmem:[#allocation21 + $0xd0] sm:$0xff]
    %v2506 = vld [vmem:[#allocation21 + $0xd8] sm:$0xff]
    %v2507 = vld [vmem:[#allocation21 + $0xe0] sm:$0xff]
    %v2508 = vld [vmem:[#allocation21 + $0xe8] sm:$0xff]
    %v2509 = vld [vmem:[#allocation21 + $0xf0] sm:$0xff]
    %v2510 = vld [vmem:[#allocation21 + $0xf8] sm:$0xff]
    %v2511 = vld [vmem:[#allocation21 + $0x100] sm:$0xff]
    %v2512 = vld [vmem:[#allocation21 + $0x108] sm:$0xff]
    %v2513 = vld [vmem:[#allocation21 + $0x110] sm:$0xff]
    %v2514 = vld [vmem:[#allocation21 + $0x118] sm:$0xff]
    %v2515 = vld [vmem:[#allocation21 + $0x120] sm:$0xff]
    %v2516 = vld [vmem:[#allocation21 + $0x128] sm:$0xff]
    %v2517 = vld [vmem:[#allocation21 + $0x130] sm:$0xff]
    %v2518 = vld [vmem:[#allocation21 + $0x138] sm:$0xff]
    %v2519 = vld [vmem:[#allocation21 + $0x140] sm:$0xff]
    %v2520 = vld [vmem:[#allocation21 + $0x148] sm:$0xff]
    %v2521 = vld [vmem:[#allocation21 + $0x150] sm:$0xff]
    %v2522 = vld [vmem:[#allocation21 + $0x158] sm:$0xff]
    %v2523 = vld [vmem:[#allocation21 + $0x160] sm:$0xff]
    %v2524 = vld [vmem:[#allocation21 + $0x168] sm:$0xff]
    %v2525 = vld [vmem:[#allocation21 + $0x170] sm:$0xff]
    %v2526 = vld [vmem:[#allocation21 + $0x178] sm:$0xff]
    %v2527 = vld [vmem:[#allocation21 + $0x180] sm:$0xff]
    %v2528 = vld [vmem:[#allocation21 + $0x188] sm:$0xff]
    %v2529 = vld [vmem:[#allocation21 + $0x190] sm:$0xff]
    %v2530 = vld [vmem:[#allocation21 + $0x198] sm:$0xff]
    %v2531 = vld [vmem:[#allocation21 + $0x1a0] sm:$0xff]
    %v2532 = vld [vmem:[#allocation21 + $0x1a8] sm:$0xff]
    %v2533 = vld [vmem:[#allocation21 + $0x1b0] sm:$0xff]
    %v2534 = vld [vmem:[#allocation21 + $0x1b8] sm:$0xff]
    %v2535 = vld [vmem:[#allocation21 + $0x1c0] sm:$0xff]
    %v2536 = vld [vmem:[#allocation21 + $0x1c8] sm:$0xff]
    %v2537 = vld [vmem:[#allocation21 + $0x1d0] sm:$0xff]
    %v2538 = vld [vmem:[#allocation21 + $0x1d8] sm:$0xff]
    %v2539 = vld [vmem:[#allocation21 + $0x1e0] sm:$0xff]
    %v2540 = vld [vmem:[#allocation21 + $0x1e8] sm:$0xff]
    %v2541 = vld [vmem:[#allocation21 + $0x1f0] sm:$0xff]
    %v2542 = vld [vmem:[#allocation21 + $0x1f8] sm:$0xff]
    %v2543 = vld [vmem:[#allocation21 + $0x200] sm:$0xff]
    %v2544 = vld [vmem:[#allocation21 + $0x208] sm:$0xff]
    %v2545 = vld [vmem:[#allocation21 + $0x210] sm:$0xff]
    %v2546 = vld [vmem:[#allocation21 + $0x218] sm:$0xff]
    %v2547 = vld [vmem:[#allocation21 + $0x220] sm:$0xff]
    %v2548 = vld [vmem:[#allocation21 + $0x228] sm:$0xff]
    %v2549 = vld [vmem:[#allocation21 + $0x230] sm:$0xff]
    %v2550 = vld [vmem:[#allocation21 + $0x238] sm:$0xff]
    %v2551 = vld [vmem:[#allocation21 + $0x240] sm:$0xff]
    %v2552 = vld [vmem:[#allocation21 + $0x248] sm:$0xff]
    %v2553 = vld [vmem:[#allocation21 + $0x250] sm:$0xff]
    %v2554 = vld [vmem:[#allocation21 + $0x258] sm:$0xff]
    %v2555 = vld [vmem:[#allocation21 + $0x260] sm:$0xff]
    %v2556 = vld [vmem:[#allocation21 + $0x268] sm:$0xff]
    %v2557 = vld [vmem:[#allocation21 + $0x270] sm:$0xff]
    %v2558 = vld [vmem:[#allocation21 + $0x278] sm:$0xff]
    %v2559 = vld [vmem:[#allocation21 + $0x280] sm:$0xff]
    %v2560 = vld [vmem:[#allocation21 + $0x288] sm:$0xff]
    %v2561 = vld [vmem:[#allocation21 + $0x290] sm:$0xff]
    %v2562 = vld [vmem:[#allocation21 + $0x298] sm:$0xff]
    %v2563 = vld [vmem:[#allocation21 + $0x2a0] sm:$0xff]
    %v2564 = vld [vmem:[#allocation21 + $0x2a8] sm:$0xff]
    %v2565 = vld [vmem:[#allocation21 + $0x2b0] sm:$0xff]
    %v2566 = vld [vmem:[#allocation21 + $0x2b8] sm:$0xff]
    %v2567 = vld [vmem:[#allocation21 + $0x2c0] sm:$0xff]
    %v2568 = vld [vmem:[#allocation21 + $0x2c8] sm:$0xff]
    %v2569 = vld [vmem:[#allocation21 + $0x2d0] sm:$0xff]
    %v2570 = vld [vmem:[#allocation21 + $0x2d8] sm:$0xff]
    %v2571 = vld [vmem:[#allocation21 + $0x2e0] sm:$0xff]
    %v2572 = vld [vmem:[#allocation21 + $0x2e8] sm:$0xff]
    %v2573 = vld [vmem:[#allocation21 + $0x2f0] sm:$0xff]
    %v2574 = vld [vmem:[#allocation21 + $0x2f8] sm:$0xff]
    %v2575 = vld [vmem:[#allocation21 + $0x300] sm:$0xff]
    %v2576 = vld [vmem:[#allocation21 + $0x308] sm:$0xff]
    %v2577 = vld [vmem:[#allocation21 + $0x310] sm:$0xff]
    %v2578 = vld [vmem:[#allocation21 + $0x318] sm:$0xff]
    %v2579 = vld [vmem:[#allocation21 + $0x320] sm:$0xff]
    %v2580 = vld [vmem:[#allocation21 + $0x328] sm:$0xff]
    %v2581 = vld [vmem:[#allocation21 + $0x330] sm:$0xff]
    %v2582 = vld [vmem:[#allocation21 + $0x338] sm:$0xff]
    %v2583 = vld [vmem:[#allocation21 + $0x340] sm:$0xff]
    %v2584 = vld [vmem:[#allocation21 + $0x348] sm:$0xff]
    %v2585 = vld [vmem:[#allocation21 + $0x350] sm:$0xff]
    %v2586 = vld [vmem:[#allocation21 + $0x358] sm:$0xff]
    %v2587 = vld [vmem:[#allocation21 + $0x360] sm:$0xff]
    %v2588 = vld [vmem:[#allocation21 + $0x368] sm:$0xff]
    %v2589 = vld [vmem:[#allocation21 + $0x370] sm:$0xff]
    %v2590 = vld [vmem:[#allocation21 + $0x378] sm:$0xff]
    %v2591 = vld [vmem:[#allocation21 + $0x380] sm:$0xff]
    %v2592 = vld [vmem:[#allocation21 + $0x388] sm:$0xff]
    %v2593 = vld [vmem:[#allocation21 + $0x390] sm:$0xff]
    %v2594 = vld [vmem:[#allocation21 + $0x398] sm:$0xff]
    %v2595 = vld [vmem:[#allocation21 + $0x3a0] sm:$0xff]
    %v2596 = vld [vmem:[#allocation21 + $0x3a8] sm:$0xff]
    %v2597 = vld [vmem:[#allocation21 + $0x3b0] sm:$0xff]
    %v2598 = vld [vmem:[#allocation21 + $0x3b8] sm:$0xff]
    %v2599 = vld [vmem:[#allocation21 + $0x3c0] sm:$0xff]
    %v2600 = vld [vmem:[#allocation21 + $0x3c8] sm:$0xff]
    %v2601 = vld [vmem:[#allocation21 + $0x3d0] sm:$0xff]
    %v2602 = vld [vmem:[#allocation21 + $0x3d8] sm:$0xff]
    %v2603 = vld [vmem:[#allocation21 + $0x3e0] sm:$0xff]
    %v2604 = vld [vmem:[#allocation21 + $0x3e8] sm:$0xff]
    %v2605 = vld [vmem:[#allocation21 + $0x3f0] sm:$0xff]
    %v2606 = vld [vmem:[#allocation21 + $0x3f8] sm:$0xff]
    %v2607 = vpack.c.bf16 %v2475, %v2475
    %v2608 = vpack.c.bf16 %v2476, %v2476
    %v2609 = vpack.c.bf16 %v2477, %v2477
    %v2610 = vpack.c.bf16 %v2478, %v2478
    %v2611 = vld [vmem:[#allocation35 + $0xc] sm:$0xf]
    %v2613 = vlaneseq
    %v2614 = vshrl.u32 %v2613, 7
    %v2615 = vsub.s32 0, %v2614
    %v2616 = vrot.slane %v2611, %v2615
    %v2617 = vlaneseq
    %v2618 = vshrl.u32 %v2617, 7
    %v2619 = vsub.s32 1, %v2618
    %v2620 = vrot.slane %v2611, %v2619
    %v2621 = vlaneseq
    %v2622 = vshrl.u32 %v2621, 7
    %v2623 = vsub.s32 2, %v2622
    %v2624 = vrot.slane %v2611, %v2623
    %v2625 = vlaneseq
    %v2626 = vshrl.u32 %v2625, 7
    %v2627 = vsub.s32 3, %v2626
    %v2628 = vrot.slane %v2611, %v2627
    %v2761 = vunpack.c.l.b16 %v2479
    %v2762 = vunpack.c.h.b16 %v2479
    %v2763 = vunpack.c.l.b16 %v2480
    %v2764 = vunpack.c.h.b16 %v2480
    %v2765 = vunpack.c.l.b16 %v2481
    %v2766 = vunpack.c.h.b16 %v2481
    %v2767 = vunpack.c.l.b16 %v2482
    %v2768 = vunpack.c.h.b16 %v2482
    %v2769 = vunpack.c.l.b16 %v2483
    %v2770 = vunpack.c.h.b16 %v2483
    %v2771 = vunpack.c.l.b16 %v2484
    %v2772 = vunpack.c.h.b16 %v2484
    %v2773 = vunpack.c.l.b16 %v2485
    %v2774 = vunpack.c.h.b16 %v2485
    %v2775 = vunpack.c.l.b16 %v2486
    %v2776 = vunpack.c.h.b16 %v2486
    %v2777 = vunpack.c.l.b16 %v2487
    %v2778 = vunpack.c.h.b16 %v2487
    %v2779 = vunpack.c.l.b16 %v2488
    %v2780 = vunpack.c.h.b16 %v2488
    %v2781 = vunpack.c.l.b16 %v2489
    %v2782 = vunpack.c.h.b16 %v2489
    %v2783 = vunpack.c.l.b16 %v2490
    %v2784 = vunpack.c.h.b16 %v2490
    %v2785 = vunpack.c.l.b16 %v2491
    %v2786 = vunpack.c.h.b16 %v2491
    %v2787 = vunpack.c.l.b16 %v2492
    %v2788 = vunpack.c.h.b16 %v2492
    %v2789 = vunpack.c.l.b16 %v2493
    %v2790 = vunpack.c.h.b16 %v2493
    %v2791 = vunpack.c.l.b16 %v2494
    %v2792 = vunpack.c.h.b16 %v2494
    %v2793 = vunpack.c.l.b16 %v2495
    %v2794 = vunpack.c.h.b16 %v2495
    %v2795 = vunpack.c.l.b16 %v2496
    %v2796 = vunpack.c.h.b16 %v2496
    %v2797 = vunpack.c.l.b16 %v2497
    %v2798 = vunpack.c.h.b16 %v2497
    %v2799 = vunpack.c.l.b16 %v2498
    %v2800 = vunpack.c.h.b16 %v2498
    %v2801 = vunpack.c.l.b16 %v2499
    %v2802 = vunpack.c.h.b16 %v2499
    %v2803 = vunpack.c.l.b16 %v2500
    %v2804 = vunpack.c.h.b16 %v2500
    %v2805 = vunpack.c.l.b16 %v2501
    %v2806 = vunpack.c.h.b16 %v2501
    %v2807 = vunpack.c.l.b16 %v2502
    %v2808 = vunpack.c.h.b16 %v2502
    %v2809 = vunpack.c.l.b16 %v2503
    %v2810 = vunpack.c.h.b16 %v2503
    %v2811 = vunpack.c.l.b16 %v2504
    %v2812 = vunpack.c.h.b16 %v2504
    %v2813 = vunpack.c.l.b16 %v2505
    %v2814 = vunpack.c.h.b16 %v2505
    %v2815 = vunpack.c.l.b16 %v2506
    %v2816 = vunpack.c.h.b16 %v2506
    %v2817 = vunpack.c.l.b16 %v2507
    %v2818 = vunpack.c.h.b16 %v2507
    %v2819 = vunpack.c.l.b16 %v2508
    %v2820 = vunpack.c.h.b16 %v2508
    %v2821 = vunpack.c.l.b16 %v2509
    %v2822 = vunpack.c.h.b16 %v2509
    %v2823 = vunpack.c.l.b16 %v2510
    %v2824 = vunpack.c.h.b16 %v2510
    %v2825 = vunpack.c.l.b16 %v2511
    %v2826 = vunpack.c.h.b16 %v2511
    %v2827 = vunpack.c.l.b16 %v2512
    %v2828 = vunpack.c.h.b16 %v2512
    %v2829 = vunpack.c.l.b16 %v2513
    %v2830 = vunpack.c.h.b16 %v2513
    %v2831 = vunpack.c.l.b16 %v2514
    %v2832 = vunpack.c.h.b16 %v2514
    %v2833 = vunpack.c.l.b16 %v2515
    %v2834 = vunpack.c.h.b16 %v2515
    %v2835 = vunpack.c.l.b16 %v2516
    %v2836 = vunpack.c.h.b16 %v2516
    %v2837 = vunpack.c.l.b16 %v2517
    %v2838 = vunpack.c.h.b16 %v2517
    %v2839 = vunpack.c.l.b16 %v2518
    %v2840 = vunpack.c.h.b16 %v2518
    %v2841 = vunpack.c.l.b16 %v2519
    %v2842 = vunpack.c.h.b16 %v2519
    %v2843 = vunpack.c.l.b16 %v2520
    %v2844 = vunpack.c.h.b16 %v2520
    %v2845 = vunpack.c.l.b16 %v2521
    %v2846 = vunpack.c.h.b16 %v2521
    %v2847 = vunpack.c.l.b16 %v2522
    %v2848 = vunpack.c.h.b16 %v2522
    %v2849 = vunpack.c.l.b16 %v2523
    %v2850 = vunpack.c.h.b16 %v2523
    %v2851 = vunpack.c.l.b16 %v2524
    %v2852 = vunpack.c.h.b16 %v2524
    %v2853 = vunpack.c.l.b16 %v2525
    %v2854 = vunpack.c.h.b16 %v2525
    %v2855 = vunpack.c.l.b16 %v2526
    %v2856 = vunpack.c.h.b16 %v2526
    %v2857 = vunpack.c.l.b16 %v2527
    %v2858 = vunpack.c.h.b16 %v2527
    %v2859 = vunpack.c.l.b16 %v2528
    %v2860 = vunpack.c.h.b16 %v2528
    %v2861 = vunpack.c.l.b16 %v2529
    %v2862 = vunpack.c.h.b16 %v2529
    %v2863 = vunpack.c.l.b16 %v2530
    %v2864 = vunpack.c.h.b16 %v2530
    %v2865 = vunpack.c.l.b16 %v2531
    %v2866 = vunpack.c.h.b16 %v2531
    %v2867 = vunpack.c.l.b16 %v2532
    %v2868 = vunpack.c.h.b16 %v2532
    %v2869 = vunpack.c.l.b16 %v2533
    %v2870 = vunpack.c.h.b16 %v2533
    %v2871 = vunpack.c.l.b16 %v2534
    %v2872 = vunpack.c.h.b16 %v2534
    %v2873 = vunpack.c.l.b16 %v2535
    %v2874 = vunpack.c.h.b16 %v2535
    %v2875 = vunpack.c.l.b16 %v2536
    %v2876 = vunpack.c.h.b16 %v2536
    %v2877 = vunpack.c.l.b16 %v2537
    %v2878 = vunpack.c.h.b16 %v2537
    %v2879 = vunpack.c.l.b16 %v2538
    %v2880 = vunpack.c.h.b16 %v2538
    %v2881 = vunpack.c.l.b16 %v2539
    %v2882 = vunpack.c.h.b16 %v2539
    %v2883 = vunpack.c.l.b16 %v2540
    %v2884 = vunpack.c.h.b16 %v2540
    %v2885 = vunpack.c.l.b16 %v2541
    %v2886 = vunpack.c.h.b16 %v2541
    %v2887 = vunpack.c.l.b16 %v2542
    %v2888 = vunpack.c.h.b16 %v2542
    %v2889 = vunpack.c.l.b16 %v2543
    %v2890 = vunpack.c.h.b16 %v2543
    %v2891 = vunpack.c.l.b16 %v2544
    %v2892 = vunpack.c.h.b16 %v2544
    %v2893 = vunpack.c.l.b16 %v2545
    %v2894 = vunpack.c.h.b16 %v2545
    %v2895 = vunpack.c.l.b16 %v2546
    %v2896 = vunpack.c.h.b16 %v2546
    %v2897 = vunpack.c.l.b16 %v2547
    %v2898 = vunpack.c.h.b16 %v2547
    %v2899 = vunpack.c.l.b16 %v2548
    %v2900 = vunpack.c.h.b16 %v2548
    %v2901 = vunpack.c.l.b16 %v2549
    %v2902 = vunpack.c.h.b16 %v2549
    %v2903 = vunpack.c.l.b16 %v2550
    %v2904 = vunpack.c.h.b16 %v2550
    %v2905 = vunpack.c.l.b16 %v2551
    %v2906 = vunpack.c.h.b16 %v2551
    %v2907 = vunpack.c.l.b16 %v2552
    %v2908 = vunpack.c.h.b16 %v2552
    %v2909 = vunpack.c.l.b16 %v2553
    %v2910 = vunpack.c.h.b16 %v2553
    %v2911 = vunpack.c.l.b16 %v2554
    %v2912 = vunpack.c.h.b16 %v2554
    %v2913 = vunpack.c.l.b16 %v2555
    %v2914 = vunpack.c.h.b16 %v2555
    %v2915 = vunpack.c.l.b16 %v2556
    %v2916 = vunpack.c.h.b16 %v2556
    %v2917 = vunpack.c.l.b16 %v2557
    %v2918 = vunpack.c.h.b16 %v2557
    %v2919 = vunpack.c.l.b16 %v2558
    %v2920 = vunpack.c.h.b16 %v2558
    %v2921 = vunpack.c.l.b16 %v2559
    %v2922 = vunpack.c.h.b16 %v2559
    %v2923 = vunpack.c.l.b16 %v2560
    %v2924 = vunpack.c.h.b16 %v2560
    %v2925 = vunpack.c.l.b16 %v2561
    %v2926 = vunpack.c.h.b16 %v2561
    %v2927 = vunpack.c.l.b16 %v2562
    %v2928 = vunpack.c.h.b16 %v2562
    %v2929 = vunpack.c.l.b16 %v2563
    %v2930 = vunpack.c.h.b16 %v2563
    %v2931 = vunpack.c.l.b16 %v2564
    %v2932 = vunpack.c.h.b16 %v2564
    %v2933 = vunpack.c.l.b16 %v2565
    %v2934 = vunpack.c.h.b16 %v2565
    %v2935 = vunpack.c.l.b16 %v2566
    %v2936 = vunpack.c.h.b16 %v2566
    %v2937 = vunpack.c.l.b16 %v2567
    %v2938 = vunpack.c.h.b16 %v2567
    %v2939 = vunpack.c.l.b16 %v2568
    %v2940 = vunpack.c.h.b16 %v2568
    %v2941 = vunpack.c.l.b16 %v2569
    %v2942 = vunpack.c.h.b16 %v2569
    %v2943 = vunpack.c.l.b16 %v2570
    %v2944 = vunpack.c.h.b16 %v2570
    %v2945 = vunpack.c.l.b16 %v2571
    %v2946 = vunpack.c.h.b16 %v2571
    %v2947 = vunpack.c.l.b16 %v2572
    %v2948 = vunpack.c.h.b16 %v2572
    %v2949 = vunpack.c.l.b16 %v2573
    %v2950 = vunpack.c.h.b16 %v2573
    %v2951 = vunpack.c.l.b16 %v2574
    %v2952 = vunpack.c.h.b16 %v2574
    %v2953 = vunpack.c.l.b16 %v2575
    %v2954 = vunpack.c.h.b16 %v2575
    %v2955 = vunpack.c.l.b16 %v2576
    %v2956 = vunpack.c.h.b16 %v2576
    %v2957 = vunpack.c.l.b16 %v2577
    %v2958 = vunpack.c.h.b16 %v2577
    %v2959 = vunpack.c.l.b16 %v2578
    %v2960 = vunpack.c.h.b16 %v2578
    %v2961 = vunpack.c.l.b16 %v2579
    %v2962 = vunpack.c.h.b16 %v2579
    %v2963 = vunpack.c.l.b16 %v2580
    %v2964 = vunpack.c.h.b16 %v2580
    %v2965 = vunpack.c.l.b16 %v2581
    %v2966 = vunpack.c.h.b16 %v2581
    %v2967 = vunpack.c.l.b16 %v2582
    %v2968 = vunpack.c.h.b16 %v2582
    %v2969 = vunpack.c.l.b16 %v2583
    %v2970 = vunpack.c.h.b16 %v2583
    %v2971 = vunpack.c.l.b16 %v2584
    %v2972 = vunpack.c.h.b16 %v2584
    %v2973 = vunpack.c.l.b16 %v2585
    %v2974 = vunpack.c.h.b16 %v2585
    %v2975 = vunpack.c.l.b16 %v2586
    %v2976 = vunpack.c.h.b16 %v2586
    %v2977 = vunpack.c.l.b16 %v2587
    %v2978 = vunpack.c.h.b16 %v2587
    %v2979 = vunpack.c.l.b16 %v2588
    %v2980 = vunpack.c.h.b16 %v2588
    %v2981 = vunpack.c.l.b16 %v2589
    %v2982 = vunpack.c.h.b16 %v2589
    %v2983 = vunpack.c.l.b16 %v2590
    %v2984 = vunpack.c.h.b16 %v2590
    %v2985 = vunpack.c.l.b16 %v2591
    %v2986 = vunpack.c.h.b16 %v2591
    %v2987 = vunpack.c.l.b16 %v2592
    %v2988 = vunpack.c.h.b16 %v2592
    %v2989 = vunpack.c.l.b16 %v2593
    %v2990 = vunpack.c.h.b16 %v2593
    %v2991 = vunpack.c.l.b16 %v2594
    %v2992 = vunpack.c.h.b16 %v2594
    %v2993 = vunpack.c.l.b16 %v2595
    %v2994 = vunpack.c.h.b16 %v2595
    %v2995 = vunpack.c.l.b16 %v2596
    %v2996 = vunpack.c.h.b16 %v2596
    %v2997 = vunpack.c.l.b16 %v2597
    %v2998 = vunpack.c.h.b16 %v2597
    %v2999 = vunpack.c.l.b16 %v2598
    %v3000 = vunpack.c.h.b16 %v2598
    %v3001 = vunpack.c.l.b16 %v2599
    %v3002 = vunpack.c.h.b16 %v2599
    %v3003 = vunpack.c.l.b16 %v2600
    %v3004 = vunpack.c.h.b16 %v2600
    %v3005 = vunpack.c.l.b16 %v2601
    %v3006 = vunpack.c.h.b16 %v2601
    %v3007 = vunpack.c.l.b16 %v2602
    %v3008 = vunpack.c.h.b16 %v2602
    %v3009 = vunpack.c.l.b16 %v2603
    %v3010 = vunpack.c.h.b16 %v2603
    %v3011 = vunpack.c.l.b16 %v2604
    %v3012 = vunpack.c.h.b16 %v2604
    %v3013 = vunpack.c.l.b16 %v2605
    %v3014 = vunpack.c.h.b16 %v2605
    %v3015 = vunpack.c.l.b16 %v2606
    %v3016 = vunpack.c.h.b16 %v2606
    %v3017 = vpack.c.b16 %v2765, %v2761
    %v3018 = vpack.c.b16 %v2766, %v2762
    %v3019 = vpack.c.b16 %v2767, %v2763
    %v3020 = vpack.c.b16 %v2768, %v2764
    %v3021 = vpack.c.b16 %v2773, %v2769
    %v3022 = vpack.c.b16 %v2774, %v2770
    %v3023 = vpack.c.b16 %v2775, %v2771
    %v3024 = vpack.c.b16 %v2776, %v2772
    %v3025 = vpack.c.b16 %v2781, %v2777
    %v3026 = vpack.c.b16 %v2782, %v2778
    %v3027 = vpack.c.b16 %v2783, %v2779
    %v3028 = vpack.c.b16 %v2784, %v2780
    %v3029 = vpack.c.b16 %v2789, %v2785
    %v3030 = vpack.c.b16 %v2790, %v2786
    %v3031 = vpack.c.b16 %v2791, %v2787
    %v3032 = vpack.c.b16 %v2792, %v2788
    %v3033 = vpack.c.b16 %v2797, %v2793
    %v3034 = vpack.c.b16 %v2798, %v2794
    %v3035 = vpack.c.b16 %v2799, %v2795
    %v3036 = vpack.c.b16 %v2800, %v2796
    %v3037 = vpack.c.b16 %v2805, %v2801
    %v3038 = vpack.c.b16 %v2806, %v2802
    %v3039 = vpack.c.b16 %v2807, %v2803
    %v3040 = vpack.c.b16 %v2808, %v2804
    %v3041 = vpack.c.b16 %v2813, %v2809
    %v3042 = vpack.c.b16 %v2814, %v2810
    %v3043 = vpack.c.b16 %v2815, %v2811
    %v3044 = vpack.c.b16 %v2816, %v2812
    %v3045 = vpack.c.b16 %v2821, %v2817
    %v3046 = vpack.c.b16 %v2822, %v2818
    %v3047 = vpack.c.b16 %v2823, %v2819
    %v3048 = vpack.c.b16 %v2824, %v2820
    %v3049 = vpack.c.b16 %v2829, %v2825
    %v3050 = vpack.c.b16 %v2830, %v2826
    %v3051 = vpack.c.b16 %v2831, %v2827
    %v3052 = vpack.c.b16 %v2832, %v2828
    %v3053 = vpack.c.b16 %v2837, %v2833
    %v3054 = vpack.c.b16 %v2838, %v2834
    %v3055 = vpack.c.b16 %v2839, %v2835
    %v3056 = vpack.c.b16 %v2840, %v2836
    %v3057 = vpack.c.b16 %v2845, %v2841
    %v3058 = vpack.c.b16 %v2846, %v2842
    %v3059 = vpack.c.b16 %v2847, %v2843
    %v3060 = vpack.c.b16 %v2848, %v2844
    %v3061 = vpack.c.b16 %v2853, %v2849
    %v3062 = vpack.c.b16 %v2854, %v2850
    %v3063 = vpack.c.b16 %v2855, %v2851
    %v3064 = vpack.c.b16 %v2856, %v2852
    %v3065 = vpack.c.b16 %v2861, %v2857
    %v3066 = vpack.c.b16 %v2862, %v2858
    %v3067 = vpack.c.b16 %v2863, %v2859
    %v3068 = vpack.c.b16 %v2864, %v2860
    %v3069 = vpack.c.b16 %v2869, %v2865
    %v3070 = vpack.c.b16 %v2870, %v2866
    %v3071 = vpack.c.b16 %v2871, %v2867
    %v3072 = vpack.c.b16 %v2872, %v2868
    %v3073 = vpack.c.b16 %v2877, %v2873
    %v3074 = vpack.c.b16 %v2878, %v2874
    %v3075 = vpack.c.b16 %v2879, %v2875
    %v3076 = vpack.c.b16 %v2880, %v2876
    %v3077 = vpack.c.b16 %v2885, %v2881
    %v3078 = vpack.c.b16 %v2886, %v2882
    %v3079 = vpack.c.b16 %v2887, %v2883
    %v3080 = vpack.c.b16 %v2888, %v2884
    %v3081 = vpack.c.b16 %v2893, %v2889
    %v3082 = vpack.c.b16 %v2894, %v2890
    %v3083 = vpack.c.b16 %v2895, %v2891
    %v3084 = vpack.c.b16 %v2896, %v2892
    %v3085 = vpack.c.b16 %v2901, %v2897
    %v3086 = vpack.c.b16 %v2902, %v2898
    %v3087 = vpack.c.b16 %v2903, %v2899
    %v3088 = vpack.c.b16 %v2904, %v2900
    %v3089 = vpack.c.b16 %v2909, %v2905
    %v3090 = vpack.c.b16 %v2910, %v2906
    %v3091 = vpack.c.b16 %v2911, %v2907
    %v3092 = vpack.c.b16 %v2912, %v2908
    %v3093 = vpack.c.b16 %v2917, %v2913
    %v3094 = vpack.c.b16 %v2918, %v2914
    %v3095 = vpack.c.b16 %v2919, %v2915
    %v3096 = vpack.c.b16 %v2920, %v2916
    %v3097 = vpack.c.b16 %v2925, %v2921
    %v3098 = vpack.c.b16 %v2926, %v2922
    %v3099 = vpack.c.b16 %v2927, %v2923
    %v3100 = vpack.c.b16 %v2928, %v2924
    %v3101 = vpack.c.b16 %v2933, %v2929
    %v3102 = vpack.c.b16 %v2934, %v2930
    %v3103 = vpack.c.b16 %v2935, %v2931
    %v3104 = vpack.c.b16 %v2936, %v2932
    %v3105 = vpack.c.b16 %v2941, %v2937
    %v3106 = vpack.c.b16 %v2942, %v2938
    %v3107 = vpack.c.b16 %v2943, %v2939
    %v3108 = vpack.c.b16 %v2944, %v2940
    %v3109 = vpack.c.b16 %v2949, %v2945
    %v3110 = vpack.c.b16 %v2950, %v2946
    %v3111 = vpack.c.b16 %v2951, %v2947
    %v3112 = vpack.c.b16 %v2952, %v2948
    %v3113 = vpack.c.b16 %v2957, %v2953
    %v3114 = vpack.c.b16 %v2958, %v2954
    %v3115 = vpack.c.b16 %v2959, %v2955
    %v3116 = vpack.c.b16 %v2960, %v2956
    %v3117 = vpack.c.b16 %v2965, %v2961
    %v3118 = vpack.c.b16 %v2966, %v2962
    %v3119 = vpack.c.b16 %v2967, %v2963
    %v3120 = vpack.c.b16 %v2968, %v2964
    %v3121 = vpack.c.b16 %v2973, %v2969
    %v3122 = vpack.c.b16 %v2974, %v2970
    %v3123 = vpack.c.b16 %v2975, %v2971
    %v3124 = vpack.c.b16 %v2976, %v2972
    %v3125 = vpack.c.b16 %v2981, %v2977
    %v3126 = vpack.c.b16 %v2982, %v2978
    %v3127 = vpack.c.b16 %v2983, %v2979
    %v3128 = vpack.c.b16 %v2984, %v2980
    %v3129 = vpack.c.b16 %v2989, %v2985
    %v3130 = vpack.c.b16 %v2990, %v2986
    %v3131 = vpack.c.b16 %v2991, %v2987
    %v3132 = vpack.c.b16 %v2992, %v2988
    %v3133 = vpack.c.b16 %v2997, %v2993
    %v3134 = vpack.c.b16 %v2998, %v2994
    %v3135 = vpack.c.b16 %v2999, %v2995
    %v3136 = vpack.c.b16 %v3000, %v2996
    %v3137 = vpack.c.b16 %v3005, %v3001
    %v3138 = vpack.c.b16 %v3006, %v3002
    %v3139 = vpack.c.b16 %v3007, %v3003
    %v3140 = vpack.c.b16 %v3008, %v3004
    %v3141 = vpack.c.b16 %v3013, %v3009
    %v3142 = vpack.c.b16 %v3014, %v3010
    %v3143 = vpack.c.b16 %v3015, %v3011
    %v3144 = vpack.c.b16 %v3016, %v3012
    %3273 = vmatprep.subr.bf16.mxu0 %v3018
    %3274 = vmatpush1.bf16.msra.mxu0 %v3017
    %3275 = vmatprep.subr.bf16.mxu0 %v3022
    %3276 = vmatpush1.bf16.msra.mxu0 %v3021
    %3277 = vmatprep.subr.bf16.mxu0 %v3026
    %3278 = vmatpush1.bf16.msra.mxu0 %v3025
    %3279 = vmatprep.subr.bf16.mxu0 %v3030
    %3280 = vmatpush1.bf16.msra.mxu0 %v3029
    %3281 = vmatprep.subr.bf16.mxu0 %v3034
    %3282 = vmatpush1.bf16.msra.mxu0 %v3033
    %3283 = vmatprep.subr.bf16.mxu0 %v3038
    %3284 = vmatpush1.bf16.msra.mxu0 %v3037
    %3285 = vmatprep.subr.bf16.mxu0 %v3042
    %3286 = vmatpush1.bf16.msra.mxu0 %v3041
    %3287 = vmatprep.subr.bf16.mxu0 %v3046
    %3288 = vmatpush1.bf16.msra.mxu0 %v3045
    %3289 = vmatprep.subr.bf16.mxu0 %v3050
    %3290 = vmatpush1.bf16.msra.mxu0 %v3049
    %3291 = vmatprep.subr.bf16.mxu0 %v3054
    %3292 = vmatpush1.bf16.msra.mxu0 %v3053
    %3293 = vmatprep.subr.bf16.mxu0 %v3058
    %3294 = vmatpush1.bf16.msra.mxu0 %v3057
    %3295 = vmatprep.subr.bf16.mxu0 %v3062
    %3296 = vmatpush1.bf16.msra.mxu0 %v3061
    %3297 = vmatprep.subr.bf16.mxu0 %v3066
    %3298 = vmatpush1.bf16.msra.mxu0 %v3065
    %3299 = vmatprep.subr.bf16.mxu0 %v3070
    %3300 = vmatpush1.bf16.msra.mxu0 %v3069
    %3301 = vmatprep.subr.bf16.mxu0 %v3074
    %3302 = vmatpush1.bf16.msra.mxu0 %v3073
    %3303 = vmatprep.subr.bf16.mxu0 %v3078
    %3304 = vmatpush1.bf16.msra.mxu0 %v3077
    %3305 = vmatprep.mubr.bf16.mxu0 %v2608
    %3306 = vmatmul.mubr.bf16.gmra.mrb[0].mxu0 %v2607
    %v3307 = vpop.f32.mrb[0].mxu0
    %v3308 = vadd.f32 %v2616, %v3307
    %v3309 = vpop.f32.mrb[0].mxu0
    %v3310 = vadd.f32 %v2620, %v3309
    %v3311 = vpop.f32.mrb[0].mxu0
    %v3312 = vpop.f32.mrb[0].mxu0
    %3313 = vdwg.mxu0
    %3314 = vmatprep.subr.bf16.mxu0 %v3082
    %3315 = vmatpush1.bf16.msra.mxu0 %v3081
    %3316 = vmatprep.subr.bf16.mxu0 %v3086
    %3317 = vmatpush1.bf16.msra.mxu0 %v3085
    %3318 = vmatprep.subr.bf16.mxu0 %v3090
    %3319 = vmatpush1.bf16.msra.mxu0 %v3089
    %3320 = vmatprep.subr.bf16.mxu0 %v3094
    %3321 = vmatpush1.bf16.msra.mxu0 %v3093
    %3322 = vmatprep.subr.bf16.mxu0 %v3098
    %3323 = vmatpush1.bf16.msra.mxu0 %v3097
    %3324 = vmatprep.subr.bf16.mxu0 %v3102
    %3325 = vmatpush1.bf16.msra.mxu0 %v3101
    %3326 = vmatprep.subr.bf16.mxu0 %v3106
    %3327 = vmatpush1.bf16.msra.mxu0 %v3105
    %3328 = vmatprep.subr.bf16.mxu0 %v3110
    %3329 = vmatpush1.bf16.msra.mxu0 %v3109
    %3330 = vmatprep.subr.bf16.mxu0 %v3114
    %3331 = vmatpush1.bf16.msra.mxu0 %v3113
    %3332 = vmatprep.subr.bf16.mxu0 %v3118
    %3333 = vmatpush1.bf16.msra.mxu0 %v3117
    %3334 = vmatprep.subr.bf16.mxu0 %v3122
    %3335 = vmatpush1.bf16.msra.mxu0 %v3121
    %3336 = vmatprep.subr.bf16.mxu0 %v3126
    %3337 = vmatpush1.bf16.msra.mxu0 %v3125
    %3338 = vmatprep.subr.bf16.mxu0 %v3130
    %3339 = vmatpush1.bf16.msra.mxu0 %v3129
    %3340 = vmatprep.subr.bf16.mxu0 %v3134
    %3341 = vmatpush1.bf16.msra.mxu0 %v3133
    %3342 = vmatprep.subr.bf16.mxu0 %v3138
    %3343 = vmatpush1.bf16.msra.mxu0 %v3137
    %3344 = vmatprep.subr.bf16.mxu0 %v3142
    %3345 = vmatpush1.bf16.msra.mxu0 %v3141
    %3346 = vmatprep.mubr.bf16.mxu0 %v2610
    %3347 = vmatmul.mubr.bf16.gmra.mrb[0].mxu0 %v2609
    %v3348 = vpop.f32.mrb[0].mxu0
    %v3349 = vadd.f32 %v3308, %v3348
    %v3350 = vpop.f32.mrb[0].mxu0
    %v3351 = vadd.f32 %v3310, %v3350
    %v3352 = vpop.f32.mrb[0].mxu0
    %v3353 = vpop.f32.mrb[0].mxu0
    %3354 = vdwg.mxu0
    %3355 = vmatprep.subr.bf16.mxu0 %v3020
    %3356 = vmatpush1.bf16.msra.mxu0 %v3019
    %3357 = vmatprep.subr.bf16.mxu0 %v3024
    %3358 = vmatpush1.bf16.msra.mxu0 %v3023
    %3359 = vmatprep.subr.bf16.mxu0 %v3028
    %3360 = vmatpush1.bf16.msra.mxu0 %v3027
    %3361 = vmatprep.subr.bf16.mxu0 %v3032
    %3362 = vmatpush1.bf16.msra.mxu0 %v3031
    %3363 = vmatprep.subr.bf16.mxu0 %v3036
    %3364 = vmatpush1.bf16.msra.mxu0 %v3035
    %3365 = vmatprep.subr.bf16.mxu0 %v3040
    %3366 = vmatpush1.bf16.msra.mxu0 %v3039
    %3367 = vmatprep.subr.bf16.mxu0 %v3044
    %3368 = vmatpush1.bf16.msra.mxu0 %v3043
    %3369 = vmatprep.subr.bf16.mxu0 %v3048
    %3370 = vmatpush1.bf16.msra.mxu0 %v3047
    %3371 = vmatprep.subr.bf16.mxu0 %v3052
    %3372 = vmatpush1.bf16.msra.mxu0 %v3051
    %3373 = vmatprep.subr.bf16.mxu0 %v3056
    %3374 = vmatpush1.bf16.msra.mxu0 %v3055
    %3375 = vmatprep.subr.bf16.mxu0 %v3060
    %3376 = vmatpush1.bf16.msra.mxu0 %v3059
    %3377 = vmatprep.subr.bf16.mxu0 %v3064
    %3378 = vmatpush1.bf16.msra.mxu0 %v3063
    %3379 = vmatprep.subr.bf16.mxu0 %v3068
    %3380 = vmatpush1.bf16.msra.mxu0 %v3067
    %3381 = vmatprep.subr.bf16.mxu0 %v3072
    %3382 = vmatpush1.bf16.msra.mxu0 %v3071
    %3383 = vmatprep.subr.bf16.mxu0 %v3076
    %3384 = vmatpush1.bf16.msra.mxu0 %v3075
    %3385 = vmatprep.subr.bf16.mxu0 %v3080
    %3386 = vmatpush1.bf16.msra.mxu0 %v3079
    %3387 = vmatprep.mubr.bf16.mxu0 %v2608
    %3388 = vmatmul.mubr.bf16.gmra.mrb[0].mxu0 %v2607
    %v3389 = vpop.f32.mrb[0].mxu0
    %v3390 = vadd.f32 %v2624, %v3389
    %v3391 = vpop.f32.mrb[0].mxu0
    %v3392 = vadd.f32 %v2628, %v3391
    %v3393 = vpop.f32.mrb[0].mxu0
    %v3394 = vpop.f32.mrb[0].mxu0
    %3395 = vdwg.mxu0
    %3396 = vmatprep.subr.bf16.mxu0 %v3084
    %3397 = vmatpush1.bf16.msra.mxu0 %v3083
    %3398 = vmatprep.subr.bf16.mxu0 %v3088
    %3399 = vmatpush1.bf16.msra.mxu0 %v3087
    %3400 = vmatprep.subr.bf16.mxu0 %v3092
    %3401 = vmatpush1.bf16.msra.mxu0 %v3091
    %3402 = vmatprep.subr.bf16.mxu0 %v3096
    %3403 = vmatpush1.bf16.msra.mxu0 %v3095
    %3404 = vmatprep.subr.bf16.mxu0 %v3100
    %3405 = vmatpush1.bf16.msra.mxu0 %v3099
    %3406 = vmatprep.subr.bf16.mxu0 %v3104
    %3407 = vmatpush1.bf16.msra.mxu0 %v3103
    %3408 = vmatprep.subr.bf16.mxu0 %v3108
    %3409 = vmatpush1.bf16.msra.mxu0 %v3107
    %3410 = vmatprep.subr.bf16.mxu0 %v3112
    %3411 = vmatpush1.bf16.msra.mxu0 %v3111
    %3412 = vmatprep.subr.bf16.mxu0 %v3116
    %3413 = vmatpush1.bf16.msra.mxu0 %v3115
    %3414 = vmatprep.subr.bf16.mxu0 %v3120
    %3415 = vmatpush1.bf16.msra.mxu0 %v3119
    %3416 = vmatprep.subr.bf16.mxu0 %v3124
    %3417 = vmatpush1.bf16.msra.mxu0 %v3123
    %3418 = vmatprep.subr.bf16.mxu0 %v3128
    %3419 = vmatpush1.bf16.msra.mxu0 %v3127
    %3420 = vmatprep.subr.bf16.mxu0 %v3132
    %3421 = vmatpush1.bf16.msra.mxu0 %v3131
    %3422 = vmatprep.subr.bf16.mxu0 %v3136
    %3423 = vmatpush1.bf16.msra.mxu0 %v3135
    %3424 = vmatprep.subr.bf16.mxu0 %v3140
    %3425 = vmatpush1.bf16.msra.mxu0 %v3139
    %3426 = vmatprep.subr.bf16.mxu0 %v3144
    %3427 = vmatpush1.bf16.msra.mxu0 %v3143
    %3428 = vmatprep.mubr.bf16.mxu0 %v2610
    %3429 = vmatmul.mubr.bf16.gmra.mrb[0].mxu0 %v2609
    %v3430 = vpop.f32.mrb[0].mxu0
    %v3431 = vadd.f32 %v3390, %v3430
    %v3432 = vpop.f32.mrb[0].mxu0
    %v3433 = vadd.f32 %v3392, %v3432
    %v3434 = vpop.f32.mrb[0].mxu0
    %v3435 = vpop.f32.mrb[0].mxu0
    %3436 = vdwg.mxu0
    %vm3437 = vcmp.gt.f32.partialorder %v3349, 0.0
    %vm3438 = vcmp.gt.f32.partialorder %v3351, 0.0
    %vm3439 = vcmp.gt.f32.partialorder %v3431, 0.0
    %vm3440 = vcmp.gt.f32.partialorder %v3433, 0.0
    %v3441 = vmin.f32 %v3349, 0.0
    %v3442 = vmin.f32 %v3351, 0.0
    %v3443 = vmin.f32 %v3431, 0.0
    %v3444 = vmin.f32 %v3433, 0.0
    %v3445 = vmul.f32 %v3441, 1.442695
    %v3446 = vpow.pop %v3445
    %v3447 = vmul.f32 %v3442, 1.442695
    %v3448 = vpow.pop %v3447
    %v3449 = vmul.f32 %v3443, 1.442695
    %v3450 = vpow.pop %v3449
    %v3451 = vmul.f32 %v3444, 1.442695
    %v3452 = vpow.pop %v3451
    %v3453 = vsub.f32 %v3446, 1.0
    %v3454 = vsub.f32 %v3448, 1.0
    %v3455 = vsub.f32 %v3450, 1.0
    %v3456 = vsub.f32 %v3452, 1.0
    %v3457 = vsel %vm3437, %v3349, %v3453
    %v3458 = vsel %vm3438, %v3351, %v3454
    %v3459 = vsel %vm3439, %v3431, %v3455
    %v3460 = vsel %vm3440, %v3433, %v3456
    %v3461 = vld [vmem:[%s10] sm:$0xf]
    %v3462 = vld [vmem:[%s10 + $0x4] sm:$0xf]
    %v3463 = vld [vmem:[%s10 + $0x8] sm:$0xf]
    %v3464 = vld [vmem:[%s10 + $0xc] sm:$0xf]
    %v3465 = vld [vmem:[%s10 + $0x10] sm:$0xf]
    %v3466 = vld [vmem:[%s10 + $0x14] sm:$0xf]
    %v3467 = vld [vmem:[%s10 + $0x18] sm:$0xf]
    %v3468 = vld [vmem:[%s10 + $0x1c] sm:$0xf]
    %v3469 = vld [vmem:[%s10 + $0x20] sm:$0xf]
    %v3470 = vld [vmem:[%s10 + $0x24] sm:$0xf]
    %v3471 = vld [vmem:[%s10 + $0x28] sm:$0xf]
    %v3472 = vld [vmem:[%s10 + $0x2c] sm:$0xf]
    %v3473 = vld [vmem:[%s10 + $0x30] sm:$0xf]
    %v3474 = vld [vmem:[%s10 + $0x34] sm:$0xf]
    %v3475 = vld [vmem:[%s10 + $0x38] sm:$0xf]
    %v3476 = vld [vmem:[%s10 + $0x3c] sm:$0xf]
    %v3477 = vld [vmem:[%s10 + $0x40] sm:$0xf]
    %v3478 = vld [vmem:[%s10 + $0x44] sm:$0xf]
    %v3479 = vld [vmem:[%s10 + $0x48] sm:$0xf]
    %v3480 = vld [vmem:[%s10 + $0x4c] sm:$0xf]
    %v3481 = vld [vmem:[%s10 + $0x50] sm:$0xf]
    %v3482 = vld [vmem:[%s10 + $0x54] sm:$0xf]
    %v3483 = vld [vmem:[%s10 + $0x58] sm:$0xf]
    %v3484 = vld [vmem:[%s10 + $0x5c] sm:$0xf]
    %v3485 = vld [vmem:[%s10 + $0x60] sm:$0xf]
    %v3486 = vld [vmem:[%s10 + $0x64] sm:$0xf]
    %v3487 = vld [vmem:[%s10 + $0x68] sm:$0xf]
    %v3488 = vld [vmem:[%s10 + $0x6c] sm:$0xf]
    %v3489 = vld [vmem:[%s10 + $0x70] sm:$0xf]
    %v3490 = vld [vmem:[%s10 + $0x74] sm:$0xf]
    %v3491 = vld [vmem:[%s10 + $0x78] sm:$0xf]
    %v3492 = vld [vmem:[%s10 + $0x7c] sm:$0xf]
    %v3493 = vld [vmem:[%s10 + $0x80] sm:$0xf]
    %v3494 = vld [vmem:[%s10 + $0x84] sm:$0xf]
    %v3495 = vld [vmem:[%s10 + $0x88] sm:$0xf]
    %v3496 = vld [vmem:[%s10 + $0x8c] sm:$0xf]
    %v3497 = vld [vmem:[%s10 + $0x90] sm:$0xf]
    %v3498 = vld [vmem:[%s10 + $0x94] sm:$0xf]
    %v3499 = vld [vmem:[%s10 + $0x98] sm:$0xf]
    %v3500 = vld [vmem:[%s10 + $0x9c] sm:$0xf]
    %v3501 = vld [vmem:[%s10 + $0xa0] sm:$0xf]
    %v3502 = vld [vmem:[%s10 + $0xa4] sm:$0xf]
    %v3503 = vld [vmem:[%s10 + $0xa8] sm:$0xf]
    %v3504 = vld [vmem:[%s10 + $0xac] sm:$0xf]
    %v3505 = vld [vmem:[%s10 + $0xb0] sm:$0xf]
    %v3506 = vld [vmem:[%s10 + $0xb4] sm:$0xf]
    %v3507 = vld [vmem:[%s10 + $0xb8] sm:$0xf]
    %v3508 = vld [vmem:[%s10 + $0xbc] sm:$0xf]
    %v3509 = vld [vmem:[%s10 + $0xc0] sm:$0xf]
    %v3510 = vld [vmem:[%s10 + $0xc4] sm:$0xf]
    %v3511 = vld [vmem:[%s10 + $0xc8] sm:$0xf]
    %v3512 = vld [vmem:[%s10 + $0xcc] sm:$0xf]
    %v3513 = vld [vmem:[%s10 + $0xd0] sm:$0xf]
    %v3514 = vld [vmem:[%s10 + $0xd4] sm:$0xf]
    %v3515 = vld [vmem:[%s10 + $0xd8] sm:$0xf]
    %v3516 = vld [vmem:[%s10 + $0xdc] sm:$0xf]
    %v3517 = vld [vmem:[%s10 + $0xe0] sm:$0xf]
    %v3518 = vld [vmem:[%s10 + $0xe4] sm:$0xf]
    %v3519 = vld [vmem:[%s10 + $0xe8] sm:$0xf]
    %v3520 = vld [vmem:[%s10 + $0xec] sm:$0xf]
    %v3521 = vld [vmem:[%s10 + $0xf0] sm:$0xf]
    %v3522 = vld [vmem:[%s10 + $0xf4] sm:$0xf]
    %v3523 = vld [vmem:[%s10 + $0xf8] sm:$0xf]
    %v3524 = vld [vmem:[%s10 + $0xfc] sm:$0xf]
    %v3525 = vpack.c.bf16 %v3457, %v3457
    %v3526 = vpack.c.bf16 %v3458, %v3458
    %v3527 = vpack.c.bf16 %v3459, %v3459
    %v3528 = vpack.c.bf16 %v3460, %v3460
    %v3529 = vld [vmem:[#allocation35 + $0x10] sm:$0x1]
    %v3531 = vlaneseq
    %v3532 = vshrl.u32 %v3531, 7
    %v3533 = vsub.s32 0, %v3532
    %v3534 = vrot.slane %v3529, %v3533
    %v3600 = vunpack.c.l.b16 %v3461
    %v3601 = vunpack.c.l.b16 %v3462
    %v3602 = vunpack.c.l.b16 %v3463
    %v3603 = vunpack.c.l.b16 %v3464
    %v3604 = vunpack.c.l.b16 %v3465
    %v3605 = vunpack.c.l.b16 %v3466
    %v3606 = vunpack.c.l.b16 %v3467
    %v3607 = vunpack.c.l.b16 %v3468
    %v3608 = vunpack.c.l.b16 %v3469
    %v3609 = vunpack.c.l.b16 %v3470
    %v3610 = vunpack.c.l.b16 %v3471
    %v3611 = vunpack.c.l.b16 %v3472
    %v3612 = vunpack.c.l.b16 %v3473
    %v3613 = vunpack.c.l.b16 %v3474
    %v3614 = vunpack.c.l.b16 %v3475
    %v3615 = vunpack.c.l.b16 %v3476
    %v3616 = vunpack.c.l.b16 %v3477
    %v3617 = vunpack.c.l.b16 %v3478
    %v3618 = vunpack.c.l.b16 %v3479
    %v3619 = vunpack.c.l.b16 %v3480
    %v3620 = vunpack.c.l.b16 %v3481
    %v3621 = vunpack.c.l.b16 %v3482
    %v3622 = vunpack.c.l.b16 %v3483
    %v3623 = vunpack.c.l.b16 %v3484
    %v3624 = vunpack.c.l.b16 %v3485
    %v3625 = vunpack.c.l.b16 %v3486
    %v3626 = vunpack.c.l.b16 %v3487
    %v3627 = vunpack.c.l.b16 %v3488
    %v3628 = vunpack.c.l.b16 %v3489
    %v3629 = vunpack.c.l.b16 %v3490
    %v3630 = vunpack.c.l.b16 %v3491
    %v3631 = vunpack.c.l.b16 %v3492
    %v3632 = vunpack.c.l.b16 %v3493
    %v3633 = vunpack.c.l.b16 %v3494
    %v3634 = vunpack.c.l.b16 %v3495
    %v3635 = vunpack.c.l.b16 %v3496
    %v3636 = vunpack.c.l.b16 %v3497
    %v3637 = vunpack.c.l.b16 %v3498
    %v3638 = vunpack.c.l.b16 %v3499
    %v3639 = vunpack.c.l.b16 %v3500
    %v3640 = vunpack.c.l.b16 %v3501
    %v3641 = vunpack.c.l.b16 %v3502
    %v3642 = vunpack.c.l.b16 %v3503
    %v3643 = vunpack.c.l.b16 %v3504
    %v3644 = vunpack.c.l.b16 %v3505
    %v3645 = vunpack.c.l.b16 %v3506
    %v3646 = vunpack.c.l.b16 %v3507
    %v3647 = vunpack.c.l.b16 %v3508
    %v3648 = vunpack.c.l.b16 %v3509
    %v3649 = vunpack.c.l.b16 %v3510
    %v3650 = vunpack.c.l.b16 %v3511
    %v3651 = vunpack.c.l.b16 %v3512
    %v3652 = vunpack.c.l.b16 %v3513
    %v3653 = vunpack.c.l.b16 %v3514
    %v3654 = vunpack.c.l.b16 %v3515
    %v3655 = vunpack.c.l.b16 %v3516
    %v3656 = vunpack.c.l.b16 %v3517
    %v3657 = vunpack.c.l.b16 %v3518
    %v3658 = vunpack.c.l.b16 %v3519
    %v3659 = vunpack.c.l.b16 %v3520
    %v3660 = vunpack.c.l.b16 %v3521
    %v3661 = vunpack.c.l.b16 %v3522
    %v3662 = vunpack.c.l.b16 %v3523
    %v3663 = vunpack.c.l.b16 %v3524
    %v3664 = vpack.c.b16 %v3601, %v3600
    %v3665 = vpack.c.b16 %v3603, %v3602
    %v3666 = vpack.c.b16 %v3605, %v3604
    %v3667 = vpack.c.b16 %v3607, %v3606
    %v3668 = vpack.c.b16 %v3609, %v3608
    %v3669 = vpack.c.b16 %v3611, %v3610
    %v3670 = vpack.c.b16 %v3613, %v3612
    %v3671 = vpack.c.b16 %v3615, %v3614
    %v3672 = vpack.c.b16 %v3617, %v3616
    %v3673 = vpack.c.b16 %v3619, %v3618
    %v3674 = vpack.c.b16 %v3621, %v3620
    %v3675 = vpack.c.b16 %v3623, %v3622
    %v3676 = vpack.c.b16 %v3625, %v3624
    %v3677 = vpack.c.b16 %v3627, %v3626
    %v3678 = vpack.c.b16 %v3629, %v3628
    %v3679 = vpack.c.b16 %v3631, %v3630
    %v3680 = vpack.c.b16 %v3633, %v3632
    %v3681 = vpack.c.b16 %v3635, %v3634
    %v3682 = vpack.c.b16 %v3637, %v3636
    %v3683 = vpack.c.b16 %v3639, %v3638
    %v3684 = vpack.c.b16 %v3641, %v3640
    %v3685 = vpack.c.b16 %v3643, %v3642
    %v3686 = vpack.c.b16 %v3645, %v3644
    %v3687 = vpack.c.b16 %v3647, %v3646
    %v3688 = vpack.c.b16 %v3649, %v3648
    %v3689 = vpack.c.b16 %v3651, %v3650
    %v3690 = vpack.c.b16 %v3653, %v3652
    %v3691 = vpack.c.b16 %v3655, %v3654
    %v3692 = vpack.c.b16 %v3657, %v3656
    %v3693 = vpack.c.b16 %v3659, %v3658
    %v3694 = vpack.c.b16 %v3661, %v3660
    %v3695 = vpack.c.b16 %v3663, %v3662
    %3728 = vmatprep.subr.bf16.mxu0 0
    %3729 = vmatpush1.bf16.msra.mxu0 %v3664
    %3730 = vmatprep.subr.bf16.mxu0 0
    %3731 = vmatpush1.bf16.msra.mxu0 %v3665
    %3732 = vmatprep.subr.bf16.mxu0 0
    %3733 = vmatpush1.bf16.msra.mxu0 %v3666
    %3734 = vmatprep.subr.bf16.mxu0 0
    %3735 = vmatpush1.bf16.msra.mxu0 %v3667
    %3736 = vmatprep.subr.bf16.mxu0 0
    %3737 = vmatpush1.bf16.msra.mxu0 %v3668
    %3738 = vmatprep.subr.bf16.mxu0 0
    %3739 = vmatpush1.bf16.msra.mxu0 %v3669
    %3740 = vmatprep.subr.bf16.mxu0 0
    %3741 = vmatpush1.bf16.msra.mxu0 %v3670
    %3742 = vmatprep.subr.bf16.mxu0 0
    %3743 = vmatpush1.bf16.msra.mxu0 %v3671
    %3744 = vmatprep.subr.bf16.mxu0 0
    %3745 = vmatpush1.bf16.msra.mxu0 %v3672
    %3746 = vmatprep.subr.bf16.mxu0 0
    %3747 = vmatpush1.bf16.msra.mxu0 %v3673
    %3748 = vmatprep.subr.bf16.mxu0 0
    %3749 = vmatpush1.bf16.msra.mxu0 %v3674
    %3750 = vmatprep.subr.bf16.mxu0 0
    %3751 = vmatpush1.bf16.msra.mxu0 %v3675
    %3752 = vmatprep.subr.bf16.mxu0 0
    %3753 = vmatpush1.bf16.msra.mxu0 %v3676
    %3754 = vmatprep.subr.bf16.mxu0 0
    %3755 = vmatpush1.bf16.msra.mxu0 %v3677
    %3756 = vmatprep.subr.bf16.mxu0 0
    %3757 = vmatpush1.bf16.msra.mxu0 %v3678
    %3758 = vmatprep.subr.bf16.mxu0 0
    %3759 = vmatpush1.bf16.msra.mxu0 %v3679
    %3760 = vmatprep.mubr.bf16.mxu0 %v3526
    %3761 = vmatmul.mubr.bf16.gmra.mrb[0].mxu0 %v3525
    %v3762 = vpop.f32.mrb[0].mxu0
    %v3763 = vadd.f32 %v3534, %v3762
    %v3764 = vpop.f32.mrb[0].mxu0
    %v3765 = vpop.f32.mrb[0].mxu0
    %v3766 = vpop.f32.mrb[0].mxu0
    %3767 = vdwg.mxu0
    %3768 = vmatprep.subr.bf16.mxu0 0
    %3769 = vmatpush1.bf16.msra.mxu0 %v3680
    %3770 = vmatprep.subr.bf16.mxu0 0
    %3771 = vmatpush1.bf16.msra.mxu0 %v3681
    %3772 = vmatprep.subr.bf16.mxu0 0
    %3773 = vmatpush1.bf16.msra.mxu0 %v3682
    %3774 = vmatprep.subr.bf16.mxu0 0
    %3775 = vmatpush1.bf16.msra.mxu0 %v3683
    %3776 = vmatprep.subr.bf16.mxu0 0
    %3777 = vmatpush1.bf16.msra.mxu0 %v3684
    %3778 = vmatprep.subr.bf16.mxu0 0
    %3779 = vmatpush1.bf16.msra.mxu0 %v3685
    %3780 = vmatprep.subr.bf16.mxu0 0
    %3781 = vmatpush1.bf16.msra.mxu0 %v3686
    %3782 = vmatprep.subr.bf16.mxu0 0
    %3783 = vmatpush1.bf16.msra.mxu0 %v3687
    %3784 = vmatprep.subr.bf16.mxu0 0
    %3785 = vmatpush1.bf16.msra.mxu0 %v3688
    %3786 = vmatprep.subr.bf16.mxu0 0
    %3787 = vmatpush1.bf16.msra.mxu0 %v3689
    %3788 = vmatprep.subr.bf16.mxu0 0
    %3789 = vmatpush1.bf16.msra.mxu0 %v3690
    %3790 = vmatprep.subr.bf16.mxu0 0
    %3791 = vmatpush1.bf16.msra.mxu0 %v3691
    %3792 = vmatprep.subr.bf16.mxu0 0
    %3793 = vmatpush1.bf16.msra.mxu0 %v3692
    %3794 = vmatprep.subr.bf16.mxu0 0
    %3795 = vmatpush1.bf16.msra.mxu0 %v3693
    %3796 = vmatprep.subr.bf16.mxu0 0
    %3797 = vmatpush1.bf16.msra.mxu0 %v3694
    %3798 = vmatprep.subr.bf16.mxu0 0
    %3799 = vmatpush1.bf16.msra.mxu0 %v3695
    %3800 = vmatprep.mubr.bf16.mxu0 %v3528
    %3801 = vmatmul.mubr.bf16.gmra.mrb[0].mxu0 %v3527
    %v3802 = vpop.f32.mrb[0].mxu0
    %v3803 = vadd.f32 %v3763, %v3802
    %v3804 = vpop.f32.mrb[0].mxu0
    %v3805 = vpop.f32.mrb[0].mxu0
    %v3806 = vpop.f32.mrb[0].mxu0
    %3807 = vdwg.mxu0
    %v3808 = vld [vmem:[#allocation3] sm:$0x3]
    %v3809 = vld [vmem:[#allocation23] sm:$0xff]
    %v3810 = vld [vmem:[#allocation23 + $0x8] sm:$0xff]
    %v3811 = vld [vmem:[#allocation23 + $0x10] sm:$0xff]
    %v3812 = vld [vmem:[#allocation23 + $0x18] sm:$0xff]
    %v3813 = vld [vmem:[#allocation23 + $0x20] sm:$0xff]
    %v3814 = vld [vmem:[#allocation23 + $0x28] sm:$0xff]
    %v3815 = vld [vmem:[#allocation23 + $0x30] sm:$0xff]
    %v3816 = vld [vmem:[#allocation23 + $0x38] sm:$0xff]
    %v3817 = vpack.c.bf16 %v3808, %v3808
    %v3818 = vld [vmem:[#allocation9] sm:$0x3]
    %v3819 = vld [vmem:[#allocation24] sm:$0xff]
    %v3820 = vld [vmem:[#allocation24 + $0x8] sm:$0xff]
    %v3821 = vpack.c.bf16 %v3818, %v3818
    %v3824 = vunpack.c.l.b16 %v3819
    %v3825 = vunpack.c.h.b16 %v3819
    %v3826 = vunpack.c.l.b16 %v3820
    %v3827 = vunpack.c.h.b16 %v3820
    %v3828 = vpack.c.b16 %v3824, %v3824
    %v3829 = vpack.c.b16 %v3825, %v3825
    %v3830 = vpack.c.b16 %v3826, %v3826
    %v3831 = vpack.c.b16 %v3827, %v3827
    %vm3832 = vcmask 64512
    %v3834 = vsel %vm3832, %v3821, 0
    %vm3836 = vcmask 1043456
    %v3838 = vsel %vm3836, %v3828, 0
    %v3841 = vsel %vm3836, %v3829, 0
    %v3844 = vsel %vm3836, %v3830, 0
    %v3847 = vsel %vm3836, %v3831, 0
    %3849 = vmatprep.subr.bf16.mxu0 %v3841
    %3850 = vmatpush1.bf16.msra.mxu0 %v3838
    %3851 = vmatprep.subr.bf16.mxu0 0
    %3852 = vmatpush1.bf16.msra.mxu0 0
    %3853 = vmatprep.subr.bf16.mxu0 0
    %3854 = vmatpush1.bf16.msra.mxu0 0
    %3855 = vmatprep.subr.bf16.mxu0 0
    %3856 = vmatpush1.bf16.msra.mxu0 0
    %3857 = vmatprep.subr.bf16.mxu0 0
    %3858 = vmatpush1.bf16.msra.mxu0 0
    %3859 = vmatprep.subr.bf16.mxu0 0
    %3860 = vmatpush1.bf16.msra.mxu0 0
    %3861 = vmatprep.subr.bf16.mxu0 0
    %3862 = vmatpush1.bf16.msra.mxu0 0
    %3863 = vmatprep.subr.bf16.mxu0 0
    %3864 = vmatpush1.bf16.msra.mxu0 0
    %3865 = vmatprep.subr.bf16.mxu0 0
    %3866 = vmatpush1.bf16.msra.mxu0 0
    %3867 = vmatprep.subr.bf16.mxu0 0
    %3868 = vmatpush1.bf16.msra.mxu0 0
    %3869 = vmatprep.subr.bf16.mxu0 0
    %3870 = vmatpush1.bf16.msra.mxu0 0
    %3871 = vmatprep.subr.bf16.mxu0 0
    %3872 = vmatpush1.bf16.msra.mxu0 0
    %3873 = vmatprep.subr.bf16.mxu0 0
    %3874 = vmatpush1.bf16.msra.mxu0 0
    %3875 = vmatprep.subr.bf16.mxu0 0
    %3876 = vmatpush1.bf16.msra.mxu0 0
    %3877 = vmatprep.subr.bf16.mxu0 0
    %3878 = vmatpush1.bf16.msra.mxu0 0
    %3879 = vmatprep.subr.bf16.mxu0 0
    %3880 = vmatpush1.bf16.msra.mxu0 0
    %3881 = vmatprep.mubr.bf16.mxu0 0
    %3882 = vmatmul.mubr.bf16.gmra.mrb[0].mxu0 %v3834
    %v3883 = vpop.f32.mrb[0].mxu0
    %v3884 = vadd.f32 0.0, %v3883
    %v3885 = vpop.f32.mrb[0].mxu0
    %v3886 = vadd.f32 0.0, %v3885
    %v3887 = vpop.f32.mrb[0].mxu0
    %v3888 = vpop.f32.mrb[0].mxu0
    %3889 = vdwg.mxu0
    %3890 = vmatprep.subr.bf16.mxu0 %v3847
    %3891 = vmatpush1.bf16.msra.mxu0 %v3844
    %3892 = vmatprep.subr.bf16.mxu0 0
    %3893 = vmatpush1.bf16.msra.mxu0 0
    %3894 = vmatprep.subr.bf16.mxu0 0
    %3895 = vmatpush1.bf16.msra.mxu0 0
    %3896 = vmatprep.subr.bf16.mxu0 0
    %3897 = vmatpush1.bf16.msra.mxu0 0
    %3898 = vmatprep.subr.bf16.mxu0 0
    %3899 = vmatpush1.bf16.msra.mxu0 0
    %3900 = vmatprep.subr.bf16.mxu0 0
    %3901 = vmatpush1.bf16.msra.mxu0 0
    %3902 = vmatprep.subr.bf16.mxu0 0
    %3903 = vmatpush1.bf16.msra.mxu0 0
    %3904 = vmatprep.subr.bf16.mxu0 0
    %3905 = vmatpush1.bf16.msra.mxu0 0
    %3906 = vmatprep.subr.bf16.mxu0 0
    %3907 = vmatpush1.bf16.msra.mxu0 0
    %3908 = vmatprep.subr.bf16.mxu0 0
    %3909 = vmatpush1.bf16.msra.mxu0 0
    %3910 = vmatprep.subr.bf16.mxu0 0
    %3911 = vmatpush1.bf16.msra.mxu0 0
    %3912 = vmatprep.subr.bf16.mxu0 0
    %3913 = vmatpush1.bf16.msra.mxu0 0
    %3914 = vmatprep.subr.bf16.mxu0 0
    %3915 = vmatpush1.bf16.msra.mxu0 0
    %3916 = vmatprep.subr.bf16.mxu0 0
    %3917 = vmatpush1.bf16.msra.mxu0 0
    %3918 = vmatprep.subr.bf16.mxu0 0
    %3919 = vmatpush1.bf16.msra.mxu0 0
    %3920 = vmatprep.subr.bf16.mxu0 0
    %3921 = vmatpush1.bf16.msra.mxu0 0
    %3922 = vmatprep.mubr.bf16.mxu0 0
    %3923 = vmatmul.mubr.bf16.gmra.mrb[0].mxu0 %v3834
    %v3924 = vpop.f32.mrb[0].mxu0
    %v3925 = vadd.f32 0.0, %v3924
    %v3926 = vpop.f32.mrb[0].mxu0
    %v3927 = vadd.f32 0.0, %v3926
    %v3928 = vpop.f32.mrb[0].mxu0
    %v3929 = vpop.f32.mrb[0].mxu0
    %3930 = vdwg.mxu0
    %v3939 = vunpack.c.l.b16 %v3809
    %v3940 = vunpack.c.h.b16 %v3809
    %v3941 = vunpack.c.l.b16 %v3810
    %v3942 = vunpack.c.h.b16 %v3810
    %v3943 = vunpack.c.l.b16 %v3811
    %v3944 = vunpack.c.h.b16 %v3811
    %v3945 = vunpack.c.l.b16 %v3812
    %v3946 = vunpack.c.h.b16 %v3812
    %v3947 = vunpack.c.l.b16 %v3813
    %v3948 = vunpack.c.h.b16 %v3813
    %v3949 = vunpack.c.l.b16 %v3814
    %v3950 = vunpack.c.h.b16 %v3814
    %v3951 = vunpack.c.l.b16 %v3815
    %v3952 = vunpack.c.h.b16 %v3815
    %v3953 = vunpack.c.l.b16 %v3816
    %v3954 = vunpack.c.h.b16 %v3816
    %v3955 = vpack.c.b16 %v3943, %v3939
    %v3956 = vpack.c.b16 %v3944, %v3940
    %v3957 = vpack.c.b16 %v3945, %v3941
    %v3958 = vpack.c.b16 %v3946, %v3942
    %v3959 = vpack.c.b16 %v3951, %v3947
    %v3960 = vpack.c.b16 %v3952, %v3948
    %v3961 = vpack.c.b16 %v3953, %v3949
    %v3962 = vpack.c.b16 %v3954, %v3950
    %vm3971 = vcmask 261120
    %v3973 = vsel %vm3971, %v3817, 0
    %3975 = vmatprep.subr.bf16.mxu0 %v3956
    %3976 = vmatpush1.bf16.msra.mxu0 %v3955
    %3977 = vmatprep.subr.bf16.mxu0 %v3960
    %3978 = vmatpush1.bf16.msra.mxu0 %v3959
    %3979 = vmatprep.subr.bf16.mxu0 0
    %3980 = vmatpush1.bf16.msra.mxu0 0
    %3981 = vmatprep.subr.bf16.mxu0 0
    %3982 = vmatpush1.bf16.msra.mxu0 0
    %3983 = vmatprep.subr.bf16.mxu0 0
    %3984 = vmatpush1.bf16.msra.mxu0 0
    %3985 = vmatprep.subr.bf16.mxu0 0
    %3986 = vmatpush1.bf16.msra.mxu0 0
    %3987 = vmatprep.subr.bf16.mxu0 0
    %3988 = vmatpush1.bf16.msra.mxu0 0
    %3989 = vmatprep.subr.bf16.mxu0 0
    %3990 = vmatpush1.bf16.msra.mxu0 0
    %3991 = vmatprep.subr.bf16.mxu0 0
    %3992 = vmatpush1.bf16.msra.mxu0 0
    %3993 = vmatprep.subr.bf16.mxu0 0
    %3994 = vmatpush1.bf16.msra.mxu0 0
    %3995 = vmatprep.subr.bf16.mxu0 0
    %3996 = vmatpush1.bf16.msra.mxu0 0
    %3997 = vmatprep.subr.bf16.mxu0 0
    %3998 = vmatpush1.bf16.msra.mxu0 0
    %3999 = vmatprep.subr.bf16.mxu0 0
    %4000 = vmatpush1.bf16.msra.mxu0 0
    %4001 = vmatprep.subr.bf16.mxu0 0
    %4002 = vmatpush1.bf16.msra.mxu0 0
    %4003 = vmatprep.subr.bf16.mxu0 0
    %4004 = vmatpush1.bf16.msra.mxu0 0
    %4005 = vmatprep.subr.bf16.mxu0 0
    %4006 = vmatpush1.bf16.msra.mxu0 0
    %4007 = vmatprep.mubr.bf16.mxu0 0
    %4008 = vmatmul.mubr.bf16.gmra.mrb[0].mxu0 %v3973
    %v4009 = vpop.f32.mrb[0].mxu0
    %v4010 = vadd.f32 %v3884, %v4009
    %v4011 = vpop.f32.mrb[0].mxu0
    %v4012 = vadd.f32 %v3886, %v4011
    %v4013 = vpop.f32.mrb[0].mxu0
    %v4014 = vpop.f32.mrb[0].mxu0
    %4015 = vdwg.mxu0
    %4016 = vmatprep.subr.bf16.mxu0 %v3958
    %4017 = vmatpush1.bf16.msra.mxu0 %v3957
    %4018 = vmatprep.subr.bf16.mxu0 %v3962
    %4019 = vmatpush1.bf16.msra.mxu0 %v3961
    %4020 = vmatprep.subr.bf16.mxu0 0
    %4021 = vmatpush1.bf16.msra.mxu0 0
    %4022 = vmatprep.subr.bf16.mxu0 0
    %4023 = vmatpush1.bf16.msra.mxu0 0
    %4024 = vmatprep.subr.bf16.mxu0 0
    %4025 = vmatpush1.bf16.msra.mxu0 0
    %4026 = vmatprep.subr.bf16.mxu0 0
    %4027 = vmatpush1.bf16.msra.mxu0 0
    %4028 = vmatprep.subr.bf16.mxu0 0
    %4029 = vmatpush1.bf16.msra.mxu0 0
    %4030 = vmatprep.subr.bf16.mxu0 0
    %4031 = vmatpush1.bf16.msra.mxu0 0
    %4032 = vmatprep.subr.bf16.mxu0 0
    %4033 = vmatpush1.bf16.msra.mxu0 0
    %4034 = vmatprep.subr.bf16.mxu0 0
    %4035 = vmatpush1.bf16.msra.mxu0 0
    %4036 = vmatprep.subr.bf16.mxu0 0
    %4037 = vmatpush1.bf16.msra.mxu0 0
    %4038 = vmatprep.subr.bf16.mxu0 0
    %4039 = vmatpush1.bf16.msra.mxu0 0
    %4040 = vmatprep.subr.bf16.mxu0 0
    %4041 = vmatpush1.bf16.msra.mxu0 0
    %4042 = vmatprep.subr.bf16.mxu0 0
    %4043 = vmatpush1.bf16.msra.mxu0 0
    %4044 = vmatprep.subr.bf16.mxu0 0
    %4045 = vmatpush1.bf16.msra.mxu0 0
    %4046 = vmatprep.subr.bf16.mxu0 0
    %4047 = vmatpush1.bf16.msra.mxu0 0
    %4048 = vmatprep.mubr.bf16.mxu0 0
    %4049 = vmatmul.mubr.bf16.gmra.mrb[0].mxu0 %v3973
    %v4050 = vpop.f32.mrb[0].mxu0
    %v4051 = vadd.f32 %v3925, %v4050
    %v4052 = vpop.f32.mrb[0].mxu0
    %v4053 = vadd.f32 %v3927, %v4052
    %v4054 = vpop.f32.mrb[0].mxu0
    %v4055 = vpop.f32.mrb[0].mxu0
    %4056 = vdwg.mxu0
    %v4057 = vld [vmem:[#allocation35 + $0x11] sm:$0xf]
    %v4059 = vlaneseq
    %v4060 = vshrl.u32 %v4059, 7
    %v4061 = vsub.s32 0, %v4060
    %v4062 = vrot.slane %v4057, %v4061
    %v4063 = vlaneseq
    %v4064 = vshrl.u32 %v4063, 7
    %v4065 = vsub.s32 1, %v4064
    %v4066 = vrot.slane %v4057, %v4065
    %v4067 = vlaneseq
    %v4068 = vshrl.u32 %v4067, 7
    %v4069 = vsub.s32 2, %v4068
    %v4070 = vrot.slane %v4057, %v4069
    %v4071 = vlaneseq
    %v4072 = vshrl.u32 %v4071, 7
    %v4073 = vsub.s32 3, %v4072
    %v4074 = vrot.slane %v4057, %v4073
    %v4079 = vadd.f32 %v4010, %v4062
    %v4080 = vadd.f32 %v4012, %v4066
    %v4081 = vadd.f32 %v4051, %v4070
    %v4082 = vadd.f32 %v4053, %v4074
    %vm4083 = vcmp.gt.f32.partialorder %v4079, 0.0
    %vm4084 = vcmp.gt.f32.partialorder %v4080, 0.0
    %vm4085 = vcmp.gt.f32.partialorder %v4081, 0.0
    %vm4086 = vcmp.gt.f32.partialorder %v4082, 0.0
    %v4087 = vmin.f32 %v4079, 0.0
    %v4088 = vmin.f32 %v4080, 0.0
    %v4089 = vmin.f32 %v4081, 0.0
    %v4090 = vmin.f32 %v4082, 0.0
    %v4091 = vmul.f32 %v4087, 1.442695
    %v4092 = vpow.pop %v4091
    %v4093 = vmul.f32 %v4088, 1.442695
    %v4094 = vpow.pop %v4093
    %v4095 = vmul.f32 %v4089, 1.442695
    %v4096 = vpow.pop %v4095
    %v4097 = vmul.f32 %v4090, 1.442695
    %v4098 = vpow.pop %v4097
    %v4099 = vsub.f32 %v4092, 1.0
    %v4100 = vsub.f32 %v4094, 1.0
    %v4101 = vsub.f32 %v4096, 1.0
    %v4102 = vsub.f32 %v4098, 1.0
    %v4103 = vsel %vm4083, %v4079, %v4099
    %v4104 = vsel %vm4084, %v4080, %v4100
    %v4105 = vsel %vm4085, %v4081, %v4101
    %v4106 = vsel %vm4086, %v4082, %v4102
    %v4107 = vld [vmem:[#allocation26] sm:$0xff]
    %v4108 = vld [vmem:[#allocation26 + $0x8] sm:$0xff]
    %v4109 = vld [vmem:[#allocation26 + $0x10] sm:$0xff]
    %v4110 = vld [vmem:[#allocation26 + $0x18] sm:$0xff]
    %v4111 = vld [vmem:[#allocation26 + $0x20] sm:$0xff]
    %v4112 = vld [vmem:[#allocation26 + $0x28] sm:$0xff]
    %v4113 = vld [vmem:[#allocation26 + $0x30] sm:$0xff]
    %v4114 = vld [vmem:[#allocation26 + $0x38] sm:$0xff]
    %v4115 = vld [vmem:[#allocation26 + $0x40] sm:$0xff]
    %v4116 = vld [vmem:[#allocation26 + $0x48] sm:$0xff]
    %v4117 = vld [vmem:[#allocation26 + $0x50] sm:$0xff]
    %v4118 = vld [vmem:[#allocation26 + $0x58] sm:$0xff]
    %v4119 = vld [vmem:[#allocation26 + $0x60] sm:$0xff]
    %v4120 = vld [vmem:[#allocation26 + $0x68] sm:$0xff]
    %v4121 = vld [vmem:[#allocation26 + $0x70] sm:$0xff]
    %v4122 = vld [vmem:[#allocation26 + $0x78] sm:$0xff]
    %v4123 = vld [vmem:[#allocation26 + $0x80] sm:$0xff]
    %v4124 = vld [vmem:[#allocation26 + $0x88] sm:$0xff]
    %v4125 = vld [vmem:[#allocation26 + $0x90] sm:$0xff]
    %v4126 = vld [vmem:[#allocation26 + $0x98] sm:$0xff]
    %v4127 = vld [vmem:[#allocation26 + $0xa0] sm:$0xff]
    %v4128 = vld [vmem:[#allocation26 + $0xa8] sm:$0xff]
    %v4129 = vld [vmem:[#allocation26 + $0xb0] sm:$0xff]
    %v4130 = vld [vmem:[#allocation26 + $0xb8] sm:$0xff]
    %v4131 = vld [vmem:[#allocation26 + $0xc0] sm:$0xff]
    %v4132 = vld [vmem:[#allocation26 + $0xc8] sm:$0xff]
    %v4133 = vld [vmem:[#allocation26 + $0xd0] sm:$0xff]
    %v4134 = vld [vmem:[#allocation26 + $0xd8] sm:$0xff]
    %v4135 = vld [vmem:[#allocation26 + $0xe0] sm:$0xff]
    %v4136 = vld [vmem:[#allocation26 + $0xe8] sm:$0xff]
    %v4137 = vld [vmem:[#allocation26 + $0xf0] sm:$0xff]
    %v4138 = vld [vmem:[#allocation26 + $0xf8] sm:$0xff]
    %v4139 = vld [vmem:[#allocation26 + $0x100] sm:$0xff]
    %v4140 = vld [vmem:[#allocation26 + $0x108] sm:$0xff]
    %v4141 = vld [vmem:[#allocation26 + $0x110] sm:$0xff]
    %v4142 = vld [vmem:[#allocation26 + $0x118] sm:$0xff]
    %v4143 = vld [vmem:[#allocation26 + $0x120] sm:$0xff]
    %v4144 = vld [vmem:[#allocation26 + $0x128] sm:$0xff]
    %v4145 = vld [vmem:[#allocation26 + $0x130] sm:$0xff]
    %v4146 = vld [vmem:[#allocation26 + $0x138] sm:$0xff]
    %v4147 = vld [vmem:[#allocation26 + $0x140] sm:$0xff]
    %v4148 = vld [vmem:[#allocation26 + $0x148] sm:$0xff]
    %v4149 = vld [vmem:[#allocation26 + $0x150] sm:$0xff]
    %v4150 = vld [vmem:[#allocation26 + $0x158] sm:$0xff]
    %v4151 = vld [vmem:[#allocation26 + $0x160] sm:$0xff]
    %v4152 = vld [vmem:[#allocation26 + $0x168] sm:$0xff]
    %v4153 = vld [vmem:[#allocation26 + $0x170] sm:$0xff]
    %v4154 = vld [vmem:[#allocation26 + $0x178] sm:$0xff]
    %v4155 = vld [vmem:[#allocation26 + $0x180] sm:$0xff]
    %v4156 = vld [vmem:[#allocation26 + $0x188] sm:$0xff]
    %v4157 = vld [vmem:[#allocation26 + $0x190] sm:$0xff]
    %v4158 = vld [vmem:[#allocation26 + $0x198] sm:$0xff]
    %v4159 = vld [vmem:[#allocation26 + $0x1a0] sm:$0xff]
    %v4160 = vld [vmem:[#allocation26 + $0x1a8] sm:$0xff]
    %v4161 = vld [vmem:[#allocation26 + $0x1b0] sm:$0xff]
    %v4162 = vld [vmem:[#allocation26 + $0x1b8] sm:$0xff]
    %v4163 = vld [vmem:[#allocation26 + $0x1c0] sm:$0xff]
    %v4164 = vld [vmem:[#allocation26 + $0x1c8] sm:$0xff]
    %v4165 = vld [vmem:[#allocation26 + $0x1d0] sm:$0xff]
    %v4166 = vld [vmem:[#allocation26 + $0x1d8] sm:$0xff]
    %v4167 = vld [vmem:[#allocation26 + $0x1e0] sm:$0xff]
    %v4168 = vld [vmem:[#allocation26 + $0x1e8] sm:$0xff]
    %v4169 = vld [vmem:[#allocation26 + $0x1f0] sm:$0xff]
    %v4170 = vld [vmem:[#allocation26 + $0x1f8] sm:$0xff]
    %v4171 = vld [vmem:[#allocation26 + $0x200] sm:$0xff]
    %v4172 = vld [vmem:[#allocation26 + $0x208] sm:$0xff]
    %v4173 = vld [vmem:[#allocation26 + $0x210] sm:$0xff]
    %v4174 = vld [vmem:[#allocation26 + $0x218] sm:$0xff]
    %v4175 = vld [vmem:[#allocation26 + $0x220] sm:$0xff]
    %v4176 = vld [vmem:[#allocation26 + $0x228] sm:$0xff]
    %v4177 = vld [vmem:[#allocation26 + $0x230] sm:$0xff]
    %v4178 = vld [vmem:[#allocation26 + $0x238] sm:$0xff]
    %v4179 = vld [vmem:[#allocation26 + $0x240] sm:$0xff]
    %v4180 = vld [vmem:[#allocation26 + $0x248] sm:$0xff]
    %v4181 = vld [vmem:[#allocation26 + $0x250] sm:$0xff]
    %v4182 = vld [vmem:[#allocation26 + $0x258] sm:$0xff]
    %v4183 = vld [vmem:[#allocation26 + $0x260] sm:$0xff]
    %v4184 = vld [vmem:[#allocation26 + $0x268] sm:$0xff]
    %v4185 = vld [vmem:[#allocation26 + $0x270] sm:$0xff]
    %v4186 = vld [vmem:[#allocation26 + $0x278] sm:$0xff]
    %v4187 = vld [vmem:[#allocation26 + $0x280] sm:$0xff]
    %v4188 = vld [vmem:[#allocation26 + $0x288] sm:$0xff]
    %v4189 = vld [vmem:[#allocation26 + $0x290] sm:$0xff]
    %v4190 = vld [vmem:[#allocation26 + $0x298] sm:$0xff]
    %v4191 = vld [vmem:[#allocation26 + $0x2a0] sm:$0xff]
    %v4192 = vld [vmem:[#allocation26 + $0x2a8] sm:$0xff]
    %v4193 = vld [vmem:[#allocation26 + $0x2b0] sm:$0xff]
    %v4194 = vld [vmem:[#allocation26 + $0x2b8] sm:$0xff]
    %v4195 = vld [vmem:[#allocation26 + $0x2c0] sm:$0xff]
    %v4196 = vld [vmem:[#allocation26 + $0x2c8] sm:$0xff]
    %v4197 = vld [vmem:[#allocation26 + $0x2d0] sm:$0xff]
    %v4198 = vld [vmem:[#allocation26 + $0x2d8] sm:$0xff]
    %v4199 = vld [vmem:[#allocation26 + $0x2e0] sm:$0xff]
    %v4200 = vld [vmem:[#allocation26 + $0x2e8] sm:$0xff]
    %v4201 = vld [vmem:[#allocation26 + $0x2f0] sm:$0xff]
    %v4202 = vld [vmem:[#allocation26 + $0x2f8] sm:$0xff]
    %v4203 = vld [vmem:[#allocation26 + $0x300] sm:$0xff]
    %v4204 = vld [vmem:[#allocation26 + $0x308] sm:$0xff]
    %v4205 = vld [vmem:[#allocation26 + $0x310] sm:$0xff]
    %v4206 = vld [vmem:[#allocation26 + $0x318] sm:$0xff]
    %v4207 = vld [vmem:[#allocation26 + $0x320] sm:$0xff]
    %v4208 = vld [vmem:[#allocation26 + $0x328] sm:$0xff]
    %v4209 = vld [vmem:[#allocation26 + $0x330] sm:$0xff]
    %v4210 = vld [vmem:[#allocation26 + $0x338] sm:$0xff]
    %v4211 = vld [vmem:[#allocation26 + $0x340] sm:$0xff]
    %v4212 = vld [vmem:[#allocation26 + $0x348] sm:$0xff]
    %v4213 = vld [vmem:[#allocation26 + $0x350] sm:$0xff]
    %v4214 = vld [vmem:[#allocation26 + $0x358] sm:$0xff]
    %v4215 = vld [vmem:[#allocation26 + $0x360] sm:$0xff]
    %v4216 = vld [vmem:[#allocation26 + $0x368] sm:$0xff]
    %v4217 = vld [vmem:[#allocation26 + $0x370] sm:$0xff]
    %v4218 = vld [vmem:[#allocation26 + $0x378] sm:$0xff]
    %v4219 = vld [vmem:[#allocation26 + $0x380] sm:$0xff]
    %v4220 = vld [vmem:[#allocation26 + $0x388] sm:$0xff]
    %v4221 = vld [vmem:[#allocation26 + $0x390] sm:$0xff]
    %v4222 = vld [vmem:[#allocation26 + $0x398] sm:$0xff]
    %v4223 = vld [vmem:[#allocation26 + $0x3a0] sm:$0xff]
    %v4224 = vld [vmem:[#allocation26 + $0x3a8] sm:$0xff]
    %v4225 = vld [vmem:[#allocation26 + $0x3b0] sm:$0xff]
    %v4226 = vld [vmem:[#allocation26 + $0x3b8] sm:$0xff]
    %v4227 = vld [vmem:[#allocation26 + $0x3c0] sm:$0xff]
    %v4228 = vld [vmem:[#allocation26 + $0x3c8] sm:$0xff]
    %v4229 = vld [vmem:[#allocation26 + $0x3d0] sm:$0xff]
    %v4230 = vld [vmem:[#allocation26 + $0x3d8] sm:$0xff]
    %v4231 = vld [vmem:[#allocation26 + $0x3e0] sm:$0xff]
    %v4232 = vld [vmem:[#allocation26 + $0x3e8] sm:$0xff]
    %v4233 = vld [vmem:[#allocation26 + $0x3f0] sm:$0xff]
    %v4234 = vld [vmem:[#allocation26 + $0x3f8] sm:$0xff]
    %v4235 = vpack.c.bf16 %v4103, %v4103
    %v4236 = vpack.c.bf16 %v4104, %v4104
    %v4237 = vpack.c.bf16 %v4105, %v4105
    %v4238 = vpack.c.bf16 %v4106, %v4106
    %v4239 = vld [vmem:[#allocation35 + $0x15] sm:$0xf]
    %v4241 = vlaneseq
    %v4242 = vshrl.u32 %v4241, 7
    %v4243 = vsub.s32 0, %v4242
    %v4244 = vrot.slane %v4239, %v4243
    %v4245 = vlaneseq
    %v4246 = vshrl.u32 %v4245, 7
    %v4247 = vsub.s32 1, %v4246
    %v4248 = vrot.slane %v4239, %v4247
    %v4249 = vlaneseq
    %v4250 = vshrl.u32 %v4249, 7
    %v4251 = vsub.s32 2, %v4250
    %v4252 = vrot.slane %v4239, %v4251
    %v4253 = vlaneseq
    %v4254 = vshrl.u32 %v4253, 7
    %v4255 = vsub.s32 3, %v4254
    %v4256 = vrot.slane %v4239, %v4255
    %v4389 = vunpack.c.l.b16 %v4107
    %v4390 = vunpack.c.h.b16 %v4107
    %v4391 = vunpack.c.l.b16 %v4108
    %v4392 = vunpack.c.h.b16 %v4108
    %v4393 = vunpack.c.l.b16 %v4109
    %v4394 = vunpack.c.h.b16 %v4109
    %v4395 = vunpack.c.l.b16 %v4110
    %v4396 = vunpack.c.h.b16 %v4110
    %v4397 = vunpack.c.l.b16 %v4111
    %v4398 = vunpack.c.h.b16 %v4111
    %v4399 = vunpack.c.l.b16 %v4112
    %v4400 = vunpack.c.h.b16 %v4112
    %v4401 = vunpack.c.l.b16 %v4113
    %v4402 = vunpack.c.h.b16 %v4113
    %v4403 = vunpack.c.l.b16 %v4114
    %v4404 = vunpack.c.h.b16 %v4114
    %v4405 = vunpack.c.l.b16 %v4115
    %v4406 = vunpack.c.h.b16 %v4115
    %v4407 = vunpack.c.l.b16 %v4116
    %v4408 = vunpack.c.h.b16 %v4116
    %v4409 = vunpack.c.l.b16 %v4117
    %v4410 = vunpack.c.h.b16 %v4117
    %v4411 = vunpack.c.l.b16 %v4118
    %v4412 = vunpack.c.h.b16 %v4118
    %v4413 = vunpack.c.l.b16 %v4119
    %v4414 = vunpack.c.h.b16 %v4119
    %v4415 = vunpack.c.l.b16 %v4120
    %v4416 = vunpack.c.h.b16 %v4120
    %v4417 = vunpack.c.l.b16 %v4121
    %v4418 = vunpack.c.h.b16 %v4121
    %v4419 = vunpack.c.l.b16 %v4122
    %v4420 = vunpack.c.h.b16 %v4122
    %v4421 = vunpack.c.l.b16 %v4123
    %v4422 = vunpack.c.h.b16 %v4123
    %v4423 = vunpack.c.l.b16 %v4124
    %v4424 = vunpack.c.h.b16 %v4124
    %v4425 = vunpack.c.l.b16 %v4125
    %v4426 = vunpack.c.h.b16 %v4125
    %v4427 = vunpack.c.l.b16 %v4126
    %v4428 = vunpack.c.h.b16 %v4126
    %v4429 = vunpack.c.l.b16 %v4127
    %v4430 = vunpack.c.h.b16 %v4127
    %v4431 = vunpack.c.l.b16 %v4128
    %v4432 = vunpack.c.h.b16 %v4128
    %v4433 = vunpack.c.l.b16 %v4129
    %v4434 = vunpack.c.h.b16 %v4129
    %v4435 = vunpack.c.l.b16 %v4130
    %v4436 = vunpack.c.h.b16 %v4130
    %v4437 = vunpack.c.l.b16 %v4131
    %v4438 = vunpack.c.h.b16 %v4131
    %v4439 = vunpack.c.l.b16 %v4132
    %v4440 = vunpack.c.h.b16 %v4132
    %v4441 = vunpack.c.l.b16 %v4133
    %v4442 = vunpack.c.h.b16 %v4133
    %v4443 = vunpack.c.l.b16 %v4134
    %v4444 = vunpack.c.h.b16 %v4134
    %v4445 = vunpack.c.l.b16 %v4135
    %v4446 = vunpack.c.h.b16 %v4135
    %v4447 = vunpack.c.l.b16 %v4136
    %v4448 = vunpack.c.h.b16 %v4136
    %v4449 = vunpack.c.l.b16 %v4137
    %v4450 = vunpack.c.h.b16 %v4137
    %v4451 = vunpack.c.l.b16 %v4138
    %v4452 = vunpack.c.h.b16 %v4138
    %v4453 = vunpack.c.l.b16 %v4139
    %v4454 = vunpack.c.h.b16 %v4139
    %v4455 = vunpack.c.l.b16 %v4140
    %v4456 = vunpack.c.h.b16 %v4140
    %v4457 = vunpack.c.l.b16 %v4141
    %v4458 = vunpack.c.h.b16 %v4141
    %v4459 = vunpack.c.l.b16 %v4142
    %v4460 = vunpack.c.h.b16 %v4142
    %v4461 = vunpack.c.l.b16 %v4143
    %v4462 = vunpack.c.h.b16 %v4143
    %v4463 = vunpack.c.l.b16 %v4144
    %v4464 = vunpack.c.h.b16 %v4144
    %v4465 = vunpack.c.l.b16 %v4145
    %v4466 = vunpack.c.h.b16 %v4145
    %v4467 = vunpack.c.l.b16 %v4146
    %v4468 = vunpack.c.h.b16 %v4146
    %v4469 = vunpack.c.l.b16 %v4147
    %v4470 = vunpack.c.h.b16 %v4147
    %v4471 = vunpack.c.l.b16 %v4148
    %v4472 = vunpack.c.h.b16 %v4148
    %v4473 = vunpack.c.l.b16 %v4149
    %v4474 = vunpack.c.h.b16 %v4149
    %v4475 = vunpack.c.l.b16 %v4150
    %v4476 = vunpack.c.h.b16 %v4150
    %v4477 = vunpack.c.l.b16 %v4151
    %v4478 = vunpack.c.h.b16 %v4151
    %v4479 = vunpack.c.l.b16 %v4152
    %v4480 = vunpack.c.h.b16 %v4152
    %v4481 = vunpack.c.l.b16 %v4153
    %v4482 = vunpack.c.h.b16 %v4153
    %v4483 = vunpack.c.l.b16 %v4154
    %v4484 = vunpack.c.h.b16 %v4154
    %v4485 = vunpack.c.l.b16 %v4155
    %v4486 = vunpack.c.h.b16 %v4155
    %v4487 = vunpack.c.l.b16 %v4156
    %v4488 = vunpack.c.h.b16 %v4156
    %v4489 = vunpack.c.l.b16 %v4157
    %v4490 = vunpack.c.h.b16 %v4157
    %v4491 = vunpack.c.l.b16 %v4158
    %v4492 = vunpack.c.h.b16 %v4158
    %v4493 = vunpack.c.l.b16 %v4159
    %v4494 = vunpack.c.h.b16 %v4159
    %v4495 = vunpack.c.l.b16 %v4160
    %v4496 = vunpack.c.h.b16 %v4160
    %v4497 = vunpack.c.l.b16 %v4161
    %v4498 = vunpack.c.h.b16 %v4161
    %v4499 = vunpack.c.l.b16 %v4162
    %v4500 = vunpack.c.h.b16 %v4162
    %v4501 = vunpack.c.l.b16 %v4163
    %v4502 = vunpack.c.h.b16 %v4163
    %v4503 = vunpack.c.l.b16 %v4164
    %v4504 = vunpack.c.h.b16 %v4164
    %v4505 = vunpack.c.l.b16 %v4165
    %v4506 = vunpack.c.h.b16 %v4165
    %v4507 = vunpack.c.l.b16 %v4166
    %v4508 = vunpack.c.h.b16 %v4166
    %v4509 = vunpack.c.l.b16 %v4167
    %v4510 = vunpack.c.h.b16 %v4167
    %v4511 = vunpack.c.l.b16 %v4168
    %v4512 = vunpack.c.h.b16 %v4168
    %v4513 = vunpack.c.l.b16 %v4169
    %v4514 = vunpack.c.h.b16 %v4169
    %v4515 = vunpack.c.l.b16 %v4170
    %v4516 = vunpack.c.h.b16 %v4170
    %v4517 = vunpack.c.l.b16 %v4171
    %v4518 = vunpack.c.h.b16 %v4171
    %v4519 = vunpack.c.l.b16 %v4172
    %v4520 = vunpack.c.h.b16 %v4172
    %v4521 = vunpack.c.l.b16 %v4173
    %v4522 = vunpack.c.h.b16 %v4173
    %v4523 = vunpack.c.l.b16 %v4174
    %v4524 = vunpack.c.h.b16 %v4174
    %v4525 = vunpack.c.l.b16 %v4175
    %v4526 = vunpack.c.h.b16 %v4175
    %v4527 = vunpack.c.l.b16 %v4176
    %v4528 = vunpack.c.h.b16 %v4176
    %v4529 = vunpack.c.l.b16 %v4177
    %v4530 = vunpack.c.h.b16 %v4177
    %v4531 = vunpack.c.l.b16 %v4178
    %v4532 = vunpack.c.h.b16 %v4178
    %v4533 = vunpack.c.l.b16 %v4179
    %v4534 = vunpack.c.h.b16 %v4179
    %v4535 = vunpack.c.l.b16 %v4180
    %v4536 = vunpack.c.h.b16 %v4180
    %v4537 = vunpack.c.l.b16 %v4181
    %v4538 = vunpack.c.h.b16 %v4181
    %v4539 = vunpack.c.l.b16 %v4182
    %v4540 = vunpack.c.h.b16 %v4182
    %v4541 = vunpack.c.l.b16 %v4183
    %v4542 = vunpack.c.h.b16 %v4183
    %v4543 = vunpack.c.l.b16 %v4184
    %v4544 = vunpack.c.h.b16 %v4184
    %v4545 = vunpack.c.l.b16 %v4185
    %v4546 = vunpack.c.h.b16 %v4185
    %v4547 = vunpack.c.l.b16 %v4186
    %v4548 = vunpack.c.h.b16 %v4186
    %v4549 = vunpack.c.l.b16 %v4187
    %v4550 = vunpack.c.h.b16 %v4187
    %v4551 = vunpack.c.l.b16 %v4188
    %v4552 = vunpack.c.h.b16 %v4188
    %v4553 = vunpack.c.l.b16 %v4189
    %v4554 = vunpack.c.h.b16 %v4189
    %v4555 = vunpack.c.l.b16 %v4190
    %v4556 = vunpack.c.h.b16 %v4190
    %v4557 = vunpack.c.l.b16 %v4191
    %v4558 = vunpack.c.h.b16 %v4191
    %v4559 = vunpack.c.l.b16 %v4192
    %v4560 = vunpack.c.h.b16 %v4192
    %v4561 = vunpack.c.l.b16 %v4193
    %v4562 = vunpack.c.h.b16 %v4193
    %v4563 = vunpack.c.l.b16 %v4194
    %v4564 = vunpack.c.h.b16 %v4194
    %v4565 = vunpack.c.l.b16 %v4195
    %v4566 = vunpack.c.h.b16 %v4195
    %v4567 = vunpack.c.l.b16 %v4196
    %v4568 = vunpack.c.h.b16 %v4196
    %v4569 = vunpack.c.l.b16 %v4197
    %v4570 = vunpack.c.h.b16 %v4197
    %v4571 = vunpack.c.l.b16 %v4198
    %v4572 = vunpack.c.h.b16 %v4198
    %v4573 = vunpack.c.l.b16 %v4199
    %v4574 = vunpack.c.h.b16 %v4199
    %v4575 = vunpack.c.l.b16 %v4200
    %v4576 = vunpack.c.h.b16 %v4200
    %v4577 = vunpack.c.l.b16 %v4201
    %v4578 = vunpack.c.h.b16 %v4201
    %v4579 = vunpack.c.l.b16 %v4202
    %v4580 = vunpack.c.h.b16 %v4202
    %v4581 = vunpack.c.l.b16 %v4203
    %v4582 = vunpack.c.h.b16 %v4203
    %v4583 = vunpack.c.l.b16 %v4204
    %v4584 = vunpack.c.h.b16 %v4204
    %v4585 = vunpack.c.l.b16 %v4205
    %v4586 = vunpack.c.h.b16 %v4205
    %v4587 = vunpack.c.l.b16 %v4206
    %v4588 = vunpack.c.h.b16 %v4206
    %v4589 = vunpack.c.l.b16 %v4207
    %v4590 = vunpack.c.h.b16 %v4207
    %v4591 = vunpack.c.l.b16 %v4208
    %v4592 = vunpack.c.h.b16 %v4208
    %v4593 = vunpack.c.l.b16 %v4209
    %v4594 = vunpack.c.h.b16 %v4209
    %v4595 = vunpack.c.l.b16 %v4210
    %v4596 = vunpack.c.h.b16 %v4210
    %v4597 = vunpack.c.l.b16 %v4211
    %v4598 = vunpack.c.h.b16 %v4211
    %v4599 = vunpack.c.l.b16 %v4212
    %v4600 = vunpack.c.h.b16 %v4212
    %v4601 = vunpack.c.l.b16 %v4213
    %v4602 = vunpack.c.h.b16 %v4213
    %v4603 = vunpack.c.l.b16 %v4214
    %v4604 = vunpack.c.h.b16 %v4214
    %v4605 = vunpack.c.l.b16 %v4215
    %v4606 = vunpack.c.h.b16 %v4215
    %v4607 = vunpack.c.l.b16 %v4216
    %v4608 = vunpack.c.h.b16 %v4216
    %v4609 = vunpack.c.l.b16 %v4217
    %v4610 = vunpack.c.h.b16 %v4217
    %v4611 = vunpack.c.l.b16 %v4218
    %v4612 = vunpack.c.h.b16 %v4218
    %v4613 = vunpack.c.l.b16 %v4219
    %v4614 = vunpack.c.h.b16 %v4219
    %v4615 = vunpack.c.l.b16 %v4220
    %v4616 = vunpack.c.h.b16 %v4220
    %v4617 = vunpack.c.l.b16 %v4221
    %v4618 = vunpack.c.h.b16 %v4221
    %v4619 = vunpack.c.l.b16 %v4222
    %v4620 = vunpack.c.h.b16 %v4222
    %v4621 = vunpack.c.l.b16 %v4223
    %v4622 = vunpack.c.h.b16 %v4223
    %v4623 = vunpack.c.l.b16 %v4224
    %v4624 = vunpack.c.h.b16 %v4224
    %v4625 = vunpack.c.l.b16 %v4225
    %v4626 = vunpack.c.h.b16 %v4225
    %v4627 = vunpack.c.l.b16 %v4226
    %v4628 = vunpack.c.h.b16 %v4226
    %v4629 = vunpack.c.l.b16 %v4227
    %v4630 = vunpack.c.h.b16 %v4227
    %v4631 = vunpack.c.l.b16 %v4228
    %v4632 = vunpack.c.h.b16 %v4228
    %v4633 = vunpack.c.l.b16 %v4229
    %v4634 = vunpack.c.h.b16 %v4229
    %v4635 = vunpack.c.l.b16 %v4230
    %v4636 = vunpack.c.h.b16 %v4230
    %v4637 = vunpack.c.l.b16 %v4231
    %v4638 = vunpack.c.h.b16 %v4231
    %v4639 = vunpack.c.l.b16 %v4232
    %v4640 = vunpack.c.h.b16 %v4232
    %v4641 = vunpack.c.l.b16 %v4233
    %v4642 = vunpack.c.h.b16 %v4233
    %v4643 = vunpack.c.l.b16 %v4234
    %v4644 = vunpack.c.h.b16 %v4234
    %v4645 = vpack.c.b16 %v4393, %v4389
    %v4646 = vpack.c.b16 %v4394, %v4390
    %v4647 = vpack.c.b16 %v4395, %v4391
    %v4648 = vpack.c.b16 %v4396, %v4392
    %v4649 = vpack.c.b16 %v4401, %v4397
    %v4650 = vpack.c.b16 %v4402, %v4398
    %v4651 = vpack.c.b16 %v4403, %v4399
    %v4652 = vpack.c.b16 %v4404, %v4400
    %v4653 = vpack.c.b16 %v4409, %v4405
    %v4654 = vpack.c.b16 %v4410, %v4406
    %v4655 = vpack.c.b16 %v4411, %v4407
    %v4656 = vpack.c.b16 %v4412, %v4408
    %v4657 = vpack.c.b16 %v4417, %v4413
    %v4658 = vpack.c.b16 %v4418, %v4414
    %v4659 = vpack.c.b16 %v4419, %v4415
    %v4660 = vpack.c.b16 %v4420, %v4416
    %v4661 = vpack.c.b16 %v4425, %v4421
    %v4662 = vpack.c.b16 %v4426, %v4422
    %v4663 = vpack.c.b16 %v4427, %v4423
    %v4664 = vpack.c.b16 %v4428, %v4424
    %v4665 = vpack.c.b16 %v4433, %v4429
    %v4666 = vpack.c.b16 %v4434, %v4430
    %v4667 = vpack.c.b16 %v4435, %v4431
    %v4668 = vpack.c.b16 %v4436, %v4432
    %v4669 = vpack.c.b16 %v4441, %v4437
    %v4670 = vpack.c.b16 %v4442, %v4438
    %v4671 = vpack.c.b16 %v4443, %v4439
    %v4672 = vpack.c.b16 %v4444, %v4440
    %v4673 = vpack.c.b16 %v4449, %v4445
    %v4674 = vpack.c.b16 %v4450, %v4446
    %v4675 = vpack.c.b16 %v4451, %v4447
    %v4676 = vpack.c.b16 %v4452, %v4448
    %v4677 = vpack.c.b16 %v4457, %v4453
    %v4678 = vpack.c.b16 %v4458, %v4454
    %v4679 = vpack.c.b16 %v4459, %v4455
    %v4680 = vpack.c.b16 %v4460, %v4456
    %v4681 = vpack.c.b16 %v4465, %v4461
    %v4682 = vpack.c.b16 %v4466, %v4462
    %v4683 = vpack.c.b16 %v4467, %v4463
    %v4684 = vpack.c.b16 %v4468, %v4464
    %v4685 = vpack.c.b16 %v4473, %v4469
    %v4686 = vpack.c.b16 %v4474, %v4470
    %v4687 = vpack.c.b16 %v4475, %v4471
    %v4688 = vpack.c.b16 %v4476, %v4472
    %v4689 = vpack.c.b16 %v4481, %v4477
    %v4690 = vpack.c.b16 %v4482, %v4478
    %v4691 = vpack.c.b16 %v4483, %v4479
    %v4692 = vpack.c.b16 %v4484, %v4480
    %v4693 = vpack.c.b16 %v4489, %v4485
    %v4694 = vpack.c.b16 %v4490, %v4486
    %v4695 = vpack.c.b16 %v4491, %v4487
    %v4696 = vpack.c.b16 %v4492, %v4488
    %v4697 = vpack.c.b16 %v4497, %v4493
    %v4698 = vpack.c.b16 %v4498, %v4494
    %v4699 = vpack.c.b16 %v4499, %v4495
    %v4700 = vpack.c.b16 %v4500, %v4496
    %v4701 = vpack.c.b16 %v4505, %v4501
    %v4702 = vpack.c.b16 %v4506, %v4502
    %v4703 = vpack.c.b16 %v4507, %v4503
    %v4704 = vpack.c.b16 %v4508, %v4504
    %v4705 = vpack.c.b16 %v4513, %v4509
    %v4706 = vpack.c.b16 %v4514, %v4510
    %v4707 = vpack.c.b16 %v4515, %v4511
    %v4708 = vpack.c.b16 %v4516, %v4512
    %v4709 = vpack.c.b16 %v4521, %v4517
    %v4710 = vpack.c.b16 %v4522, %v4518
    %v4711 = vpack.c.b16 %v4523, %v4519
    %v4712 = vpack.c.b16 %v4524, %v4520
    %v4713 = vpack.c.b16 %v4529, %v4525
    %v4714 = vpack.c.b16 %v4530, %v4526
    %v4715 = vpack.c.b16 %v4531, %v4527
    %v4716 = vpack.c.b16 %v4532, %v4528
    %v4717 = vpack.c.b16 %v4537, %v4533
    %v4718 = vpack.c.b16 %v4538, %v4534
    %v4719 = vpack.c.b16 %v4539, %v4535
    %v4720 = vpack.c.b16 %v4540, %v4536
    %v4721 = vpack.c.b16 %v4545, %v4541
    %v4722 = vpack.c.b16 %v4546, %v4542
    %v4723 = vpack.c.b16 %v4547, %v4543
    %v4724 = vpack.c.b16 %v4548, %v4544
    %v4725 = vpack.c.b16 %v4553, %v4549
    %v4726 = vpack.c.b16 %v4554, %v4550
    %v4727 = vpack.c.b16 %v4555, %v4551
    %v4728 = vpack.c.b16 %v4556, %v4552
    %v4729 = vpack.c.b16 %v4561, %v4557
    %v4730 = vpack.c.b16 %v4562, %v4558
    %v4731 = vpack.c.b16 %v4563, %v4559
    %v4732 = vpack.c.b16 %v4564, %v4560
    %v4733 = vpack.c.b16 %v4569, %v4565
    %v4734 = vpack.c.b16 %v4570, %v4566
    %v4735 = vpack.c.b16 %v4571, %v4567
    %v4736 = vpack.c.b16 %v4572, %v4568
    %v4737 = vpack.c.b16 %v4577, %v4573
    %v4738 = vpack.c.b16 %v4578, %v4574
    %v4739 = vpack.c.b16 %v4579, %v4575
    %v4740 = vpack.c.b16 %v4580, %v4576
    %v4741 = vpack.c.b16 %v4585, %v4581
    %v4742 = vpack.c.b16 %v4586, %v4582
    %v4743 = vpack.c.b16 %v4587, %v4583
    %v4744 = vpack.c.b16 %v4588, %v4584
    %v4745 = vpack.c.b16 %v4593, %v4589
    %v4746 = vpack.c.b16 %v4594, %v4590
    %v4747 = vpack.c.b16 %v4595, %v4591
    %v4748 = vpack.c.b16 %v4596, %v4592
    %v4749 = vpack.c.b16 %v4601, %v4597
    %v4750 = vpack.c.b16 %v4602, %v4598
    %v4751 = vpack.c.b16 %v4603, %v4599
    %v4752 = vpack.c.b16 %v4604, %v4600
    %v4753 = vpack.c.b16 %v4609, %v4605
    %v4754 = vpack.c.b16 %v4610, %v4606
    %v4755 = vpack.c.b16 %v4611, %v4607
    %v4756 = vpack.c.b16 %v4612, %v4608
    %v4757 = vpack.c.b16 %v4617, %v4613
    %v4758 = vpack.c.b16 %v4618, %v4614
    %v4759 = vpack.c.b16 %v4619, %v4615
    %v4760 = vpack.c.b16 %v4620, %v4616
    %v4761 = vpack.c.b16 %v4625, %v4621
    %v4762 = vpack.c.b16 %v4626, %v4622
    %v4763 = vpack.c.b16 %v4627, %v4623
    %v4764 = vpack.c.b16 %v4628, %v4624
    %v4765 = vpack.c.b16 %v4633, %v4629
    %v4766 = vpack.c.b16 %v4634, %v4630
    %v4767 = vpack.c.b16 %v4635, %v4631
    %v4768 = vpack.c.b16 %v4636, %v4632
    %v4769 = vpack.c.b16 %v4641, %v4637
    %v4770 = vpack.c.b16 %v4642, %v4638
    %v4771 = vpack.c.b16 %v4643, %v4639
    %v4772 = vpack.c.b16 %v4644, %v4640
    %4901 = vmatprep.subr.bf16.mxu0 %v4646
    %4902 = vmatpush1.bf16.msra.mxu0 %v4645
    %4903 = vmatprep.subr.bf16.mxu0 %v4650
    %4904 = vmatpush1.bf16.msra.mxu0 %v4649
    %4905 = vmatprep.subr.bf16.mxu0 %v4654
    %4906 = vmatpush1.bf16.msra.mxu0 %v4653
    %4907 = vmatprep.subr.bf16.mxu0 %v4658
    %4908 = vmatpush1.bf16.msra.mxu0 %v4657
    %4909 = vmatprep.subr.bf16.mxu0 %v4662
    %4910 = vmatpush1.bf16.msra.mxu0 %v4661
    %4911 = vmatprep.subr.bf16.mxu0 %v4666
    %4912 = vmatpush1.bf16.msra.mxu0 %v4665
    %4913 = vmatprep.subr.bf16.mxu0 %v4670
    %4914 = vmatpush1.bf16.msra.mxu0 %v4669
    %4915 = vmatprep.subr.bf16.mxu0 %v4674
    %4916 = vmatpush1.bf16.msra.mxu0 %v4673
    %4917 = vmatprep.subr.bf16.mxu0 %v4678
    %4918 = vmatpush1.bf16.msra.mxu0 %v4677
    %4919 = vmatprep.subr.bf16.mxu0 %v4682
    %4920 = vmatpush1.bf16.msra.mxu0 %v4681
    %4921 = vmatprep.subr.bf16.mxu0 %v4686
    %4922 = vmatpush1.bf16.msra.mxu0 %v4685
    %4923 = vmatprep.subr.bf16.mxu0 %v4690
    %4924 = vmatpush1.bf16.msra.mxu0 %v4689
    %4925 = vmatprep.subr.bf16.mxu0 %v4694
    %4926 = vmatpush1.bf16.msra.mxu0 %v4693
    %4927 = vmatprep.subr.bf16.mxu0 %v4698
    %4928 = vmatpush1.bf16.msra.mxu0 %v4697
    %4929 = vmatprep.subr.bf16.mxu0 %v4702
    %4930 = vmatpush1.bf16.msra.mxu0 %v4701
    %4931 = vmatprep.subr.bf16.mxu0 %v4706
    %4932 = vmatpush1.bf16.msra.mxu0 %v4705
    %4933 = vmatprep.mubr.bf16.mxu0 %v4236
    %4934 = vmatmul.mubr.bf16.gmra.mrb[0].mxu0 %v4235
    %v4935 = vpop.f32.mrb[0].mxu0
    %v4936 = vadd.f32 %v4244, %v4935
    %v4937 = vpop.f32.mrb[0].mxu0
    %v4938 = vadd.f32 %v4248, %v4937
    %v4939 = vpop.f32.mrb[0].mxu0
    %v4940 = vpop.f32.mrb[0].mxu0
    %4941 = vdwg.mxu0
    %4942 = vmatprep.subr.bf16.mxu0 %v4710
    %4943 = vmatpush1.bf16.msra.mxu0 %v4709
    %4944 = vmatprep.subr.bf16.mxu0 %v4714
    %4945 = vmatpush1.bf16.msra.mxu0 %v4713
    %4946 = vmatprep.subr.bf16.mxu0 %v4718
    %4947 = vmatpush1.bf16.msra.mxu0 %v4717
    %4948 = vmatprep.subr.bf16.mxu0 %v4722
    %4949 = vmatpush1.bf16.msra.mxu0 %v4721
    %4950 = vmatprep.subr.bf16.mxu0 %v4726
    %4951 = vmatpush1.bf16.msra.mxu0 %v4725
    %4952 = vmatprep.subr.bf16.mxu0 %v4730
    %4953 = vmatpush1.bf16.msra.mxu0 %v4729
    %4954 = vmatprep.subr.bf16.mxu0 %v4734
    %4955 = vmatpush1.bf16.msra.mxu0 %v4733
    %4956 = vmatprep.subr.bf16.mxu0 %v4738
    %4957 = vmatpush1.bf16.msra.mxu0 %v4737
    %4958 = vmatprep.subr.bf16.mxu0 %v4742
    %4959 = vmatpush1.bf16.msra.mxu0 %v4741
    %4960 = vmatprep.subr.bf16.mxu0 %v4746
    %4961 = vmatpush1.bf16.msra.mxu0 %v4745
    %4962 = vmatprep.subr.bf16.mxu0 %v4750
    %4963 = vmatpush1.bf16.msra.mxu0 %v4749
    %4964 = vmatprep.subr.bf16.mxu0 %v4754
    %4965 = vmatpush1.bf16.msra.mxu0 %v4753
    %4966 = vmatprep.subr.bf16.mxu0 %v4758
    %4967 = vmatpush1.bf16.msra.mxu0 %v4757
    %4968 = vmatprep.subr.bf16.mxu0 %v4762
    %4969 = vmatpush1.bf16.msra.mxu0 %v4761
    %4970 = vmatprep.subr.bf16.mxu0 %v4766
    %4971 = vmatpush1.bf16.msra.mxu0 %v4765
    %4972 = vmatprep.subr.bf16.mxu0 %v4770
    %4973 = vmatpush1.bf16.msra.mxu0 %v4769
    %4974 = vmatprep.mubr.bf16.mxu0 %v4238
    %4975 = vmatmul.mubr.bf16.gmra.mrb[0].mxu0 %v4237
    %v4976 = vpop.f32.mrb[0].mxu0
    %v4977 = vadd.f32 %v4936, %v4976
    %v4978 = vpop.f32.mrb[0].mxu0
    %v4979 = vadd.f32 %v4938, %v4978
    %v4980 = vpop.f32.mrb[0].mxu0
    %v4981 = vpop.f32.mrb[0].mxu0
    %4982 = vdwg.mxu0
    %4983 = vmatprep.subr.bf16.mxu0 %v4648
    %4984 = vmatpush1.bf16.msra.mxu0 %v4647
    %4985 = vmatprep.subr.bf16.mxu0 %v4652
    %4986 = vmatpush1.bf16.msra.mxu0 %v4651
    %4987 = vmatprep.subr.bf16.mxu0 %v4656
    %4988 = vmatpush1.bf16.msra.mxu0 %v4655
    %4989 = vmatprep.subr.bf16.mxu0 %v4660
    %4990 = vmatpush1.bf16.msra.mxu0 %v4659
    %4991 = vmatprep.subr.bf16.mxu0 %v4664
    %4992 = vmatpush1.bf16.msra.mxu0 %v4663
    %4993 = vmatprep.subr.bf16.mxu0 %v4668
    %4994 = vmatpush1.bf16.msra.mxu0 %v4667
    %4995 = vmatprep.subr.bf16.mxu0 %v4672
    %4996 = vmatpush1.bf16.msra.mxu0 %v4671
    %4997 = vmatprep.subr.bf16.mxu0 %v4676
    %4998 = vmatpush1.bf16.msra.mxu0 %v4675
    %4999 = vmatprep.subr.bf16.mxu0 %v4680
    %5000 = vmatpush1.bf16.msra.mxu0 %v4679
    %5001 = vmatprep.subr.bf16.mxu0 %v4684
    %5002 = vmatpush1.bf16.msra.mxu0 %v4683
    %5003 = vmatprep.subr.bf16.mxu0 %v4688
    %5004 = vmatpush1.bf16.msra.mxu0 %v4687
    %5005 = vmatprep.subr.bf16.mxu0 %v4692
    %5006 = vmatpush1.bf16.msra.mxu0 %v4691
    %5007 = vmatprep.subr.bf16.mxu0 %v4696
    %5008 = vmatpush1.bf16.msra.mxu0 %v4695
    %5009 = vmatprep.subr.bf16.mxu0 %v4700
    %5010 = vmatpush1.bf16.msra.mxu0 %v4699
    %5011 = vmatprep.subr.bf16.mxu0 %v4704
    %5012 = vmatpush1.bf16.msra.mxu0 %v4703
    %5013 = vmatprep.subr.bf16.mxu0 %v4708
    %5014 = vmatpush1.bf16.msra.mxu0 %v4707
    %5015 = vmatprep.mubr.bf16.mxu0 %v4236
    %5016 = vmatmul.mubr.bf16.gmra.mrb[0].mxu0 %v4235
    %v5017 = vpop.f32.mrb[0].mxu0
    %v5018 = vadd.f32 %v4252, %v5017
    %v5019 = vpop.f32.mrb[0].mxu0
    %v5020 = vadd.f32 %v4256, %v5019
    %v5021 = vpop.f32.mrb[0].mxu0
    %v5022 = vpop.f32.mrb[0].mxu0
    %5023 = vdwg.mxu0
    %5024 = vmatprep.subr.bf16.mxu0 %v4712
    %5025 = vmatpush1.bf16.msra.mxu0 %v4711
    %5026 = vmatprep.subr.bf16.mxu0 %v4716
    %5027 = vmatpush1.bf16.msra.mxu0 %v4715
    %5028 = vmatprep.subr.bf16.mxu0 %v4720
    %5029 = vmatpush1.bf16.msra.mxu0 %v4719
    %5030 = vmatprep.subr.bf16.mxu0 %v4724
    %5031 = vmatpush1.bf16.msra.mxu0 %v4723
    %5032 = vmatprep.subr.bf16.mxu0 %v4728
    %5033 = vmatpush1.bf16.msra.mxu0 %v4727
    %5034 = vmatprep.subr.bf16.mxu0 %v4732
    %5035 = vmatpush1.bf16.msra.mxu0 %v4731
    %5036 = vmatprep.subr.bf16.mxu0 %v4736
    %5037 = vmatpush1.bf16.msra.mxu0 %v4735
    %5038 = vmatprep.subr.bf16.mxu0 %v4740
    %5039 = vmatpush1.bf16.msra.mxu0 %v4739
    %5040 = vmatprep.subr.bf16.mxu0 %v4744
    %5041 = vmatpush1.bf16.msra.mxu0 %v4743
    %5042 = vmatprep.subr.bf16.mxu0 %v4748
    %5043 = vmatpush1.bf16.msra.mxu0 %v4747
    %5044 = vmatprep.subr.bf16.mxu0 %v4752
    %5045 = vmatpush1.bf16.msra.mxu0 %v4751
    %5046 = vmatprep.subr.bf16.mxu0 %v4756
    %5047 = vmatpush1.bf16.msra.mxu0 %v4755
    %5048 = vmatprep.subr.bf16.mxu0 %v4760
    %5049 = vmatpush1.bf16.msra.mxu0 %v4759
    %5050 = vmatprep.subr.bf16.mxu0 %v4764
    %5051 = vmatpush1.bf16.msra.mxu0 %v4763
    %5052 = vmatprep.subr.bf16.mxu0 %v4768
    %5053 = vmatpush1.bf16.msra.mxu0 %v4767
    %5054 = vmatprep.subr.bf16.mxu0 %v4772
    %5055 = vmatpush1.bf16.msra.mxu0 %v4771
    %5056 = vmatprep.mubr.bf16.mxu0 %v4238
    %5057 = vmatmul.mubr.bf16.gmra.mrb[0].mxu0 %v4237
    %v5058 = vpop.f32.mrb[0].mxu0
    %v5059 = vadd.f32 %v5018, %v5058
    %v5060 = vpop.f32.mrb[0].mxu0
    %v5061 = vadd.f32 %v5020, %v5060
    %v5062 = vpop.f32.mrb[0].mxu0
    %v5063 = vpop.f32.mrb[0].mxu0
    %5064 = vdwg.mxu0
    %vm5065 = vcmp.gt.f32.partialorder %v4977, 0.0
    %vm5066 = vcmp.gt.f32.partialorder %v4979, 0.0
    %vm5067 = vcmp.gt.f32.partialorder %v5059, 0.0
    %vm5068 = vcmp.gt.f32.partialorder %v5061, 0.0
    %v5069 = vmin.f32 %v4977, 0.0
    %v5070 = vmin.f32 %v4979, 0.0
    %v5071 = vmin.f32 %v5059, 0.0
    %v5072 = vmin.f32 %v5061, 0.0
    %v5073 = vmul.f32 %v5069, 1.442695
    %v5074 = vpow.pop %v5073
    %v5075 = vmul.f32 %v5070, 1.442695
    %v5076 = vpow.pop %v5075
    %v5077 = vmul.f32 %v5071, 1.442695
    %v5078 = vpow.pop %v5077
    %v5079 = vmul.f32 %v5072, 1.442695
    %v5080 = vpow.pop %v5079
    %v5081 = vsub.f32 %v5074, 1.0
    %v5082 = vsub.f32 %v5076, 1.0
    %v5083 = vsub.f32 %v5078, 1.0
    %v5084 = vsub.f32 %v5080, 1.0
    %v5085 = vsel %vm5065, %v4977, %v5081
    %v5086 = vsel %vm5066, %v4979, %v5082
    %v5087 = vsel %vm5067, %v5059, %v5083
    %v5088 = vsel %vm5068, %v5061, %v5084
    %v5089 = vld [vmem:[#allocation2] sm:$0x3]
    %v5090 = vld [vmem:[%s14] sm:$0xff]
    %v5091 = vld [vmem:[%s14 + $0x8] sm:$0xff]
    %v5092 = vld [vmem:[%s14 + $0x10] sm:$0xff]
    %v5093 = vld [vmem:[%s14 + $0x18] sm:$0xff]
    %v5094 = vld [vmem:[%s14 + $0x20] sm:$0xff]
    %v5095 = vld [vmem:[%s14 + $0x28] sm:$0xff]
    %v5096 = vld [vmem:[%s14 + $0x30] sm:$0xff]
    %v5097 = vld [vmem:[%s14 + $0x38] sm:$0xff]
    %v5098 = vld [vmem:[%s14 + $0x40] sm:$0xff]
    %v5099 = vld [vmem:[%s14 + $0x48] sm:$0xff]
    %v5100 = vld [vmem:[%s14 + $0x50] sm:$0xff]
    %v5101 = vld [vmem:[%s14 + $0x58] sm:$0xff]
    %v5102 = vld [vmem:[%s14 + $0x60] sm:$0xff]
    %v5103 = vld [vmem:[%s14 + $0x68] sm:$0xff]
    %v5104 = vld [vmem:[%s14 + $0x70] sm:$0xff]
    %v5105 = vld [vmem:[%s14 + $0x78] sm:$0xff]
    %v5106 = vld [vmem:[%s14 + $0x80] sm:$0xff]
    %v5107 = vld [vmem:[%s14 + $0x88] sm:$0xff]
    %v5108 = vld [vmem:[%s14 + $0x90] sm:$0xff]
    %v5109 = vld [vmem:[%s14 + $0x98] sm:$0xff]
    %v5110 = vld [vmem:[%s14 + $0xa0] sm:$0xff]
    %v5111 = vld [vmem:[%s14 + $0xa8] sm:$0xff]
    %v5112 = vld [vmem:[%s14 + $0xb0] sm:$0xff]
    %v5113 = vld [vmem:[%s14 + $0xb8] sm:$0xff]
    %v5114 = vld [vmem:[%s14 + $0xc0] sm:$0xff]
    %v5115 = vld [vmem:[%s14 + $0xc8] sm:$0xff]
    %v5116 = vld [vmem:[%s14 + $0xd0] sm:$0xff]
    %v5117 = vld [vmem:[%s14 + $0xd8] sm:$0xff]
    %v5118 = vld [vmem:[%s14 + $0xe0] sm:$0xff]
    %v5119 = vld [vmem:[%s14 + $0xe8] sm:$0xff]
    %v5120 = vld [vmem:[%s14 + $0xf0] sm:$0xff]
    %v5121 = vld [vmem:[%s14 + $0xf8] sm:$0xff]
    %v5122 = vld [vmem:[%s14 + $0x100] sm:$0xff]
    %v5123 = vld [vmem:[%s14 + $0x108] sm:$0xff]
    %v5124 = vld [vmem:[%s14 + $0x110] sm:$0xff]
    %v5125 = vld [vmem:[%s14 + $0x118] sm:$0xff]
    %v5126 = vld [vmem:[%s14 + $0x120] sm:$0xff]
    %v5127 = vld [vmem:[%s14 + $0x128] sm:$0xff]
    %v5128 = vld [vmem:[%s14 + $0x130] sm:$0xff]
    %v5129 = vld [vmem:[%s14 + $0x138] sm:$0xff]
    %v5130 = vld [vmem:[%s14 + $0x140] sm:$0xff]
    %v5131 = vld [vmem:[%s14 + $0x148] sm:$0xff]
    %v5132 = vld [vmem:[%s14 + $0x150] sm:$0xff]
    %v5133 = vld [vmem:[%s14 + $0x158] sm:$0xff]
    %v5134 = vld [vmem:[%s14 + $0x160] sm:$0xff]
    %v5135 = vld [vmem:[%s14 + $0x168] sm:$0xff]
    %v5136 = vld [vmem:[%s14 + $0x170] sm:$0xff]
    %v5137 = vld [vmem:[%s14 + $0x178] sm:$0xff]
    %v5138 = vld [vmem:[%s14 + $0x180] sm:$0xff]
    %v5139 = vld [vmem:[%s14 + $0x188] sm:$0xff]
    %v5140 = vld [vmem:[%s14 + $0x190] sm:$0xff]
    %v5141 = vld [vmem:[%s14 + $0x198] sm:$0xff]
    %v5142 = vld [vmem:[%s14 + $0x1a0] sm:$0xff]
    %v5143 = vld [vmem:[%s14 + $0x1a8] sm:$0xff]
    %v5144 = vld [vmem:[%s14 + $0x1b0] sm:$0xff]
    %v5145 = vld [vmem:[%s14 + $0x1b8] sm:$0xff]
    %v5146 = vld [vmem:[%s14 + $0x1c0] sm:$0xff]
    %v5147 = vld [vmem:[%s14 + $0x1c8] sm:$0xff]
    %v5148 = vld [vmem:[%s14 + $0x1d0] sm:$0xff]
    %v5149 = vld [vmem:[%s14 + $0x1d8] sm:$0xff]
    %v5150 = vld [vmem:[%s14 + $0x1e0] sm:$0xff]
    %v5151 = vld [vmem:[%s14 + $0x1e8] sm:$0xff]
    %v5152 = vld [vmem:[%s14 + $0x1f0] sm:$0xff]
    %v5153 = vld [vmem:[%s14 + $0x1f8] sm:$0xff]
    %v5154 = vpack.c.bf16 %v5085, %v5085
    %v5155 = vpack.c.bf16 %v5086, %v5086
    %v5156 = vpack.c.bf16 %v5087, %v5087
    %v5157 = vpack.c.bf16 %v5088, %v5088
    %v5158 = vld [vmem:[#allocation35 + $0x19] sm:$0x3]
    %v5160 = vlaneseq
    %v5161 = vshrl.u32 %v5160, 7
    %v5162 = vsub.s32 0, %v5161
    %v5163 = vrot.slane %v5158, %v5162
    %v5164 = vlaneseq
    %v5165 = vshrl.u32 %v5164, 7
    %v5166 = vsub.s32 1, %v5165
    %v5167 = vrot.slane %v5158, %v5166
    %v5234 = vunpack.c.l.b16 %v5090
    %v5235 = vunpack.c.h.b16 %v5090
    %v5236 = vunpack.c.l.b16 %v5091
    %v5237 = vunpack.c.h.b16 %v5091
    %v5238 = vunpack.c.l.b16 %v5092
    %v5239 = vunpack.c.h.b16 %v5092
    %v5240 = vunpack.c.l.b16 %v5093
    %v5241 = vunpack.c.h.b16 %v5093
    %v5242 = vunpack.c.l.b16 %v5094
    %v5243 = vunpack.c.h.b16 %v5094
    %v5244 = vunpack.c.l.b16 %v5095
    %v5245 = vunpack.c.h.b16 %v5095
    %v5246 = vunpack.c.l.b16 %v5096
    %v5247 = vunpack.c.h.b16 %v5096
    %v5248 = vunpack.c.l.b16 %v5097
    %v5249 = vunpack.c.h.b16 %v5097
    %v5250 = vunpack.c.l.b16 %v5098
    %v5251 = vunpack.c.h.b16 %v5098
    %v5252 = vunpack.c.l.b16 %v5099
    %v5253 = vunpack.c.h.b16 %v5099
    %v5254 = vunpack.c.l.b16 %v5100
    %v5255 = vunpack.c.h.b16 %v5100
    %v5256 = vunpack.c.l.b16 %v5101
    %v5257 = vunpack.c.h.b16 %v5101
    %v5258 = vunpack.c.l.b16 %v5102
    %v5259 = vunpack.c.h.b16 %v5102
    %v5260 = vunpack.c.l.b16 %v5103
    %v5261 = vunpack.c.h.b16 %v5103
    %v5262 = vunpack.c.l.b16 %v5104
    %v5263 = vunpack.c.h.b16 %v5104
    %v5264 = vunpack.c.l.b16 %v5105
    %v5265 = vunpack.c.h.b16 %v5105
    %v5266 = vunpack.c.l.b16 %v5106
    %v5267 = vunpack.c.h.b16 %v5106
    %v5268 = vunpack.c.l.b16 %v5107
    %v5269 = vunpack.c.h.b16 %v5107
    %v5270 = vunpack.c.l.b16 %v5108
    %v5271 = vunpack.c.h.b16 %v5108
    %v5272 = vunpack.c.l.b16 %v5109
    %v5273 = vunpack.c.h.b16 %v5109
    %v5274 = vunpack.c.l.b16 %v5110
    %v5275 = vunpack.c.h.b16 %v5110
    %v5276 = vunpack.c.l.b16 %v5111
    %v5277 = vunpack.c.h.b16 %v5111
    %v5278 = vunpack.c.l.b16 %v5112
    %v5279 = vunpack.c.h.b16 %v5112
    %v5280 = vunpack.c.l.b16 %v5113
    %v5281 = vunpack.c.h.b16 %v5113
    %v5282 = vunpack.c.l.b16 %v5114
    %v5283 = vunpack.c.h.b16 %v5114
    %v5284 = vunpack.c.l.b16 %v5115
    %v5285 = vunpack.c.h.b16 %v5115
    %v5286 = vunpack.c.l.b16 %v5116
    %v5287 = vunpack.c.h.b16 %v5116
    %v5288 = vunpack.c.l.b16 %v5117
    %v5289 = vunpack.c.h.b16 %v5117
    %v5290 = vunpack.c.l.b16 %v5118
    %v5291 = vunpack.c.h.b16 %v5118
    %v5292 = vunpack.c.l.b16 %v5119
    %v5293 = vunpack.c.h.b16 %v5119
    %v5294 = vunpack.c.l.b16 %v5120
    %v5295 = vunpack.c.h.b16 %v5120
    %v5296 = vunpack.c.l.b16 %v5121
    %v5297 = vunpack.c.h.b16 %v5121
    %v5298 = vunpack.c.l.b16 %v5122
    %v5299 = vunpack.c.h.b16 %v5122
    %v5300 = vunpack.c.l.b16 %v5123
    %v5301 = vunpack.c.h.b16 %v5123
    %v5302 = vunpack.c.l.b16 %v5124
    %v5303 = vunpack.c.h.b16 %v5124
    %v5304 = vunpack.c.l.b16 %v5125
    %v5305 = vunpack.c.h.b16 %v5125
    %v5306 = vunpack.c.l.b16 %v5126
    %v5307 = vunpack.c.h.b16 %v5126
    %v5308 = vunpack.c.l.b16 %v5127
    %v5309 = vunpack.c.h.b16 %v5127
    %v5310 = vunpack.c.l.b16 %v5128
    %v5311 = vunpack.c.h.b16 %v5128
    %v5312 = vunpack.c.l.b16 %v5129
    %v5313 = vunpack.c.h.b16 %v5129
    %v5314 = vunpack.c.l.b16 %v5130
    %v5315 = vunpack.c.h.b16 %v5130
    %v5316 = vunpack.c.l.b16 %v5131
    %v5317 = vunpack.c.h.b16 %v5131
    %v5318 = vunpack.c.l.b16 %v5132
    %v5319 = vunpack.c.h.b16 %v5132
    %v5320 = vunpack.c.l.b16 %v5133
    %v5321 = vunpack.c.h.b16 %v5133
    %v5322 = vunpack.c.l.b16 %v5134
    %v5323 = vunpack.c.h.b16 %v5134
    %v5324 = vunpack.c.l.b16 %v5135
    %v5325 = vunpack.c.h.b16 %v5135
    %v5326 = vunpack.c.l.b16 %v5136
    %v5327 = vunpack.c.h.b16 %v5136
    %v5328 = vunpack.c.l.b16 %v5137
    %v5329 = vunpack.c.h.b16 %v5137
    %v5330 = vunpack.c.l.b16 %v5138
    %v5331 = vunpack.c.h.b16 %v5138
    %v5332 = vunpack.c.l.b16 %v5139
    %v5333 = vunpack.c.h.b16 %v5139
    %v5334 = vunpack.c.l.b16 %v5140
    %v5335 = vunpack.c.h.b16 %v5140
    %v5336 = vunpack.c.l.b16 %v5141
    %v5337 = vunpack.c.h.b16 %v5141
    %v5338 = vunpack.c.l.b16 %v5142
    %v5339 = vunpack.c.h.b16 %v5142
    %v5340 = vunpack.c.l.b16 %v5143
    %v5341 = vunpack.c.h.b16 %v5143
    %v5342 = vunpack.c.l.b16 %v5144
    %v5343 = vunpack.c.h.b16 %v5144
    %v5344 = vunpack.c.l.b16 %v5145
    %v5345 = vunpack.c.h.b16 %v5145
    %v5346 = vunpack.c.l.b16 %v5146
    %v5347 = vunpack.c.h.b16 %v5146
    %v5348 = vunpack.c.l.b16 %v5147
    %v5349 = vunpack.c.h.b16 %v5147
    %v5350 = vunpack.c.l.b16 %v5148
    %v5351 = vunpack.c.h.b16 %v5148
    %v5352 = vunpack.c.l.b16 %v5149
    %v5353 = vunpack.c.h.b16 %v5149
    %v5354 = vunpack.c.l.b16 %v5150
    %v5355 = vunpack.c.h.b16 %v5150
    %v5356 = vunpack.c.l.b16 %v5151
    %v5357 = vunpack.c.h.b16 %v5151
    %v5358 = vunpack.c.l.b16 %v5152
    %v5359 = vunpack.c.h.b16 %v5152
    %v5360 = vunpack.c.l.b16 %v5153
    %v5361 = vunpack.c.h.b16 %v5153
    %v5362 = vpack.c.b16 %v5236, %v5234
    %v5363 = vpack.c.b16 %v5237, %v5235
    %v5364 = vpack.c.b16 %v5240, %v5238
    %v5365 = vpack.c.b16 %v5241, %v5239
    %v5366 = vpack.c.b16 %v5244, %v5242
    %v5367 = vpack.c.b16 %v5245, %v5243
    %v5368 = vpack.c.b16 %v5248, %v5246
    %v5369 = vpack.c.b16 %v5249, %v5247
    %v5370 = vpack.c.b16 %v5252, %v5250
    %v5371 = vpack.c.b16 %v5253, %v5251
    %v5372 = vpack.c.b16 %v5256, %v5254
    %v5373 = vpack.c.b16 %v5257, %v5255
    %v5374 = vpack.c.b16 %v5260, %v5258
    %v5375 = vpack.c.b16 %v5261, %v5259
    %v5376 = vpack.c.b16 %v5264, %v5262
    %v5377 = vpack.c.b16 %v5265, %v5263
    %v5378 = vpack.c.b16 %v5268, %v5266
    %v5379 = vpack.c.b16 %v5269, %v5267
    %v5380 = vpack.c.b16 %v5272, %v5270
    %v5381 = vpack.c.b16 %v5273, %v5271
    %v5382 = vpack.c.b16 %v5276, %v5274
    %v5383 = vpack.c.b16 %v5277, %v5275
    %v5384 = vpack.c.b16 %v5280, %v5278
    %v5385 = vpack.c.b16 %v5281, %v5279
    %v5386 = vpack.c.b16 %v5284, %v5282
    %v5387 = vpack.c.b16 %v5285, %v5283
    %v5388 = vpack.c.b16 %v5288, %v5286
    %v5389 = vpack.c.b16 %v5289, %v5287
    %v5390 = vpack.c.b16 %v5292, %v5290
    %v5391 = vpack.c.b16 %v5293, %v5291
    %v5392 = vpack.c.b16 %v5296, %v5294
    %v5393 = vpack.c.b16 %v5297, %v5295
    %v5394 = vpack.c.b16 %v5300, %v5298
    %v5395 = vpack.c.b16 %v5301, %v5299
    %v5396 = vpack.c.b16 %v5304, %v5302
    %v5397 = vpack.c.b16 %v5305, %v5303
    %v5398 = vpack.c.b16 %v5308, %v5306
    %v5399 = vpack.c.b16 %v5309, %v5307
    %v5400 = vpack.c.b16 %v5312, %v5310
    %v5401 = vpack.c.b16 %v5313, %v5311
    %v5402 = vpack.c.b16 %v5316, %v5314
    %v5403 = vpack.c.b16 %v5317, %v5315
    %v5404 = vpack.c.b16 %v5320, %v5318
    %v5405 = vpack.c.b16 %v5321, %v5319
    %v5406 = vpack.c.b16 %v5324, %v5322
    %v5407 = vpack.c.b16 %v5325, %v5323
    %v5408 = vpack.c.b16 %v5328, %v5326
    %v5409 = vpack.c.b16 %v5329, %v5327
    %v5410 = vpack.c.b16 %v5332, %v5330
    %v5411 = vpack.c.b16 %v5333, %v5331
    %v5412 = vpack.c.b16 %v5336, %v5334
    %v5413 = vpack.c.b16 %v5337, %v5335
    %v5414 = vpack.c.b16 %v5340, %v5338
    %v5415 = vpack.c.b16 %v5341, %v5339
    %v5416 = vpack.c.b16 %v5344, %v5342
    %v5417 = vpack.c.b16 %v5345, %v5343
    %v5418 = vpack.c.b16 %v5348, %v5346
    %v5419 = vpack.c.b16 %v5349, %v5347
    %v5420 = vpack.c.b16 %v5352, %v5350
    %v5421 = vpack.c.b16 %v5353, %v5351
    %v5422 = vpack.c.b16 %v5356, %v5354
    %v5423 = vpack.c.b16 %v5357, %v5355
    %v5424 = vpack.c.b16 %v5360, %v5358
    %v5425 = vpack.c.b16 %v5361, %v5359
    %5490 = vmatprep.subr.bf16.mxu0 %v5363
    %5491 = vmatpush1.bf16.msra.mxu0 %v5362
    %5492 = vmatprep.subr.bf16.mxu0 %v5365
    %5493 = vmatpush1.bf16.msra.mxu0 %v5364
    %5494 = vmatprep.subr.bf16.mxu0 %v5367
    %5495 = vmatpush1.bf16.msra.mxu0 %v5366
    %5496 = vmatprep.subr.bf16.mxu0 %v5369
    %5497 = vmatpush1.bf16.msra.mxu0 %v5368
    %5498 = vmatprep.subr.bf16.mxu0 %v5371
    %5499 = vmatpush1.bf16.msra.mxu0 %v5370
    %5500 = vmatprep.subr.bf16.mxu0 %v5373
    %5501 = vmatpush1.bf16.msra.mxu0 %v5372
    %5502 = vmatprep.subr.bf16.mxu0 %v5375
    %5503 = vmatpush1.bf16.msra.mxu0 %v5374
    %5504 = vmatprep.subr.bf16.mxu0 %v5377
    %5505 = vmatpush1.bf16.msra.mxu0 %v5376
    %5506 = vmatprep.subr.bf16.mxu0 %v5379
    %5507 = vmatpush1.bf16.msra.mxu0 %v5378
    %5508 = vmatprep.subr.bf16.mxu0 %v5381
    %5509 = vmatpush1.bf16.msra.mxu0 %v5380
    %5510 = vmatprep.subr.bf16.mxu0 %v5383
    %5511 = vmatpush1.bf16.msra.mxu0 %v5382
    %5512 = vmatprep.subr.bf16.mxu0 %v5385
    %5513 = vmatpush1.bf16.msra.mxu0 %v5384
    %5514 = vmatprep.subr.bf16.mxu0 %v5387
    %5515 = vmatpush1.bf16.msra.mxu0 %v5386
    %5516 = vmatprep.subr.bf16.mxu0 %v5389
    %5517 = vmatpush1.bf16.msra.mxu0 %v5388
    %5518 = vmatprep.subr.bf16.mxu0 %v5391
    %5519 = vmatpush1.bf16.msra.mxu0 %v5390
    %5520 = vmatprep.subr.bf16.mxu0 %v5393
    %5521 = vmatpush1.bf16.msra.mxu0 %v5392
    %5522 = vmatprep.mubr.bf16.mxu0 %v5155
    %5523 = vmatmul.mubr.bf16.gmra.mrb[0].mxu0 %v5154
    %v5524 = vpop.f32.mrb[0].mxu0
    %v5525 = vadd.f32 %v5163, %v5524
    %v5526 = vpop.f32.mrb[0].mxu0
    %v5527 = vadd.f32 %v5167, %v5526
    %v5528 = vpop.f32.mrb[0].mxu0
    %v5529 = vpop.f32.mrb[0].mxu0
    %5530 = vdwg.mxu0
    %5531 = vmatprep.subr.bf16.mxu0 %v5395
    %5532 = vmatpush1.bf16.msra.mxu0 %v5394
    %5533 = vmatprep.subr.bf16.mxu0 %v5397
    %5534 = vmatpush1.bf16.msra.mxu0 %v5396
    %5535 = vmatprep.subr.bf16.mxu0 %v5399
    %5536 = vmatpush1.bf16.msra.mxu0 %v5398
    %5537 = vmatprep.subr.bf16.mxu0 %v5401
    %5538 = vmatpush1.bf16.msra.mxu0 %v5400
    %5539 = vmatprep.subr.bf16.mxu0 %v5403
    %5540 = vmatpush1.bf16.msra.mxu0 %v5402
    %5541 = vmatprep.subr.bf16.mxu0 %v5405
    %5542 = vmatpush1.bf16.msra.mxu0 %v5404
    %5543 = vmatprep.subr.bf16.mxu0 %v5407
    %5544 = vmatpush1.bf16.msra.mxu0 %v5406
    %5545 = vmatprep.subr.bf16.mxu0 %v5409
    %5546 = vmatpush1.bf16.msra.mxu0 %v5408
    %5547 = vmatprep.subr.bf16.mxu0 %v5411
    %5548 = vmatpush1.bf16.msra.mxu0 %v5410
    %5549 = vmatprep.subr.bf16.mxu0 %v5413
    %5550 = vmatpush1.bf16.msra.mxu0 %v5412
    %5551 = vmatprep.subr.bf16.mxu0 %v5415
    %5552 = vmatpush1.bf16.msra.mxu0 %v5414
    %5553 = vmatprep.subr.bf16.mxu0 %v5417
    %5554 = vmatpush1.bf16.msra.mxu0 %v5416
    %5555 = vmatprep.subr.bf16.mxu0 %v5419
    %5556 = vmatpush1.bf16.msra.mxu0 %v5418
    %5557 = vmatprep.subr.bf16.mxu0 %v5421
    %5558 = vmatpush1.bf16.msra.mxu0 %v5420
    %5559 = vmatprep.subr.bf16.mxu0 %v5423
    %5560 = vmatpush1.bf16.msra.mxu0 %v5422
    %5561 = vmatprep.subr.bf16.mxu0 %v5425
    %5562 = vmatpush1.bf16.msra.mxu0 %v5424
    %5563 = vmatprep.mubr.bf16.mxu0 %v5157
    %5564 = vmatmul.mubr.bf16.gmra.mrb[0].mxu0 %v5156
    %v5565 = vpop.f32.mrb[0].mxu0
    %v5566 = vadd.f32 %v5525, %v5565
    %v5567 = vpop.f32.mrb[0].mxu0
    %v5568 = vadd.f32 %v5527, %v5567
    %v5569 = vpop.f32.mrb[0].mxu0
    %v5570 = vpop.f32.mrb[0].mxu0
    %5571 = vdwg.mxu0
    %v5572 = vld [vmem:[#allocation27] sm:$0xff]
    %v5573 = vld [vmem:[#allocation27 + $0x8] sm:$0xff]
    %v5574 = vld [vmem:[#allocation27 + $0x10] sm:$0xff]
    %v5575 = vld [vmem:[#allocation27 + $0x18] sm:$0xff]
    %v5576 = vld [vmem:[#allocation27 + $0x20] sm:$0xff]
    %v5577 = vld [vmem:[#allocation27 + $0x28] sm:$0xff]
    %v5578 = vld [vmem:[#allocation27 + $0x30] sm:$0xff]
    %v5579 = vld [vmem:[#allocation27 + $0x38] sm:$0xff]
    %v5580 = vpack.c.bf16 %v5089, %v5089
    %v5581 = vld [vmem:[#allocation35 + $0x1b] sm:$0x3]
    %v5583 = vlaneseq
    %v5584 = vshrl.u32 %v5583, 7
    %v5585 = vsub.s32 0, %v5584
    %v5586 = vrot.slane %v5581, %v5585
    %v5587 = vlaneseq
    %v5588 = vshrl.u32 %v5587, 7
    %v5589 = vsub.s32 1, %v5588
    %v5590 = vrot.slane %v5581, %v5589
    %v5601 = vunpack.c.l.b16 %v5572
    %v5602 = vunpack.c.h.b16 %v5572
    %v5603 = vunpack.c.l.b16 %v5573
    %v5604 = vunpack.c.h.b16 %v5573
    %v5605 = vunpack.c.l.b16 %v5574
    %v5606 = vunpack.c.h.b16 %v5574
    %v5607 = vunpack.c.l.b16 %v5575
    %v5608 = vunpack.c.h.b16 %v5575
    %v5609 = vunpack.c.l.b16 %v5576
    %v5610 = vunpack.c.h.b16 %v5576
    %v5611 = vunpack.c.l.b16 %v5577
    %v5612 = vunpack.c.h.b16 %v5577
    %v5613 = vunpack.c.l.b16 %v5578
    %v5614 = vunpack.c.h.b16 %v5578
    %v5615 = vunpack.c.l.b16 %v5579
    %v5616 = vunpack.c.h.b16 %v5579
    %v5617 = vpack.c.b16 %v5603, %v5601
    %v5618 = vpack.c.b16 %v5604, %v5602
    %v5619 = vpack.c.b16 %v5607, %v5605
    %v5620 = vpack.c.b16 %v5608, %v5606
    %v5621 = vpack.c.b16 %v5611, %v5609
    %v5622 = vpack.c.b16 %v5612, %v5610
    %v5623 = vpack.c.b16 %v5615, %v5613
    %v5624 = vpack.c.b16 %v5616, %v5614
    %vm5633 = vcmask 523264
    %v5635 = vsel %vm5633, %v5580, 0
    %5637 = vmatprep.subr.bf16.mxu0 %v5618
    %5638 = vmatpush1.bf16.msra.mxu0 %v5617
    %5639 = vmatprep.subr.bf16.mxu0 %v5620
    %5640 = vmatpush1.bf16.msra.mxu0 %v5619
    %5641 = vmatprep.subr.bf16.mxu0 %v5622
    %5642 = vmatpush1.bf16.msra.mxu0 %v5621
    %5643 = vmatprep.subr.bf16.mxu0 %v5624
    %5644 = vmatpush1.bf16.msra.mxu0 %v5623
    %5645 = vmatprep.subr.bf16.mxu0 0
    %5646 = vmatpush1.bf16.msra.mxu0 0
    %5647 = vmatprep.subr.bf16.mxu0 0
    %5648 = vmatpush1.bf16.msra.mxu0 0
    %5649 = vmatprep.subr.bf16.mxu0 0
    %5650 = vmatpush1.bf16.msra.mxu0 0
    %5651 = vmatprep.subr.bf16.mxu0 0
    %5652 = vmatpush1.bf16.msra.mxu0 0
    %5653 = vmatprep.subr.bf16.mxu0 0
    %5654 = vmatpush1.bf16.msra.mxu0 0
    %5655 = vmatprep.subr.bf16.mxu0 0
    %5656 = vmatpush1.bf16.msra.mxu0 0
    %5657 = vmatprep.subr.bf16.mxu0 0
    %5658 = vmatpush1.bf16.msra.mxu0 0
    %5659 = vmatprep.subr.bf16.mxu0 0
    %5660 = vmatpush1.bf16.msra.mxu0 0
    %5661 = vmatprep.subr.bf16.mxu0 0
    %5662 = vmatpush1.bf16.msra.mxu0 0
    %5663 = vmatprep.subr.bf16.mxu0 0
    %5664 = vmatpush1.bf16.msra.mxu0 0
    %5665 = vmatprep.subr.bf16.mxu0 0
    %5666 = vmatpush1.bf16.msra.mxu0 0
    %5667 = vmatprep.subr.bf16.mxu0 0
    %5668 = vmatpush1.bf16.msra.mxu0 0
    %5669 = vmatprep.mubr.bf16.mxu0 0
    %5670 = vmatmul.mubr.bf16.gmra.mrb[0].mxu0 %v5635
    %v5671 = vpop.f32.mrb[0].mxu0
    %v5672 = vadd.f32 %v5586, %v5671
    %v5673 = vpop.f32.mrb[0].mxu0
    %v5674 = vadd.f32 %v5590, %v5673
    %v5675 = vpop.f32.mrb[0].mxu0
    %v5676 = vpop.f32.mrb[0].mxu0
    %5677 = vdwg.mxu0
    %v5678 = vadd.f32 %v5566, %v5672
    %v5679 = vsub.f32 0.0, %v5678
    %v5680 = vmul.f32 %v5679, 1.442695
    %v5681 = vpow.pop %v5680
    %v5682 = vadd.f32 %v5681, 1.0
    %v5683 = vrcp.pop %v5682
    %v5684 = vmul.f32 1.0, %v5683
    %v5685 = vmul.f32 %v5684, %v5674
    %v5686 = vadd.f32 %v5568, %v5685
    %v5687 = vtanh.pop %v5686
    %v5688 = vsub.f32 1.0, %v5684
    %5690 = vrot.lane.b32.xlu0 %v5687, 64
    %v5691 = vpop.permute.xlu0 %5690
    %v5693 = vmul.f32 %v5688, %v5691
    %5695 = vrot.lane.b32.xlu0 %v5089, 64
    %v5696 = vpop.permute.xlu0 %5695
    %v5698 = vmul.f32 %v5684, %v5696
    %v5699 = vadd.f32 %v5693, %v5698
    %5701 = vrot.lane.b32.xlu0 %v5699, 64
    %v5702 = vpop.permute.xlu0 %5701
    %vm5704 = vcmask 517120
    %5705 = vst.msk [vmem:[#allocation2] sm:$0x3] %vm5704, %v5702
    %v5706 = vld [vmem:[#allocation29] sm:$0xff]
    %v5707 = vld [vmem:[#allocation29 + $0x8] sm:$0xff]
    %v5708 = vld [vmem:[#allocation29 + $0x10] sm:$0xff]
    %v5709 = vld [vmem:[#allocation29 + $0x18] sm:$0xff]
    %v5710 = vld [vmem:[#allocation29 + $0x20] sm:$0xff]
    %v5711 = vld [vmem:[#allocation29 + $0x28] sm:$0xff]
    %v5712 = vld [vmem:[#allocation29 + $0x30] sm:$0xff]
    %v5713 = vld [vmem:[#allocation29 + $0x38] sm:$0xff]
    %v5714 = vsel %vm5633, %v5702, 0
    %5716 = vmatprep.subr.mxu0 0.0
    %5717 = vmatpush1.msra.mxu0 %v5706
    %5718 = vmatprep.subr.mxu0 0.0
    %5719 = vmatpush1.msra.mxu0 %v5707
    %5720 = vmatprep.subr.mxu0 0.0
    %5721 = vmatpush1.msra.mxu0 %v5708
    %5722 = vmatprep.subr.mxu0 0.0
    %5723 = vmatpush1.msra.mxu0 %v5709
    %5724 = vmatprep.subr.mxu0 0.0
    %5725 = vmatpush1.msra.mxu0 %v5710
    %5726 = vmatprep.subr.mxu0 0.0
    %5727 = vmatpush1.msra.mxu0 %v5711
    %5728 = vmatprep.subr.mxu0 0.0
    %5729 = vmatpush1.msra.mxu0 %v5712
    %5730 = vmatprep.subr.mxu0 0.0
    %5731 = vmatpush1.msra.mxu0 %v5713
    %5732 = vmatprep.subr.mxu0 0.0
    %5733 = vmatpush1.msra.mxu0 0.0
    %5734 = vmatprep.subr.mxu0 0.0
    %5735 = vmatpush1.msra.mxu0 0.0
    %5736 = vmatprep.subr.mxu0 0.0
    %5737 = vmatpush1.msra.mxu0 0.0
    %5738 = vmatprep.subr.mxu0 0.0
    %5739 = vmatpush1.msra.mxu0 0.0
    %5740 = vmatprep.subr.mxu0 0.0
    %5741 = vmatpush1.msra.mxu0 0.0
    %5742 = vmatprep.subr.mxu0 0.0
    %5743 = vmatpush1.msra.mxu0 0.0
    %5744 = vmatprep.subr.mxu0 0.0
    %5745 = vmatpush1.msra.mxu0 0.0
    %5746 = vmatprep.subr.mxu0 0.0
    %5747 = vmatpush1.msra.mxu0 0.0
    %5748 = vmatprep.subr.mxu0 0.0
    %5749 = vmatpush1.msra.mxu0 0.0
    %5750 = vmatprep.subr.mxu0 0.0
    %5751 = vmatpush1.msra.mxu0 0.0
    %5752 = vmatprep.subr.mxu0 0.0
    %5753 = vmatpush1.msra.mxu0 0.0
    %5754 = vmatprep.subr.mxu0 0.0
    %5755 = vmatpush1.msra.mxu0 0.0
    %5756 = vmatprep.subr.mxu0 0.0
    %5757 = vmatpush1.msra.mxu0 0.0
    %5758 = vmatprep.subr.mxu0 0.0
    %5759 = vmatpush1.msra.mxu0 0.0
    %5760 = vmatprep.subr.mxu0 0.0
    %5761 = vmatpush1.msra.mxu0 0.0
    %5762 = vmatprep.subr.mxu0 0.0
    %5763 = vmatpush1.msra.mxu0 0.0
    %5764 = vmatprep.subr.mxu0 0.0
    %5765 = vmatpush1.msra.mxu0 0.0
    %5766 = vmatprep.subr.mxu0 0.0
    %5767 = vmatpush1.msra.mxu0 0.0
    %5768 = vmatprep.subr.mxu0 0.0
    %5769 = vmatpush1.msra.mxu0 0.0
    %5770 = vmatprep.subr.mxu0 0.0
    %5771 = vmatpush1.msra.mxu0 0.0
    %5772 = vmatprep.subr.mxu0 0.0
    %5773 = vmatpush1.msra.mxu0 0.0
    %5774 = vmatprep.subr.mxu0 0.0
    %5775 = vmatpush1.msra.mxu0 0.0
    %5776 = vmatprep.subr.mxu0 0.0
    %5777 = vmatpush1.msra.mxu0 0.0
    %5778 = vmatprep.subr.mxu0 0.0
    %5779 = vmatpush1.msra.mxu0 0.0
    %5780 = vmatprep.mubr.f32.mxu0 0.0
    %5781 = vmatmul.mubr.f32.gmra.mrb[0].mxu0 %v5714
    %v5782 = vpop.f32.mrb[0].mxu0
    %v5783 = vadd.f32 0.0, %v5782
    %v5784 = vpop.f32.mrb[0].mxu0
    %5785 = vdwg.mxu0
    %v5786 = vld [vmem:[#allocation35 + $0x1d] sm:$0x1]
    %v5788 = vlaneseq
    %v5789 = vshrl.u32 %v5788, 7
    %v5790 = vsub.s32 0, %v5789
    %v5791 = vrot.slane %v5786, %v5790
    %v5793 = vadd.f32 %v5783, %v5791
    %v5794 = vld [vmem:[#allocation30] sm:$0xff]
    %v5795 = vld [vmem:[#allocation30 + $0x8] sm:$0xff]
    %v5796 = vld [vmem:[#allocation30 + $0x10] sm:$0xff]
    %v5797 = vld [vmem:[#allocation30 + $0x18] sm:$0xff]
    %v5799 = vsel %vm3971, %v3803, 0
    %5801 = vmatprep.subr.mxu0 0.0
    %5802 = vmatpush1.msra.mxu0 %v5794
    %5803 = vmatprep.subr.mxu0 0.0
    %5804 = vmatpush1.msra.mxu0 %v5795
    %5805 = vmatprep.subr.mxu0 0.0
    %5806 = vmatpush1.msra.mxu0 %v5796
    %5807 = vmatprep.subr.mxu0 0.0
    %5808 = vmatpush1.msra.mxu0 %v5797
    %5809 = vmatprep.subr.mxu0 0.0
    %5810 = vmatpush1.msra.mxu0 0.0
    %5811 = vmatprep.subr.mxu0 0.0
    %5812 = vmatpush1.msra.mxu0 0.0
    %5813 = vmatprep.subr.mxu0 0.0
    %5814 = vmatpush1.msra.mxu0 0.0
    %5815 = vmatprep.subr.mxu0 0.0
    %5816 = vmatpush1.msra.mxu0 0.0
    %5817 = vmatprep.subr.mxu0 0.0
    %5818 = vmatpush1.msra.mxu0 0.0
    %5819 = vmatprep.subr.mxu0 0.0
    %5820 = vmatpush1.msra.mxu0 0.0
    %5821 = vmatprep.subr.mxu0 0.0
    %5822 = vmatpush1.msra.mxu0 0.0
    %5823 = vmatprep.subr.mxu0 0.0
    %5824 = vmatpush1.msra.mxu0 0.0
    %5825 = vmatprep.subr.mxu0 0.0
    %5826 = vmatpush1.msra.mxu0 0.0
    %5827 = vmatprep.subr.mxu0 0.0
    %5828 = vmatpush1.msra.mxu0 0.0
    %5829 = vmatprep.subr.mxu0 0.0
    %5830 = vmatpush1.msra.mxu0 0.0
    %5831 = vmatprep.subr.mxu0 0.0
    %5832 = vmatpush1.msra.mxu0 0.0
    %5833 = vmatprep.subr.mxu0 0.0
    %5834 = vmatpush1.msra.mxu0 0.0
    %5835 = vmatprep.subr.mxu0 0.0
    %5836 = vmatpush1.msra.mxu0 0.0
    %5837 = vmatprep.subr.mxu0 0.0
    %5838 = vmatpush1.msra.mxu0 0.0
    %5839 = vmatprep.subr.mxu0 0.0
    %5840 = vmatpush1.msra.mxu0 0.0
    %5841 = vmatprep.subr.mxu0 0.0
    %5842 = vmatpush1.msra.mxu0 0.0
    %5843 = vmatprep.subr.mxu0 0.0
    %5844 = vmatpush1.msra.mxu0 0.0
    %5845 = vmatprep.subr.mxu0 0.0
    %5846 = vmatpush1.msra.mxu0 0.0
    %5847 = vmatprep.subr.mxu0 0.0
    %5848 = vmatpush1.msra.mxu0 0.0
    %5849 = vmatprep.subr.mxu0 0.0
    %5850 = vmatpush1.msra.mxu0 0.0
    %5851 = vmatprep.subr.mxu0 0.0
    %5852 = vmatpush1.msra.mxu0 0.0
    %5853 = vmatprep.subr.mxu0 0.0
    %5854 = vmatpush1.msra.mxu0 0.0
    %5855 = vmatprep.subr.mxu0 0.0
    %5856 = vmatpush1.msra.mxu0 0.0
    %5857 = vmatprep.subr.mxu0 0.0
    %5858 = vmatpush1.msra.mxu0 0.0
    %5859 = vmatprep.subr.mxu0 0.0
    %5860 = vmatpush1.msra.mxu0 0.0
    %5861 = vmatprep.subr.mxu0 0.0
    %5862 = vmatpush1.msra.mxu0 0.0
    %5863 = vmatprep.subr.mxu0 0.0
    %5864 = vmatpush1.msra.mxu0 0.0
    %5865 = vmatprep.mubr.f32.mxu0 0.0
    %5866 = vmatmul.mubr.f32.gmra.mrb[0].mxu0 %v5799
    %v5867 = vpop.f32.mrb[0].mxu0
    %v5868 = vadd.f32 0.0, %v5867
    %v5869 = vpop.f32.mrb[0].mxu0
    %5870 = vdwg.mxu0
    %5872 = vrot.lane.b32.xlu0 %v5868, 64
    %v5873 = vpop.permute.xlu0 %5872
    %v5875 = vadd.f32 %v5783, %v5873
    %v5876 = vld [vmem:[#allocation35 + $0x1e] sm:$0x1]
    %v5878 = vlaneseq
    %v5879 = vshrl.u32 %v5878, 7
    %v5880 = vsub.s32 0, %v5879
    %v5881 = vrot.slane %v5876, %v5880
    %5882 = vrot.lane.b32.xlu0 %v5881, 64
    %v5883 = vpop.permute.xlu0 %5882
    %v5885 = vadd.f32 %v5875, %v5883
    %v5886 = vmul.f32 %v5793, 1.442695
    %v5887 = vpow.pop %v5886
    %v5888 = vmul.f32 %v5885, 1.442695
    %v5889 = vpow.pop %v5888
    %v5890 = vld [vmem:[#allocation11] sm:$0x3]
    %5892 = vrot.lane.b32.xlu0 %v5890, 96
    %v5893 = vpop.permute.xlu0 %5892
    %v5895 = vmul.f32 %v5889, %v5893
    %5897 = vrot.lane.b32.xlu0 %v5895, 96
    %v5898 = vpop.permute.xlu0 %5897
    %v5900 = vadd.f32 %v5885, %v5898
    %5902 = vrot.lane.b32.xlu0 %v5900, 64
    %v5903 = vpop.permute.xlu0 %5902
    %vm5905 = vcmask 254976
    %5906 = vst.msk [vmem:[#allocation3] sm:$0x3] %vm5905, %v5903
    // Predicated region
    $region166: #{tpu_custom_call.1} parent=1 // pred_check
      %p5907 = pneg %p312
    $region167: #{tpu_custom_call.1} parent=1 // pred_check_branch
      %5909 = sbr.rel (%p5907) target = $region169
    $region168: #{tpu_custom_call.1} parent=1 // pred_region
      %s5910 = smul.u32 4, 64
      %s5911 = smul.u32 %s5910, 13
      %s5912 = sshll.u32 %s5911, 4
      %5913 = dma.done [#allocation5], %s5912
    $region169: #{tpu_custom_call.1} parent=1 // pred_fallthru
      _
    %v5914 = vld [vmem:[#allocation32] sm:$0xff]
    %v5915 = vld [vmem:[#allocation32 + $0x8] sm:$0xff]
    %v5916 = vld [vmem:[#allocation32 + $0x10] sm:$0xff]
    %v5917 = vld [vmem:[#allocation32 + $0x18] sm:$0xff]
    %v5918 = vld [vmem:[#allocation32 + $0x20] sm:$0xff]
    %v5919 = vld [vmem:[#allocation32 + $0x28] sm:$0xff]
    %v5920 = vld [vmem:[#allocation32 + $0x30] sm:$0xff]
    %v5921 = vld [vmem:[#allocation32 + $0x38] sm:$0xff]
    %v5922 = vld [vmem:[#allocation32 + $0x40] sm:$0xff]
    %v5923 = vld [vmem:[#allocation32 + $0x48] sm:$0xff]
    %v5924 = vld [vmem:[#allocation32 + $0x50] sm:$0xff]
    %v5925 = vld [vmem:[#allocation32 + $0x58] sm:$0xff]
    %v5926 = vld [vmem:[#allocation32 + $0x60] sm:$0xff]
    %v5927 = vld [vmem:[#allocation32 + $0x68] sm:$0xff]
    %v5928 = vld [vmem:[#allocation32 + $0x70] sm:$0xff]
    %v5929 = vld [vmem:[#allocation32 + $0x78] sm:$0xff]
    %v5930 = vpack.c.bf16 %v5699, %v5699
    %v5931 = vld [vmem:[#allocation33] sm:$0xff]
    %v5932 = vld [vmem:[#allocation33 + $0x8] sm:$0xff]
    %v5933 = vld [vmem:[#allocation33 + $0x10] sm:$0xff]
    %v5934 = vld [vmem:[#allocation33 + $0x18] sm:$0xff]
    %v5935 = vld [vmem:[#allocation33 + $0x20] sm:$0xff]
    %v5936 = vld [vmem:[#allocation33 + $0x28] sm:$0xff]
    %v5937 = vld [vmem:[#allocation33 + $0x30] sm:$0xff]
    %v5938 = vld [vmem:[#allocation33 + $0x38] sm:$0xff]
    %v5939 = vpack.c.bf16 %v5900, %v5900
    %5941 = vrot.lane.b32.xlu0 %v5939, 64
    %v5942 = vpop.permute.xlu0 %5941
    %v5951 = vunpack.c.l.b16 %v5931
    %v5952 = vunpack.c.h.b16 %v5931
    %v5953 = vunpack.c.l.b16 %v5932
    %v5954 = vunpack.c.h.b16 %v5932
    %v5955 = vunpack.c.l.b16 %v5933
    %v5956 = vunpack.c.h.b16 %v5933
    %v5957 = vunpack.c.l.b16 %v5934
    %v5958 = vunpack.c.h.b16 %v5934
    %v5959 = vunpack.c.l.b16 %v5935
    %v5960 = vunpack.c.h.b16 %v5935
    %v5961 = vunpack.c.l.b16 %v5936
    %v5962 = vunpack.c.h.b16 %v5936
    %v5963 = vunpack.c.l.b16 %v5937
    %v5964 = vunpack.c.h.b16 %v5937
    %v5965 = vunpack.c.l.b16 %v5938
    %v5966 = vunpack.c.h.b16 %v5938
    %v5967 = vpack.c.b16 %v5955, %v5951
    %v5968 = vpack.c.b16 %v5956, %v5952
    %v5969 = vpack.c.b16 %v5957, %v5953
    %v5970 = vpack.c.b16 %v5958, %v5954
    %v5971 = vpack.c.b16 %v5963, %v5959
    %v5972 = vpack.c.b16 %v5964, %v5960
    %v5973 = vpack.c.b16 %v5965, %v5961
    %v5974 = vpack.c.b16 %v5966, %v5962
    %v5984 = vsel %vm3971, %v5942, 0
    %5986 = vmatprep.subr.bf16.mxu0 %v5968
    %5987 = vmatpush1.bf16.msra.mxu0 %v5967
    %5988 = vmatprep.subr.bf16.mxu0 %v5972
    %5989 = vmatpush1.bf16.msra.mxu0 %v5971
    %5990 = vmatprep.subr.bf16.mxu0 0
    %5991 = vmatpush1.bf16.msra.mxu0 0
    %5992 = vmatprep.subr.bf16.mxu0 0
    %5993 = vmatpush1.bf16.msra.mxu0 0
    %5994 = vmatprep.subr.bf16.mxu0 0
    %5995 = vmatpush1.bf16.msra.mxu0 0
    %5996 = vmatprep.subr.bf16.mxu0 0
    %5997 = vmatpush1.bf16.msra.mxu0 0
    %5998 = vmatprep.subr.bf16.mxu0 0
    %5999 = vmatpush1.bf16.msra.mxu0 0
    %6000 = vmatprep.subr.bf16.mxu0 0
    %6001 = vmatpush1.bf16.msra.mxu0 0
    %6002 = vmatprep.subr.bf16.mxu0 0
    %6003 = vmatpush1.bf16.msra.mxu0 0
    %6004 = vmatprep.subr.bf16.mxu0 0
    %6005 = vmatpush1.bf16.msra.mxu0 0
    %6006 = vmatprep.subr.bf16.mxu0 0
    %6007 = vmatpush1.bf16.msra.mxu0 0
    %6008 = vmatprep.subr.bf16.mxu0 0
    %6009 = vmatpush1.bf16.msra.mxu0 0
    %6010 = vmatprep.subr.bf16.mxu0 0
    %6011 = vmatpush1.bf16.msra.mxu0 0
    %6012 = vmatprep.subr.bf16.mxu0 0
    %6013 = vmatpush1.bf16.msra.mxu0 0
    %6014 = vmatprep.subr.bf16.mxu0 0
    %6015 = vmatpush1.bf16.msra.mxu0 0
    %6016 = vmatprep.subr.bf16.mxu0 0
    %6017 = vmatpush1.bf16.msra.mxu0 0
    %6018 = vmatprep.mubr.bf16.mxu0 0
    %6019 = vmatmul.mubr.bf16.gmra.mrb[0].mxu0 %v5984
    %v6020 = vpop.f32.mrb[0].mxu0
    %v6021 = vadd.f32 0.0, %v6020
    %v6022 = vpop.f32.mrb[0].mxu0
    %v6023 = vadd.f32 0.0, %v6022
    %v6024 = vpop.f32.mrb[0].mxu0
    %v6025 = vpop.f32.mrb[0].mxu0
    %6026 = vdwg.mxu0
    %6027 = vmatprep.subr.bf16.mxu0 %v5970
    %6028 = vmatpush1.bf16.msra.mxu0 %v5969
    %6029 = vmatprep.subr.bf16.mxu0 %v5974
    %6030 = vmatpush1.bf16.msra.mxu0 %v5973
    %6031 = vmatprep.subr.bf16.mxu0 0
    %6032 = vmatpush1.bf16.msra.mxu0 0
    %6033 = vmatprep.subr.bf16.mxu0 0
    %6034 = vmatpush1.bf16.msra.mxu0 0
    %6035 = vmatprep.subr.bf16.mxu0 0
    %6036 = vmatpush1.bf16.msra.mxu0 0
    %6037 = vmatprep.subr.bf16.mxu0 0
    %6038 = vmatpush1.bf16.msra.mxu0 0
    %6039 = vmatprep.subr.bf16.mxu0 0
    %6040 = vmatpush1.bf16.msra.mxu0 0
    %6041 = vmatprep.subr.bf16.mxu0 0
    %6042 = vmatpush1.bf16.msra.mxu0 0
    %6043 = vmatprep.subr.bf16.mxu0 0
    %6044 = vmatpush1.bf16.msra.mxu0 0
    %6045 = vmatprep.subr.bf16.mxu0 0
    %6046 = vmatpush1.bf16.msra.mxu0 0
    %6047 = vmatprep.subr.bf16.mxu0 0
    %6048 = vmatpush1.bf16.msra.mxu0 0
    %6049 = vmatprep.subr.bf16.mxu0 0
    %6050 = vmatpush1.bf16.msra.mxu0 0
    %6051 = vmatprep.subr.bf16.mxu0 0
    %6052 = vmatpush1.bf16.msra.mxu0 0
    %6053 = vmatprep.subr.bf16.mxu0 0
    %6054 = vmatpush1.bf16.msra.mxu0 0
    %6055 = vmatprep.subr.bf16.mxu0 0
    %6056 = vmatpush1.bf16.msra.mxu0 0
    %6057 = vmatprep.subr.bf16.mxu0 0
    %6058 = vmatpush1.bf16.msra.mxu0 0
    %6059 = vmatprep.mubr.bf16.mxu0 0
    %6060 = vmatmul.mubr.bf16.gmra.mrb[0].mxu0 %v5984
    %v6061 = vpop.f32.mrb[0].mxu0
    %v6062 = vadd.f32 0.0, %v6061
    %v6063 = vpop.f32.mrb[0].mxu0
    %v6064 = vadd.f32 0.0, %v6063
    %v6065 = vpop.f32.mrb[0].mxu0
    %v6066 = vpop.f32.mrb[0].mxu0
    %6067 = vdwg.mxu0
    %6069 = vrot.lane.b32.xlu0 %v5930, 64
    %v6070 = vpop.permute.xlu0 %6069
    %v6087 = vunpack.c.l.b16 %v5914
    %v6088 = vunpack.c.h.b16 %v5914
    %v6089 = vunpack.c.l.b16 %v5915
    %v6090 = vunpack.c.h.b16 %v5915
    %v6091 = vunpack.c.l.b16 %v5916
    %v6092 = vunpack.c.h.b16 %v5916
    %v6093 = vunpack.c.l.b16 %v5917
    %v6094 = vunpack.c.h.b16 %v5917
    %v6095 = vunpack.c.l.b16 %v5918
    %v6096 = vunpack.c.h.b16 %v5918
    %v6097 = vunpack.c.l.b16 %v5919
    %v6098 = vunpack.c.h.b16 %v5919
    %v6099 = vunpack.c.l.b16 %v5920
    %v6100 = vunpack.c.h.b16 %v5920
    %v6101 = vunpack.c.l.b16 %v5921
    %v6102 = vunpack.c.h.b16 %v5921
    %v6103 = vunpack.c.l.b16 %v5922
    %v6104 = vunpack.c.h.b16 %v5922
    %v6105 = vunpack.c.l.b16 %v5923
    %v6106 = vunpack.c.h.b16 %v5923
    %v6107 = vunpack.c.l.b16 %v5924
    %v6108 = vunpack.c.h.b16 %v5924
    %v6109 = vunpack.c.l.b16 %v5925
    %v6110 = vunpack.c.h.b16 %v5925
    %v6111 = vunpack.c.l.b16 %v5926
    %v6112 = vunpack.c.h.b16 %v5926
    %v6113 = vunpack.c.l.b16 %v5927
    %v6114 = vunpack.c.h.b16 %v5927
    %v6115 = vunpack.c.l.b16 %v5928
    %v6116 = vunpack.c.h.b16 %v5928
    %v6117 = vunpack.c.l.b16 %v5929
    %v6118 = vunpack.c.h.b16 %v5929
    %v6119 = vpack.c.b16 %v6091, %v6087
    %v6120 = vpack.c.b16 %v6092, %v6088
    %v6121 = vpack.c.b16 %v6093, %v6089
    %v6122 = vpack.c.b16 %v6094, %v6090
    %v6123 = vpack.c.b16 %v6099, %v6095
    %v6124 = vpack.c.b16 %v6100, %v6096
    %v6125 = vpack.c.b16 %v6101, %v6097
    %v6126 = vpack.c.b16 %v6102, %v6098
    %v6127 = vpack.c.b16 %v6107, %v6103
    %v6128 = vpack.c.b16 %v6108, %v6104
    %v6129 = vpack.c.b16 %v6109, %v6105
    %v6130 = vpack.c.b16 %v6110, %v6106
    %v6131 = vpack.c.b16 %v6115, %v6111
    %v6132 = vpack.c.b16 %v6116, %v6112
    %v6133 = vpack.c.b16 %v6117, %v6113
    %v6134 = vpack.c.b16 %v6118, %v6114
    %v6152 = vsel %vm5633, %v6070, 0
    %6154 = vmatprep.subr.bf16.mxu0 %v6120
    %6155 = vmatpush1.bf16.msra.mxu0 %v6119
    %6156 = vmatprep.subr.bf16.mxu0 %v6124
    %6157 = vmatpush1.bf16.msra.mxu0 %v6123
    %6158 = vmatprep.subr.bf16.mxu0 %v6128
    %6159 = vmatpush1.bf16.msra.mxu0 %v6127
    %6160 = vmatprep.subr.bf16.mxu0 %v6132
    %6161 = vmatpush1.bf16.msra.mxu0 %v6131
    %6162 = vmatprep.subr.bf16.mxu0 0
    %6163 = vmatpush1.bf16.msra.mxu0 0
    %6164 = vmatprep.subr.bf16.mxu0 0
    %6165 = vmatpush1.bf16.msra.mxu0 0
    %6166 = vmatprep.subr.bf16.mxu0 0
    %6167 = vmatpush1.bf16.msra.mxu0 0
    %6168 = vmatprep.subr.bf16.mxu0 0
    %6169 = vmatpush1.bf16.msra.mxu0 0
    %6170 = vmatprep.subr.bf16.mxu0 0
    %6171 = vmatpush1.bf16.msra.mxu0 0
    %6172 = vmatprep.subr.bf16.mxu0 0
    %6173 = vmatpush1.bf16.msra.mxu0 0
    %6174 = vmatprep.subr.bf16.mxu0 0
    %6175 = vmatpush1.bf16.msra.mxu0 0
    %6176 = vmatprep.subr.bf16.mxu0 0
    %6177 = vmatpush1.bf16.msra.mxu0 0
    %6178 = vmatprep.subr.bf16.mxu0 0
    %6179 = vmatpush1.bf16.msra.mxu0 0
    %6180 = vmatprep.subr.bf16.mxu0 0
    %6181 = vmatpush1.bf16.msra.mxu0 0
    %6182 = vmatprep.subr.bf16.mxu0 0
    %6183 = vmatpush1.bf16.msra.mxu0 0
    %6184 = vmatprep.subr.bf16.mxu0 0
    %6185 = vmatpush1.bf16.msra.mxu0 0
    %6186 = vmatprep.mubr.bf16.mxu0 0
    %6187 = vmatmul.mubr.bf16.gmra.mrb[0].mxu0 %v6152
    %v6188 = vpop.f32.mrb[0].mxu0
    %v6189 = vadd.f32 %v6021, %v6188
    %v6190 = vpop.f32.mrb[0].mxu0
    %v6191 = vadd.f32 %v6023, %v6190
    %v6192 = vpop.f32.mrb[0].mxu0
    %v6193 = vpop.f32.mrb[0].mxu0
    %6194 = vdwg.mxu0
    %6195 = vmatprep.subr.bf16.mxu0 %v6122
    %6196 = vmatpush1.bf16.msra.mxu0 %v6121
    %6197 = vmatprep.subr.bf16.mxu0 %v6126
    %6198 = vmatpush1.bf16.msra.mxu0 %v6125
    %6199 = vmatprep.subr.bf16.mxu0 %v6130
    %6200 = vmatpush1.bf16.msra.mxu0 %v6129
    %6201 = vmatprep.subr.bf16.mxu0 %v6134
    %6202 = vmatpush1.bf16.msra.mxu0 %v6133
    %6203 = vmatprep.subr.bf16.mxu0 0
    %6204 = vmatpush1.bf16.msra.mxu0 0
    %6205 = vmatprep.subr.bf16.mxu0 0
    %6206 = vmatpush1.bf16.msra.mxu0 0
    %6207 = vmatprep.subr.bf16.mxu0 0
    %6208 = vmatpush1.bf16.msra.mxu0 0
    %6209 = vmatprep.subr.bf16.mxu0 0
    %6210 = vmatpush1.bf16.msra.mxu0 0
    %6211 = vmatprep.subr.bf16.mxu0 0
    %6212 = vmatpush1.bf16.msra.mxu0 0
    %6213 = vmatprep.subr.bf16.mxu0 0
    %6214 = vmatpush1.bf16.msra.mxu0 0
    %6215 = vmatprep.subr.bf16.mxu0 0
    %6216 = vmatpush1.bf16.msra.mxu0 0
    %6217 = vmatprep.subr.bf16.mxu0 0
    %6218 = vmatpush1.bf16.msra.mxu0 0
    %6219 = vmatprep.subr.bf16.mxu0 0
    %6220 = vmatpush1.bf16.msra.mxu0 0
    %6221 = vmatprep.subr.bf16.mxu0 0
    %6222 = vmatpush1.bf16.msra.mxu0 0
    %6223 = vmatprep.subr.bf16.mxu0 0
    %6224 = vmatpush1.bf16.msra.mxu0 0
    %6225 = vmatprep.subr.bf16.mxu0 0
    %6226 = vmatpush1.bf16.msra.mxu0 0
    %6227 = vmatprep.mubr.bf16.mxu0 0
    %6228 = vmatmul.mubr.bf16.gmra.mrb[0].mxu0 %v6152
    %v6229 = vpop.f32.mrb[0].mxu0
    %v6230 = vadd.f32 %v6062, %v6229
    %v6231 = vpop.f32.mrb[0].mxu0
    %v6232 = vadd.f32 %v6064, %v6231
    %v6233 = vpop.f32.mrb[0].mxu0
    %v6234 = vpop.f32.mrb[0].mxu0
    %6235 = vdwg.mxu0
    %v6236 = vld [vmem:[#allocation35 + $0x1f] sm:$0xf]
    %v6238 = vlaneseq
    %v6239 = vshrl.u32 %v6238, 7
    %v6240 = vsub.s32 0, %v6239
    %v6241 = vrot.slane %v6236, %v6240
    %v6242 = vlaneseq
    %v6243 = vshrl.u32 %v6242, 7
    %v6244 = vsub.s32 1, %v6243
    %v6245 = vrot.slane %v6236, %v6244
    %v6246 = vlaneseq
    %v6247 = vshrl.u32 %v6246, 7
    %v6248 = vsub.s32 2, %v6247
    %v6249 = vrot.slane %v6236, %v6248
    %v6250 = vlaneseq
    %v6251 = vshrl.u32 %v6250, 7
    %v6252 = vsub.s32 3, %v6251
    %v6253 = vrot.slane %v6236, %v6252
    %v6258 = vadd.f32 %v6189, %v6241
    %v6259 = vadd.f32 %v6191, %v6245
    %v6260 = vadd.f32 %v6230, %v6249
    %v6261 = vadd.f32 %v6232, %v6253
    %vm6262 = vcmp.gt.f32.partialorder %v6258, 0.0
    %vm6263 = vcmp.gt.f32.partialorder %v6259, 0.0
    %vm6264 = vcmp.gt.f32.partialorder %v6260, 0.0
    %vm6265 = vcmp.gt.f32.partialorder %v6261, 0.0
    %v6266 = vmin.f32 %v6258, 0.0
    %v6267 = vmin.f32 %v6259, 0.0
    %v6268 = vmin.f32 %v6260, 0.0
    %v6269 = vmin.f32 %v6261, 0.0
    %v6270 = vmul.f32 %v6266, 1.442695
    %v6271 = vpow.pop %v6270
    %v6272 = vmul.f32 %v6267, 1.442695
    %v6273 = vpow.pop %v6272
    %v6274 = vmul.f32 %v6268, 1.442695
    %v6275 = vpow.pop %v6274
    %v6276 = vmul.f32 %v6269, 1.442695
    %v6277 = vpow.pop %v6276
    %v6278 = vsub.f32 %v6271, 1.0
    %v6279 = vsub.f32 %v6273, 1.0
    %v6280 = vsub.f32 %v6275, 1.0
    %v6281 = vsub.f32 %v6277, 1.0
    %v6282 = vsel %vm6262, %v6258, %v6278
    %v6283 = vsel %vm6263, %v6259, %v6279
    %v6284 = vsel %vm6264, %v6260, %v6280
    %v6285 = vsel %vm6265, %v6261, %v6281
    %v6286 = vld [vmem:[#allocation4] sm:$0xff]
    %v6287 = vld [vmem:[#allocation4 + $0x8] sm:$0xff]
    %v6288 = vld [vmem:[#allocation4 + $0x10] sm:$0xff]
    %v6289 = vld [vmem:[#allocation4 + $0x18] sm:$0xff]
    %v6290 = vld [vmem:[#allocation4 + $0x68] sm:$0xff]
    %v6291 = vld [vmem:[#allocation4 + $0x70] sm:$0xff]
    %v6292 = vld [vmem:[#allocation4 + $0x78] sm:$0xff]
    %v6293 = vld [vmem:[#allocation4 + $0x80] sm:$0xff]
    %v6294 = vld [vmem:[#allocation4 + $0xd0] sm:$0xff]
    %v6295 = vld [vmem:[#allocation4 + $0xd8] sm:$0xff]
    %v6296 = vld [vmem:[#allocation4 + $0xe0] sm:$0xff]
    %v6297 = vld [vmem:[#allocation4 + $0xe8] sm:$0xff]
    %v6298 = vld [vmem:[#allocation4 + $0x138] sm:$0xff]
    %v6299 = vld [vmem:[#allocation4 + $0x140] sm:$0xff]
    %v6300 = vld [vmem:[#allocation4 + $0x148] sm:$0xff]
    %v6301 = vld [vmem:[#allocation4 + $0x150] sm:$0xff]
    %v6302 = vld [vmem:[#allocation4 + $0x1a0] sm:$0xff]
    %v6303 = vld [vmem:[#allocation4 + $0x1a8] sm:$0xff]
    %v6304 = vld [vmem:[#allocation4 + $0x1b0] sm:$0xff]
    %v6305 = vld [vmem:[#allocation4 + $0x1b8] sm:$0xff]
    %v6306 = vld [vmem:[#allocation4 + $0x208] sm:$0xff]
    %v6307 = vld [vmem:[#allocation4 + $0x210] sm:$0xff]
    %v6308 = vld [vmem:[#allocation4 + $0x218] sm:$0xff]
    %v6309 = vld [vmem:[#allocation4 + $0x220] sm:$0xff]
    %v6310 = vld [vmem:[#allocation4 + $0x270] sm:$0xff]
    %v6311 = vld [vmem:[#allocation4 + $0x278] sm:$0xff]
    %v6312 = vld [vmem:[#allocation4 + $0x280] sm:$0xff]
    %v6313 = vld [vmem:[#allocation4 + $0x288] sm:$0xff]
    %v6314 = vld [vmem:[#allocation4 + $0x2d8] sm:$0xff]
    %v6315 = vld [vmem:[#allocation4 + $0x2e0] sm:$0xff]
    %v6316 = vld [vmem:[#allocation4 + $0x2e8] sm:$0xff]
    %v6317 = vld [vmem:[#allocation4 + $0x2f0] sm:$0xff]
    %v6318 = vld [vmem:[#allocation4 + $0x340] sm:$0xff]
    %v6319 = vld [vmem:[#allocation4 + $0x348] sm:$0xff]
    %v6320 = vld [vmem:[#allocation4 + $0x350] sm:$0xff]
    %v6321 = vld [vmem:[#allocation4 + $0x358] sm:$0xff]
    %v6322 = vld [vmem:[#allocation4 + $0x3a8] sm:$0xff]
    %v6323 = vld [vmem:[#allocation4 + $0x3b0] sm:$0xff]
    %v6324 = vld [vmem:[#allocation4 + $0x3b8] sm:$0xff]
    %v6325 = vld [vmem:[#allocation4 + $0x3c0] sm:$0xff]
    %v6326 = vld [vmem:[#allocation4 + $0x410] sm:$0xff]
    %v6327 = vld [vmem:[#allocation4 + $0x418] sm:$0xff]
    %v6328 = vld [vmem:[#allocation4 + $0x420] sm:$0xff]
    %v6329 = vld [vmem:[#allocation4 + $0x428] sm:$0xff]
    %v6330 = vld [vmem:[#allocation4 + $0x478] sm:$0xff]
    %v6331 = vld [vmem:[#allocation4 + $0x480] sm:$0xff]
    %v6332 = vld [vmem:[#allocation4 + $0x488] sm:$0xff]
    %v6333 = vld [vmem:[#allocation4 + $0x490] sm:$0xff]
    %v6334 = vld [vmem:[#allocation4 + $0x4e0] sm:$0xff]
    %v6335 = vld [vmem:[#allocation4 + $0x4e8] sm:$0xff]
    %v6336 = vld [vmem:[#allocation4 + $0x4f0] sm:$0xff]
    %v6337 = vld [vmem:[#allocation4 + $0x4f8] sm:$0xff]
    %v6338 = vld [vmem:[#allocation4 + $0x548] sm:$0xff]
    %v6339 = vld [vmem:[#allocation4 + $0x550] sm:$0xff]
    %v6340 = vld [vmem:[#allocation4 + $0x558] sm:$0xff]
    %v6341 = vld [vmem:[#allocation4 + $0x560] sm:$0xff]
    %v6342 = vld [vmem:[#allocation4 + $0x5b0] sm:$0xff]
    %v6343 = vld [vmem:[#allocation4 + $0x5b8] sm:$0xff]
    %v6344 = vld [vmem:[#allocation4 + $0x5c0] sm:$0xff]
    %v6345 = vld [vmem:[#allocation4 + $0x5c8] sm:$0xff]
    %v6346 = vld [vmem:[#allocation4 + $0x618] sm:$0xff]
    %v6347 = vld [vmem:[#allocation4 + $0x620] sm:$0xff]
    %v6348 = vld [vmem:[#allocation4 + $0x628] sm:$0xff]
    %v6349 = vld [vmem:[#allocation4 + $0x630] sm:$0xff]
    %v6350 = vld [vmem:[#allocation4 + $0x680] sm:$0xff]
    %v6351 = vld [vmem:[#allocation4 + $0x688] sm:$0xff]
    %v6352 = vld [vmem:[#allocation4 + $0x690] sm:$0xff]
    %v6353 = vld [vmem:[#allocation4 + $0x698] sm:$0xff]
    %v6354 = vld [vmem:[#allocation4 + $0x6e8] sm:$0xff]
    %v6355 = vld [vmem:[#allocation4 + $0x6f0] sm:$0xff]
    %v6356 = vld [vmem:[#allocation4 + $0x6f8] sm:$0xff]
    %v6357 = vld [vmem:[#allocation4 + $0x700] sm:$0xff]
    %v6358 = vld [vmem:[#allocation4 + $0x750] sm:$0xff]
    %v6359 = vld [vmem:[#allocation4 + $0x758] sm:$0xff]
    %v6360 = vld [vmem:[#allocation4 + $0x760] sm:$0xff]
    %v6361 = vld [vmem:[#allocation4 + $0x768] sm:$0xff]
    %v6362 = vld [vmem:[#allocation4 + $0x7b8] sm:$0xff]
    %v6363 = vld [vmem:[#allocation4 + $0x7c0] sm:$0xff]
    %v6364 = vld [vmem:[#allocation4 + $0x7c8] sm:$0xff]
    %v6365 = vld [vmem:[#allocation4 + $0x7d0] sm:$0xff]
    %v6366 = vld [vmem:[#allocation4 + $0x820] sm:$0xff]
    %v6367 = vld [vmem:[#allocation4 + $0x828] sm:$0xff]
    %v6368 = vld [vmem:[#allocation4 + $0x830] sm:$0xff]
    %v6369 = vld [vmem:[#allocation4 + $0x838] sm:$0xff]
    %v6370 = vld [vmem:[#allocation4 + $0x888] sm:$0xff]
    %v6371 = vld [vmem:[#allocation4 + $0x890] sm:$0xff]
    %v6372 = vld [vmem:[#allocation4 + $0x898] sm:$0xff]
    %v6373 = vld [vmem:[#allocation4 + $0x8a0] sm:$0xff]
    %v6374 = vld [vmem:[#allocation4 + $0x8f0] sm:$0xff]
    %v6375 = vld [vmem:[#allocation4 + $0x8f8] sm:$0xff]
    %v6376 = vld [vmem:[#allocation4 + $0x900] sm:$0xff]
    %v6377 = vld [vmem:[#allocation4 + $0x908] sm:$0xff]
    %v6378 = vld [vmem:[#allocation4 + $0x958] sm:$0xff]
    %v6379 = vld [vmem:[#allocation4 + $0x960] sm:$0xff]
    %v6380 = vld [vmem:[#allocation4 + $0x968] sm:$0xff]
    %v6381 = vld [vmem:[#allocation4 + $0x970] sm:$0xff]
    %v6382 = vld [vmem:[#allocation4 + $0x9c0] sm:$0xff]
    %v6383 = vld [vmem:[#allocation4 + $0x9c8] sm:$0xff]
    %v6384 = vld [vmem:[#allocation4 + $0x9d0] sm:$0xff]
    %v6385 = vld [vmem:[#allocation4 + $0x9d8] sm:$0xff]
    %v6386 = vld [vmem:[#allocation4 + $0xa28] sm:$0xff]
    %v6387 = vld [vmem:[#allocation4 + $0xa30] sm:$0xff]
    %v6388 = vld [vmem:[#allocation4 + $0xa38] sm:$0xff]
    %v6389 = vld [vmem:[#allocation4 + $0xa40] sm:$0xff]
    %v6390 = vld [vmem:[#allocation4 + $0xa90] sm:$0xff]
    %v6391 = vld [vmem:[#allocation4 + $0xa98] sm:$0xff]
    %v6392 = vld [vmem:[#allocation4 + $0xaa0] sm:$0xff]
    %v6393 = vld [vmem:[#allocation4 + $0xaa8] sm:$0xff]
    %v6394 = vld [vmem:[#allocation4 + $0xaf8] sm:$0xff]
    %v6395 = vld [vmem:[#allocation4 + $0xb00] sm:$0xff]
    %v6396 = vld [vmem:[#allocation4 + $0xb08] sm:$0xff]
    %v6397 = vld [vmem:[#allocation4 + $0xb10] sm:$0xff]
    %v6398 = vld [vmem:[#allocation4 + $0xb60] sm:$0xff]
    %v6399 = vld [vmem:[#allocation4 + $0xb68] sm:$0xff]
    %v6400 = vld [vmem:[#allocation4 + $0xb70] sm:$0xff]
    %v6401 = vld [vmem:[#allocation4 + $0xb78] sm:$0xff]
    %v6402 = vld [vmem:[#allocation4 + $0xbc8] sm:$0xff]
    %v6403 = vld [vmem:[#allocation4 + $0xbd0] sm:$0xff]
    %v6404 = vld [vmem:[#allocation4 + $0xbd8] sm:$0xff]
    %v6405 = vld [vmem:[#allocation4 + $0xbe0] sm:$0xff]
    %v6406 = vld [vmem:[#allocation4 + $0xc30] sm:$0xff]
    %v6407 = vld [vmem:[#allocation4 + $0xc38] sm:$0xff]
    %v6408 = vld [vmem:[#allocation4 + $0xc40] sm:$0xff]
    %v6409 = vld [vmem:[#allocation4 + $0xc48] sm:$0xff]
    %v6410 = vld [vmem:[#allocation4 + $0xc98] sm:$0xff]
    %v6411 = vld [vmem:[#allocation4 + $0xca0] sm:$0xff]
    %v6412 = vld [vmem:[#allocation4 + $0xca8] sm:$0xff]
    %v6413 = vld [vmem:[#allocation4 + $0xcb0] sm:$0xff]
    %v6414 = vpack.c.bf16 %v6282, %v6282
    %v6415 = vpack.c.bf16 %v6283, %v6283
    %v6416 = vpack.c.bf16 %v6284, %v6284
    %v6417 = vpack.c.bf16 %v6285, %v6285
    %v6418 = vld [vmem:[#allocation35 + $0x23] sm:$0xf]
    %v6420 = vlaneseq
    %v6421 = vshrl.u32 %v6420, 7
    %v6422 = vsub.s32 0, %v6421
    %v6423 = vrot.slane %v6418, %v6422
    %v6424 = vlaneseq
    %v6425 = vshrl.u32 %v6424, 7
    %v6426 = vsub.s32 1, %v6425
    %v6427 = vrot.slane %v6418, %v6426
    %v6428 = vlaneseq
    %v6429 = vshrl.u32 %v6428, 7
    %v6430 = vsub.s32 2, %v6429
    %v6431 = vrot.slane %v6418, %v6430
    %v6432 = vlaneseq
    %v6433 = vshrl.u32 %v6432, 7
    %v6434 = vsub.s32 3, %v6433
    %v6435 = vrot.slane %v6418, %v6434
    %6440 = vmatprep.subr.bf16.mxu0 %v6287
    %6441 = vmatpush1.bf16.msra.mxu0 %v6286
    %6442 = vmatprep.subr.bf16.mxu0 %v6291
    %6443 = vmatpush1.bf16.msra.mxu0 %v6290
    %6444 = vmatprep.subr.bf16.mxu0 %v6295
    %6445 = vmatpush1.bf16.msra.mxu0 %v6294
    %6446 = vmatprep.subr.bf16.mxu0 %v6299
    %6447 = vmatpush1.bf16.msra.mxu0 %v6298
    %6448 = vmatprep.subr.bf16.mxu0 %v6303
    %6449 = vmatpush1.bf16.msra.mxu0 %v6302
    %6450 = vmatprep.subr.bf16.mxu0 %v6307
    %6451 = vmatpush1.bf16.msra.mxu0 %v6306
    %6452 = vmatprep.subr.bf16.mxu0 %v6311
    %6453 = vmatpush1.bf16.msra.mxu0 %v6310
    %6454 = vmatprep.subr.bf16.mxu0 %v6315
    %6455 = vmatpush1.bf16.msra.mxu0 %v6314
    %6456 = vmatprep.subr.bf16.mxu0 %v6319
    %6457 = vmatpush1.bf16.msra.mxu0 %v6318
    %6458 = vmatprep.subr.bf16.mxu0 %v6323
    %6459 = vmatpush1.bf16.msra.mxu0 %v6322
    %6460 = vmatprep.subr.bf16.mxu0 %v6327
    %6461 = vmatpush1.bf16.msra.mxu0 %v6326
    %6462 = vmatprep.subr.bf16.mxu0 %v6331
    %6463 = vmatpush1.bf16.msra.mxu0 %v6330
    %6464 = vmatprep.subr.bf16.mxu0 %v6335
    %6465 = vmatpush1.bf16.msra.mxu0 %v6334
    %6466 = vmatprep.subr.bf16.mxu0 %v6339
    %6467 = vmatpush1.bf16.msra.mxu0 %v6338
    %6468 = vmatprep.subr.bf16.mxu0 %v6343
    %6469 = vmatpush1.bf16.msra.mxu0 %v6342
    %6470 = vmatprep.subr.bf16.mxu0 %v6347
    %6471 = vmatpush1.bf16.msra.mxu0 %v6346
    %6472 = vmatprep.mubr.bf16.mxu0 %v6415
    %6473 = vmatmul.mubr.bf16.gmra.mrb[0].mxu0 %v6414
    %v6474 = vpop.f32.mrb[0].mxu0
    %v6475 = vadd.f32 %v6423, %v6474
    %v6476 = vpop.f32.mrb[0].mxu0
    %v6477 = vadd.f32 %v6427, %v6476
    %v6478 = vpop.f32.mrb[0].mxu0
    %v6479 = vpop.f32.mrb[0].mxu0
    %6480 = vdwg.mxu0
    %6481 = vmatprep.subr.bf16.mxu0 %v6351
    %6482 = vmatpush1.bf16.msra.mxu0 %v6350
    %6483 = vmatprep.subr.bf16.mxu0 %v6355
    %6484 = vmatpush1.bf16.msra.mxu0 %v6354
    %6485 = vmatprep.subr.bf16.mxu0 %v6359
    %6486 = vmatpush1.bf16.msra.mxu0 %v6358
    %6487 = vmatprep.subr.bf16.mxu0 %v6363
    %6488 = vmatpush1.bf16.msra.mxu0 %v6362
    %6489 = vmatprep.subr.bf16.mxu0 %v6367
    %6490 = vmatpush1.bf16.msra.mxu0 %v6366
    %6491 = vmatprep.subr.bf16.mxu0 %v6371
    %6492 = vmatpush1.bf16.msra.mxu0 %v6370
    %6493 = vmatprep.subr.bf16.mxu0 %v6375
    %6494 = vmatpush1.bf16.msra.mxu0 %v6374
    %6495 = vmatprep.subr.bf16.mxu0 %v6379
    %6496 = vmatpush1.bf16.msra.mxu0 %v6378
    %6497 = vmatprep.subr.bf16.mxu0 %v6383
    %6498 = vmatpush1.bf16.msra.mxu0 %v6382
    %6499 = vmatprep.subr.bf16.mxu0 %v6387
    %6500 = vmatpush1.bf16.msra.mxu0 %v6386
    %6501 = vmatprep.subr.bf16.mxu0 %v6391
    %6502 = vmatpush1.bf16.msra.mxu0 %v6390
    %6503 = vmatprep.subr.bf16.mxu0 %v6395
    %6504 = vmatpush1.bf16.msra.mxu0 %v6394
    %6505 = vmatprep.subr.bf16.mxu0 %v6399
    %6506 = vmatpush1.bf16.msra.mxu0 %v6398
    %6507 = vmatprep.subr.bf16.mxu0 %v6403
    %6508 = vmatpush1.bf16.msra.mxu0 %v6402
    %6509 = vmatprep.subr.bf16.mxu0 %v6407
    %6510 = vmatpush1.bf16.msra.mxu0 %v6406
    %6511 = vmatprep.subr.bf16.mxu0 %v6411
    %6512 = vmatpush1.bf16.msra.mxu0 %v6410
    %6513 = vmatprep.mubr.bf16.mxu0 %v6417
    %6514 = vmatmul.mubr.bf16.gmra.mrb[0].mxu0 %v6416
    %v6515 = vpop.f32.mrb[0].mxu0
    %v6516 = vadd.f32 %v6475, %v6515
    %v6517 = vpop.f32.mrb[0].mxu0
    %v6518 = vadd.f32 %v6477, %v6517
    %v6519 = vpop.f32.mrb[0].mxu0
    %v6520 = vpop.f32.mrb[0].mxu0
    %6521 = vdwg.mxu0
    %6522 = vmatprep.subr.bf16.mxu0 %v6289
    %6523 = vmatpush1.bf16.msra.mxu0 %v6288
    %6524 = vmatprep.subr.bf16.mxu0 %v6293
    %6525 = vmatpush1.bf16.msra.mxu0 %v6292
    %6526 = vmatprep.subr.bf16.mxu0 %v6297
    %6527 = vmatpush1.bf16.msra.mxu0 %v6296
    %6528 = vmatprep.subr.bf16.mxu0 %v6301
    %6529 = vmatpush1.bf16.msra.mxu0 %v6300
    %6530 = vmatprep.subr.bf16.mxu0 %v6305
    %6531 = vmatpush1.bf16.msra.mxu0 %v6304
    %6532 = vmatprep.subr.bf16.mxu0 %v6309
    %6533 = vmatpush1.bf16.msra.mxu0 %v6308
    %6534 = vmatprep.subr.bf16.mxu0 %v6313
    %6535 = vmatpush1.bf16.msra.mxu0 %v6312
    %6536 = vmatprep.subr.bf16.mxu0 %v6317
    %6537 = vmatpush1.bf16.msra.mxu0 %v6316
    %6538 = vmatprep.subr.bf16.mxu0 %v6321
    %6539 = vmatpush1.bf16.msra.mxu0 %v6320
    %6540 = vmatprep.subr.bf16.mxu0 %v6325
    %6541 = vmatpush1.bf16.msra.mxu0 %v6324
    %6542 = vmatprep.subr.bf16.mxu0 %v6329
    %6543 = vmatpush1.bf16.msra.mxu0 %v6328
    %6544 = vmatprep.subr.bf16.mxu0 %v6333
    %6545 = vmatpush1.bf16.msra.mxu0 %v6332
    %6546 = vmatprep.subr.bf16.mxu0 %v6337
    %6547 = vmatpush1.bf16.msra.mxu0 %v6336
    %6548 = vmatprep.subr.bf16.mxu0 %v6341
    %6549 = vmatpush1.bf16.msra.mxu0 %v6340
    %6550 = vmatprep.subr.bf16.mxu0 %v6345
    %6551 = vmatpush1.bf16.msra.mxu0 %v6344
    %6552 = vmatprep.subr.bf16.mxu0 %v6349
    %6553 = vmatpush1.bf16.msra.mxu0 %v6348
    %6554 = vmatprep.mubr.bf16.mxu0 %v6415
    %6555 = vmatmul.mubr.bf16.gmra.mrb[0].mxu0 %v6414
    %v6556 = vpop.f32.mrb[0].mxu0
    %v6557 = vadd.f32 %v6431, %v6556
    %v6558 = vpop.f32.mrb[0].mxu0
    %v6559 = vadd.f32 %v6435, %v6558
    %v6560 = vpop.f32.mrb[0].mxu0
    %v6561 = vpop.f32.mrb[0].mxu0
    %6562 = vdwg.mxu0
    %6563 = vmatprep.subr.bf16.mxu0 %v6353
    %6564 = vmatpush1.bf16.msra.mxu0 %v6352
    %6565 = vmatprep.subr.bf16.mxu0 %v6357
    %6566 = vmatpush1.bf16.msra.mxu0 %v6356
    %6567 = vmatprep.subr.bf16.mxu0 %v6361
    %6568 = vmatpush1.bf16.msra.mxu0 %v6360
    %6569 = vmatprep.subr.bf16.mxu0 %v6365
    %6570 = vmatpush1.bf16.msra.mxu0 %v6364
    %6571 = vmatprep.subr.bf16.mxu0 %v6369
    %6572 = vmatpush1.bf16.msra.mxu0 %v6368
    %6573 = vmatprep.subr.bf16.mxu0 %v6373
    %6574 = vmatpush1.bf16.msra.mxu0 %v6372
    %6575 = vmatprep.subr.bf16.mxu0 %v6377
    %6576 = vmatpush1.bf16.msra.mxu0 %v6376
    %6577 = vmatprep.subr.bf16.mxu0 %v6381
    %6578 = vmatpush1.bf16.msra.mxu0 %v6380
    %6579 = vmatprep.subr.bf16.mxu0 %v6385
    %6580 = vmatpush1.bf16.msra.mxu0 %v6384
    %6581 = vmatprep.subr.bf16.mxu0 %v6389
    %6582 = vmatpush1.bf16.msra.mxu0 %v6388
    %6583 = vmatprep.subr.bf16.mxu0 %v6393
    %6584 = vmatpush1.bf16.msra.mxu0 %v6392
    %6585 = vmatprep.subr.bf16.mxu0 %v6397
    %6586 = vmatpush1.bf16.msra.mxu0 %v6396
    %6587 = vmatprep.subr.bf16.mxu0 %v6401
    %6588 = vmatpush1.bf16.msra.mxu0 %v6400
    %6589 = vmatprep.subr.bf16.mxu0 %v6405
    %6590 = vmatpush1.bf16.msra.mxu0 %v6404
    %6591 = vmatprep.subr.bf16.mxu0 %v6409
    %6592 = vmatpush1.bf16.msra.mxu0 %v6408
    %6593 = vmatprep.subr.bf16.mxu0 %v6413
    %6594 = vmatpush1.bf16.msra.mxu0 %v6412
    %6595 = vmatprep.mubr.bf16.mxu0 %v6417
    %6596 = vmatmul.mubr.bf16.gmra.mrb[0].mxu0 %v6416
    %v6597 = vpop.f32.mrb[0].mxu0
    %v6598 = vadd.f32 %v6557, %v6597
    %v6599 = vpop.f32.mrb[0].mxu0
    %v6600 = vadd.f32 %v6559, %v6599
    %v6601 = vpop.f32.mrb[0].mxu0
    %v6602 = vpop.f32.mrb[0].mxu0
    %6603 = vdwg.mxu0
    %vm6604 = vcmp.gt.f32.partialorder %v6516, 0.0
    %vm6605 = vcmp.gt.f32.partialorder %v6518, 0.0
    %vm6606 = vcmp.gt.f32.partialorder %v6598, 0.0
    %vm6607 = vcmp.gt.f32.partialorder %v6600, 0.0
    %v6608 = vmin.f32 %v6516, 0.0
    %v6609 = vmin.f32 %v6518, 0.0
    %v6610 = vmin.f32 %v6598, 0.0
    %v6611 = vmin.f32 %v6600, 0.0
    %v6612 = vmul.f32 %v6608, 1.442695
    %v6613 = vpow.pop %v6612
    %v6614 = vmul.f32 %v6609, 1.442695
    %v6615 = vpow.pop %v6614
    %v6616 = vmul.f32 %v6610, 1.442695
    %v6617 = vpow.pop %v6616
    %v6618 = vmul.f32 %v6611, 1.442695
    %v6619 = vpow.pop %v6618
    %v6620 = vsub.f32 %v6613, 1.0
    %v6621 = vsub.f32 %v6615, 1.0
    %v6622 = vsub.f32 %v6617, 1.0
    %v6623 = vsub.f32 %v6619, 1.0
    %v6624 = vsel %vm6604, %v6516, %v6620
    %v6625 = vsel %vm6605, %v6518, %v6621
    %v6626 = vsel %vm6606, %v6598, %v6622
    %v6627 = vsel %vm6607, %v6600, %v6623
    %v6628 = vld [vmem:[#allocation4 + $0x20] sm:$0xff]
    %v6629 = vld [vmem:[#allocation4 + $0x28] sm:$0xff]
    %v6630 = vld [vmem:[#allocation4 + $0x30] sm:$0xff]
    %v6631 = vld [vmem:[#allocation4 + $0x38] sm:$0xff]
    %v6632 = vld [vmem:[#allocation4 + $0x88] sm:$0xff]
    %v6633 = vld [vmem:[#allocation4 + $0x90] sm:$0xff]
    %v6634 = vld [vmem:[#allocation4 + $0x98] sm:$0xff]
    %v6635 = vld [vmem:[#allocation4 + $0xa0] sm:$0xff]
    %v6636 = vld [vmem:[#allocation4 + $0xf0] sm:$0xff]
    %v6637 = vld [vmem:[#allocation4 + $0xf8] sm:$0xff]
    %v6638 = vld [vmem:[#allocation4 + $0x100] sm:$0xff]
    %v6639 = vld [vmem:[#allocation4 + $0x108] sm:$0xff]
    %v6640 = vld [vmem:[#allocation4 + $0x158] sm:$0xff]
    %v6641 = vld [vmem:[#allocation4 + $0x160] sm:$0xff]
    %v6642 = vld [vmem:[#allocation4 + $0x168] sm:$0xff]
    %v6643 = vld [vmem:[#allocation4 + $0x170] sm:$0xff]
    %v6644 = vld [vmem:[#allocation4 + $0x1c0] sm:$0xff]
    %v6645 = vld [vmem:[#allocation4 + $0x1c8] sm:$0xff]
    %v6646 = vld [vmem:[#allocation4 + $0x1d0] sm:$0xff]
    %v6647 = vld [vmem:[#allocation4 + $0x1d8] sm:$0xff]
    %v6648 = vld [vmem:[#allocation4 + $0x228] sm:$0xff]
    %v6649 = vld [vmem:[#allocation4 + $0x230] sm:$0xff]
    %v6650 = vld [vmem:[#allocation4 + $0x238] sm:$0xff]
    %v6651 = vld [vmem:[#allocation4 + $0x240] sm:$0xff]
    %v6652 = vld [vmem:[#allocation4 + $0x290] sm:$0xff]
    %v6653 = vld [vmem:[#allocation4 + $0x298] sm:$0xff]
    %v6654 = vld [vmem:[#allocation4 + $0x2a0] sm:$0xff]
    %v6655 = vld [vmem:[#allocation4 + $0x2a8] sm:$0xff]
    %v6656 = vld [vmem:[#allocation4 + $0x2f8] sm:$0xff]
    %v6657 = vld [vmem:[#allocation4 + $0x300] sm:$0xff]
    %v6658 = vld [vmem:[#allocation4 + $0x308] sm:$0xff]
    %v6659 = vld [vmem:[#allocation4 + $0x310] sm:$0xff]
    %v6660 = vld [vmem:[#allocation4 + $0x360] sm:$0xff]
    %v6661 = vld [vmem:[#allocation4 + $0x368] sm:$0xff]
    %v6662 = vld [vmem:[#allocation4 + $0x370] sm:$0xff]
    %v6663 = vld [vmem:[#allocation4 + $0x378] sm:$0xff]
    %v6664 = vld [vmem:[#allocation4 + $0x3c8] sm:$0xff]
    %v6665 = vld [vmem:[#allocation4 + $0x3d0] sm:$0xff]
    %v6666 = vld [vmem:[#allocation4 + $0x3d8] sm:$0xff]
    %v6667 = vld [vmem:[#allocation4 + $0x3e0] sm:$0xff]
    %v6668 = vld [vmem:[#allocation4 + $0x430] sm:$0xff]
    %v6669 = vld [vmem:[#allocation4 + $0x438] sm:$0xff]
    %v6670 = vld [vmem:[#allocation4 + $0x440] sm:$0xff]
    %v6671 = vld [vmem:[#allocation4 + $0x448] sm:$0xff]
    %v6672 = vld [vmem:[#allocation4 + $0x498] sm:$0xff]
    %v6673 = vld [vmem:[#allocation4 + $0x4a0] sm:$0xff]
    %v6674 = vld [vmem:[#allocation4 + $0x4a8] sm:$0xff]
    %v6675 = vld [vmem:[#allocation4 + $0x4b0] sm:$0xff]
    %v6676 = vld [vmem:[#allocation4 + $0x500] sm:$0xff]
    %v6677 = vld [vmem:[#allocation4 + $0x508] sm:$0xff]
    %v6678 = vld [vmem:[#allocation4 + $0x510] sm:$0xff]
    %v6679 = vld [vmem:[#allocation4 + $0x518] sm:$0xff]
    %v6680 = vld [vmem:[#allocation4 + $0x568] sm:$0xff]
    %v6681 = vld [vmem:[#allocation4 + $0x570] sm:$0xff]
    %v6682 = vld [vmem:[#allocation4 + $0x578] sm:$0xff]
    %v6683 = vld [vmem:[#allocation4 + $0x580] sm:$0xff]
    %v6684 = vld [vmem:[#allocation4 + $0x5d0] sm:$0xff]
    %v6685 = vld [vmem:[#allocation4 + $0x5d8] sm:$0xff]
    %v6686 = vld [vmem:[#allocation4 + $0x5e0] sm:$0xff]
    %v6687 = vld [vmem:[#allocation4 + $0x5e8] sm:$0xff]
    %v6688 = vld [vmem:[#allocation4 + $0x638] sm:$0xff]
    %v6689 = vld [vmem:[#allocation4 + $0x640] sm:$0xff]
    %v6690 = vld [vmem:[#allocation4 + $0x648] sm:$0xff]
    %v6691 = vld [vmem:[#allocation4 + $0x650] sm:$0xff]
    %v6692 = vld [vmem:[#allocation4 + $0x6a0] sm:$0xff]
    %v6693 = vld [vmem:[#allocation4 + $0x6a8] sm:$0xff]
    %v6694 = vld [vmem:[#allocation4 + $0x6b0] sm:$0xff]
    %v6695 = vld [vmem:[#allocation4 + $0x6b8] sm:$0xff]
    %v6696 = vld [vmem:[#allocation4 + $0x708] sm:$0xff]
    %v6697 = vld [vmem:[#allocation4 + $0x710] sm:$0xff]
    %v6698 = vld [vmem:[#allocation4 + $0x718] sm:$0xff]
    %v6699 = vld [vmem:[#allocation4 + $0x720] sm:$0xff]
    %v6700 = vld [vmem:[#allocation4 + $0x770] sm:$0xff]
    %v6701 = vld [vmem:[#allocation4 + $0x778] sm:$0xff]
    %v6702 = vld [vmem:[#allocation4 + $0x780] sm:$0xff]
    %v6703 = vld [vmem:[#allocation4 + $0x788] sm:$0xff]
    %v6704 = vld [vmem:[#allocation4 + $0x7d8] sm:$0xff]
    %v6705 = vld [vmem:[#allocation4 + $0x7e0] sm:$0xff]
    %v6706 = vld [vmem:[#allocation4 + $0x7e8] sm:$0xff]
    %v6707 = vld [vmem:[#allocation4 + $0x7f0] sm:$0xff]
    %v6708 = vld [vmem:[#allocation4 + $0x840] sm:$0xff]
    %v6709 = vld [vmem:[#allocation4 + $0x848] sm:$0xff]
    %v6710 = vld [vmem:[#allocation4 + $0x850] sm:$0xff]
    %v6711 = vld [vmem:[#allocation4 + $0x858] sm:$0xff]
    %v6712 = vld [vmem:[#allocation4 + $0x8a8] sm:$0xff]
    %v6713 = vld [vmem:[#allocation4 + $0x8b0] sm:$0xff]
    %v6714 = vld [vmem:[#allocation4 + $0x8b8] sm:$0xff]
    %v6715 = vld [vmem:[#allocation4 + $0x8c0] sm:$0xff]
    %v6716 = vld [vmem:[#allocation4 + $0x910] sm:$0xff]
    %v6717 = vld [vmem:[#allocation4 + $0x918] sm:$0xff]
    %v6718 = vld [vmem:[#allocation4 + $0x920] sm:$0xff]
    %v6719 = vld [vmem:[#allocation4 + $0x928] sm:$0xff]
    %v6720 = vld [vmem:[#allocation4 + $0x978] sm:$0xff]
    %v6721 = vld [vmem:[#allocation4 + $0x980] sm:$0xff]
    %v6722 = vld [vmem:[#allocation4 + $0x988] sm:$0xff]
    %v6723 = vld [vmem:[#allocation4 + $0x990] sm:$0xff]
    %v6724 = vld [vmem:[#allocation4 + $0x9e0] sm:$0xff]
    %v6725 = vld [vmem:[#allocation4 + $0x9e8] sm:$0xff]
    %v6726 = vld [vmem:[#allocation4 + $0x9f0] sm:$0xff]
    %v6727 = vld [vmem:[#allocation4 + $0x9f8] sm:$0xff]
    %v6728 = vld [vmem:[#allocation4 + $0xa48] sm:$0xff]
    %v6729 = vld [vmem:[#allocation4 + $0xa50] sm:$0xff]
    %v6730 = vld [vmem:[#allocation4 + $0xa58] sm:$0xff]
    %v6731 = vld [vmem:[#allocation4 + $0xa60] sm:$0xff]
    %v6732 = vld [vmem:[#allocation4 + $0xab0] sm:$0xff]
    %v6733 = vld [vmem:[#allocation4 + $0xab8] sm:$0xff]
    %v6734 = vld [vmem:[#allocation4 + $0xac0] sm:$0xff]
    %v6735 = vld [vmem:[#allocation4 + $0xac8] sm:$0xff]
    %v6736 = vld [vmem:[#allocation4 + $0xb18] sm:$0xff]
    %v6737 = vld [vmem:[#allocation4 + $0xb20] sm:$0xff]
    %v6738 = vld [vmem:[#allocation4 + $0xb28] sm:$0xff]
    %v6739 = vld [vmem:[#allocation4 + $0xb30] sm:$0xff]
    %v6740 = vld [vmem:[#allocation4 + $0xb80] sm:$0xff]
    %v6741 = vld [vmem:[#allocation4 + $0xb88] sm:$0xff]
    %v6742 = vld [vmem:[#allocation4 + $0xb90] sm:$0xff]
    %v6743 = vld [vmem:[#allocation4 + $0xb98] sm:$0xff]
    %v6744 = vld [vmem:[#allocation4 + $0xbe8] sm:$0xff]
    %v6745 = vld [vmem:[#allocation4 + $0xbf0] sm:$0xff]
    %v6746 = vld [vmem:[#allocation4 + $0xbf8] sm:$0xff]
    %v6747 = vld [vmem:[#allocation4 + $0xc00] sm:$0xff]
    %v6748 = vld [vmem:[#allocation4 + $0xc50] sm:$0xff]
    %v6749 = vld [vmem:[#allocation4 + $0xc58] sm:$0xff]
    %v6750 = vld [vmem:[#allocation4 + $0xc60] sm:$0xff]
    %v6751 = vld [vmem:[#allocation4 + $0xc68] sm:$0xff]
    %v6752 = vld [vmem:[#allocation4 + $0xcb8] sm:$0xff]
    %v6753 = vld [vmem:[#allocation4 + $0xcc0] sm:$0xff]
    %v6754 = vld [vmem:[#allocation4 + $0xcc8] sm:$0xff]
    %v6755 = vld [vmem:[#allocation4 + $0xcd0] sm:$0xff]
    %v6756 = vpack.c.bf16 %v6624, %v6624
    %v6757 = vpack.c.bf16 %v6625, %v6625
    %v6758 = vpack.c.bf16 %v6626, %v6626
    %v6759 = vpack.c.bf16 %v6627, %v6627
    %v6760 = vld [vmem:[#allocation35 + $0x27] sm:$0xf]
    %v6762 = vlaneseq
    %v6763 = vshrl.u32 %v6762, 7
    %v6764 = vsub.s32 0, %v6763
    %v6765 = vrot.slane %v6760, %v6764
    %v6766 = vlaneseq
    %v6767 = vshrl.u32 %v6766, 7
    %v6768 = vsub.s32 1, %v6767
    %v6769 = vrot.slane %v6760, %v6768
    %v6770 = vlaneseq
    %v6771 = vshrl.u32 %v6770, 7
    %v6772 = vsub.s32 2, %v6771
    %v6773 = vrot.slane %v6760, %v6772
    %v6774 = vlaneseq
    %v6775 = vshrl.u32 %v6774, 7
    %v6776 = vsub.s32 3, %v6775
    %v6777 = vrot.slane %v6760, %v6776
    %6782 = vmatprep.subr.bf16.mxu0 %v6629
    %6783 = vmatpush1.bf16.msra.mxu0 %v6628
    %6784 = vmatprep.subr.bf16.mxu0 %v6633
    %6785 = vmatpush1.bf16.msra.mxu0 %v6632
    %6786 = vmatprep.subr.bf16.mxu0 %v6637
    %6787 = vmatpush1.bf16.msra.mxu0 %v6636
    %6788 = vmatprep.subr.bf16.mxu0 %v6641
    %6789 = vmatpush1.bf16.msra.mxu0 %v6640
    %6790 = vmatprep.subr.bf16.mxu0 %v6645
    %6791 = vmatpush1.bf16.msra.mxu0 %v6644
    %6792 = vmatprep.subr.bf16.mxu0 %v6649
    %6793 = vmatpush1.bf16.msra.mxu0 %v6648
    %6794 = vmatprep.subr.bf16.mxu0 %v6653
    %6795 = vmatpush1.bf16.msra.mxu0 %v6652
    %6796 = vmatprep.subr.bf16.mxu0 %v6657
    %6797 = vmatpush1.bf16.msra.mxu0 %v6656
    %6798 = vmatprep.subr.bf16.mxu0 %v6661
    %6799 = vmatpush1.bf16.msra.mxu0 %v6660
    %6800 = vmatprep.subr.bf16.mxu0 %v6665
    %6801 = vmatpush1.bf16.msra.mxu0 %v6664
    %6802 = vmatprep.subr.bf16.mxu0 %v6669
    %6803 = vmatpush1.bf16.msra.mxu0 %v6668
    %6804 = vmatprep.subr.bf16.mxu0 %v6673
    %6805 = vmatpush1.bf16.msra.mxu0 %v6672
    %6806 = vmatprep.subr.bf16.mxu0 %v6677
    %6807 = vmatpush1.bf16.msra.mxu0 %v6676
    %6808 = vmatprep.subr.bf16.mxu0 %v6681
    %6809 = vmatpush1.bf16.msra.mxu0 %v6680
    %6810 = vmatprep.subr.bf16.mxu0 %v6685
    %6811 = vmatpush1.bf16.msra.mxu0 %v6684
    %6812 = vmatprep.subr.bf16.mxu0 %v6689
    %6813 = vmatpush1.bf16.msra.mxu0 %v6688
    %6814 = vmatprep.mubr.bf16.mxu0 %v6757
    %6815 = vmatmul.mubr.bf16.gmra.mrb[0].mxu0 %v6756
    %v6816 = vpop.f32.mrb[0].mxu0
    %v6817 = vadd.f32 %v6765, %v6816
    %v6818 = vpop.f32.mrb[0].mxu0
    %v6819 = vadd.f32 %v6769, %v6818
    %v6820 = vpop.f32.mrb[0].mxu0
    %v6821 = vpop.f32.mrb[0].mxu0
    %6822 = vdwg.mxu0
    %6823 = vmatprep.subr.bf16.mxu0 %v6693
    %6824 = vmatpush1.bf16.msra.mxu0 %v6692
    %6825 = vmatprep.subr.bf16.mxu0 %v6697
    %6826 = vmatpush1.bf16.msra.mxu0 %v6696
    %6827 = vmatprep.subr.bf16.mxu0 %v6701
    %6828 = vmatpush1.bf16.msra.mxu0 %v6700
    %6829 = vmatprep.subr.bf16.mxu0 %v6705
    %6830 = vmatpush1.bf16.msra.mxu0 %v6704
    %6831 = vmatprep.subr.bf16.mxu0 %v6709
    %6832 = vmatpush1.bf16.msra.mxu0 %v6708
    %6833 = vmatprep.subr.bf16.mxu0 %v6713
    %6834 = vmatpush1.bf16.msra.mxu0 %v6712
    %6835 = vmatprep.subr.bf16.mxu0 %v6717
    %6836 = vmatpush1.bf16.msra.mxu0 %v6716
    %6837 = vmatprep.subr.bf16.mxu0 %v6721
    %6838 = vmatpush1.bf16.msra.mxu0 %v6720
    %6839 = vmatprep.subr.bf16.mxu0 %v6725
    %6840 = vmatpush1.bf16.msra.mxu0 %v6724
    %6841 = vmatprep.subr.bf16.mxu0 %v6729
    %6842 = vmatpush1.bf16.msra.mxu0 %v6728
    %6843 = vmatprep.subr.bf16.mxu0 %v6733
    %6844 = vmatpush1.bf16.msra.mxu0 %v6732
    %6845 = vmatprep.subr.bf16.mxu0 %v6737
    %6846 = vmatpush1.bf16.msra.mxu0 %v6736
    %6847 = vmatprep.subr.bf16.mxu0 %v6741
    %6848 = vmatpush1.bf16.msra.mxu0 %v6740
    %6849 = vmatprep.subr.bf16.mxu0 %v6745
    %6850 = vmatpush1.bf16.msra.mxu0 %v6744
    %6851 = vmatprep.subr.bf16.mxu0 %v6749
    %6852 = vmatpush1.bf16.msra.mxu0 %v6748
    %6853 = vmatprep.subr.bf16.mxu0 %v6753
    %6854 = vmatpush1.bf16.msra.mxu0 %v6752
    %6855 = vmatprep.mubr.bf16.mxu0 %v6759
    %6856 = vmatmul.mubr.bf16.gmra.mrb[0].mxu0 %v6758
    %v6857 = vpop.f32.mrb[0].mxu0
    %v6858 = vadd.f32 %v6817, %v6857
    %v6859 = vpop.f32.mrb[0].mxu0
    %v6860 = vadd.f32 %v6819, %v6859
    %v6861 = vpop.f32.mrb[0].mxu0
    %v6862 = vpop.f32.mrb[0].mxu0
    %6863 = vdwg.mxu0
    %6864 = vmatprep.subr.bf16.mxu0 %v6631
    %6865 = vmatpush1.bf16.msra.mxu0 %v6630
    %6866 = vmatprep.subr.bf16.mxu0 %v6635
    %6867 = vmatpush1.bf16.msra.mxu0 %v6634
    %6868 = vmatprep.subr.bf16.mxu0 %v6639
    %6869 = vmatpush1.bf16.msra.mxu0 %v6638
    %6870 = vmatprep.subr.bf16.mxu0 %v6643
    %6871 = vmatpush1.bf16.msra.mxu0 %v6642
    %6872 = vmatprep.subr.bf16.mxu0 %v6647
    %6873 = vmatpush1.bf16.msra.mxu0 %v6646
    %6874 = vmatprep.subr.bf16.mxu0 %v6651
    %6875 = vmatpush1.bf16.msra.mxu0 %v6650
    %6876 = vmatprep.subr.bf16.mxu0 %v6655
    %6877 = vmatpush1.bf16.msra.mxu0 %v6654
    %6878 = vmatprep.subr.bf16.mxu0 %v6659
    %6879 = vmatpush1.bf16.msra.mxu0 %v6658
    %6880 = vmatprep.subr.bf16.mxu0 %v6663
    %6881 = vmatpush1.bf16.msra.mxu0 %v6662
    %6882 = vmatprep.subr.bf16.mxu0 %v6667
    %6883 = vmatpush1.bf16.msra.mxu0 %v6666
    %6884 = vmatprep.subr.bf16.mxu0 %v6671
    %6885 = vmatpush1.bf16.msra.mxu0 %v6670
    %6886 = vmatprep.subr.bf16.mxu0 %v6675
    %6887 = vmatpush1.bf16.msra.mxu0 %v6674
    %6888 = vmatprep.subr.bf16.mxu0 %v6679
    %6889 = vmatpush1.bf16.msra.mxu0 %v6678
    %6890 = vmatprep.subr.bf16.mxu0 %v6683
    %6891 = vmatpush1.bf16.msra.mxu0 %v6682
    %6892 = vmatprep.subr.bf16.mxu0 %v6687
    %6893 = vmatpush1.bf16.msra.mxu0 %v6686
    %6894 = vmatprep.subr.bf16.mxu0 %v6691
    %6895 = vmatpush1.bf16.msra.mxu0 %v6690
    %6896 = vmatprep.mubr.bf16.mxu0 %v6757
    %6897 = vmatmul.mubr.bf16.gmra.mrb[0].mxu0 %v6756
    %v6898 = vpop.f32.mrb[0].mxu0
    %v6899 = vadd.f32 %v6773, %v6898
    %v6900 = vpop.f32.mrb[0].mxu0
    %v6901 = vadd.f32 %v6777, %v6900
    %v6902 = vpop.f32.mrb[0].mxu0
    %v6903 = vpop.f32.mrb[0].mxu0
    %6904 = vdwg.mxu0
    %6905 = vmatprep.subr.bf16.mxu0 %v6695
    %6906 = vmatpush1.bf16.msra.mxu0 %v6694
    %6907 = vmatprep.subr.bf16.mxu0 %v6699
    %6908 = vmatpush1.bf16.msra.mxu0 %v6698
    %6909 = vmatprep.subr.bf16.mxu0 %v6703
    %6910 = vmatpush1.bf16.msra.mxu0 %v6702
    %6911 = vmatprep.subr.bf16.mxu0 %v6707
    %6912 = vmatpush1.bf16.msra.mxu0 %v6706
    %6913 = vmatprep.subr.bf16.mxu0 %v6711
    %6914 = vmatpush1.bf16.msra.mxu0 %v6710
    %6915 = vmatprep.subr.bf16.mxu0 %v6715
    %6916 = vmatpush1.bf16.msra.mxu0 %v6714
    %6917 = vmatprep.subr.bf16.mxu0 %v6719
    %6918 = vmatpush1.bf16.msra.mxu0 %v6718
    %6919 = vmatprep.subr.bf16.mxu0 %v6723
    %6920 = vmatpush1.bf16.msra.mxu0 %v6722
    %6921 = vmatprep.subr.bf16.mxu0 %v6727
    %6922 = vmatpush1.bf16.msra.mxu0 %v6726
    %6923 = vmatprep.subr.bf16.mxu0 %v6731
    %6924 = vmatpush1.bf16.msra.mxu0 %v6730
    %6925 = vmatprep.subr.bf16.mxu0 %v6735
    %6926 = vmatpush1.bf16.msra.mxu0 %v6734
    %6927 = vmatprep.subr.bf16.mxu0 %v6739
    %6928 = vmatpush1.bf16.msra.mxu0 %v6738
    %6929 = vmatprep.subr.bf16.mxu0 %v6743
    %6930 = vmatpush1.bf16.msra.mxu0 %v6742
    %6931 = vmatprep.subr.bf16.mxu0 %v6747
    %6932 = vmatpush1.bf16.msra.mxu0 %v6746
    %6933 = vmatprep.subr.bf16.mxu0 %v6751
    %6934 = vmatpush1.bf16.msra.mxu0 %v6750
    %6935 = vmatprep.subr.bf16.mxu0 %v6755
    %6936 = vmatpush1.bf16.msra.mxu0 %v6754
    %6937 = vmatprep.mubr.bf16.mxu0 %v6759
    %6938 = vmatmul.mubr.bf16.gmra.mrb[0].mxu0 %v6758
    %v6939 = vpop.f32.mrb[0].mxu0
    %v6940 = vadd.f32 %v6899, %v6939
    %v6941 = vpop.f32.mrb[0].mxu0
    %v6942 = vadd.f32 %v6901, %v6941
    %v6943 = vpop.f32.mrb[0].mxu0
    %v6944 = vpop.f32.mrb[0].mxu0
    %6945 = vdwg.mxu0
    %vm6946 = vcmp.gt.f32.partialorder %v6858, 0.0
    %vm6947 = vcmp.gt.f32.partialorder %v6860, 0.0
    %vm6948 = vcmp.gt.f32.partialorder %v6940, 0.0
    %vm6949 = vcmp.gt.f32.partialorder %v6942, 0.0
    %v6950 = vmin.f32 %v6858, 0.0
    %v6951 = vmin.f32 %v6860, 0.0
    %v6952 = vmin.f32 %v6940, 0.0
    %v6953 = vmin.f32 %v6942, 0.0
    %v6954 = vmul.f32 %v6950, 1.442695
    %v6955 = vpow.pop %v6954
    %v6956 = vmul.f32 %v6951, 1.442695
    %v6957 = vpow.pop %v6956
    %v6958 = vmul.f32 %v6952, 1.442695
    %v6959 = vpow.pop %v6958
    %v6960 = vmul.f32 %v6953, 1.442695
    %v6961 = vpow.pop %v6960
    %v6962 = vsub.f32 %v6955, 1.0
    %v6963 = vsub.f32 %v6957, 1.0
    %v6964 = vsub.f32 %v6959, 1.0
    %v6965 = vsub.f32 %v6961, 1.0
    %v6966 = vsel %vm6946, %v6858, %v6962
    %v6967 = vsel %vm6947, %v6860, %v6963
    %v6968 = vsel %vm6948, %v6940, %v6964
    %v6969 = vsel %vm6949, %v6942, %v6965
    %v6970 = vld [vmem:[#allocation4 + $0x40] sm:$0xff]
    %v6971 = vld [vmem:[#allocation4 + $0x48] sm:$0xff]
    %v6972 = vld [vmem:[#allocation4 + $0x50] sm:$0xff]
    %v6973 = vld [vmem:[#allocation4 + $0x58] sm:$0xff]
    %v6974 = vld [vmem:[#allocation4 + $0xa8] sm:$0xff]
    %v6975 = vld [vmem:[#allocation4 + $0xb0] sm:$0xff]
    %v6976 = vld [vmem:[#allocation4 + $0xb8] sm:$0xff]
    %v6977 = vld [vmem:[#allocation4 + $0xc0] sm:$0xff]
    %v6978 = vld [vmem:[#allocation4 + $0x110] sm:$0xff]
    %v6979 = vld [vmem:[#allocation4 + $0x118] sm:$0xff]
    %v6980 = vld [vmem:[#allocation4 + $0x120] sm:$0xff]
    %v6981 = vld [vmem:[#allocation4 + $0x128] sm:$0xff]
    %v6982 = vld [vmem:[#allocation4 + $0x178] sm:$0xff]
    %v6983 = vld [vmem:[#allocation4 + $0x180] sm:$0xff]
    %v6984 = vld [vmem:[#allocation4 + $0x188] sm:$0xff]
    %v6985 = vld [vmem:[#allocation4 + $0x190] sm:$0xff]
    %v6986 = vld [vmem:[#allocation4 + $0x1e0] sm:$0xff]
    %v6987 = vld [vmem:[#allocation4 + $0x1e8] sm:$0xff]
    %v6988 = vld [vmem:[#allocation4 + $0x1f0] sm:$0xff]
    %v6989 = vld [vmem:[#allocation4 + $0x1f8] sm:$0xff]
    %v6990 = vld [vmem:[#allocation4 + $0x248] sm:$0xff]
    %v6991 = vld [vmem:[#allocation4 + $0x250] sm:$0xff]
    %v6992 = vld [vmem:[#allocation4 + $0x258] sm:$0xff]
    %v6993 = vld [vmem:[#allocation4 + $0x260] sm:$0xff]
    %v6994 = vld [vmem:[#allocation4 + $0x2b0] sm:$0xff]
    %v6995 = vld [vmem:[#allocation4 + $0x2b8] sm:$0xff]
    %v6996 = vld [vmem:[#allocation4 + $0x2c0] sm:$0xff]
    %v6997 = vld [vmem:[#allocation4 + $0x2c8] sm:$0xff]
    %v6998 = vld [vmem:[#allocation4 + $0x318] sm:$0xff]
    %v6999 = vld [vmem:[#allocation4 + $0x320] sm:$0xff]
    %v7000 = vld [vmem:[#allocation4 + $0x328] sm:$0xff]
    %v7001 = vld [vmem:[#allocation4 + $0x330] sm:$0xff]
    %v7002 = vld [vmem:[#allocation4 + $0x380] sm:$0xff]
    %v7003 = vld [vmem:[#allocation4 + $0x388] sm:$0xff]
    %v7004 = vld [vmem:[#allocation4 + $0x390] sm:$0xff]
    %v7005 = vld [vmem:[#allocation4 + $0x398] sm:$0xff]
    %v7006 = vld [vmem:[#allocation4 + $0x3e8] sm:$0xff]
    %v7007 = vld [vmem:[#allocation4 + $0x3f0] sm:$0xff]
    %v7008 = vld [vmem:[#allocation4 + $0x3f8] sm:$0xff]
    %v7009 = vld [vmem:[#allocation4 + $0x400] sm:$0xff]
    %v7010 = vld [vmem:[#allocation4 + $0x450] sm:$0xff]
    %v7011 = vld [vmem:[#allocation4 + $0x458] sm:$0xff]
    %v7012 = vld [vmem:[#allocation4 + $0x460] sm:$0xff]
    %v7013 = vld [vmem:[#allocation4 + $0x468] sm:$0xff]
    %v7014 = vld [vmem:[#allocation4 + $0x4b8] sm:$0xff]
    %v7015 = vld [vmem:[#allocation4 + $0x4c0] sm:$0xff]
    %v7016 = vld [vmem:[#allocation4 + $0x4c8] sm:$0xff]
    %v7017 = vld [vmem:[#allocation4 + $0x4d0] sm:$0xff]
    %v7018 = vld [vmem:[#allocation4 + $0x520] sm:$0xff]
    %v7019 = vld [vmem:[#allocation4 + $0x528] sm:$0xff]
    %v7020 = vld [vmem:[#allocation4 + $0x530] sm:$0xff]
    %v7021 = vld [vmem:[#allocation4 + $0x538] sm:$0xff]
    %v7022 = vld [vmem:[#allocation4 + $0x588] sm:$0xff]
    %v7023 = vld [vmem:[#allocation4 + $0x590] sm:$0xff]
    %v7024 = vld [vmem:[#allocation4 + $0x598] sm:$0xff]
    %v7025 = vld [vmem:[#allocation4 + $0x5a0] sm:$0xff]
    %v7026 = vld [vmem:[#allocation4 + $0x5f0] sm:$0xff]
    %v7027 = vld [vmem:[#allocation4 + $0x5f8] sm:$0xff]
    %v7028 = vld [vmem:[#allocation4 + $0x600] sm:$0xff]
    %v7029 = vld [vmem:[#allocation4 + $0x608] sm:$0xff]
    %v7030 = vld [vmem:[#allocation4 + $0x658] sm:$0xff]
    %v7031 = vld [vmem:[#allocation4 + $0x660] sm:$0xff]
    %v7032 = vld [vmem:[#allocation4 + $0x668] sm:$0xff]
    %v7033 = vld [vmem:[#allocation4 + $0x670] sm:$0xff]
    %v7034 = vld [vmem:[#allocation4 + $0x6c0] sm:$0xff]
    %v7035 = vld [vmem:[#allocation4 + $0x6c8] sm:$0xff]
    %v7036 = vld [vmem:[#allocation4 + $0x6d0] sm:$0xff]
    %v7037 = vld [vmem:[#allocation4 + $0x6d8] sm:$0xff]
    %v7038 = vld [vmem:[#allocation4 + $0x728] sm:$0xff]
    %v7039 = vld [vmem:[#allocation4 + $0x730] sm:$0xff]
    %v7040 = vld [vmem:[#allocation4 + $0x738] sm:$0xff]
    %v7041 = vld [vmem:[#allocation4 + $0x740] sm:$0xff]
    %v7042 = vld [vmem:[#allocation4 + $0x790] sm:$0xff]
    %v7043 = vld [vmem:[#allocation4 + $0x798] sm:$0xff]
    %v7044 = vld [vmem:[#allocation4 + $0x7a0] sm:$0xff]
    %v7045 = vld [vmem:[#allocation4 + $0x7a8] sm:$0xff]
    %v7046 = vld [vmem:[#allocation4 + $0x7f8] sm:$0xff]
    %v7047 = vld [vmem:[#allocation4 + $0x800] sm:$0xff]
    %v7048 = vld [vmem:[#allocation4 + $0x808] sm:$0xff]
    %v7049 = vld [vmem:[#allocation4 + $0x810] sm:$0xff]
    %v7050 = vld [vmem:[#allocation4 + $0x860] sm:$0xff]
    %v7051 = vld [vmem:[#allocation4 + $0x868] sm:$0xff]
    %v7052 = vld [vmem:[#allocation4 + $0x870] sm:$0xff]
    %v7053 = vld [vmem:[#allocation4 + $0x878] sm:$0xff]
    %v7054 = vld [vmem:[#allocation4 + $0x8c8] sm:$0xff]
    %v7055 = vld [vmem:[#allocation4 + $0x8d0] sm:$0xff]
    %v7056 = vld [vmem:[#allocation4 + $0x8d8] sm:$0xff]
    %v7057 = vld [vmem:[#allocation4 + $0x8e0] sm:$0xff]
    %v7058 = vld [vmem:[#allocation4 + $0x930] sm:$0xff]
    %v7059 = vld [vmem:[#allocation4 + $0x938] sm:$0xff]
    %v7060 = vld [vmem:[#allocation4 + $0x940] sm:$0xff]
    %v7061 = vld [vmem:[#allocation4 + $0x948] sm:$0xff]
    %v7062 = vld [vmem:[#allocation4 + $0x998] sm:$0xff]
    %v7063 = vld [vmem:[#allocation4 + $0x9a0] sm:$0xff]
    %v7064 = vld [vmem:[#allocation4 + $0x9a8] sm:$0xff]
    %v7065 = vld [vmem:[#allocation4 + $0x9b0] sm:$0xff]
    %v7066 = vld [vmem:[#allocation4 + $0xa00] sm:$0xff]
    %v7067 = vld [vmem:[#allocation4 + $0xa08] sm:$0xff]
    %v7068 = vld [vmem:[#allocation4 + $0xa10] sm:$0xff]
    %v7069 = vld [vmem:[#allocation4 + $0xa18] sm:$0xff]
    %v7070 = vld [vmem:[#allocation4 + $0xa68] sm:$0xff]
    %v7071 = vld [vmem:[#allocation4 + $0xa70] sm:$0xff]
    %v7072 = vld [vmem:[#allocation4 + $0xa78] sm:$0xff]
    %v7073 = vld [vmem:[#allocation4 + $0xa80] sm:$0xff]
    %v7074 = vld [vmem:[#allocation4 + $0xad0] sm:$0xff]
    %v7075 = vld [vmem:[#allocation4 + $0xad8] sm:$0xff]
    %v7076 = vld [vmem:[#allocation4 + $0xae0] sm:$0xff]
    %v7077 = vld [vmem:[#allocation4 + $0xae8] sm:$0xff]
    %v7078 = vld [vmem:[#allocation4 + $0xb38] sm:$0xff]
    %v7079 = vld [vmem:[#allocation4 + $0xb40] sm:$0xff]
    %v7080 = vld [vmem:[#allocation4 + $0xb48] sm:$0xff]
    %v7081 = vld [vmem:[#allocation4 + $0xb50] sm:$0xff]
    %v7082 = vld [vmem:[#allocation4 + $0xba0] sm:$0xff]
    %v7083 = vld [vmem:[#allocation4 + $0xba8] sm:$0xff]
    %v7084 = vld [vmem:[#allocation4 + $0xbb0] sm:$0xff]
    %v7085 = vld [vmem:[#allocation4 + $0xbb8] sm:$0xff]
    %v7086 = vld [vmem:[#allocation4 + $0xc08] sm:$0xff]
    %v7087 = vld [vmem:[#allocation4 + $0xc10] sm:$0xff]
    %v7088 = vld [vmem:[#allocation4 + $0xc18] sm:$0xff]
    %v7089 = vld [vmem:[#allocation4 + $0xc20] sm:$0xff]
    %v7090 = vld [vmem:[#allocation4 + $0xc70] sm:$0xff]
    %v7091 = vld [vmem:[#allocation4 + $0xc78] sm:$0xff]
    %v7092 = vld [vmem:[#allocation4 + $0xc80] sm:$0xff]
    %v7093 = vld [vmem:[#allocation4 + $0xc88] sm:$0xff]
    %v7094 = vld [vmem:[#allocation4 + $0xcd8] sm:$0xff]
    %v7095 = vld [vmem:[#allocation4 + $0xce0] sm:$0xff]
    %v7096 = vld [vmem:[#allocation4 + $0xce8] sm:$0xff]
    %v7097 = vld [vmem:[#allocation4 + $0xcf0] sm:$0xff]
    %v7098 = vpack.c.bf16 %v6966, %v6966
    %v7099 = vpack.c.bf16 %v6967, %v6967
    %v7100 = vpack.c.bf16 %v6968, %v6968
    %v7101 = vpack.c.bf16 %v6969, %v6969
    %v7102 = vld [vmem:[#allocation35 + $0x2b] sm:$0xf]
    %v7104 = vlaneseq
    %v7105 = vshrl.u32 %v7104, 7
    %v7106 = vsub.s32 0, %v7105
    %v7107 = vrot.slane %v7102, %v7106
    %v7108 = vlaneseq
    %v7109 = vshrl.u32 %v7108, 7
    %v7110 = vsub.s32 1, %v7109
    %v7111 = vrot.slane %v7102, %v7110
    %v7112 = vlaneseq
    %v7113 = vshrl.u32 %v7112, 7
    %v7114 = vsub.s32 2, %v7113
    %v7115 = vrot.slane %v7102, %v7114
    %v7116 = vlaneseq
    %v7117 = vshrl.u32 %v7116, 7
    %v7118 = vsub.s32 3, %v7117
    %v7119 = vrot.slane %v7102, %v7118
    %7124 = vmatprep.subr.bf16.mxu0 %v6971
    %7125 = vmatpush1.bf16.msra.mxu0 %v6970
    %7126 = vmatprep.subr.bf16.mxu0 %v6975
    %7127 = vmatpush1.bf16.msra.mxu0 %v6974
    %7128 = vmatprep.subr.bf16.mxu0 %v6979
    %7129 = vmatpush1.bf16.msra.mxu0 %v6978
    %7130 = vmatprep.subr.bf16.mxu0 %v6983
    %7131 = vmatpush1.bf16.msra.mxu0 %v6982
    %7132 = vmatprep.subr.bf16.mxu0 %v6987
    %7133 = vmatpush1.bf16.msra.mxu0 %v6986
    %7134 = vmatprep.subr.bf16.mxu0 %v6991
    %7135 = vmatpush1.bf16.msra.mxu0 %v6990
    %7136 = vmatprep.subr.bf16.mxu0 %v6995
    %7137 = vmatpush1.bf16.msra.mxu0 %v6994
    %7138 = vmatprep.subr.bf16.mxu0 %v6999
    %7139 = vmatpush1.bf16.msra.mxu0 %v6998
    %7140 = vmatprep.subr.bf16.mxu0 %v7003
    %7141 = vmatpush1.bf16.msra.mxu0 %v7002
    %7142 = vmatprep.subr.bf16.mxu0 %v7007
    %7143 = vmatpush1.bf16.msra.mxu0 %v7006
    %7144 = vmatprep.subr.bf16.mxu0 %v7011
    %7145 = vmatpush1.bf16.msra.mxu0 %v7010
    %7146 = vmatprep.subr.bf16.mxu0 %v7015
    %7147 = vmatpush1.bf16.msra.mxu0 %v7014
    %7148 = vmatprep.subr.bf16.mxu0 %v7019
    %7149 = vmatpush1.bf16.msra.mxu0 %v7018
    %7150 = vmatprep.subr.bf16.mxu0 %v7023
    %7151 = vmatpush1.bf16.msra.mxu0 %v7022
    %7152 = vmatprep.subr.bf16.mxu0 %v7027
    %7153 = vmatpush1.bf16.msra.mxu0 %v7026
    %7154 = vmatprep.subr.bf16.mxu0 %v7031
    %7155 = vmatpush1.bf16.msra.mxu0 %v7030
    %7156 = vmatprep.mubr.bf16.mxu0 %v7099
    %7157 = vmatmul.mubr.bf16.gmra.mrb[0].mxu0 %v7098
    %v7158 = vpop.f32.mrb[0].mxu0
    %v7159 = vadd.f32 %v7107, %v7158
    %v7160 = vpop.f32.mrb[0].mxu0
    %v7161 = vadd.f32 %v7111, %v7160
    %v7162 = vpop.f32.mrb[0].mxu0
    %v7163 = vpop.f32.mrb[0].mxu0
    %7164 = vdwg.mxu0
    %7165 = vmatprep.subr.bf16.mxu0 %v7035
    %7166 = vmatpush1.bf16.msra.mxu0 %v7034
    %7167 = vmatprep.subr.bf16.mxu0 %v7039
    %7168 = vmatpush1.bf16.msra.mxu0 %v7038
    %7169 = vmatprep.subr.bf16.mxu0 %v7043
    %7170 = vmatpush1.bf16.msra.mxu0 %v7042
    %7171 = vmatprep.subr.bf16.mxu0 %v7047
    %7172 = vmatpush1.bf16.msra.mxu0 %v7046
    %7173 = vmatprep.subr.bf16.mxu0 %v7051
    %7174 = vmatpush1.bf16.msra.mxu0 %v7050
    %7175 = vmatprep.subr.bf16.mxu0 %v7055
    %7176 = vmatpush1.bf16.msra.mxu0 %v7054
    %7177 = vmatprep.subr.bf16.mxu0 %v7059
    %7178 = vmatpush1.bf16.msra.mxu0 %v7058
    %7179 = vmatprep.subr.bf16.mxu0 %v7063
    %7180 = vmatpush1.bf16.msra.mxu0 %v7062
    %7181 = vmatprep.subr.bf16.mxu0 %v7067
    %7182 = vmatpush1.bf16.msra.mxu0 %v7066
    %7183 = vmatprep.subr.bf16.mxu0 %v7071
    %7184 = vmatpush1.bf16.msra.mxu0 %v7070
    %7185 = vmatprep.subr.bf16.mxu0 %v7075
    %7186 = vmatpush1.bf16.msra.mxu0 %v7074
    %7187 = vmatprep.subr.bf16.mxu0 %v7079
    %7188 = vmatpush1.bf16.msra.mxu0 %v7078
    %7189 = vmatprep.subr.bf16.mxu0 %v7083
    %7190 = vmatpush1.bf16.msra.mxu0 %v7082
    %7191 = vmatprep.subr.bf16.mxu0 %v7087
    %7192 = vmatpush1.bf16.msra.mxu0 %v7086
    %7193 = vmatprep.subr.bf16.mxu0 %v7091
    %7194 = vmatpush1.bf16.msra.mxu0 %v7090
    %7195 = vmatprep.subr.bf16.mxu0 %v7095
    %7196 = vmatpush1.bf16.msra.mxu0 %v7094
    %7197 = vmatprep.mubr.bf16.mxu0 %v7101
    %7198 = vmatmul.mubr.bf16.gmra.mrb[0].mxu0 %v7100
    %v7199 = vpop.f32.mrb[0].mxu0
    %v7200 = vadd.f32 %v7159, %v7199
    %v7201 = vpop.f32.mrb[0].mxu0
    %v7202 = vadd.f32 %v7161, %v7201
    %v7203 = vpop.f32.mrb[0].mxu0
    %v7204 = vpop.f32.mrb[0].mxu0
    %7205 = vdwg.mxu0
    %7206 = vmatprep.subr.bf16.mxu0 %v6973
    %7207 = vmatpush1.bf16.msra.mxu0 %v6972
    %7208 = vmatprep.subr.bf16.mxu0 %v6977
    %7209 = vmatpush1.bf16.msra.mxu0 %v6976
    %7210 = vmatprep.subr.bf16.mxu0 %v6981
    %7211 = vmatpush1.bf16.msra.mxu0 %v6980
    %7212 = vmatprep.subr.bf16.mxu0 %v6985
    %7213 = vmatpush1.bf16.msra.mxu0 %v6984
    %7214 = vmatprep.subr.bf16.mxu0 %v6989
    %7215 = vmatpush1.bf16.msra.mxu0 %v6988
    %7216 = vmatprep.subr.bf16.mxu0 %v6993
    %7217 = vmatpush1.bf16.msra.mxu0 %v6992
    %7218 = vmatprep.subr.bf16.mxu0 %v6997
    %7219 = vmatpush1.bf16.msra.mxu0 %v6996
    %7220 = vmatprep.subr.bf16.mxu0 %v7001
    %7221 = vmatpush1.bf16.msra.mxu0 %v7000
    %7222 = vmatprep.subr.bf16.mxu0 %v7005
    %7223 = vmatpush1.bf16.msra.mxu0 %v7004
    %7224 = vmatprep.subr.bf16.mxu0 %v7009
    %7225 = vmatpush1.bf16.msra.mxu0 %v7008
    %7226 = vmatprep.subr.bf16.mxu0 %v7013
    %7227 = vmatpush1.bf16.msra.mxu0 %v7012
    %7228 = vmatprep.subr.bf16.mxu0 %v7017
    %7229 = vmatpush1.bf16.msra.mxu0 %v7016
    %7230 = vmatprep.subr.bf16.mxu0 %v7021
    %7231 = vmatpush1.bf16.msra.mxu0 %v7020
    %7232 = vmatprep.subr.bf16.mxu0 %v7025
    %7233 = vmatpush1.bf16.msra.mxu0 %v7024
    %7234 = vmatprep.subr.bf16.mxu0 %v7029
    %7235 = vmatpush1.bf16.msra.mxu0 %v7028
    %7236 = vmatprep.subr.bf16.mxu0 %v7033
    %7237 = vmatpush1.bf16.msra.mxu0 %v7032
    %7238 = vmatprep.mubr.bf16.mxu0 %v7099
    %7239 = vmatmul.mubr.bf16.gmra.mrb[0].mxu0 %v7098
    %v7240 = vpop.f32.mrb[0].mxu0
    %v7241 = vadd.f32 %v7115, %v7240
    %v7242 = vpop.f32.mrb[0].mxu0
    %v7243 = vadd.f32 %v7119, %v7242
    %v7244 = vpop.f32.mrb[0].mxu0
    %v7245 = vpop.f32.mrb[0].mxu0
    %7246 = vdwg.mxu0
    %7247 = vmatprep.subr.bf16.mxu0 %v7037
    %7248 = vmatpush1.bf16.msra.mxu0 %v7036
    %7249 = vmatprep.subr.bf16.mxu0 %v7041
    %7250 = vmatpush1.bf16.msra.mxu0 %v7040
    %7251 = vmatprep.subr.bf16.mxu0 %v7045
    %7252 = vmatpush1.bf16.msra.mxu0 %v7044
    %7253 = vmatprep.subr.bf16.mxu0 %v7049
    %7254 = vmatpush1.bf16.msra.mxu0 %v7048
    %7255 = vmatprep.subr.bf16.mxu0 %v7053
    %7256 = vmatpush1.bf16.msra.mxu0 %v7052
    %7257 = vmatprep.subr.bf16.mxu0 %v7057
    %7258 = vmatpush1.bf16.msra.mxu0 %v7056
    %7259 = vmatprep.subr.bf16.mxu0 %v7061
    %7260 = vmatpush1.bf16.msra.mxu0 %v7060
    %7261 = vmatprep.subr.bf16.mxu0 %v7065
    %7262 = vmatpush1.bf16.msra.mxu0 %v7064
    %7263 = vmatprep.subr.bf16.mxu0 %v7069
    %7264 = vmatpush1.bf16.msra.mxu0 %v7068
    %7265 = vmatprep.subr.bf16.mxu0 %v7073
    %7266 = vmatpush1.bf16.msra.mxu0 %v7072
    %7267 = vmatprep.subr.bf16.mxu0 %v7077
    %7268 = vmatpush1.bf16.msra.mxu0 %v7076
    %7269 = vmatprep.subr.bf16.mxu0 %v7081
    %7270 = vmatpush1.bf16.msra.mxu0 %v7080
    %7271 = vmatprep.subr.bf16.mxu0 %v7085
    %7272 = vmatpush1.bf16.msra.mxu0 %v7084
    %7273 = vmatprep.subr.bf16.mxu0 %v7089
    %7274 = vmatpush1.bf16.msra.mxu0 %v7088
    %7275 = vmatprep.subr.bf16.mxu0 %v7093
    %7276 = vmatpush1.bf16.msra.mxu0 %v7092
    %7277 = vmatprep.subr.bf16.mxu0 %v7097
    %7278 = vmatpush1.bf16.msra.mxu0 %v7096
    %7279 = vmatprep.mubr.bf16.mxu0 %v7101
    %7280 = vmatmul.mubr.bf16.gmra.mrb[0].mxu0 %v7100
    %v7281 = vpop.f32.mrb[0].mxu0
    %v7282 = vadd.f32 %v7241, %v7281
    %v7283 = vpop.f32.mrb[0].mxu0
    %v7284 = vadd.f32 %v7243, %v7283
    %v7285 = vpop.f32.mrb[0].mxu0
    %v7286 = vpop.f32.mrb[0].mxu0
    %7287 = vdwg.mxu0
    %vm7288 = vcmp.gt.f32.partialorder %v7200, 0.0
    %vm7289 = vcmp.gt.f32.partialorder %v7202, 0.0
    %vm7290 = vcmp.gt.f32.partialorder %v7282, 0.0
    %vm7291 = vcmp.gt.f32.partialorder %v7284, 0.0
    %v7292 = vmin.f32 %v7200, 0.0
    %v7293 = vmin.f32 %v7202, 0.0
    %v7294 = vmin.f32 %v7282, 0.0
    %v7295 = vmin.f32 %v7284, 0.0
    %v7296 = vmul.f32 %v7292, 1.442695
    %v7297 = vpow.pop %v7296
    %v7298 = vmul.f32 %v7293, 1.442695
    %v7299 = vpow.pop %v7298
    %v7300 = vmul.f32 %v7294, 1.442695
    %v7301 = vpow.pop %v7300
    %v7302 = vmul.f32 %v7295, 1.442695
    %v7303 = vpow.pop %v7302
    %v7304 = vsub.f32 %v7297, 1.0
    %v7305 = vsub.f32 %v7299, 1.0
    %v7306 = vsub.f32 %v7301, 1.0
    %v7307 = vsub.f32 %v7303, 1.0
    %v7308 = vsel %vm7288, %v7200, %v7304
    %v7309 = vsel %vm7289, %v7202, %v7305
    %v7310 = vsel %vm7290, %v7282, %v7306
    %v7311 = vsel %vm7291, %v7284, %v7307
    %v7312 = vld [vmem:[#allocation4 + $0x60] sm:$0xff]
    %v7313 = vld [vmem:[#allocation4 + $0xc8] sm:$0xff]
    %v7314 = vld [vmem:[#allocation4 + $0x130] sm:$0xff]
    %v7315 = vld [vmem:[#allocation4 + $0x198] sm:$0xff]
    %v7316 = vld [vmem:[#allocation4 + $0x200] sm:$0xff]
    %v7317 = vld [vmem:[#allocation4 + $0x268] sm:$0xff]
    %v7318 = vld [vmem:[#allocation4 + $0x2d0] sm:$0xff]
    %v7319 = vld [vmem:[#allocation4 + $0x338] sm:$0xff]
    %v7320 = vld [vmem:[#allocation4 + $0x3a0] sm:$0xff]
    %v7321 = vld [vmem:[#allocation4 + $0x408] sm:$0xff]
    %v7322 = vld [vmem:[#allocation4 + $0x470] sm:$0xff]
    %v7323 = vld [vmem:[#allocation4 + $0x4d8] sm:$0xff]
    %v7324 = vld [vmem:[#allocation4 + $0x540] sm:$0xff]
    %v7325 = vld [vmem:[#allocation4 + $0x5a8] sm:$0xff]
    %v7326 = vld [vmem:[#allocation4 + $0x610] sm:$0xff]
    %v7327 = vld [vmem:[#allocation4 + $0x678] sm:$0xff]
    %v7328 = vld [vmem:[#allocation4 + $0x6e0] sm:$0xff]
    %v7329 = vld [vmem:[#allocation4 + $0x748] sm:$0xff]
    %v7330 = vld [vmem:[#allocation4 + $0x7b0] sm:$0xff]
    %v7331 = vld [vmem:[#allocation4 + $0x818] sm:$0xff]
    %v7332 = vld [vmem:[#allocation4 + $0x880] sm:$0xff]
    %v7333 = vld [vmem:[#allocation4 + $0x8e8] sm:$0xff]
    %v7334 = vld [vmem:[#allocation4 + $0x950] sm:$0xff]
    %v7335 = vld [vmem:[#allocation4 + $0x9b8] sm:$0xff]
    %v7336 = vld [vmem:[#allocation4 + $0xa20] sm:$0xff]
    %v7337 = vld [vmem:[#allocation4 + $0xa88] sm:$0xff]
    %v7338 = vld [vmem:[#allocation4 + $0xaf0] sm:$0xff]
    %v7339 = vld [vmem:[#allocation4 + $0xb58] sm:$0xff]
    %v7340 = vld [vmem:[#allocation4 + $0xbc0] sm:$0xff]
    %v7341 = vld [vmem:[#allocation4 + $0xc28] sm:$0xff]
    %v7342 = vld [vmem:[#allocation4 + $0xc90] sm:$0xff]
    %v7343 = vld [vmem:[#allocation4 + $0xcf8] sm:$0xff]
    %v7344 = vpack.c.bf16 %v7308, %v7308
    %v7345 = vpack.c.bf16 %v7309, %v7309
    %v7346 = vpack.c.bf16 %v7310, %v7310
    %v7347 = vpack.c.bf16 %v7311, %v7311
    %v7348 = vld [vmem:[#allocation35 + $0x2f] sm:$0x1]
    %v7350 = vlaneseq
    %v7351 = vshrl.u32 %v7350, 7
    %v7352 = vsub.s32 0, %v7351
    %v7353 = vrot.slane %v7348, %v7352
    %7355 = vmatprep.subr.bf16.mxu0 0
    %7356 = vmatpush1.bf16.msra.mxu0 %v7312
    %7357 = vmatprep.subr.bf16.mxu0 0
    %7358 = vmatpush1.bf16.msra.mxu0 %v7313
    %7359 = vmatprep.subr.bf16.mxu0 0
    %7360 = vmatpush1.bf16.msra.mxu0 %v7314
    %7361 = vmatprep.subr.bf16.mxu0 0
    %7362 = vmatpush1.bf16.msra.mxu0 %v7315
    %7363 = vmatprep.subr.bf16.mxu0 0
    %7364 = vmatpush1.bf16.msra.mxu0 %v7316
    %7365 = vmatprep.subr.bf16.mxu0 0
    %7366 = vmatpush1.bf16.msra.mxu0 %v7317
    %7367 = vmatprep.subr.bf16.mxu0 0
    %7368 = vmatpush1.bf16.msra.mxu0 %v7318
    %7369 = vmatprep.subr.bf16.mxu0 0
    %7370 = vmatpush1.bf16.msra.mxu0 %v7319
    %7371 = vmatprep.subr.bf16.mxu0 0
    %7372 = vmatpush1.bf16.msra.mxu0 %v7320
    %7373 = vmatprep.subr.bf16.mxu0 0
    %7374 = vmatpush1.bf16.msra.mxu0 %v7321
    %7375 = vmatprep.subr.bf16.mxu0 0
    %7376 = vmatpush1.bf16.msra.mxu0 %v7322
    %7377 = vmatprep.subr.bf16.mxu0 0
    %7378 = vmatpush1.bf16.msra.mxu0 %v7323
    %7379 = vmatprep.subr.bf16.mxu0 0
    %7380 = vmatpush1.bf16.msra.mxu0 %v7324
    %7381 = vmatprep.subr.bf16.mxu0 0
    %7382 = vmatpush1.bf16.msra.mxu0 %v7325
    %7383 = vmatprep.subr.bf16.mxu0 0
    %7384 = vmatpush1.bf16.msra.mxu0 %v7326
    %7385 = vmatprep.subr.bf16.mxu0 0
    %7386 = vmatpush1.bf16.msra.mxu0 %v7327
    %7387 = vmatprep.mubr.bf16.mxu0 %v7345
    %7388 = vmatmul.mubr.bf16.gmra.mrb[0].mxu0 %v7344
    %v7389 = vpop.f32.mrb[0].mxu0
    %v7390 = vadd.f32 %v7353, %v7389
    %v7391 = vpop.f32.mrb[0].mxu0
    %v7392 = vpop.f32.mrb[0].mxu0
    %v7393 = vpop.f32.mrb[0].mxu0
    %7394 = vdwg.mxu0
    %7395 = vmatprep.subr.bf16.mxu0 0
    %7396 = vmatpush1.bf16.msra.mxu0 %v7328
    %7397 = vmatprep.subr.bf16.mxu0 0
    %7398 = vmatpush1.bf16.msra.mxu0 %v7329
    %7399 = vmatprep.subr.bf16.mxu0 0
    %7400 = vmatpush1.bf16.msra.mxu0 %v7330
    %7401 = vmatprep.subr.bf16.mxu0 0
    %7402 = vmatpush1.bf16.msra.mxu0 %v7331
    %7403 = vmatprep.subr.bf16.mxu0 0
    %7404 = vmatpush1.bf16.msra.mxu0 %v7332
    %7405 = vmatprep.subr.bf16.mxu0 0
    %7406 = vmatpush1.bf16.msra.mxu0 %v7333
    %7407 = vmatprep.subr.bf16.mxu0 0
    %7408 = vmatpush1.bf16.msra.mxu0 %v7334
    %7409 = vmatprep.subr.bf16.mxu0 0
    %7410 = vmatpush1.bf16.msra.mxu0 %v7335
    %7411 = vmatprep.subr.bf16.mxu0 0
    %7412 = vmatpush1.bf16.msra.mxu0 %v7336
    %7413 = vmatprep.subr.bf16.mxu0 0
    %7414 = vmatpush1.bf16.msra.mxu0 %v7337
    %7415 = vmatprep.subr.bf16.mxu0 0
    %7416 = vmatpush1.bf16.msra.mxu0 %v7338
    %7417 = vmatprep.subr.bf16.mxu0 0
    %7418 = vmatpush1.bf16.msra.mxu0 %v7339
    %7419 = vmatprep.subr.bf16.mxu0 0
    %7420 = vmatpush1.bf16.msra.mxu0 %v7340
    %7421 = vmatprep.subr.bf16.mxu0 0
    %7422 = vmatpush1.bf16.msra.mxu0 %v7341
    %7423 = vmatprep.subr.bf16.mxu0 0
    %7424 = vmatpush1.bf16.msra.mxu0 %v7342
    %7425 = vmatprep.subr.bf16.mxu0 0
    %7426 = vmatpush1.bf16.msra.mxu0 %v7343
    %7427 = vmatprep.mubr.bf16.mxu0 %v7347
    %7428 = vmatmul.mubr.bf16.gmra.mrb[0].mxu0 %v7346
    %v7429 = vpop.f32.mrb[0].mxu0
    %v7430 = vadd.f32 %v7390, %v7429
    %v7431 = vpop.f32.mrb[0].mxu0
    %v7432 = vpop.f32.mrb[0].mxu0
    %v7433 = vpop.f32.mrb[0].mxu0
    %7434 = vdwg.mxu0
    %v7435 = vmul.f32 %v7430, 1.442695
    %v7436 = vpow.pop %v7435
    %v7437 = vld [vmem:[#allocation12] sm:$0x1]
    %v7439 = vlaneseq
    %v7440 = vshrl.u32 %v7439, 7
    %v7441 = vsub.s32 0, %v7440
    %v7442 = vrot.slane %v7437, %v7441
    %v7444 = vmul.f32 %v7436, %v7442
    %v7446 = vrot.slane %v7444, 1
    %v7448 = vadd.f32 %v7430, %v7446
    %vm7449 = vcmask 1040384
    %v7450 = vsel %vm7449, %v7448, 0.0
    %7451 = vrot.lane.b32.xlu0 %v5699, 96
    %v7452 = vpop.permute.xlu0 %7451
    %7455 = vrot.lane.b32.xlu0 %v7450, 96
    %v7456 = vpop.permute.xlu0 %7455
    %v7458 = vsel %vm3971, %v5793, %v5887
    %v7459 = vsel %vm5633, %v7458, %v5885
    %vm7460 = vcmask 785408
    %v7461 = vsel %vm7460, %v7459, %v5889
    %v7462 = vsel %vm3971, %v5903, %v7452
    %v7463 = vsel %vm7460, %v7462, %v7456
    %v7466 = vcombine.low %v7461, %v7463
    %v7468 = vunpack.c.l.s4 1983009808
    %v7469 = vunpack.c.0.s8 %v7468
    %v7470 = vlaneseq
    %v7471 = vshrl.u32 %v7470, 7
    %v7472 = vsub.s32 %v7469, %v7471
    %v7473 = vrot.slane %v7466, %v7472
    %7475 = vst [vmem:[#allocation36] sm:$0xf] %v7473
    // Predicated region
    $region170: #{tpu_custom_call.1} parent=1 // pred_check
      _
    $region171: #{tpu_custom_call.1} parent=1 // pred_check_branch
      %7477 = sbr.rel (0) target = $region173
    $region172: #{tpu_custom_call.1} parent=1 // pred_region
      %s7479 = ssub.s32 64, 64
      %7480 = vsyncadd [#allocation8], %s7479
      %s7482 = sshll.u32 [#allocation36], 4
      %s7483 = int_to_ptr.vmem [resolvable:$true] %s7482
      %7485 = dma.vmem_to_hbm [thread:$0]  %s7483, 64, %s22, [#allocation8]
    $region173: #{tpu_custom_call.1} parent=1 // pred_fallthru
      _
    // Predicated region
    $region174: #{tpu_custom_call.1} parent=1 // pred_check
      _
    $region175: #{tpu_custom_call.1} parent=1 // pred_check_branch
      %7487 = sbr.rel (0) target = $region177
    $region176: #{tpu_custom_call.1} parent=1 // pred_region
      %7488 = dma.done [#allocation8], 64
    $region177: #{tpu_custom_call.1} parent=1 // pred_fallthru
      _
    %7489 = vsyncpa [#allocation7], 1
    %7490 = vsyncpa [#allocation10], 1
    %7491 = vsyncpa [#allocation13], 1
    %7492 = vsyncpa [#allocation16], 1
    %7493 = vsyncpa [#allocation19], 1
    %7494 = vsyncpa [#allocation22], 1
    %7495 = vsyncpa [#allocation25], 1
    %7496 = vsyncpa [#allocation28], 1
    %7497 = vsyncpa [#allocation31], 1
    %7498 = vsyncpa [#allocation34], 1
    %7499 = vsyncpa [#allocation8], 1
  %7500 = vsyncmov [#allocation5]
  %s7501 = vpop.sfrf %7500
  %p7502 = scmp.eq.s32.totalorder %s7501, 0
  %p7503 = pneg %p7502
  %7505 = shalt.err (%p7503)

</llo_original>
